<compile_context>
chip_gen: v7x
topology: tpu7x:2x2x1
jax: 0.10.0
libtpu: 0.0.40
codegen_flags: <defaults>
</compile_context>

<pallas_src>
import functools

import jax
import jax.numpy as jnp
from jax.experimental import pallas as pl
from jax.experimental.pallas import tpu as pltpu


# Set to jnp.float32 for bit-exact parity with the f32 PyTorch reference
# (bf16 halves HBM traffic on the mem-bound 1x1 convs; f32 accumulation is
# always used on the MXU).
MM_DTYPE = jnp.bfloat16

# Scoped-VMEM limit: > the 32 MiB default but < v7x's 64 MiB physical VMEM.
_VMEM_LIMIT = 48 * 1024 * 1024


# --------------------------------------------------------------------------- helpers

def _round_up(v, m):
    return ((v + m - 1) // m) * m


def _pick_row_tile(m, target):
    """Row tile <= target; forces >=2 grid steps so both v7x TCs get work."""
    tm = min(target, _round_up(m, 8))
    if m > 16 and (m + tm - 1) // tm < 2:
        tm = _round_up((m + 1) // 2, 8)
    return max(tm, 8)


# ----------------------------------------------- matmul + bias (+ReLU, +BN partials)

def _mm_bias_kernel(x_ref, w_ref, b_ref, o_ref, *, relu):
    y = jnp.dot(x_ref[...], w_ref[...], preferred_element_type=jnp.float32) + b_ref[...]
    if relu:
        y = jnp.maximum(y, 0.0)
    o_ref[...] = y.astype(o_ref.dtype)


def _mm_bias_stats_kernel(x_ref, w_ref, b_ref, o_ref, s_ref, *, relu, tm, m_valid,
                          mask_tail):
    y = jnp.dot(x_ref[...], w_ref[...], preferred_element_type=jnp.float32) + b_ref[...]
    if relu:
        y = jnp.maximum(y, 0.0)
    o_ref[...] = y.astype(o_ref.dtype)

    # Per-tile partial [sum, sum-of-squares] for train-mode BatchNorm stats.
    # NOTE: E[x^2]-E[x]^2 in f32 can cancel for large-mean inputs; acceptable
    # here (post-ReLU conv outputs), variance is clamped >= 0 downstream.
    def write_stats(v):
        s_ref[0] = jnp.concatenate([jnp.sum(v, axis=0, keepdims=True),
                                    jnp.sum(v * v, axis=0, keepdims=True)], axis=0)

    if not mask_tail:                       # static: no tail -> no masking at all
        write_stats(y)
    else:
        last = pl.num_programs(0) - 1

        @pl.when(pl.program_id(0) != last)
        def _():
            write_stats(y)

        @pl.when(pl.program_id(0) == last)   # mask only the padded tail rows
        def _():
            row = pl.program_id(0) * tm + jax.lax.broadcasted_iota(jnp.int32, (tm, 1), 0)
            write_stats(jnp.where(row < m_valid, y, 0.0))


def matmul_bias(x, w, b, *, relu=False, with_stats=False, row_tile=1024,
                out_dtype=jnp.float32):
    """(M,K)@(K,N)+b, fused ReLU, optional per-column sum/sumsq partials."""
    m, k = x.shape
    n = w.shape[1]
    tm = _pick_row_tile(m, row_tile)
    nt = (m + tm - 1) // tm
    mask_tail = (m % tm) != 0
    b2 = b.reshape(1, n).astype(jnp.float32)
    in_specs = [pl.BlockSpec((tm, k), lambda i: (i, 0)),
                pl.BlockSpec((k, n), lambda i: (0, 0)),
                pl.BlockSpec((1, n), lambda i: (0, 0))]
    cp = pltpu.CompilerParams(dimension_semantics=("parallel",),
                              vmem_limit_bytes=_VMEM_LIMIT)
    if not with_stats:
        out = pl.pallas_call(
            functools.partial(_mm_bias_kernel, relu=relu),
            out_shape=jax.ShapeDtypeStruct((m, n), out_dtype),
            grid=(nt,),
            in_specs=in_specs,
            out_specs=pl.BlockSpec((tm, n), lambda i: (i, 0)),
            compiler_params=cp,
        )(x, w, b2)
        return out, None

    out, part = pl.pallas_call(
        functools.partial(_mm_bias_stats_kernel, relu=relu, tm=tm, m_valid=m,
                          mask_tail=mask_tail),
        out_shape=(jax.ShapeDtypeStruct((m, n), out_dtype),
                   jax.ShapeDtypeStruct((nt, 2, n), jnp.float32)),
        grid=(nt,),
        in_specs=in_specs,
        out_specs=(pl.BlockSpec((tm, n), lambda i: (i, 0)),
                   pl.BlockSpec((1, 2, n), lambda i: (i, 0, 0))),
        compiler_params=cp,
    )(x, w, b2)
    return out, jnp.sum(part, axis=0)                     # (2, n): [sum, sumsq]


# ---- fused: pointwise 1x1 conv + grouped 3x3 conv + bias + BN'd skip + `stage` add

def _fused_gconv_kernel(gprev_ref, gcur_ref, gnext_ref, y_ref, x_ref,
                        pw_ws_ref, pw_wp_ref, pw_bs_ref, pw_bp_ref,
                        dw_w_ref, dw_b_ref, bn_ref, o_ref, gs_ref, gp_ref,
                        *, trh, nrt, wf, n_out, up_out):
    r = pl.program_id(1)
    rows = trh + 2
    cg = gcur_ref.shape[-1]

    # (trh+2, Wf, 14) `give` window assembled from 1-row halo blocks.
    give_win = jnp.concatenate([gprev_ref[0], gcur_ref[0], gnext_ref[0]], axis=0)
    gmat = give_win.reshape(rows * wf, cg)

    # Fused pointwise 1x1 conv on the MXU.  Two column orders of the same
    # weight give g and the within-group pair-swapped g (no lane permutes).
    gs = jnp.dot(gmat, pw_ws_ref[...], preferred_element_type=jnp.float32) + pw_bs_ref[...]
    gp = jnp.dot(gmat, pw_wp_ref[...], preferred_element_type=jnp.float32) + pw_bp_ref[...]

    # Stage the width-padded windows in VMEM scratch; taps are ref-level loads.
    zcol = jnp.zeros((rows, 1, n_out), jnp.float32)
    gs_ref[:, pl.ds(0, 1), :] = zcol
    gs_ref[:, pl.ds(wf + 1, 1), :] = zcol
    gp_ref[:, pl.ds(0, 1), :] = zcol
    gp_ref[:, pl.ds(wf + 1, 1), :] = zcol
    gs_ref[:, pl.ds(1, wf), :] = gs.reshape(rows, wf, n_out)
    gp_ref[:, pl.ds(1, wf), :] = gp.reshape(rows, wf, n_out)

    # Conv zero padding at the image top/bottom: only the boundary row-tiles
    # pay for it (pl.when), interior tiles skip entirely.
    zrow = jnp.zeros((1, wf + 2, n_out), jnp.float32)

    @pl.when(r == 0)
    def _():
        gs_ref[pl.ds(0, 1), :, :] = zrow
        gp_ref[pl.ds(0, 1), :, :] = zrow

    @pl.when(r == nrt - 1)
    def _():
        gs_ref[pl.ds(rows - 1, 1), :, :] = zrow
        gp_ref[pl.ds(rows - 1, 1), :, :] = zrow

    # Grouped 3x3 conv (group size 2): 9 taps x 2 per-channel VPU FMAs.
    ws = dw_w_ref[0]                            # (9, C): weight on input channel co
    wp = dw_w_ref[1]                            # (9, C): weight on input channel co^1
    acc = jnp.zeros((trh, wf, n_out), jnp.float32)
    for kh in range(3):
        for kw in range(3):
            t = kh * 3 + kw
            acc = acc + gs_ref[pl.ds(kh, trh), pl.ds(kw, wf), :] * ws[t]
            acc = acc + gp_ref[pl.ds(kh, trh), pl.ds(kw, wf), :] * wp[t]
    acc = acc + dw_b_ref[0]

    # BN-normalize of the virtual concat [tr_out, x_out] (never materialized in
    # HBM) + `stage` residual combine.
    cat = jnp.concatenate([y_ref[0].astype(jnp.float32),
                           x_ref[0].astype(jnp.float32)], axis=-1)
    res = cat * bn_ref[0] + bn_ref[1]
    # TODO(synk): `stage` is an injected nn.Module in the reference; realized
    # here as an elementwise add of the grouped-conv output and the BN'd skip.
    o_ref[0] = (acc + res).astype(o_ref.dtype)


def gconv_pointwise_bn_add(give_nhwc, y_nhwc, x_nhwc, pw_ws, pw_wp, pw_bs, pw_bp,
                           dw_w, dw_b, bn_scale, bn_shift):
    b, h2, wf, cg = give_nhwc.shape
    n_out = bn_scale.shape[0]
    up_out = y_nhwc.shape[-1]
    x_out = x_nhwc.shape[-1]

    # Row tile: <=512 output rows worth of pixels per grid step (VMEM-safe on
    # every generation incl. v7x's 64 MiB).
    trh = 1
    for cand in (32, 16, 8, 4, 2, 1):
        if h2 % cand == 0 and cand * wf <= 512:
            trh = cand
            break
    if b * (h2 // trh) < 2 and trh > 1 and h2 % (trh // 2) == 0:
        trh //= 2                               # keep both v7x TCs busy
    nrt = h2 // trh

    bn = jnp.stack([bn_scale, bn_shift], axis=0)           # (2, n_out)
    kern = functools.partial(_fused_gconv_kernel, trh=trh, nrt=nrt, wf=wf,
                             n_out=n_out, up_out=up_out)

    body_map = lambda bi, ri: (bi, ri, 0, 0)
    prev_map = lambda bi, ri: (bi, jnp.maximum(ri * trh - 1, 0), 0, 0)      # 1-row halo
    next_map = lambda bi, ri: (bi, jnp.minimum(ri * trh + trh, h2 - 1), 0, 0)
    c2 = lambda bi, ri: (0, 0)
    c3 = lambda bi, ri: (0, 0, 0)

    # TODO(synk): at real channel counts repack the out block lane-dense
    # ((W,C)->W*C) to avoid masked vst on narrow C; skipped here for lowering
    # robustness at tiny C.
    return pl.pallas_call(
        kern,
        out_shape=jax.ShapeDtypeStruct((b, h2, wf, n_out), jnp.float32),
        grid=(b, nrt),
        in_specs=[pl.BlockSpec((1, 1, wf, cg), prev_map),
                  pl.BlockSpec((1, trh, wf, cg), body_map),
                  pl.BlockSpec((1, 1, wf, cg), next_map),
                  pl.BlockSpec((1, trh, wf, up_out), body_map),
                  pl.BlockSpec((1, trh, wf, x_out), body_map),
                  pl.BlockSpec((cg, n_out), c2),            # pointwise W (same order)
                  pl.BlockSpec((cg, n_out), c2),            # pointwise W (pair-swapped)
                  pl.BlockSpec((1, n_out), c2),             # pointwise b
                  pl.BlockSpec((1, n_out), c2),             # pointwise b (swapped)
                  pl.BlockSpec((2, 9, n_out), c3),          # grouped-conv taps
                  pl.BlockSpec((1, n_out), c2),             # grouped-conv bias
                  pl.BlockSpec((2, n_out), c2)],            # BN scale/shift
        out_specs=pl.BlockSpec((1, trh, wf, n_out), body_map),
        scratch_shapes=[pltpu.VMEM((trh + 2, wf + 2, n_out), jnp.float32),
                        pltpu.VMEM((trh + 2, wf + 2, n_out), jnp.float32)],
        compiler_params=pltpu.CompilerParams(
            dimension_semantics=("parallel", "parallel"),
            vmem_limit_bytes=_VMEM_LIMIT),
    )(give_nhwc, give_nhwc, give_nhwc, y_nhwc, x_nhwc,
      pw_ws, pw_wp, pw_bs.reshape(1, n_out), pw_bp.reshape(1, n_out),
      dw_w, dw_b.reshape(1, n_out), bn)


# --------------------------------------------------------------------------- params

def init_params(key, up_in, x_in, n_out):
    up_out = n_out // 2
    x_out = n_out // 2
    ks = jax.random.split(key, 8)
    p = {}
    # ConvTranspose2d(up_in, up_out, 2, stride=2): torch weight (up_in, up_out, 2, 2)
    w_tr = jax.random.normal(ks[0], (up_in, up_out, 2, 2), jnp.float32) * 0.1
    p["tr_w"] = jnp.transpose(w_tr, (0, 2, 3, 1)).reshape(up_in, 4 * up_out)  # (kh,kw,co)
    b_tr = jax.random.normal(ks[1], (up_out,), jnp.float32) * 0.1
    p["tr_b"] = jnp.tile(b_tr, 4)
    # Conv2d(x_in, x_out, 1)
    p["xc_w"] = jax.random.normal(ks[2], (x_in, x_out), jnp.float32) * 0.1
    p["xc_b"] = jax.random.normal(ks[3], (x_out,), jnp.float32) * 0.1
    # BatchNorm2d(n_out): default affine init
    p["bn_g"] = jnp.ones((n_out,), jnp.float32)
    p["bn_b"] = jnp.zeros((n_out,), jnp.float32)
    # Conv2d(14, n_out, 1): keep both the original and pair-swapped column order
    # so the fused gconv kernel gets g and its within-group partner for free.
    pw_w = jax.random.normal(ks[4], (14, n_out), jnp.float32) * 0.1
    pw_b = jax.random.normal(ks[5], (n_out,), jnp.float32) * 0.1
    sw = jnp.arange(n_out) ^ 1
    p["pw_ws"], p["pw_wp"] = pw_w, pw_w[:, sw]
    p["pw_bs"], p["pw_bp"] = pw_b, pw_b[sw]
    # Conv2d(n_out, n_out, 3, stride=ratio, padding=1, groups=n_out//2):
    # torch weight (n_out, 2, 3, 3) -> per-channel (same, partner) taps (2, 9, C)
    w_dw = jax.random.normal(ks[6], (n_out, 2, 3, 3), jnp.float32) * 0.1
    co = jnp.arange(n_out)
    j_same = co % 2
    w_same = w_dw[co, j_same]          # applied to input channel co
    w_part = w_dw[co, 1 - j_same]      # applied to input channel co ^ 1
    p["dw_w"] = jnp.stack([jnp.transpose(w_same, (1, 2, 0)).reshape(9, n_out),
                           jnp.transpose(w_part, (1, 2, 0)).reshape(9, n_out)], axis=0)
    p["dw_b"] = jax.random.normal(ks[7], (n_out,), jnp.float32) * 0.1
    # NOTE: nn.Linear g_fc exists in __init__ but is unused by forward -> not implemented.
    return p


# --------------------------------------------------------------------------- forward

def unet_stage_block(up_p, x_p, give, params, ratio):
    """Forward of UnetStageBlock (train-mode BatchNorm; `stage` realized as add)."""
    # TODO(synk): `stage` realized as elementwise add and the grouped conv
    # ignores stride=ratio -> requires ratio == 1 (matching spatial dims).
    assert ratio == 1, "stage==add requires matching spatial dims (ratio must be 1)"
    b, c_up, h, w = up_p.shape
    _, c_x, hf, wfull = x_p.shape
    _, c_g, hg, wg = give.shape
    assert hf == 2 * h and wfull == 2 * w and (hg, wg) == (hf, wfull)
    n_out = params["bn_g"].shape[0]
    up_out = n_out // 2
    x_out = n_out // 2
    mmdt = MM_DTYPE

    # ---- tr_conv: ConvTranspose2d(k=2, s=2) as one matmul (+fused ReLU & BN partials)
    up_rows = jnp.transpose(up_p, (0, 2, 3, 1)).reshape(b * h * w, c_up).astype(mmdt)
    y_mm, y_stats4 = matmul_bias(up_rows, params["tr_w"].astype(mmdt), params["tr_b"],
                                 relu=True, with_stats=True, out_dtype=mmdt)
    # TODO(synk): 2x2 pixel shuffle still done by XLA (on bf16 = half traffic);
    # could be folded into the tr_conv out BlockSpec via a (B,H,2,2W,C) layout.
    y = y_mm.reshape(b, h, w, 2, 2, up_out).transpose(0, 1, 3, 2, 4, 5)
    y = y.reshape(b, 2 * h, 2 * w, up_out)
    y_stats = jnp.sum(y_stats4.reshape(2, 4, up_out), axis=1)     # fold (kh, kw)

    # ---- x_conv: 1x1 conv (+fused ReLU & BN partials)
    # TODO(synk): x2 could be recomputed inside the gconv kernel to drop this
    # HBM round trip entirely; emitted as bf16 instead to halve it.
    x_rows = jnp.transpose(x_p, (0, 2, 3, 1)).reshape(b * hf * wfull, c_x).astype(mmdt)
    x2_mm, x_stats = matmul_bias(x_rows, params["xc_w"].astype(mmdt), params["xc_b"],
                                 relu=True, with_stats=True, out_dtype=mmdt)
    x2 = x2_mm.reshape(b, hf, wfull, x_out)

    # ---- BatchNorm2d (training-mode batch stats) folded to per-channel scale/shift
    m_f = float(b * hf * wfull)
    s = jnp.concatenate([y_stats, x_stats], axis=-1)              # (2, n_out)
    mean = s[0] / m_f
    var = jnp.maximum(s[1] / m_f - mean * mean, 0.0)              # biased batch variance
    bn_scale = params["bn_g"] * jax.lax.rsqrt(var + 1e-5)
    bn_shift = params["bn_b"] - mean * bn_scale

    # ---- fused: pointwise(give) -> grouped 3x3 conv -> + BN'd [y, x2] (`stage` add)
    give_nhwc = jnp.transpose(give, (0, 2, 3, 1)).astype(mmdt)
    out = gconv_pointwise_bn_add(give_nhwc, y, x2,
                                 params["pw_ws"].astype(mmdt),
                                 params["pw_wp"].astype(mmdt),
                                 params["pw_bs"], params["pw_bp"],
                                 params["dw_w"], params["dw_b"],
                                 bn_scale, bn_shift)
    return jnp.transpose(out, (0, 3, 1, 2))                        # back to NCHW


# --------------------------------------------------------------------------- main

if __name__ == "__main__":
    key = jax.random.PRNGKey(0)
    k1, k2, k3, kp = jax.random.split(key, 4)

    B, up_in, x_in, n_out, ratio = 2, 4, 4, 8, 1
    H = W = 16                                     # up_p spatial; x_p / give are 2x

    up_p = jax.random.normal(k1, (B, up_in, H, W), jnp.float32)
    x_p = jax.random.normal(k2, (B, x_in, 2 * H, 2 * W), jnp.float32)
    give = jax.random.normal(k3, (B, 14, 2 * H, 2 * W), jnp.float32)

    params = init_params(kp, up_in, x_in, n_out)

    fwd = jax.jit(functools.partial(unet_stage_block, ratio=ratio))
    out = fwd(up_p, x_p, give, params)
    jax.block_until_ready(out)
    assert out.shape == (B, n_out, 2 * H, 2 * W), out.shape
    assert bool(jnp.all(jnp.isfinite(out)))
    print("KERNEL_OK")
</pallas_src>

<mosaic_0001>
module attributes {stable_mosaic.version = 11 : i64} {
  func.func @_mm_bias_stats_kernel(%arg0: i32, %arg1: memref<256x4xbf16, #tpu.memory_space<vmem>>, %arg2: memref<4x16xbf16, #tpu.memory_space<vmem>>, %arg3: memref<1x16xf32, #tpu.memory_space<vmem>>, %arg4: memref<256x16xbf16, #tpu.memory_space<vmem>>, %arg5: memref<1x2x16xf32, #tpu.memory_space<vmem>>) attributes {dimension_semantics = [#tpu.dimension_semantics<parallel>], iteration_bounds = array<i64: 2>, scalar_prefetch = 0 : i64, scratch_operands = 0 : i64, tpu.core_type = #tpu.core_type<tc>, window_params = [{transform_indices = @transform_0, window_bounds = array<i64: 256, 4>}, {pipeline_mode = #tpu.pipeline_mode<synchronous>, transform_indices = @transform_1, window_bounds = array<i64: 4, 16>}, {pipeline_mode = #tpu.pipeline_mode<synchronous>, transform_indices = @transform_2, window_bounds = array<i64: 1, 16>}, {transform_indices = @transform_3, window_bounds = array<i64: 256, 16>}, {transform_indices = @transform_4, window_bounds = array<i64: 1, 2, 16>}]} {
    %c0 = arith.constant 0 : index
    %c0_0 = arith.constant 0 : index
    %0 = vector.load %arg1[%c0, %c0_0] : memref<256x4xbf16, #tpu.memory_space<vmem>>, vector<256x4xbf16>
    %c0_1 = arith.constant 0 : index
    %c0_2 = arith.constant 0 : index
    %1 = vector.load %arg2[%c0_1, %c0_2] : memref<4x16xbf16, #tpu.memory_space<vmem>>, vector<4x16xbf16>
    %cst = arith.constant dense<0.000000e+00> : vector<256x16xf32>
    %2 = tpu.matmul %0, %1, %cst {dimension_numbers = #tpu.dot_dimension_numbers<[1], [0], [0], [1], [0, 0, 1, 1], [], []>} : vector<256x4xbf16>, vector<4x16xbf16>, vector<256x16xf32> -> vector<256x16xf32>
    %c0_3 = arith.constant 0 : index
    %c0_4 = arith.constant 0 : index
    %3 = vector.load %arg3[%c0_3, %c0_4] : memref<1x16xf32, #tpu.memory_space<vmem>>, vector<1x16xf32>
    %4 = vector.broadcast %3 : vector<1x16xf32> to vector<256x16xf32>
    %5 = arith.addf %2, %4 : vector<256x16xf32>
    %cst_5 = arith.constant 0.000000e+00 : f32
    %6 = vector.broadcast %cst_5 : f32 to vector<256x16xf32>
    %7 = arith.maximumf %5, %6 : vector<256x16xf32>
    %8 = arith.truncf %7 : vector<256x16xf32> to vector<256x16xbf16>
    %c0_6 = arith.constant 0 : index
    %c0_7 = arith.constant 0 : index
    %9 = vector.load %arg4[%c0_6, %c0_7] : memref<256x16xbf16, #tpu.memory_space<vmem>>, vector<256x16xbf16>
    tpu.vector_store %arg4[%c0_6, %c0_7], %8 {strides = array<i32>} : memref<256x16xbf16, #tpu.memory_space<vmem>>, vector<256x16xbf16>,
    %cst_8 = arith.constant dense<0.000000e+00> : vector<16xf32>
    %10 = vector.multi_reduction <add>, %7, %cst_8 [0] : vector<256x16xf32> to vector<16xf32>
    %11 = vector.shape_cast %10 : vector<16xf32> to vector<1x16xf32>
    %12 = arith.mulf %7, %7 : vector<256x16xf32>
    %cst_9 = arith.constant dense<0.000000e+00> : vector<16xf32>
    %13 = vector.multi_reduction <add>, %12, %cst_9 [0] : vector<256x16xf32> to vector<16xf32>
    %14 = vector.shape_cast %13 : vector<16xf32> to vector<1x16xf32>
    %15 = tpu.concatenate %11, %14 in 0 : vector<1x16xf32>, vector<1x16xf32> -> vector<2x16xf32>
    %c0_10 = arith.constant 0 : index
    %c0_11 = arith.constant 0 : index
    %c0_12 = arith.constant 0 : index
    %16 = vector.load %arg5[%c0_10, %c0_11, %c0_12] : memref<1x2x16xf32, #tpu.memory_space<vmem>>, vector<1x2x16xf32>
    %17 = vector.shape_cast %16 : vector<1x2x16xf32> to vector<2x16xf32>
    %18 = vector.shape_cast %15 : vector<2x16xf32> to vector<1x2x16xf32>
    tpu.vector_store %arg5[%c0_10, %c0_11, %c0_12], %18 {strides = array<i32>} : memref<1x2x16xf32, #tpu.memory_space<vmem>>, vector<1x2x16xf32>,
    return
  }
  func.func @transform_0(%arg0: i32) -> (i32, i32) {
    %c0_i32 = arith.constant 0 : i32
    %c0_i32_0 = arith.constant 0 : i32
    return %arg0, %c0_i32 : i32, i32
  }
  func.func @transform_1(%arg0: i32) -> (i32, i32) {
    %c0_i32 = arith.constant 0 : i32
    %c0_i32_0 = arith.constant 0 : i32
    %c0_i32_1 = arith.constant 0 : i32
    return %c0_i32, %c0_i32_0 : i32, i32
  }
  func.func @transform_2(%arg0: i32) -> (i32, i32) {
    %c0_i32 = arith.constant 0 : i32
    %c0_i32_0 = arith.constant 0 : i32
    %c0_i32_1 = arith.constant 0 : i32
    return %c0_i32, %c0_i32_0 : i32, i32
  }
  func.func @transform_3(%arg0: i32) -> (i32, i32) {
    %c0_i32 = arith.constant 0 : i32
    %c0_i32_0 = arith.constant 0 : i32
    return %arg0, %c0_i32 : i32, i32
  }
  func.func @transform_4(%arg0: i32) -> (i32, i32, i32) {
    %c0_i32 = arith.constant 0 : i32
    %c0_i32_0 = arith.constant 0 : i32
    %c0_i32_1 = arith.constant 0 : i32
    return %arg0, %c0_i32, %c0_i32_0 : i32, i32, i32
  }
}

module attributes {stable_mosaic.version = 11 : i64} {
  func.func @_mm_bias_stats_kernel(%arg0: i32, %arg1: memref<1024x4xbf16, #tpu.memory_space<vmem>>, %arg2: memref<4x4xbf16, #tpu.memory_space<vmem>>, %arg3: memref<1x4xf32, #tpu.memory_space<vmem>>, %arg4: memref<1024x4xbf16, #tpu.memory_space<vmem>>, %arg5: memref<1x2x4xf32, #tpu.memory_space<vmem>>) attributes {dimension_semantics = [#tpu.dimension_semantics<parallel>], iteration_bounds = array<i64: 2>, scalar_prefetch = 0 : i64, scratch_operands = 0 : i64, tpu.core_type = #tpu.core_type<tc>, window_params = [{transform_indices = @transform_0, window_bounds = array<i64: 1024, 4>}, {pipeline_mode = #tpu.pipeline_mode<synchronous>, transform_indices = @transform_1, window_bounds = array<i64: 4, 4>}, {pipeline_mode = #tpu.pipeline_mode<synchronous>, transform_indices = @transform_2, window_bounds = array<i64: 1, 4>}, {transform_indices = @transform_3, window_bounds = array<i64: 1024, 4>}, {transform_indices = @transform_4, window_bounds = array<i64: 1, 2, 4>}]} {
    %c0 = arith.constant 0 : index
    %c0_0 = arith.constant 0 : index
    %0 = vector.load %arg1[%c0, %c0_0] : memref<1024x4xbf16, #tpu.memory_space<vmem>>, vector<1024x4xbf16>
    %c0_1 = arith.constant 0 : index
    %c0_2 = arith.constant 0 : index
    %1 = vector.load %arg2[%c0_1, %c0_2] : memref<4x4xbf16, #tpu.memory_space<vmem>>, vector<4x4xbf16>
    %cst = arith.constant dense<0.000000e+00> : vector<1024x4xf32>
    %2 = tpu.matmul %0, %1, %cst {dimension_numbers = #tpu.dot_dimension_numbers<[1], [0], [0], [1], [0, 0, 1, 1], [], []>} : vector<1024x4xbf16>, vector<4x4xbf16>, vector<1024x4xf32> -> vector<1024x4xf32>
    %c0_3 = arith.constant 0 : index
    %c0_4 = arith.constant 0 : index
    %3 = vector.load %arg3[%c0_3, %c0_4] : memref<1x4xf32, #tpu.memory_space<vmem>>, vector<1x4xf32>
    %4 = vector.broadcast %3 : vector<1x4xf32> to vector<1024x4xf32>
    %5 = arith.addf %2, %4 : vector<1024x4xf32>
    %cst_5 = arith.constant 0.000000e+00 : f32
    %6 = vector.broadcast %cst_5 : f32 to vector<1024x4xf32>
    %7 = arith.maximumf %5, %6 : vector<1024x4xf32>
    %8 = arith.truncf %7 : vector<1024x4xf32> to vector<1024x4xbf16>
    %c0_6 = arith.constant 0 : index
    %c0_7 = arith.constant 0 : index
    %9 = vector.load %arg4[%c0_6, %c0_7] : memref<1024x4xbf16, #tpu.memory_space<vmem>>, vector<1024x4xbf16>
    tpu.vector_store %arg4[%c0_6, %c0_7], %8 {strides = array<i32>} : memref<1024x4xbf16, #tpu.memory_space<vmem>>, vector<1024x4xbf16>,
    %cst_8 = arith.constant dense<0.000000e+00> : vector<4xf32>
    %10 = vector.multi_reduction <add>, %7, %cst_8 [0] : vector<1024x4xf32> to vector<4xf32>
    %11 = vector.shape_cast %10 : vector<4xf32> to vector<1x4xf32>
    %12 = arith.mulf %7, %7 : vector<1024x4xf32>
    %cst_9 = arith.constant dense<0.000000e+00> : vector<4xf32>
    %13 = vector.multi_reduction <add>, %12, %cst_9 [0] : vector<1024x4xf32> to vector<4xf32>
    %14 = vector.shape_cast %13 : vector<4xf32> to vector<1x4xf32>
    %15 = tpu.concatenate %11, %14 in 0 : vector<1x4xf32>, vector<1x4xf32> -> vector<2x4xf32>
    %c0_10 = arith.constant 0 : index
    %c0_11 = arith.constant 0 : index
    %c0_12 = arith.constant 0 : index
    %16 = vector.load %arg5[%c0_10, %c0_11, %c0_12] : memref<1x2x4xf32, #tpu.memory_space<vmem>>, vector<1x2x4xf32>
    %17 = vector.shape_cast %16 : vector<1x2x4xf32> to vector<2x4xf32>
    %18 = vector.shape_cast %15 : vector<2x4xf32> to vector<1x2x4xf32>
    tpu.vector_store %arg5[%c0_10, %c0_11, %c0_12], %18 {strides = array<i32>} : memref<1x2x4xf32, #tpu.memory_space<vmem>>, vector<1x2x4xf32>,
    return
  }
  func.func @transform_0(%arg0: i32) -> (i32, i32) {
    %c0_i32 = arith.constant 0 : i32
    %c0_i32_0 = arith.constant 0 : i32
    return %arg0, %c0_i32 : i32, i32
  }
  func.func @transform_1(%arg0: i32) -> (i32, i32) {
    %c0_i32 = arith.constant 0 : i32
    %c0_i32_0 = arith.constant 0 : i32
    %c0_i32_1 = arith.constant 0 : i32
    return %c0_i32, %c0_i32_0 : i32, i32
  }
  func.func @transform_2(%arg0: i32) -> (i32, i32) {
    %c0_i32 = arith.constant 0 : i32
    %c0_i32_0 = arith.constant 0 : i32
    %c0_i32_1 = arith.constant 0 : i32
    return %c0_i32, %c0_i32_0 : i32, i32
  }
  func.func @transform_3(%arg0: i32) -> (i32, i32) {
    %c0_i32 = arith.constant 0 : i32
    %c0_i32_0 = arith.constant 0 : i32
    return %arg0, %c0_i32 : i32, i32
  }
  func.func @transform_4(%arg0: i32) -> (i32, i32, i32) {
    %c0_i32 = arith.constant 0 : i32
    %c0_i32_0 = arith.constant 0 : i32
    %c0_i32_1 = arith.constant 0 : i32
    return %arg0, %c0_i32, %c0_i32_0 : i32, i32, i32
  }
}

module attributes {stable_mosaic.version = 11 : i64} {
  func.func @_fused_gconv_kernel(%arg0: i32, %arg1: i32, %arg2: memref<1x1x32x14xbf16, #tpu.memory_space<vmem>>, %arg3: memref<1x16x32x14xbf16, #tpu.memory_space<vmem>>, %arg4: memref<1x1x32x14xbf16, #tpu.memory_space<vmem>>, %arg5: memref<1x16x32x4xbf16, #tpu.memory_space<vmem>>, %arg6: memref<1x16x32x4xbf16, #tpu.memory_space<vmem>>, %arg7: memref<14x8xbf16, #tpu.memory_space<vmem>>, %arg8: memref<14x8xbf16, #tpu.memory_space<vmem>>, %arg9: memref<1x8xf32, #tpu.memory_space<vmem>>, %arg10: memref<1x8xf32, #tpu.memory_space<vmem>>, %arg11: memref<2x9x8xf32, #tpu.memory_space<vmem>>, %arg12: memref<1x8xf32, #tpu.memory_space<vmem>>, %arg13: memref<2x8xf32, #tpu.memory_space<vmem>>, %arg14: memref<1x16x32x8xf32, #tpu.memory_space<vmem>>, %arg15: memref<18x34x8xf32, #tpu.memory_space<vmem>>, %arg16: memref<18x34x8xf32, #tpu.memory_space<vmem>>) attributes {dimension_semantics = [#tpu.dimension_semantics<parallel>, #tpu.dimension_semantics<parallel>], iteration_bounds = array<i64: 2, 2>, scalar_prefetch = 0 : i64, scratch_operands = 2 : i64, tpu.core_type = #tpu.core_type<tc>, window_params = [{transform_indices = @transform_0, window_bounds = array<i64: 1, 1, 32, 14>}, {transform_indices = @transform_1, window_bounds = array<i64: 1, 16, 32, 14>}, {transform_indices = @transform_2, window_bounds = array<i64: 1, 1, 32, 14>}, {transform_indices = @transform_3, window_bounds = array<i64: 1, 16, 32, 4>}, {transform_indices = @transform_4, window_bounds = array<i64: 1, 16, 32, 4>}, {pipeline_mode = #tpu.pipeline_mode<synchronous>, transform_indices = @transform_5, window_bounds = array<i64: 14, 8>}, {pipeline_mode = #tpu.pipeline_mode<synchronous>, transform_indices = @transform_6, window_bounds = array<i64: 14, 8>}, {pipeline_mode = #tpu.pipeline_mode<synchronous>, transform_indices = @transform_7, window_bounds = array<i64: 1, 8>}, {pipeline_mode = #tpu.pipeline_mode<synchronous>, transform_indices = @transform_8, window_bounds = array<i64: 1, 8>}, {pipeline_mode = #tpu.pipeline_mode<synchronous>, transform_indices = @transform_9, window_bounds = array<i64: 2, 9, 8>}, {pipeline_mode = #tpu.pipeline_mode<synchronous>, transform_indices = @transform_10, window_bounds = array<i64: 1, 8>}, {pipeline_mode = #tpu.pipeline_mode<synchronous>, transform_indices = @transform_11, window_bounds = array<i64: 2, 8>}, {transform_indices = @transform_12, window_bounds = array<i64: 1, 16, 32, 8>}]} {
    %c0 = arith.constant 0 : index
    %c0_0 = arith.constant 0 : index
    %c0_1 = arith.constant 0 : index
    %c0_2 = arith.constant 0 : index
    %0 = vector.load %arg2[%c0, %c0_0, %c0_1, %c0_2] : memref<1x1x32x14xbf16, #tpu.memory_space<vmem>>, vector<1x1x32x14xbf16>
    %1 = vector.shape_cast %0 : vector<1x1x32x14xbf16> to vector<1x32x14xbf16>
    %c0_3 = arith.constant 0 : index
    %c0_4 = arith.constant 0 : index
    %c0_5 = arith.constant 0 : index
    %c0_6 = arith.constant 0 : index
    %2 = vector.load %arg3[%c0_3, %c0_4, %c0_5, %c0_6] : memref<1x16x32x14xbf16, #tpu.memory_space<vmem>>, vector<1x16x32x14xbf16>
    %3 = vector.shape_cast %2 : vector<1x16x32x14xbf16> to vector<16x32x14xbf16>
    %c0_7 = arith.constant 0 : index
    %c0_8 = arith.constant 0 : index
    %c0_9 = arith.constant 0 : index
    %c0_10 = arith.constant 0 : index
    %4 = vector.load %arg4[%c0_7, %c0_8, %c0_9, %c0_10] : memref<1x1x32x14xbf16, #tpu.memory_space<vmem>>, vector<1x1x32x14xbf16>
    %5 = vector.shape_cast %4 : vector<1x1x32x14xbf16> to vector<1x32x14xbf16>
    %6 = tpu.concatenate %1, %3, %5 in 0 : vector<1x32x14xbf16>, vector<16x32x14xbf16>, vector<1x32x14xbf16> -> vector<18x32x14xbf16>
    %7 = vector.shape_cast %6 : vector<18x32x14xbf16> to vector<576x14xbf16>
    %c0_11 = arith.constant 0 : index
    %c0_12 = arith.constant 0 : index
    %8 = vector.load %arg7[%c0_11, %c0_12] : memref<14x8xbf16, #tpu.memory_space<vmem>>, vector<14x8xbf16>
    %cst = arith.constant dense<0.000000e+00> : vector<576x8xf32>
    %9 = tpu.matmul %7, %8, %cst {dimension_numbers = #tpu.dot_dimension_numbers<[1], [0], [0], [1], [0, 0, 1, 1], [], []>} : vector<576x14xbf16>, vector<14x8xbf16>, vector<576x8xf32> -> vector<576x8xf32>
    %c0_13 = arith.constant 0 : index
    %c0_14 = arith.constant 0 : index
    %10 = vector.load %arg9[%c0_13, %c0_14] : memref<1x8xf32, #tpu.memory_space<vmem>>, vector<1x8xf32>
    %11 = vector.broadcast %10 : vector<1x8xf32> to vector<576x8xf32>
    %12 = arith.addf %9, %11 : vector<576x8xf32>
    %c0_15 = arith.constant 0 : index
    %c0_16 = arith.constant 0 : index
    %13 = vector.load %arg8[%c0_15, %c0_16] : memref<14x8xbf16, #tpu.memory_space<vmem>>, vector<14x8xbf16>
    %cst_17 = arith.constant dense<0.000000e+00> : vector<576x8xf32>
    %14 = tpu.matmul %7, %13, %cst_17 {dimension_numbers = #tpu.dot_dimension_numbers<[1], [0], [0], [1], [0, 0, 1, 1], [], []>} : vector<576x14xbf16>, vector<14x8xbf16>, vector<576x8xf32> -> vector<576x8xf32>
    %c0_18 = arith.constant 0 : index
    %c0_19 = arith.constant 0 : index
    %15 = vector.load %arg10[%c0_18, %c0_19] : memref<1x8xf32, #tpu.memory_space<vmem>>, vector<1x8xf32>
    %16 = vector.broadcast %15 : vector<1x8xf32> to vector<576x8xf32>
    %17 = arith.addf %14, %16 : vector<576x8xf32>
    %cst_20 = arith.constant 0.000000e+00 : f32
    %18 = vector.broadcast %cst_20 : f32 to vector<18x1x8xf32>
    %c0_21 = arith.constant 0 : index
    %c0_22 = arith.constant 0 : index
    %c0_23 = arith.constant 0 : index
    %19 = vector.load %arg15[%c0_21, %c0_22, %c0_23] : memref<18x34x8xf32, #tpu.memory_space<vmem>>, vector<18x1x8xf32>
    tpu.vector_store %arg15[%c0_21, %c0_22, %c0_23], %18 {strides = array<i32>} : memref<18x34x8xf32, #tpu.memory_space<vmem>>, vector<18x1x8xf32>,
    %c0_24 = arith.constant 0 : index
    %c33 = arith.constant 33 : index
    %c0_25 = arith.constant 0 : index
    %20 = vector.load %arg15[%c0_24, %c33, %c0_25] : memref<18x34x8xf32, #tpu.memory_space<vmem>>, vector<18x1x8xf32>
    tpu.vector_store %arg15[%c0_24, %c33, %c0_25], %18 {strides = array<i32>} : memref<18x34x8xf32, #tpu.memory_space<vmem>>, vector<18x1x8xf32>,
    %c0_26 = arith.constant 0 : index
    %c0_27 = arith.constant 0 : index
    %c0_28 = arith.constant 0 : index
    %21 = vector.load %arg16[%c0_26, %c0_27, %c0_28] : memref<18x34x8xf32, #tpu.memory_space<vmem>>, vector<18x1x8xf32>
    tpu.vector_store %arg16[%c0_26, %c0_27, %c0_28], %18 {strides = array<i32>} : memref<18x34x8xf32, #tpu.memory_space<vmem>>, vector<18x1x8xf32>,
    %c0_29 = arith.constant 0 : index
    %c33_30 = arith.constant 33 : index
    %c0_31 = arith.constant 0 : index
    %22 = vector.load %arg16[%c0_29, %c33_30, %c0_31] : memref<18x34x8xf32, #tpu.memory_space<vmem>>, vector<18x1x8xf32>
    tpu.vector_store %arg16[%c0_29, %c33_30, %c0_31], %18 {strides = array<i32>} : memref<18x34x8xf32, #tpu.memory_space<vmem>>, vector<18x1x8xf32>,
    %23 = vector.shape_cast %12 : vector<576x8xf32> to vector<18x32x8xf32>
    %c0_32 = arith.constant 0 : index
    %c1 = arith.constant 1 : index
    %c0_33 = arith.constant 0 : index
    %24 = vector.load %arg15[%c0_32, %c1, %c0_33] : memref<18x34x8xf32, #tpu.memory_space<vmem>>, vector<18x32x8xf32>
    tpu.vector_store %arg15[%c0_32, %c1, %c0_33], %23 {strides = array<i32>} : memref<18x34x8xf32, #tpu.memory_space<vmem>>, vector<18x32x8xf32>,
    %25 = vector.shape_cast %17 : vector<576x8xf32> to vector<18x32x8xf32>
    %c0_34 = arith.constant 0 : index
    %c1_35 = arith.constant 1 : index
    %c0_36 = arith.constant 0 : index
    %26 = vector.load %arg16[%c0_34, %c1_35, %c0_36] : memref<18x34x8xf32, #tpu.memory_space<vmem>>, vector<18x32x8xf32>
    tpu.vector_store %arg16[%c0_34, %c1_35, %c0_36], %25 {strides = array<i32>} : memref<18x34x8xf32, #tpu.memory_space<vmem>>, vector<18x32x8xf32>,
    %cst_37 = arith.constant 0.000000e+00 : f32
    %27 = vector.broadcast %cst_37 : f32 to vector<1x34x8xf32>
    %c0_i32 = arith.constant 0 : i32
    %28 = arith.cmpi eq, %arg1, %c0_i32 : i32
    %29 = arith.extui %28 : i1 to i32
    %c0_i32_38 = arith.constant 0 : i32
    %30 = arith.cmpi ne, %29, %c0_i32_38 : i32
    scf.if %30 {
      %c0_118 = arith.constant 0 : index
      %c0_119 = arith.constant 0 : index
      %c0_120 = arith.constant 0 : index
      %191 = vector.load %arg15[%c0_118, %c0_119, %c0_120] : memref<18x34x8xf32, #tpu.memory_space<vmem>>, vector<1x34x8xf32>
      tpu.vector_store %arg15[%c0_118, %c0_119, %c0_120], %27 {strides = array<i32>} : memref<18x34x8xf32, #tpu.memory_space<vmem>>, vector<1x34x8xf32>,
      %c0_121 = arith.constant 0 : index
      %c0_122 = arith.constant 0 : index
      %c0_123 = arith.constant 0 : index
      %192 = vector.load %arg16[%c0_121, %c0_122, %c0_123] : memref<18x34x8xf32, #tpu.memory_space<vmem>>, vector<1x34x8xf32>
      tpu.vector_store %arg16[%c0_121, %c0_122, %c0_123], %27 {strides = array<i32>} : memref<18x34x8xf32, #tpu.memory_space<vmem>>, vector<1x34x8xf32>,
    } else {
    }
    %c1_i32 = arith.constant 1 : i32
    %31 = arith.cmpi eq, %arg1, %c1_i32 : i32
    %32 = arith.extui %31 : i1 to i32
    %c0_i32_39 = arith.constant 0 : i32
    %33 = arith.cmpi ne, %32, %c0_i32_39 : i32
    scf.if %33 {
      %c17 = arith.constant 17 : index
      %c0_118 = arith.constant 0 : index
      %c0_119 = arith.constant 0 : index
      %191 = vector.load %arg15[%c17, %c0_118, %c0_119] : memref<18x34x8xf32, #tpu.memory_space<vmem>>, vector<1x34x8xf32>
      tpu.vector_store %arg15[%c17, %c0_118, %c0_119], %27 {strides = array<i32>} : memref<18x34x8xf32, #tpu.memory_space<vmem>>, vector<1x34x8xf32>,
      %c17_120 = arith.constant 17 : index
      %c0_121 = arith.constant 0 : index
      %c0_122 = arith.constant 0 : index
      %192 = vector.load %arg16[%c17_120, %c0_121, %c0_122] : memref<18x34x8xf32, #tpu.memory_space<vmem>>, vector<1x34x8xf32>
      tpu.vector_store %arg16[%c17_120, %c0_121, %c0_122], %27 {strides = array<i32>} : memref<18x34x8xf32, #tpu.memory_space<vmem>>, vector<1x34x8xf32>,
    } else {
    }
    %c0_40 = arith.constant 0 : index
    %c0_41 = arith.constant 0 : index
    %c0_42 = arith.constant 0 : index
    %34 = vector.load %arg11[%c0_40, %c0_41, %c0_42] : memref<2x9x8xf32, #tpu.memory_space<vmem>>, vector<1x9x8xf32>
    %35 = vector.shape_cast %34 : vector<1x9x8xf32> to vector<9x8xf32>
    %c1_43 = arith.constant 1 : index
    %c0_44 = arith.constant 0 : index
    %c0_45 = arith.constant 0 : index
    %36 = vector.load %arg11[%c1_43, %c0_44, %c0_45] : memref<2x9x8xf32, #tpu.memory_space<vmem>>, vector<1x9x8xf32>
    %37 = vector.shape_cast %36 : vector<1x9x8xf32> to vector<9x8xf32>
    %cst_46 = arith.constant 0.000000e+00 : f32
    %38 = vector.broadcast %cst_46 : f32 to vector<16x32x8xf32>
    %c0_47 = arith.constant 0 : index
    %c0_48 = arith.constant 0 : index
    %c0_49 = arith.constant 0 : index
    %39 = vector.load %arg15[%c0_47, %c0_48, %c0_49] : memref<18x34x8xf32, #tpu.memory_space<vmem>>, vector<16x32x8xf32>
    %40 = vector.extract_strided_slice %35 {offsets = [0, 0], sizes = [1, 8], strides = [1, 1]} : vector<9x8xf32> to vector<1x8xf32>
    %41 = vector.shape_cast %40 : vector<1x8xf32> to vector<8xf32>
    %42 = vector.shape_cast %41 : vector<8xf32> to vector<1x1x8xf32>
    %43 = vector.broadcast %42 : vector<1x1x8xf32> to vector<16x32x8xf32>
    %44 = arith.mulf %39, %43 : vector<16x32x8xf32>
    %45 = arith.addf %38, %44 : vector<16x32x8xf32>
    %c0_50 = arith.constant 0 : index
    %c0_51 = arith.constant 0 : index
    %c0_52 = arith.constant 0 : index
    %46 = vector.load %arg16[%c0_50, %c0_51, %c0_52] : memref<18x34x8xf32, #tpu.memory_space<vmem>>, vector<16x32x8xf32>
    %47 = vector.extract_strided_slice %37 {offsets = [0, 0], sizes = [1, 8], strides = [1, 1]} : vector<9x8xf32> to vector<1x8xf32>
    %48 = vector.shape_cast %47 : vector<1x8xf32> to vector<8xf32>
    %49 = vector.shape_cast %48 : vector<8xf32> to vector<1x1x8xf32>
    %50 = vector.broadcast %49 : vector<1x1x8xf32> to vector<16x32x8xf32>
    %51 = arith.mulf %46, %50 : vector<16x32x8xf32>
    %52 = arith.addf %45, %51 : vector<16x32x8xf32>
    %c0_53 = arith.constant 0 : index
    %c1_54 = arith.constant 1 : index
    %c0_55 = arith.constant 0 : index
    %53 = vector.load %arg15[%c0_53, %c1_54, %c0_55] : memref<18x34x8xf32, #tpu.memory_space<vmem>>, vector<16x32x8xf32>
    %54 = vector.extract_strided_slice %35 {offsets = [1, 0], sizes = [1, 8], strides = [1, 1]} : vector<9x8xf32> to vector<1x8xf32>
    %55 = vector.shape_cast %54 : vector<1x8xf32> to vector<8xf32>
    %56 = vector.shape_cast %55 : vector<8xf32> to vector<1x1x8xf32>
    %57 = vector.broadcast %56 : vector<1x1x8xf32> to vector<16x32x8xf32>
    %58 = arith.mulf %53, %57 : vector<16x32x8xf32>
    %59 = arith.addf %52, %58 : vector<16x32x8xf32>
    %c0_56 = arith.constant 0 : index
    %c1_57 = arith.constant 1 : index
    %c0_58 = arith.constant 0 : index
    %60 = vector.load %arg16[%c0_56, %c1_57, %c0_58] : memref<18x34x8xf32, #tpu.memory_space<vmem>>, vector<16x32x8xf32>
    %61 = vector.extract_strided_slice %37 {offsets = [1, 0], sizes = [1, 8], strides = [1, 1]} : vector<9x8xf32> to vector<1x8xf32>
    %62 = vector.shape_cast %61 : vector<1x8xf32> to vector<8xf32>
    %63 = vector.shape_cast %62 : vector<8xf32> to vector<1x1x8xf32>
    %64 = vector.broadcast %63 : vector<1x1x8xf32> to vector<16x32x8xf32>
    %65 = arith.mulf %60, %64 : vector<16x32x8xf32>
    %66 = arith.addf %59, %65 : vector<16x32x8xf32>
    %c0_59 = arith.constant 0 : index
    %c2 = arith.constant 2 : index
    %c0_60 = arith.constant 0 : index
    %67 = vector.load %arg15[%c0_59, %c2, %c0_60] : memref<18x34x8xf32, #tpu.memory_space<vmem>>, vector<16x32x8xf32>
    %68 = vector.extract_strided_slice %35 {offsets = [2, 0], sizes = [1, 8], strides = [1, 1]} : vector<9x8xf32> to vector<1x8xf32>
    %69 = vector.shape_cast %68 : vector<1x8xf32> to vector<8xf32>
    %70 = vector.shape_cast %69 : vector<8xf32> to vector<1x1x8xf32>
    %71 = vector.broadcast %70 : vector<1x1x8xf32> to vector<16x32x8xf32>
    %72 = arith.mulf %67, %71 : vector<16x32x8xf32>
    %73 = arith.addf %66, %72 : vector<16x32x8xf32>
    %c0_61 = arith.constant 0 : index
    %c2_62 = arith.constant 2 : index
    %c0_63 = arith.constant 0 : index
    %74 = vector.load %arg16[%c0_61, %c2_62, %c0_63] : memref<18x34x8xf32, #tpu.memory_space<vmem>>, vector<16x32x8xf32>
    %75 = vector.extract_strided_slice %37 {offsets = [2, 0], sizes = [1, 8], strides = [1, 1]} : vector<9x8xf32> to vector<1x8xf32>
    %76 = vector.shape_cast %75 : vector<1x8xf32> to vector<8xf32>
    %77 = vector.shape_cast %76 : vector<8xf32> to vector<1x1x8xf32>
    %78 = vector.broadcast %77 : vector<1x1x8xf32> to vector<16x32x8xf32>
    %79 = arith.mulf %74, %78 : vector<16x32x8xf32>
    %80 = arith.addf %73, %79 : vector<16x32x8xf32>
    %c1_64 = arith.constant 1 : index
    %c0_65 = arith.constant 0 : index
    %c0_66 = arith.constant 0 : index
    %81 = vector.load %arg15[%c1_64, %c0_65, %c0_66] : memref<18x34x8xf32, #tpu.memory_space<vmem>>, vector<16x32x8xf32>
    %82 = vector.extract_strided_slice %35 {offsets = [3, 0], sizes = [1, 8], strides = [1, 1]} : vector<9x8xf32> to vector<1x8xf32>
    %83 = vector.shape_cast %82 : vector<1x8xf32> to vector<8xf32>
    %84 = vector.shape_cast %83 : vector<8xf32> to vector<1x1x8xf32>
    %85 = vector.broadcast %84 : vector<1x1x8xf32> to vector<16x32x8xf32>
    %86 = arith.mulf %81, %85 : vector<16x32x8xf32>
    %87 = arith.addf %80, %86 : vector<16x32x8xf32>
    %c1_67 = arith.constant 1 : index
    %c0_68 = arith.constant 0 : index
    %c0_69 = arith.constant 0 : index
    %88 = vector.load %arg16[%c1_67, %c0_68, %c0_69] : memref<18x34x8xf32, #tpu.memory_space<vmem>>, vector<16x32x8xf32>
    %89 = vector.extract_strided_slice %37 {offsets = [3, 0], sizes = [1, 8], strides = [1, 1]} : vector<9x8xf32> to vector<1x8xf32>
    %90 = vector.shape_cast %89 : vector<1x8xf32> to vector<8xf32>
    %91 = vector.shape_cast %90 : vector<8xf32> to vector<1x1x8xf32>
    %92 = vector.broadcast %91 : vector<1x1x8xf32> to vector<16x32x8xf32>
    %93 = arith.mulf %88, %92 : vector<16x32x8xf32>
    %94 = arith.addf %87, %93 : vector<16x32x8xf32>
    %c1_70 = arith.constant 1 : index
    %c1_71 = arith.constant 1 : index
    %c0_72 = arith.constant 0 : index
    %95 = vector.load %arg15[%c1_70, %c1_71, %c0_72] : memref<18x34x8xf32, #tpu.memory_space<vmem>>, vector<16x32x8xf32>
    %96 = vector.extract_strided_slice %35 {offsets = [4, 0], sizes = [1, 8], strides = [1, 1]} : vector<9x8xf32> to vector<1x8xf32>
    %97 = vector.shape_cast %96 : vector<1x8xf32> to vector<8xf32>
    %98 = vector.shape_cast %97 : vector<8xf32> to vector<1x1x8xf32>
    %99 = vector.broadcast %98 : vector<1x1x8xf32> to vector<16x32x8xf32>
    %100 = arith.mulf %95, %99 : vector<16x32x8xf32>
    %101 = arith.addf %94, %100 : vector<16x32x8xf32>
    %c1_73 = arith.constant 1 : index
    %c1_74 = arith.constant 1 : index
    %c0_75 = arith.constant 0 : index
    %102 = vector.load %arg16[%c1_73, %c1_74, %c0_75] : memref<18x34x8xf32, #tpu.memory_space<vmem>>, vector<16x32x8xf32>
    %103 = vector.extract_strided_slice %37 {offsets = [4, 0], sizes = [1, 8], strides = [1, 1]} : vector<9x8xf32> to vector<1x8xf32>
    %104 = vector.shape_cast %103 : vector<1x8xf32> to vector<8xf32>
    %105 = vector.shape_cast %104 : vector<8xf32> to vector<1x1x8xf32>
    %106 = vector.broadcast %105 : vector<1x1x8xf32> to vector<16x32x8xf32>
    %107 = arith.mulf %102, %106 : vector<16x32x8xf32>
    %108 = arith.addf %101, %107 : vector<16x32x8xf32>
    %c1_76 = arith.constant 1 : index
    %c2_77 = arith.constant 2 : index
    %c0_78 = arith.constant 0 : index
    %109 = vector.load %arg15[%c1_76, %c2_77, %c0_78] : memref<18x34x8xf32, #tpu.memory_space<vmem>>, vector<16x32x8xf32>
    %110 = vector.extract_strided_slice %35 {offsets = [5, 0], sizes = [1, 8], strides = [1, 1]} : vector<9x8xf32> to vector<1x8xf32>
    %111 = vector.shape_cast %110 : vector<1x8xf32> to vector<8xf32>
    %112 = vector.shape_cast %111 : vector<8xf32> to vector<1x1x8xf32>
    %113 = vector.broadcast %112 : vector<1x1x8xf32> to vector<16x32x8xf32>
    %114 = arith.mulf %109, %113 : vector<16x32x8xf32>
    %115 = arith.addf %108, %114 : vector<16x32x8xf32>
    %c1_79 = arith.constant 1 : index
    %c2_80 = arith.constant 2 : index
    %c0_81 = arith.constant 0 : index
    %116 = vector.load %arg16[%c1_79, %c2_80, %c0_81] : memref<18x34x8xf32, #tpu.memory_space<vmem>>, vector<16x32x8xf32>
    %117 = vector.extract_strided_slice %37 {offsets = [5, 0], sizes = [1, 8], strides = [1, 1]} : vector<9x8xf32> to vector<1x8xf32>
    %118 = vector.shape_cast %117 : vector<1x8xf32> to vector<8xf32>
    %119 = vector.shape_cast %118 : vector<8xf32> to vector<1x1x8xf32>
    %120 = vector.broadcast %119 : vector<1x1x8xf32> to vector<16x32x8xf32>
    %121 = arith.mulf %116, %120 : vector<16x32x8xf32>
    %122 = arith.addf %115, %121 : vector<16x32x8xf32>
    %c2_82 = arith.constant 2 : index
    %c0_83 = arith.constant 0 : index
    %c0_84 = arith.constant 0 : index
    %123 = vector.load %arg15[%c2_82, %c0_83, %c0_84] : memref<18x34x8xf32, #tpu.memory_space<vmem>>, vector<16x32x8xf32>
    %124 = vector.extract_strided_slice %35 {offsets = [6, 0], sizes = [1, 8], strides = [1, 1]} : vector<9x8xf32> to vector<1x8xf32>
    %125 = vector.shape_cast %124 : vector<1x8xf32> to vector<8xf32>
    %126 = vector.shape_cast %125 : vector<8xf32> to vector<1x1x8xf32>
    %127 = vector.broadcast %126 : vector<1x1x8xf32> to vector<16x32x8xf32>
    %128 = arith.mulf %123, %127 : vector<16x32x8xf32>
    %129 = arith.addf %122, %128 : vector<16x32x8xf32>
    %c2_85 = arith.constant 2 : index
    %c0_86 = arith.constant 0 : index
    %c0_87 = arith.constant 0 : index
    %130 = vector.load %arg16[%c2_85, %c0_86, %c0_87] : memref<18x34x8xf32, #tpu.memory_space<vmem>>, vector<16x32x8xf32>
    %131 = vector.extract_strided_slice %37 {offsets = [6, 0], sizes = [1, 8], strides = [1, 1]} : vector<9x8xf32> to vector<1x8xf32>
    %132 = vector.shape_cast %131 : vector<1x8xf32> to vector<8xf32>
    %133 = vector.shape_cast %132 : vector<8xf32> to vector<1x1x8xf32>
    %134 = vector.broadcast %133 : vector<1x1x8xf32> to vector<16x32x8xf32>
    %135 = arith.mulf %130, %134 : vector<16x32x8xf32>
    %136 = arith.addf %129, %135 : vector<16x32x8xf32>
    %c2_88 = arith.constant 2 : index
    %c1_89 = arith.constant 1 : index
    %c0_90 = arith.constant 0 : index
    %137 = vector.load %arg15[%c2_88, %c1_89, %c0_90] : memref<18x34x8xf32, #tpu.memory_space<vmem>>, vector<16x32x8xf32>
    %138 = vector.extract_strided_slice %35 {offsets = [7, 0], sizes = [1, 8], strides = [1, 1]} : vector<9x8xf32> to vector<1x8xf32>
    %139 = vector.shape_cast %138 : vector<1x8xf32> to vector<8xf32>
    %140 = vector.shape_cast %139 : vector<8xf32> to vector<1x1x8xf32>
    %141 = vector.broadcast %140 : vector<1x1x8xf32> to vector<16x32x8xf32>
    %142 = arith.mulf %137, %141 : vector<16x32x8xf32>
    %143 = arith.addf %136, %142 : vector<16x32x8xf32>
    %c2_91 = arith.constant 2 : index
    %c1_92 = arith.constant 1 : index
    %c0_93 = arith.constant 0 : index
    %144 = vector.load %arg16[%c2_91, %c1_92, %c0_93] : memref<18x34x8xf32, #tpu.memory_space<vmem>>, vector<16x32x8xf32>
    %145 = vector.extract_strided_slice %37 {offsets = [7, 0], sizes = [1, 8], strides = [1, 1]} : vector<9x8xf32> to vector<1x8xf32>
    %146 = vector.shape_cast %145 : vector<1x8xf32> to vector<8xf32>
    %147 = vector.shape_cast %146 : vector<8xf32> to vector<1x1x8xf32>
    %148 = vector.broadcast %147 : vector<1x1x8xf32> to vector<16x32x8xf32>
    %149 = arith.mulf %144, %148 : vector<16x32x8xf32>
    %150 = arith.addf %143, %149 : vector<16x32x8xf32>
    %c2_94 = arith.constant 2 : index
    %c2_95 = arith.constant 2 : index
    %c0_96 = arith.constant 0 : index
    %151 = vector.load %arg15[%c2_94, %c2_95, %c0_96] : memref<18x34x8xf32, #tpu.memory_space<vmem>>, vector<16x32x8xf32>
    %152 = vector.extract_strided_slice %35 {offsets = [8, 0], sizes = [1, 8], strides = [1, 1]} : vector<9x8xf32> to vector<1x8xf32>
    %153 = vector.shape_cast %152 : vector<1x8xf32> to vector<8xf32>
    %154 = vector.shape_cast %153 : vector<8xf32> to vector<1x1x8xf32>
    %155 = vector.broadcast %154 : vector<1x1x8xf32> to vector<16x32x8xf32>
    %156 = arith.mulf %151, %155 : vector<16x32x8xf32>
    %157 = arith.addf %150, %156 : vector<16x32x8xf32>
    %c2_97 = arith.constant 2 : index
    %c2_98 = arith.constant 2 : index
    %c0_99 = arith.constant 0 : index
    %158 = vector.load %arg16[%c2_97, %c2_98, %c0_99] : memref<18x34x8xf32, #tpu.memory_space<vmem>>, vector<16x32x8xf32>
    %159 = vector.extract_strided_slice %37 {offsets = [8, 0], sizes = [1, 8], strides = [1, 1]} : vector<9x8xf32> to vector<1x8xf32>
    %160 = vector.shape_cast %159 : vector<1x8xf32> to vector<8xf32>
    %161 = vector.shape_cast %160 : vector<8xf32> to vector<1x1x8xf32>
    %162 = vector.broadcast %161 : vector<1x1x8xf32> to vector<16x32x8xf32>
    %163 = arith.mulf %158, %162 : vector<16x32x8xf32>
    %164 = arith.addf %157, %163 : vector<16x32x8xf32>
    %c0_100 = arith.constant 0 : index
    %c0_101 = arith.constant 0 : index
    %165 = vector.load %arg12[%c0_100, %c0_101] : memref<1x8xf32, #tpu.memory_space<vmem>>, vector<1x8xf32>
    %166 = vector.shape_cast %165 : vector<1x8xf32> to vector<8xf32>
    %167 = vector.shape_cast %166 : vector<8xf32> to vector<1x1x8xf32>
    %168 = vector.broadcast %167 : vector<1x1x8xf32> to vector<16x32x8xf32>
    %169 = arith.addf %164, %168 : vector<16x32x8xf32>
    %c0_102 = arith.constant 0 : index
    %c0_103 = arith.constant 0 : index
    %c0_104 = arith.constant 0 : index
    %c0_105 = arith.constant 0 : index
    %170 = vector.load %arg5[%c0_102, %c0_103, %c0_104, %c0_105] : memref<1x16x32x4xbf16, #tpu.memory_space<vmem>>, vector<1x16x32x4xbf16>
    %171 = vector.shape_cast %170 : vector<1x16x32x4xbf16> to vector<16x32x4xbf16>
    %172 = arith.extf %171 : vector<16x32x4xbf16> to vector<16x32x4xf32>
    %c0_106 = arith.constant 0 : index
    %c0_107 = arith.constant 0 : index
    %c0_108 = arith.constant 0 : index
    %c0_109 = arith.constant 0 : index
    %173 = vector.load %arg6[%c0_106, %c0_107, %c0_108, %c0_109] : memref<1x16x32x4xbf16, #tpu.memory_space<vmem>>, vector<1x16x32x4xbf16>
    %174 = vector.shape_cast %173 : vector<1x16x32x4xbf16> to vector<16x32x4xbf16>
    %175 = arith.extf %174 : vector<16x32x4xbf16> to vector<16x32x4xf32>
    %176 = tpu.concatenate %172, %175 in 2 : vector<16x32x4xf32>, vector<16x32x4xf32> -> vector<16x32x8xf32>
    %c0_110 = arith.constant 0 : index
    %c0_111 = arith.constant 0 : index
    %177 = vector.load %arg13[%c0_110, %c0_111] : memref<2x8xf32, #tpu.memory_space<vmem>>, vector<1x8xf32>
    %178 = vector.shape_cast %177 : vector<1x8xf32> to vector<8xf32>
    %179 = vector.shape_cast %178 : vector<8xf32> to vector<1x1x8xf32>
    %180 = vector.broadcast %179 : vector<1x1x8xf32> to vector<16x32x8xf32>
    %181 = arith.mulf %176, %180 : vector<16x32x8xf32>
    %c1_112 = arith.constant 1 : index
    %c0_113 = arith.constant 0 : index
    %182 = vector.load %arg13[%c1_112, %c0_113] : memref<2x8xf32, #tpu.memory_space<vmem>>, vector<1x8xf32>
    %183 = vector.shape_cast %182 : vector<1x8xf32> to vector<8xf32>
    %184 = vector.shape_cast %183 : vector<8xf32> to vector<1x1x8xf32>
    %185 = vector.broadcast %184 : vector<1x1x8xf32> to vector<16x32x8xf32>
    %186 = arith.addf %181, %185 : vector<16x32x8xf32>
    %187 = arith.addf %169, %186 : vector<16x32x8xf32>
    %c0_114 = arith.constant 0 : index
    %c0_115 = arith.constant 0 : index
    %c0_116 = arith.constant 0 : index
    %c0_117 = arith.constant 0 : index
    %188 = vector.load %arg14[%c0_114, %c0_115, %c0_116, %c0_117] : memref<1x16x32x8xf32, #tpu.memory_space<vmem>>, vector<1x16x32x8xf32>
    %189 = vector.shape_cast %188 : vector<1x16x32x8xf32> to vector<16x32x8xf32>
    %190 = vector.shape_cast %187 : vector<16x32x8xf32> to vector<1x16x32x8xf32>
    tpu.vector_store %arg14[%c0_114, %c0_115, %c0_116, %c0_117], %190 {strides = array<i32>} : memref<1x16x32x8xf32, #tpu.memory_space<vmem>>, vector<1x16x32x8xf32>,
    return
  }
  func.func @transform_0(%arg0: i32, %arg1: i32) -> (i32, i32, i32, i32) {
    %c16_i32 = arith.constant 16 : i32
    %0 = arith.muli %arg1, %c16_i32 : i32
    %c1_i32 = arith.constant 1 : i32
    %1 = arith.subi %0, %c1_i32 : i32
    %c0_i32 = arith.constant 0 : i32
    %2 = arith.maxsi %1, %c0_i32 : i32
    %c0_i32_0 = arith.constant 0 : i32
    %c0_i32_1 = arith.constant 0 : i32
    %c0_i32_2 = arith.constant 0 : i32
    return %arg0, %2, %c0_i32_0, %c0_i32_1 : i32, i32, i32, i32
  }
  func.func @transform_1(%arg0: i32, %arg1: i32) -> (i32, i32, i32, i32) {
    %c0_i32 = arith.constant 0 : i32
    %c0_i32_0 = arith.constant 0 : i32
    %c0_i32_1 = arith.constant 0 : i32
    return %arg0, %arg1, %c0_i32, %c0_i32_0 : i32, i32, i32, i32
  }
  func.func @transform_2(%arg0: i32, %arg1: i32) -> (i32, i32, i32, i32) {
    %c16_i32 = arith.constant 16 : i32
    %0 = arith.muli %arg1, %c16_i32 : i32
    %c16_i32_0 = arith.constant 16 : i32
    %1 = arith.addi %0, %c16_i32_0 : i32
    %c31_i32 = arith.constant 31 : i32
    %2 = arith.minsi %1, %c31_i32 : i32
    %c0_i32 = arith.constant 0 : i32
    %c0_i32_1 = arith.constant 0 : i32
    %c0_i32_2 = arith.constant 0 : i32
    return %arg0, %2, %c0_i32, %c0_i32_1 : i32, i32, i32, i32
  }
  func.func @transform_3(%arg0: i32, %arg1: i32) -> (i32, i32, i32, i32) {
    %c0_i32 = arith.constant 0 : i32
    %c0_i32_0 = arith.constant 0 : i32
    %c0_i32_1 = arith.constant 0 : i32
    return %arg0, %arg1, %c0_i32, %c0_i32_0 : i32, i32, i32, i32
  }
  func.func @transform_4(%arg0: i32, %arg1: i32) -> (i32, i32, i32, i32) {
    %c0_i32 = arith.constant 0 : i32
    %c0_i32_0 = arith.constant 0 : i32
    %c0_i32_1 = arith.constant 0 : i32
    return %arg0, %arg1, %c0_i32, %c0_i32_0 : i32, i32, i32, i32
  }
  func.func @transform_5(%arg0: i32, %arg1: i32) -> (i32, i32) {
    %c0_i32 = arith.constant 0 : i32
    %c0_i32_0 = arith.constant 0 : i32
    %c0_i32_1 = arith.constant 0 : i32
    return %c0_i32, %c0_i32_0 : i32, i32
  }
  func.func @transform_6(%arg0: i32, %arg1: i32) -> (i32, i32) {
    %c0_i32 = arith.constant 0 : i32
    %c0_i32_0 = arith.constant 0 : i32
    %c0_i32_1 = arith.constant 0 : i32
    return %c0_i32, %c0_i32_0 : i32, i32
  }
  func.func @transform_7(%arg0: i32, %arg1: i32) -> (i32, i32) {
    %c0_i32 = arith.constant 0 : i32
    %c0_i32_0 = arith.constant 0 : i32
    %c0_i32_1 = arith.constant 0 : i32
    return %c0_i32, %c0_i32_0 : i32, i32
  }
  func.func @transform_8(%arg0: i32, %arg1: i32) -> (i32, i32) {
    %c0_i32 = arith.constant 0 : i32
    %c0_i32_0 = arith.constant 0 : i32
    %c0_i32_1 = arith.constant 0 : i32
    return %c0_i32, %c0_i32_0 : i32, i32
  }
  func.func @transform_9(%arg0: i32, %arg1: i32) -> (i32, i32, i32) {
    %c0_i32 = arith.constant 0 : i32
    %c0_i32_0 = arith.constant 0 : i32
    %c0_i32_1 = arith.constant 0 : i32
    %c0_i32_2 = arith.constant 0 : i32
    return %c0_i32, %c0_i32_0, %c0_i32_1 : i32, i32, i32
  }
  func.func @transform_10(%arg0: i32, %arg1: i32) -> (i32, i32) {
    %c0_i32 = arith.constant 0 : i32
    %c0_i32_0 = arith.constant 0 : i32
    %c0_i32_1 = arith.constant 0 : i32
    return %c0_i32, %c0_i32_0 : i32, i32
  }
  func.func @transform_11(%arg0: i32, %arg1: i32) -> (i32, i32) {
    %c0_i32 = arith.constant 0 : i32
    %c0_i32_0 = arith.constant 0 : i32
    %c0_i32_1 = arith.constant 0 : i32
    return %c0_i32, %c0_i32_0 : i32, i32
  }
  func.func @transform_12(%arg0: i32, %arg1: i32) -> (i32, i32, i32, i32) {
    %c0_i32 = arith.constant 0 : i32
    %c0_i32_0 = arith.constant 0 : i32
    %c0_i32_1 = arith.constant 0 : i32
    return %arg0, %arg1, %c0_i32, %c0_i32_0 : i32, i32, i32, i32
  }
}

</mosaic_0001>

<llo_original>
// kernel: unet_stage_block.3
$region0: #{unet_stage_block.3}
  #allocation0 [shape = 'u32[]', space=smem, size = 0x4, offset = 0x4, fixed_abs, tag = 'smem constant byte address 0x4 - core index']
  #allocation1 [shape = 'u32[144,128]{1,0:T(1,128)}', space=vmem, size = 0x12000, scoped, tag = 'internal scratch']
  %s0 = inlined_call_operand.vmem [shape: bf16[512,4], index: 0, kind: input, shape index: {}]
  %s1 = inlined_call_operand.vmem [shape: bf16[4,16], index: 1, kind: input, shape index: {}]
  %s2 = inlined_call_operand.vmem [shape: f32[1,16], index: 2, kind: input, shape index: {}]
  %s3 = inlined_call_operand.vmem [shape: bf16[512,16], index: 3, kind: output, shape index: {0}]
  %s4 = inlined_call_operand.vmem [shape: f32[2,2,16], index: 4, kind: output, shape index: {1}]
  %5 = xla_tuple %s3, %s4
  %s6 = sld [smem:[#allocation0]]
  $region53: #{unet_stage_block.3} parent=0
    _
  %s8 = ssub.s32 1, %s6
  %s9 = scalar_select 0, %s8, %s6
  loop: start=0, step=1, limit=4
  $region2: #{unet_stage_block.3} parent=0 // loop_pre_header
    _
  $region3: #{unet_stage_block.3} parent=0 // loop_header
    %s11 = sphi 0, %s15
    %p12 = scmp.ge.s32.totalorder %s11, 4
    %s21 = sphi 0, %s23
    %s24 = sphi 0, %s21
    %s25 = sphi 0, %s24
    %s41 = sphi 0, %s25
    %s45 = sphi 0, %s45
    %s47 = sphi 0, %s45
    %s48 = sphi 0, %s47
    %s62 = sphi 0, %s48
    %s66 = sphi 0, %s66
    %s68 = sphi 0, %s66
    %s69 = sphi 0, %s68
    %s83 = sphi 0, %s69
    %s89 = sphi 0, %s91
    %s92 = sphi 0, %s89
    %s93 = sphi 0, %s92
    %s109 = sphi 0, %s93
    %s115 = sphi 0, %s117
    %s118 = sphi 0, %s115
    %s119 = sphi 0, %s118
    %s135 = sphi 0, %s119
  $region4: #{unet_stage_block.3} parent=0 // loop_header_branch
    %14 = sbr.rel (%p12) target = $region8
  $region5: #{unet_stage_block.3} parent=0 // loop_body
    %s16 = ssub.s32 %s11, 1
    %s17 = ssub.s32 %s11, 2
    %s18 = sadd.s32 %s11, 1
    %s19 = ssub.s32 %s11, %s18
    %p20 = scmp.eq.s32.totalorder %s19, 0
    %s22 = sadd.s32 %s21, 1
    %s23 = scalar_select %p20, %s21, %s22
    %p26 = pneg %p20
    %p27 = scmp.eq.s32.totalorder %s11, 1
    %p28 = por %p26, %p27
    %p29 = scmp.ne.s32.totalorder %s21, %s24
    %p30 = scmp.eq.s32.totalorder %s11, 0
    %p31 = por %p29, %p30
    %p32 = scmp.ne.s32.totalorder %s21, %s24
    %p33 = scmp.eq.s32.totalorder %s16, 1
    %p34 = por %p32, %p33
    %p35 = scmp.ne.s32.totalorder %s24, %s25
    %p36 = scmp.eq.s32.totalorder %s16, 0
    %p37 = por %p35, %p36
    %p38 = scmp.ne.s32.totalorder %s24, %s25
    %p39 = scmp.eq.s32.totalorder %s17, 1
    %p40 = por %p38, %p39
    %p42 = scmp.ne.s32.totalorder %s25, %s41
    %p43 = scmp.eq.s32.totalorder %s17, 0
    %p44 = por %p42, %p43
    %s46 = sadd.s32 %s45, 1
    %p49 = scmp.eq.s32.totalorder %s11, 1
    %p50 = scmp.ne.s32.totalorder %s45, %s47
    %p51 = scmp.eq.s32.totalorder %s11, 0
    %p52 = por %p50, %p51
    %p53 = scmp.ne.s32.totalorder %s45, %s47
    %p54 = scmp.eq.s32.totalorder %s16, 1
    %p55 = por %p53, %p54
    %p56 = scmp.ne.s32.totalorder %s47, %s48
    %p57 = scmp.eq.s32.totalorder %s16, 0
    %p58 = por %p56, %p57
    %p59 = scmp.ne.s32.totalorder %s47, %s48
    %p60 = scmp.eq.s32.totalorder %s17, 1
    %p61 = por %p59, %p60
    %p63 = scmp.ne.s32.totalorder %s48, %s62
    %p64 = scmp.eq.s32.totalorder %s17, 0
    %p65 = por %p63, %p64
    %s67 = sadd.s32 %s66, 1
    %p70 = scmp.eq.s32.totalorder %s11, 1
    %p71 = scmp.ne.s32.totalorder %s66, %s68
    %p72 = scmp.eq.s32.totalorder %s11, 0
    %p73 = por %p71, %p72
    %p74 = scmp.ne.s32.totalorder %s66, %s68
    %p75 = scmp.eq.s32.totalorder %s16, 1
    %p76 = por %p74, %p75
    %p77 = scmp.ne.s32.totalorder %s68, %s69
    %p78 = scmp.eq.s32.totalorder %s16, 0
    %p79 = por %p77, %p78
    %p80 = scmp.ne.s32.totalorder %s68, %s69
    %p81 = scmp.eq.s32.totalorder %s17, 1
    %p82 = por %p80, %p81
    %p84 = scmp.ne.s32.totalorder %s69, %s83
    %p85 = scmp.eq.s32.totalorder %s17, 0
    %p86 = por %p84, %p85
    %s87 = ssub.s32 %s11, %s18
    %p88 = scmp.eq.s32.totalorder %s87, 0
    %s90 = sadd.s32 %s89, 1
    %s91 = scalar_select %p88, %s89, %s90
    %p94 = pneg %p88
    %p95 = scmp.eq.s32.totalorder %s11, 1
    %p96 = por %p94, %p95
    %p97 = scmp.ne.s32.totalorder %s89, %s92
    %p98 = scmp.eq.s32.totalorder %s11, 0
    %p99 = por %p97, %p98
    %p100 = scmp.ne.s32.totalorder %s89, %s92
    %p101 = scmp.eq.s32.totalorder %s16, 1
    %p102 = por %p100, %p101
    %p103 = scmp.ne.s32.totalorder %s92, %s93
    %p104 = scmp.eq.s32.totalorder %s16, 0
    %p105 = por %p103, %p104
    %p106 = scmp.ne.s32.totalorder %s92, %s93
    %p107 = scmp.eq.s32.totalorder %s17, 1
    %p108 = por %p106, %p107
    %p110 = scmp.ne.s32.totalorder %s93, %s109
    %p111 = scmp.eq.s32.totalorder %s17, 0
    %p112 = por %p110, %p111
    %s113 = ssub.s32 %s11, %s18
    %p114 = scmp.eq.s32.totalorder %s113, 0
    %s116 = sadd.s32 %s115, 1
    %s117 = scalar_select %p114, %s115, %s116
    %p120 = pneg %p114
    %p121 = scmp.eq.s32.totalorder %s11, 1
    %p122 = por %p120, %p121
    %p123 = scmp.ne.s32.totalorder %s115, %s118
    %p124 = scmp.eq.s32.totalorder %s11, 0
    %p125 = por %p123, %p124
    %p126 = scmp.ne.s32.totalorder %s115, %s118
    %p127 = scmp.eq.s32.totalorder %s16, 1
    %p128 = por %p126, %p127
    %p129 = scmp.ne.s32.totalorder %s118, %s119
    %p130 = scmp.eq.s32.totalorder %s16, 0
    %p131 = por %p129, %p130
    %p132 = scmp.ne.s32.totalorder %s118, %s119
    %p133 = scmp.eq.s32.totalorder %s17, 1
    %p134 = por %p132, %p133
    %p136 = scmp.ne.s32.totalorder %s119, %s135
    %p137 = scmp.eq.s32.totalorder %s17, 0
    %p138 = por %p136, %p137
    %p139 = scmp.le.s32.totalorder 1, %s11
    %p140 = scmp.lt.s32.totalorder %s11, 3
    %p141 = pnand %p139, %p140
    %p142 = pneg %p141
    // Predicated region
    $region9: #{unet_stage_block.3} parent=5 // pred_check
      _
    $region10: #{unet_stage_block.3} parent=5 // pred_check_branch
      %144 = sbr.rel (%p141) target = $region12
    $region11: #{unet_stage_block.3} parent=5 // pred_region
      %s145 = ssub.s32 %s11, 1
      // Predicated region
      $region13: #{unet_stage_block.3} parent=11 // pred_check
        %p146 = pneg %p58
      $region14: #{unet_stage_block.3} parent=11 // pred_check_branch
        %148 = sbr.rel (%p146) target = $region16
      $region15: #{unet_stage_block.3} parent=11 // pred_region
        _
      $region16: #{unet_stage_block.3} parent=11 // pred_fallthru
        _
      // Predicated region
      $region17: #{unet_stage_block.3} parent=11 // pred_check
        %p149 = pneg %p79
      $region18: #{unet_stage_block.3} parent=11 // pred_check_branch
        %151 = sbr.rel (%p149) target = $region20
      $region19: #{unet_stage_block.3} parent=11 // pred_region
        _
      $region20: #{unet_stage_block.3} parent=11 // pred_fallthru
        _
    $region12: #{unet_stage_block.3} parent=5 // pred_fallthru
      _
    %p152 = scmp.lt.s32.totalorder %s11, 2
    // Predicated region
    $region21: #{unet_stage_block.3} parent=5 // pred_check
      %p153 = pneg %p152
    $region22: #{unet_stage_block.3} parent=5 // pred_check_branch
      %155 = sbr.rel (%p153) target = $region24
    $region23: #{unet_stage_block.3} parent=5 // pred_region
      // Predicated region
      $region25: #{unet_stage_block.3} parent=23 // pred_check
        %p156 = pneg %p31
      $region26: #{unet_stage_block.3} parent=23 // pred_check_branch
        %158 = sbr.rel (%p156) target = $region28
      $region27: #{unet_stage_block.3} parent=23 // pred_region
        %s159 = smul.u32 32, %s11
        %p160 = scmp.lt.s32.totalorder %s159, 63
        %s161 = scalar_select %p160, %s159, 63
        %s162 = smul.addr %s161, 4
        %s163 = scalar_lea.vmem %s0, %s162
        %s164 = smul.u32 32, %s11
      $region28: #{unet_stage_block.3} parent=23 // pred_fallthru
        _
    $region24: #{unet_stage_block.3} parent=5 // pred_fallthru
      _
    %p165 = scmp.le.s32.totalorder 1, %s11
    %p166 = scmp.lt.s32.totalorder %s11, 3
    %p167 = pnand %p165, %p166
    %p168 = pneg %p167
    // Predicated region
    $region29: #{unet_stage_block.3} parent=5 // pred_check
      _
    $region30: #{unet_stage_block.3} parent=5 // pred_check_branch
      %170 = sbr.rel (%p167) target = $region32
    $region31: #{unet_stage_block.3} parent=5 // pred_region
      %s171 = ssub.s32 %s11, 1
      %s172 = smul.u32 32, %s16
      %p173 = scmp.lt.s32.totalorder %s172, 63
      %s174 = scalar_select %p173, %s172, 63
      %s175 = smul.addr %s174, 4
      %s176 = scalar_lea.vmem %s0, %s175
      %p177 = pneg %p37
      %p178 = pneg %p34
      %p179 = pneg %p58
      %p180 = pneg %p55
      %p181 = pneg %p79
      %p182 = pneg %p76
      %p183 = pneg %p105
      %p184 = pneg %p102
      %s185 = smul.u32 32, %s16
      %p186 = scmp.lt.s32.totalorder %s185, 63
      %s187 = scalar_select %p186, %s185, 63
      %s188 = smul.addr %s187, 4
      %s189 = scalar_lea.vmem %s3, %s188
      %p190 = pneg %p131
      %p191 = pneg %p128
      %p192 = scmp.lt.s32.totalorder %s16, 1
      %s193 = scalar_select %p192, %s16, 1
      %s194 = smul.addr %s193, 2
      %s195 = scalar_lea.vmem %s4, %s194
      %s196 = smul.u32 32, %s16
      %p197 = scmp.lt.s32.totalorder %s196, 63
      %s198 = scalar_select %p197, %s196, 63
      %s199 = smul.addr %s198, 4
      %s200 = scalar_lea.vmem %s0, %s199
      %s201 = smul.u32 32, %s16
      %s202 = smul.u32 32, %s16
      %p203 = scmp.lt.s32.totalorder %s202, 63
      %s204 = scalar_select %p203, %s202, 63
      %s205 = smul.addr %s204, 4
      %s206 = scalar_lea.vmem %s3, %s205
      %s207 = smul.u32 32, %s16
      %p208 = scmp.lt.s32.totalorder %s16, 1
      %s209 = scalar_select %p208, %s16, 1
      %s210 = smul.addr %s209, 2
      %s211 = scalar_lea.vmem %s4, %s210
      %v213 = vld [vmem:[%s200] sm:$0xf]
      %v214 = vld [vmem:[%s200 + $0x4] sm:$0xf]
      %v215 = vld [vmem:[%s200 + $0x8] sm:$0xf]
      %v216 = vld [vmem:[%s200 + $0xc] sm:$0xf]
      %v217 = vld [vmem:[%s200 + $0x10] sm:$0xf]
      %v218 = vld [vmem:[%s200 + $0x14] sm:$0xf]
      %v219 = vld [vmem:[%s200 + $0x18] sm:$0xf]
      %v220 = vld [vmem:[%s200 + $0x1c] sm:$0xf]
      %v221 = vld [vmem:[%s200 + $0x20] sm:$0xf]
      %v222 = vld [vmem:[%s200 + $0x24] sm:$0xf]
      %v223 = vld [vmem:[%s200 + $0x28] sm:$0xf]
      %v224 = vld [vmem:[%s200 + $0x2c] sm:$0xf]
      %v225 = vld [vmem:[%s200 + $0x30] sm:$0xf]
      %v226 = vld [vmem:[%s200 + $0x34] sm:$0xf]
      %v227 = vld [vmem:[%s200 + $0x38] sm:$0xf]
      %v228 = vld [vmem:[%s200 + $0x3c] sm:$0xf]
      %v229 = vld [vmem:[%s200 + $0x40] sm:$0xf]
      %v230 = vld [vmem:[%s200 + $0x44] sm:$0xf]
      %v231 = vld [vmem:[%s200 + $0x48] sm:$0xf]
      %v232 = vld [vmem:[%s200 + $0x4c] sm:$0xf]
      %v233 = vld [vmem:[%s200 + $0x50] sm:$0xf]
      %v234 = vld [vmem:[%s200 + $0x54] sm:$0xf]
      %v235 = vld [vmem:[%s200 + $0x58] sm:$0xf]
      %v236 = vld [vmem:[%s200 + $0x5c] sm:$0xf]
      %v237 = vld [vmem:[%s200 + $0x60] sm:$0xf]
      %v238 = vld [vmem:[%s200 + $0x64] sm:$0xf]
      %v239 = vld [vmem:[%s200 + $0x68] sm:$0xf]
      %v240 = vld [vmem:[%s200 + $0x6c] sm:$0xf]
      %v241 = vld [vmem:[%s200 + $0x70] sm:$0xf]
      %v242 = vld [vmem:[%s200 + $0x74] sm:$0xf]
      %v243 = vld [vmem:[%s200 + $0x78] sm:$0xf]
      %v244 = vld [vmem:[%s200 + $0x7c] sm:$0xf]
      %v245 = vld [vmem:[%s1] sm:$0x3]
      %v246 = vld [vmem:[%s2] sm:$0x1]
      %v248 = vlaneseq
      %v249 = vshrl.u32 %v248, 7
      %v250 = vsub.s32 0, %v249
      %v251 = vrot.slane %v246, %v250
      %v285 = vunpack.c.l.b16 %v213
      %v286 = vunpack.c.l.b16 %v214
      %v287 = vunpack.c.l.b16 %v215
      %v288 = vunpack.c.l.b16 %v216
      %v289 = vunpack.c.l.b16 %v217
      %v290 = vunpack.c.l.b16 %v218
      %v291 = vunpack.c.l.b16 %v219
      %v292 = vunpack.c.l.b16 %v220
      %v293 = vunpack.c.l.b16 %v221
      %v294 = vunpack.c.l.b16 %v222
      %v295 = vunpack.c.l.b16 %v223
      %v296 = vunpack.c.l.b16 %v224
      %v297 = vunpack.c.l.b16 %v225
      %v298 = vunpack.c.l.b16 %v226
      %v299 = vunpack.c.l.b16 %v227
      %v300 = vunpack.c.l.b16 %v228
      %v301 = vunpack.c.l.b16 %v229
      %v302 = vunpack.c.l.b16 %v230
      %v303 = vunpack.c.l.b16 %v231
      %v304 = vunpack.c.l.b16 %v232
      %v305 = vunpack.c.l.b16 %v233
      %v306 = vunpack.c.l.b16 %v234
      %v307 = vunpack.c.l.b16 %v235
      %v308 = vunpack.c.l.b16 %v236
      %v309 = vunpack.c.l.b16 %v237
      %v310 = vunpack.c.l.b16 %v238
      %v311 = vunpack.c.l.b16 %v239
      %v312 = vunpack.c.l.b16 %v240
      %v313 = vunpack.c.l.b16 %v241
      %v314 = vunpack.c.l.b16 %v242
      %v315 = vunpack.c.l.b16 %v243
      %v316 = vunpack.c.l.b16 %v244
      %v317 = vpack.c.b16 %v286, %v285
      %v318 = vpack.c.b16 %v288, %v287
      %v319 = vpack.c.b16 %v290, %v289
      %v320 = vpack.c.b16 %v292, %v291
      %v321 = vpack.c.b16 %v294, %v293
      %v322 = vpack.c.b16 %v296, %v295
      %v323 = vpack.c.b16 %v298, %v297
      %v324 = vpack.c.b16 %v300, %v299
      %v325 = vpack.c.b16 %v302, %v301
      %v326 = vpack.c.b16 %v304, %v303
      %v327 = vpack.c.b16 %v306, %v305
      %v328 = vpack.c.b16 %v308, %v307
      %v329 = vpack.c.b16 %v310, %v309
      %v330 = vpack.c.b16 %v312, %v311
      %v331 = vpack.c.b16 %v314, %v313
      %v332 = vpack.c.b16 %v316, %v315
      %vm333 = vcmask 31744
      %v335 = vsel %vm333, %v317, 0
      %v338 = vsel %vm333, %v318, 0
      %v341 = vsel %vm333, %v319, 0
      %v344 = vsel %vm333, %v320, 0
      %v347 = vsel %vm333, %v321, 0
      %v350 = vsel %vm333, %v322, 0
      %v353 = vsel %vm333, %v323, 0
      %v356 = vsel %vm333, %v324, 0
      %v359 = vsel %vm333, %v325, 0
      %v362 = vsel %vm333, %v326, 0
      %v365 = vsel %vm333, %v327, 0
      %v368 = vsel %vm333, %v328, 0
      %v371 = vsel %vm333, %v329, 0
      %v374 = vsel %vm333, %v330, 0
      %v377 = vsel %vm333, %v331, 0
      %v380 = vsel %vm333, %v332, 0
      %vm382 = vcmask 1041408
      %v384 = vsel %vm382, %v245, 0
      %386 = vmatprep.subr.bf16.mxu0 0
      %387 = vmatpush1.bf16.msra.mxu0 %v384
      %388 = vmatprep.subr.bf16.mxu0 0
      %389 = vmatpush1.bf16.msra.mxu0 0
      %390 = vmatprep.subr.bf16.mxu0 0
      %391 = vmatpush1.bf16.msra.mxu0 0
      %392 = vmatprep.subr.bf16.mxu0 0
      %393 = vmatpush1.bf16.msra.mxu0 0
      %394 = vmatprep.subr.bf16.mxu0 0
      %395 = vmatpush1.bf16.msra.mxu0 0
      %396 = vmatprep.subr.bf16.mxu0 0
      %397 = vmatpush1.bf16.msra.mxu0 0
      %398 = vmatprep.subr.bf16.mxu0 0
      %399 = vmatpush1.bf16.msra.mxu0 0
      %400 = vmatprep.subr.bf16.mxu0 0
      %401 = vmatpush1.bf16.msra.mxu0 0
      %402 = vmatprep.subr.bf16.mxu0 0
      %403 = vmatpush1.bf16.msra.mxu0 0
      %404 = vmatprep.subr.bf16.mxu0 0
      %405 = vmatpush1.bf16.msra.mxu0 0
      %406 = vmatprep.subr.bf16.mxu0 0
      %407 = vmatpush1.bf16.msra.mxu0 0
      %408 = vmatprep.subr.bf16.mxu0 0
      %409 = vmatpush1.bf16.msra.mxu0 0
      %410 = vmatprep.subr.bf16.mxu0 0
      %411 = vmatpush1.bf16.msra.mxu0 0
      %412 = vmatprep.subr.bf16.mxu0 0
      %413 = vmatpush1.bf16.msra.mxu0 0
      %414 = vmatprep.subr.bf16.mxu0 0
      %415 = vmatpush1.bf16.msra.mxu0 0
      %416 = vmatprep.subr.bf16.mxu0 0
      %417 = vmatpush1.bf16.msra.mxu0 0
      %418 = vmatprep.mubr.bf16.mxu0 0
      %419 = vmatmul.mubr.bf16.gmra.mrb[0].mxu0 %v335
      %v420 = vpop.f32.mrb[0].mxu0
      %v421 = vadd.f32 %v251, %v420
      %v422 = vpop.f32.mrb[0].mxu0
      %v423 = vpop.f32.mrb[0].mxu0
      %v424 = vadd.f32 %v251, %v423
      %v425 = vpop.f32.mrb[0].mxu0
      %426 = vmatprep.mubr.bf16.mxu0 0
      %427 = vmatmul.mubr.bf16.gmra.mrb[0].mxu0 %v338
      %v428 = vpop.f32.mrb[0].mxu0
      %v429 = vadd.f32 %v251, %v428
      %v430 = vpop.f32.mrb[0].mxu0
      %v431 = vpop.f32.mrb[0].mxu0
      %v432 = vadd.f32 %v251, %v431
      %v433 = vpop.f32.mrb[0].mxu0
      %434 = vmatprep.mubr.bf16.mxu0 0
      %435 = vmatmul.mubr.bf16.gmra.mrb[0].mxu0 %v341
      %v436 = vpop.f32.mrb[0].mxu0
      %v437 = vadd.f32 %v251, %v436
      %v438 = vpop.f32.mrb[0].mxu0
      %v439 = vpop.f32.mrb[0].mxu0
      %v440 = vadd.f32 %v251, %v439
      %v441 = vpop.f32.mrb[0].mxu0
      %442 = vmatprep.mubr.bf16.mxu0 0
      %443 = vmatmul.mubr.bf16.gmra.mrb[0].mxu0 %v344
      %v444 = vpop.f32.mrb[0].mxu0
      %v445 = vadd.f32 %v251, %v444
      %v446 = vpop.f32.mrb[0].mxu0
      %v447 = vpop.f32.mrb[0].mxu0
      %v448 = vadd.f32 %v251, %v447
      %v449 = vpop.f32.mrb[0].mxu0
      %450 = vmatprep.mubr.bf16.mxu0 0
      %451 = vmatmul.mubr.bf16.gmra.mrb[0].mxu0 %v347
      %v452 = vpop.f32.mrb[0].mxu0
      %v453 = vadd.f32 %v251, %v452
      %v454 = vpop.f32.mrb[0].mxu0
      %v455 = vpop.f32.mrb[0].mxu0
      %v456 = vadd.f32 %v251, %v455
      %v457 = vpop.f32.mrb[0].mxu0
      %458 = vmatprep.mubr.bf16.mxu0 0
      %459 = vmatmul.mubr.bf16.gmra.mrb[0].mxu0 %v350
      %v460 = vpop.f32.mrb[0].mxu0
      %v461 = vadd.f32 %v251, %v460
      %v462 = vpop.f32.mrb[0].mxu0
      %v463 = vpop.f32.mrb[0].mxu0
      %v464 = vadd.f32 %v251, %v463
      %v465 = vpop.f32.mrb[0].mxu0
      %466 = vmatprep.mubr.bf16.mxu0 0
      %467 = vmatmul.mubr.bf16.gmra.mrb[0].mxu0 %v353
      %v468 = vpop.f32.mrb[0].mxu0
      %v469 = vadd.f32 %v251, %v468
      %v470 = vpop.f32.mrb[0].mxu0
      %v471 = vpop.f32.mrb[0].mxu0
      %v472 = vadd.f32 %v251, %v471
      %v473 = vpop.f32.mrb[0].mxu0
      %474 = vmatprep.mubr.bf16.mxu0 0
      %475 = vmatmul.mubr.bf16.gmra.mrb[0].mxu0 %v356
      %v476 = vpop.f32.mrb[0].mxu0
      %v477 = vadd.f32 %v251, %v476
      %v478 = vpop.f32.mrb[0].mxu0
      %v479 = vpop.f32.mrb[0].mxu0
      %v480 = vadd.f32 %v251, %v479
      %v481 = vpop.f32.mrb[0].mxu0
      %482 = vmatprep.mubr.bf16.mxu0 0
      %483 = vmatmul.mubr.bf16.gmra.mrb[0].mxu0 %v359
      %v484 = vpop.f32.mrb[0].mxu0
      %v485 = vadd.f32 %v251, %v484
      %v486 = vpop.f32.mrb[0].mxu0
      %v487 = vpop.f32.mrb[0].mxu0
      %v488 = vadd.f32 %v251, %v487
      %v489 = vpop.f32.mrb[0].mxu0
      %490 = vmatprep.mubr.bf16.mxu0 0
      %491 = vmatmul.mubr.bf16.gmra.mrb[0].mxu0 %v362
      %v492 = vpop.f32.mrb[0].mxu0
      %v493 = vadd.f32 %v251, %v492
      %v494 = vpop.f32.mrb[0].mxu0
      %v495 = vpop.f32.mrb[0].mxu0
      %v496 = vadd.f32 %v251, %v495
      %v497 = vpop.f32.mrb[0].mxu0
      %498 = vmatprep.mubr.bf16.mxu0 0
      %499 = vmatmul.mubr.bf16.gmra.mrb[0].mxu0 %v365
      %v500 = vpop.f32.mrb[0].mxu0
      %v501 = vadd.f32 %v251, %v500
      %v502 = vpop.f32.mrb[0].mxu0
      %v503 = vpop.f32.mrb[0].mxu0
      %v504 = vadd.f32 %v251, %v503
      %v505 = vpop.f32.mrb[0].mxu0
      %506 = vmatprep.mubr.bf16.mxu0 0
      %507 = vmatmul.mubr.bf16.gmra.mrb[0].mxu0 %v368
      %v508 = vpop.f32.mrb[0].mxu0
      %v509 = vadd.f32 %v251, %v508
      %v510 = vpop.f32.mrb[0].mxu0
      %v511 = vpop.f32.mrb[0].mxu0
      %v512 = vadd.f32 %v251, %v511
      %v513 = vpop.f32.mrb[0].mxu0
      %514 = vmatprep.mubr.bf16.mxu0 0
      %515 = vmatmul.mubr.bf16.gmra.mrb[0].mxu0 %v371
      %v516 = vpop.f32.mrb[0].mxu0
      %v517 = vadd.f32 %v251, %v516
      %v518 = vpop.f32.mrb[0].mxu0
      %v519 = vpop.f32.mrb[0].mxu0
      %v520 = vadd.f32 %v251, %v519
      %v521 = vpop.f32.mrb[0].mxu0
      %522 = vmatprep.mubr.bf16.mxu0 0
      %523 = vmatmul.mubr.bf16.gmra.mrb[0].mxu0 %v374
      %v524 = vpop.f32.mrb[0].mxu0
      %v525 = vadd.f32 %v251, %v524
      %v526 = vpop.f32.mrb[0].mxu0
      %v527 = vpop.f32.mrb[0].mxu0
      %v528 = vadd.f32 %v251, %v527
      %v529 = vpop.f32.mrb[0].mxu0
      %530 = vmatprep.mubr.bf16.mxu0 0
      %531 = vmatmul.mubr.bf16.gmra.mrb[0].mxu0 %v377
      %v532 = vpop.f32.mrb[0].mxu0
      %v533 = vadd.f32 %v251, %v532
      %v534 = vpop.f32.mrb[0].mxu0
      %v535 = vpop.f32.mrb[0].mxu0
      %v536 = vadd.f32 %v251, %v535
      %v537 = vpop.f32.mrb[0].mxu0
      %538 = vmatprep.mubr.bf16.mxu0 0
      %539 = vmatmul.mubr.bf16.gmra.mrb[0].mxu0 %v380
      %v540 = vpop.f32.mrb[0].mxu0
      %v541 = vadd.f32 %v251, %v540
      %v542 = vpop.f32.mrb[0].mxu0
      %v543 = vpop.f32.mrb[0].mxu0
      %v544 = vadd.f32 %v251, %v543
      %v545 = vpop.f32.mrb[0].mxu0
      %546 = vdwg.mxu0
      %v547 = vmax.f32 %v421, 0.0
      %v548 = vmax.f32 %v424, 0.0
      %v549 = vmax.f32 %v429, 0.0
      %v550 = vmax.f32 %v432, 0.0
      %v551 = vmax.f32 %v437, 0.0
      %v552 = vmax.f32 %v440, 0.0
      %v553 = vmax.f32 %v445, 0.0
      %v554 = vmax.f32 %v448, 0.0
      %v555 = vmax.f32 %v453, 0.0
      %v556 = vmax.f32 %v456, 0.0
      %v557 = vmax.f32 %v461, 0.0
      %v558 = vmax.f32 %v464, 0.0
      %v559 = vmax.f32 %v469, 0.0
      %v560 = vmax.f32 %v472, 0.0
      %v561 = vmax.f32 %v477, 0.0
      %v562 = vmax.f32 %v480, 0.0
      %v563 = vmax.f32 %v485, 0.0
      %v564 = vmax.f32 %v488, 0.0
      %v565 = vmax.f32 %v493, 0.0
      %v566 = vmax.f32 %v496, 0.0
      %v567 = vmax.f32 %v501, 0.0
      %v568 = vmax.f32 %v504, 0.0
      %v569 = vmax.f32 %v509, 0.0
      %v570 = vmax.f32 %v512, 0.0
      %v571 = vmax.f32 %v517, 0.0
      %v572 = vmax.f32 %v520, 0.0
      %v573 = vmax.f32 %v525, 0.0
      %v574 = vmax.f32 %v528, 0.0
      %v575 = vmax.f32 %v533, 0.0
      %v576 = vmax.f32 %v536, 0.0
      %v577 = vmax.f32 %v541, 0.0
      %v578 = vmax.f32 %v544, 0.0
      %v579 = vpack.c.bf16 %v548, %v547
      %v580 = vpack.c.bf16 %v550, %v549
      %v581 = vpack.c.bf16 %v552, %v551
      %v582 = vpack.c.bf16 %v554, %v553
      %v583 = vpack.c.bf16 %v556, %v555
      %v584 = vpack.c.bf16 %v558, %v557
      %v585 = vpack.c.bf16 %v560, %v559
      %v586 = vpack.c.bf16 %v562, %v561
      %v587 = vpack.c.bf16 %v564, %v563
      %v588 = vpack.c.bf16 %v566, %v565
      %v589 = vpack.c.bf16 %v568, %v567
      %v590 = vpack.c.bf16 %v570, %v569
      %v591 = vpack.c.bf16 %v572, %v571
      %v592 = vpack.c.bf16 %v574, %v573
      %v593 = vpack.c.bf16 %v576, %v575
      %v594 = vpack.c.bf16 %v578, %v577
      %v611 = vunpack.c.l.b16 %v579
      %v612 = vunpack.c.h.b16 %v579
      %v613 = vunpack.c.l.b16 %v580
      %v614 = vunpack.c.h.b16 %v580
      %v615 = vunpack.c.l.b16 %v581
      %v616 = vunpack.c.h.b16 %v581
      %v617 = vunpack.c.l.b16 %v582
      %v618 = vunpack.c.h.b16 %v582
      %v619 = vunpack.c.l.b16 %v583
      %v620 = vunpack.c.h.b16 %v583
      %v621 = vunpack.c.l.b16 %v584
      %v622 = vunpack.c.h.b16 %v584
      %v623 = vunpack.c.l.b16 %v585
      %v624 = vunpack.c.h.b16 %v585
      %v625 = vunpack.c.l.b16 %v586
      %v626 = vunpack.c.h.b16 %v586
      %v627 = vunpack.c.l.b16 %v587
      %v628 = vunpack.c.h.b16 %v587
      %v629 = vunpack.c.l.b16 %v588
      %v630 = vunpack.c.h.b16 %v588
      %v631 = vunpack.c.l.b16 %v589
      %v632 = vunpack.c.h.b16 %v589
      %v633 = vunpack.c.l.b16 %v590
      %v634 = vunpack.c.h.b16 %v590
      %v635 = vunpack.c.l.b16 %v591
      %v636 = vunpack.c.h.b16 %v591
      %v637 = vunpack.c.l.b16 %v592
      %v638 = vunpack.c.h.b16 %v592
      %v639 = vunpack.c.l.b16 %v593
      %v640 = vunpack.c.h.b16 %v593
      %v641 = vunpack.c.l.b16 %v594
      %v642 = vunpack.c.h.b16 %v594
      %v643 = vpack.c.b16 %v611, %v611
      %v644 = vpack.c.b16 %v612, %v612
      %v645 = vpack.c.b16 %v613, %v613
      %v646 = vpack.c.b16 %v614, %v614
      %v647 = vpack.c.b16 %v615, %v615
      %v648 = vpack.c.b16 %v616, %v616
      %v649 = vpack.c.b16 %v617, %v617
      %v650 = vpack.c.b16 %v618, %v618
      %v651 = vpack.c.b16 %v619, %v619
      %v652 = vpack.c.b16 %v620, %v620
      %v653 = vpack.c.b16 %v621, %v621
      %v654 = vpack.c.b16 %v622, %v622
      %v655 = vpack.c.b16 %v623, %v623
      %v656 = vpack.c.b16 %v624, %v624
      %v657 = vpack.c.b16 %v625, %v625
      %v658 = vpack.c.b16 %v626, %v626
      %v659 = vpack.c.b16 %v627, %v627
      %v660 = vpack.c.b16 %v628, %v628
      %v661 = vpack.c.b16 %v629, %v629
      %v662 = vpack.c.b16 %v630, %v630
      %v663 = vpack.c.b16 %v631, %v631
      %v664 = vpack.c.b16 %v632, %v632
      %v665 = vpack.c.b16 %v633, %v633
      %v666 = vpack.c.b16 %v634, %v634
      %v667 = vpack.c.b16 %v635, %v635
      %v668 = vpack.c.b16 %v636, %v636
      %v669 = vpack.c.b16 %v637, %v637
      %v670 = vpack.c.b16 %v638, %v638
      %v671 = vpack.c.b16 %v639, %v639
      %v672 = vpack.c.b16 %v640, %v640
      %v673 = vpack.c.b16 %v641, %v641
      %v674 = vpack.c.b16 %v642, %v642
      %vm707 = vcmask 125952
      %708 = vst.msk [vmem:[%s206] sm:$0xf] %vm707, %v643
      %709 = vst.msk [vmem:[%s206 + $0x4] sm:$0xf] %vm707, %v644
      %710 = vst.msk [vmem:[%s206 + $0x8] sm:$0xf] %vm707, %v645
      %711 = vst.msk [vmem:[%s206 + $0xc] sm:$0xf] %vm707, %v646
      %712 = vst.msk [vmem:[%s206 + $0x10] sm:$0xf] %vm707, %v647
      %713 = vst.msk [vmem:[%s206 + $0x14] sm:$0xf] %vm707, %v648
      %714 = vst.msk [vmem:[%s206 + $0x18] sm:$0xf] %vm707, %v649
      %715 = vst.msk [vmem:[%s206 + $0x1c] sm:$0xf] %vm707, %v650
      %716 = vst.msk [vmem:[%s206 + $0x20] sm:$0xf] %vm707, %v651
      %717 = vst.msk [vmem:[%s206 + $0x24] sm:$0xf] %vm707, %v652
      %718 = vst.msk [vmem:[%s206 + $0x28] sm:$0xf] %vm707, %v653
      %719 = vst.msk [vmem:[%s206 + $0x2c] sm:$0xf] %vm707, %v654
      %720 = vst.msk [vmem:[%s206 + $0x30] sm:$0xf] %vm707, %v655
      %721 = vst.msk [vmem:[%s206 + $0x34] sm:$0xf] %vm707, %v656
      %722 = vst.msk [vmem:[%s206 + $0x38] sm:$0xf] %vm707, %v657
      %723 = vst.msk [vmem:[%s206 + $0x3c] sm:$0xf] %vm707, %v658
      %724 = vst.msk [vmem:[%s206 + $0x40] sm:$0xf] %vm707, %v659
      %725 = vst.msk [vmem:[%s206 + $0x44] sm:$0xf] %vm707, %v660
      %726 = vst.msk [vmem:[%s206 + $0x48] sm:$0xf] %vm707, %v661
      %727 = vst.msk [vmem:[%s206 + $0x4c] sm:$0xf] %vm707, %v662
      %728 = vst.msk [vmem:[%s206 + $0x50] sm:$0xf] %vm707, %v663
      %729 = vst.msk [vmem:[%s206 + $0x54] sm:$0xf] %vm707, %v664
      %730 = vst.msk [vmem:[%s206 + $0x58] sm:$0xf] %vm707, %v665
      %731 = vst.msk [vmem:[%s206 + $0x5c] sm:$0xf] %vm707, %v666
      %732 = vst.msk [vmem:[%s206 + $0x60] sm:$0xf] %vm707, %v667
      %733 = vst.msk [vmem:[%s206 + $0x64] sm:$0xf] %vm707, %v668
      %734 = vst.msk [vmem:[%s206 + $0x68] sm:$0xf] %vm707, %v669
      %735 = vst.msk [vmem:[%s206 + $0x6c] sm:$0xf] %vm707, %v670
      %736 = vst.msk [vmem:[%s206 + $0x70] sm:$0xf] %vm707, %v671
      %737 = vst.msk [vmem:[%s206 + $0x74] sm:$0xf] %vm707, %v672
      %738 = vst.msk [vmem:[%s206 + $0x78] sm:$0xf] %vm707, %v673
      %739 = vst.msk [vmem:[%s206 + $0x7c] sm:$0xf] %vm707, %v674
      %vm740 = vcmask 130048
      %v741 = vsel %vm740, %v547, 0.0
      %v742 = vsel %vm740, %v548, 0.0
      %v743 = vadd.f32 %v741, %v742
      %v744 = vsel %vm740, %v549, 0.0
      %v745 = vadd.f32 %v743, %v744
      %v746 = vsel %vm740, %v550, 0.0
      %v747 = vadd.f32 %v745, %v746
      %v748 = vsel %vm740, %v551, 0.0
      %v749 = vadd.f32 %v747, %v748
      %v750 = vsel %vm740, %v552, 0.0
      %v751 = vadd.f32 %v749, %v750
      %v752 = vsel %vm740, %v553, 0.0
      %v753 = vadd.f32 %v751, %v752
      %v754 = vsel %vm740, %v554, 0.0
      %v755 = vadd.f32 %v753, %v754
      %v756 = vsel %vm740, %v555, 0.0
      %v757 = vadd.f32 %v755, %v756
      %v758 = vsel %vm740, %v556, 0.0
      %v759 = vadd.f32 %v757, %v758
      %v760 = vsel %vm740, %v557, 0.0
      %v761 = vadd.f32 %v759, %v760
      %v762 = vsel %vm740, %v558, 0.0
      %v763 = vadd.f32 %v761, %v762
      %v764 = vsel %vm740, %v559, 0.0
      %v765 = vadd.f32 %v763, %v764
      %v766 = vsel %vm740, %v560, 0.0
      %v767 = vadd.f32 %v765, %v766
      %v768 = vsel %vm740, %v561, 0.0
      %v769 = vadd.f32 %v767, %v768
      %v770 = vsel %vm740, %v562, 0.0
      %v771 = vadd.f32 %v769, %v770
      %v772 = vsel %vm740, %v563, 0.0
      %v773 = vadd.f32 %v771, %v772
      %v774 = vsel %vm740, %v564, 0.0
      %v775 = vadd.f32 %v773, %v774
      %v776 = vsel %vm740, %v565, 0.0
      %v777 = vadd.f32 %v775, %v776
      %v778 = vsel %vm740, %v566, 0.0
      %v779 = vadd.f32 %v777, %v778
      %v780 = vsel %vm740, %v567, 0.0
      %v781 = vadd.f32 %v779, %v780
      %v782 = vsel %vm740, %v568, 0.0
      %v783 = vadd.f32 %v781, %v782
      %v784 = vsel %vm740, %v569, 0.0
      %v785 = vadd.f32 %v783, %v784
      %v786 = vsel %vm740, %v570, 0.0
      %v787 = vadd.f32 %v785, %v786
      %v788 = vsel %vm740, %v571, 0.0
      %v789 = vadd.f32 %v787, %v788
      %v790 = vsel %vm740, %v572, 0.0
      %v791 = vadd.f32 %v789, %v790
      %v792 = vsel %vm740, %v573, 0.0
      %v793 = vadd.f32 %v791, %v792
      %v794 = vsel %vm740, %v574, 0.0
      %v795 = vadd.f32 %v793, %v794
      %v796 = vsel %vm740, %v575, 0.0
      %v797 = vadd.f32 %v795, %v796
      %v798 = vsel %vm740, %v576, 0.0
      %v799 = vadd.f32 %v797, %v798
      %v800 = vsel %vm740, %v577, 0.0
      %v801 = vadd.f32 %v799, %v800
      %v802 = vsel %vm740, %v578, 0.0
      %v803 = vadd.f32 %v801, %v802
      %v804 = vrot.slane %v803, 4
      %v805 = vadd.f32 %v803, %v804
      %v806 = vrot.slane %v805, 2
      %v807 = vadd.f32 %v805, %v806
      %v808 = vrot.slane %v807, 1
      %v809 = vadd.f32 %v807, %v808
      %v810 = vmul.f32 %v547, %v547
      %v811 = vmul.f32 %v548, %v548
      %v812 = vmul.f32 %v549, %v549
      %v813 = vmul.f32 %v550, %v550
      %v814 = vmul.f32 %v551, %v551
      %v815 = vmul.f32 %v552, %v552
      %v816 = vmul.f32 %v553, %v553
      %v817 = vmul.f32 %v554, %v554
      %v818 = vmul.f32 %v555, %v555
      %v819 = vmul.f32 %v556, %v556
      %v820 = vmul.f32 %v557, %v557
      %v821 = vmul.f32 %v558, %v558
      %v822 = vmul.f32 %v559, %v559
      %v823 = vmul.f32 %v560, %v560
      %v824 = vmul.f32 %v561, %v561
      %v825 = vmul.f32 %v562, %v562
      %v826 = vmul.f32 %v563, %v563
      %v827 = vmul.f32 %v564, %v564
      %v828 = vmul.f32 %v565, %v565
      %v829 = vmul.f32 %v566, %v566
      %v830 = vmul.f32 %v567, %v567
      %v831 = vmul.f32 %v568, %v568
      %v832 = vmul.f32 %v569, %v569
      %v833 = vmul.f32 %v570, %v570
      %v834 = vmul.f32 %v571, %v571
      %v835 = vmul.f32 %v572, %v572
      %v836 = vmul.f32 %v573, %v573
      %v837 = vmul.f32 %v574, %v574
      %v838 = vmul.f32 %v575, %v575
      %v839 = vmul.f32 %v576, %v576
      %v840 = vmul.f32 %v577, %v577
      %v841 = vmul.f32 %v578, %v578
      %v842 = vsel %vm740, %v810, 0.0
      %v843 = vsel %vm740, %v811, 0.0
      %v844 = vadd.f32 %v842, %v843
      %v845 = vsel %vm740, %v812, 0.0
      %v846 = vadd.f32 %v844, %v845
      %v847 = vsel %vm740, %v813, 0.0
      %v848 = vadd.f32 %v846, %v847
      %v849 = vsel %vm740, %v814, 0.0
      %v850 = vadd.f32 %v848, %v849
      %v851 = vsel %vm740, %v815, 0.0
      %v852 = vadd.f32 %v850, %v851
      %v853 = vsel %vm740, %v816, 0.0
      %v854 = vadd.f32 %v852, %v853
      %v855 = vsel %vm740, %v817, 0.0
      %v856 = vadd.f32 %v854, %v855
      %v857 = vsel %vm740, %v818, 0.0
      %v858 = vadd.f32 %v856, %v857
      %v859 = vsel %vm740, %v819, 0.0
      %v860 = vadd.f32 %v858, %v859
      %v861 = vsel %vm740, %v820, 0.0
      %v862 = vadd.f32 %v860, %v861
      %v863 = vsel %vm740, %v821, 0.0
      %v864 = vadd.f32 %v862, %v863
      %v865 = vsel %vm740, %v822, 0.0
      %v866 = vadd.f32 %v864, %v865
      %v867 = vsel %vm740, %v823, 0.0
      %v868 = vadd.f32 %v866, %v867
      %v869 = vsel %vm740, %v824, 0.0
      %v870 = vadd.f32 %v868, %v869
      %v871 = vsel %vm740, %v825, 0.0
      %v872 = vadd.f32 %v870, %v871
      %v873 = vsel %vm740, %v826, 0.0
      %v874 = vadd.f32 %v872, %v873
      %v875 = vsel %vm740, %v827, 0.0
      %v876 = vadd.f32 %v874, %v875
      %v877 = vsel %vm740, %v828, 0.0
      %v878 = vadd.f32 %v876, %v877
      %v879 = vsel %vm740, %v829, 0.0
      %v880 = vadd.f32 %v878, %v879
      %v881 = vsel %vm740, %v830, 0.0
      %v882 = vadd.f32 %v880, %v881
      %v883 = vsel %vm740, %v831, 0.0
      %v884 = vadd.f32 %v882, %v883
      %v885 = vsel %vm740, %v832, 0.0
      %v886 = vadd.f32 %v884, %v885
      %v887 = vsel %vm740, %v833, 0.0
      %v888 = vadd.f32 %v886, %v887
      %v889 = vsel %vm740, %v834, 0.0
      %v890 = vadd.f32 %v888, %v889
      %v891 = vsel %vm740, %v835, 0.0
      %v892 = vadd.f32 %v890, %v891
      %v893 = vsel %vm740, %v836, 0.0
      %v894 = vadd.f32 %v892, %v893
      %v895 = vsel %vm740, %v837, 0.0
      %v896 = vadd.f32 %v894, %v895
      %v897 = vsel %vm740, %v838, 0.0
      %v898 = vadd.f32 %v896, %v897
      %v899 = vsel %vm740, %v839, 0.0
      %v900 = vadd.f32 %v898, %v899
      %v901 = vsel %vm740, %v840, 0.0
      %v902 = vadd.f32 %v900, %v901
      %v903 = vsel %vm740, %v841, 0.0
      %v904 = vadd.f32 %v902, %v903
      %v905 = vrot.slane %v904, 4
      %v906 = vadd.f32 %v904, %v905
      %v907 = vrot.slane %v906, 2
      %v908 = vadd.f32 %v906, %v907
      %v909 = vrot.slane %v908, 1
      %v910 = vadd.f32 %v908, %v909
      %vm911 = vcmask 1040384
      %v912 = vsel %vm911, %v809, %v910
      %vm913 = vcmask 123904
      %914 = vst.msk [vmem:[%s211] sm:$0x3] %vm913, %v912
      %s915 = smul.u32 32, %s16
      %p916 = scmp.lt.s32.totalorder %s915, 63
      %s917 = scalar_select %p916, %s915, 63
      %s918 = smul.addr %s917, 4
      %s919 = scalar_lea.vmem %s3, %s918
      %p920 = scmp.lt.s32.totalorder %s16, 1
      %s921 = scalar_select %p920, %s16, 1
      %s922 = smul.addr %s921, 2
      %s923 = scalar_lea.vmem %s4, %s922
      // Predicated region
      $region33: #{unet_stage_block.3} parent=31 // pred_check
        %p924 = pneg %p102
      $region34: #{unet_stage_block.3} parent=31 // pred_check_branch
        %926 = sbr.rel (%p924) target = $region36
      $region35: #{unet_stage_block.3} parent=31 // pred_region
        %s927 = smul.u32 32, %s16
      $region36: #{unet_stage_block.3} parent=31 // pred_fallthru
        _
      // Predicated region
      $region37: #{unet_stage_block.3} parent=31 // pred_check
        %p928 = pneg %p128
      $region38: #{unet_stage_block.3} parent=31 // pred_check_branch
        %930 = sbr.rel (%p928) target = $region40
      $region39: #{unet_stage_block.3} parent=31 // pred_region
        _
      $region40: #{unet_stage_block.3} parent=31 // pred_fallthru
        _
    $region32: #{unet_stage_block.3} parent=5 // pred_fallthru
      _
    %p931 = scmp.le.s32.totalorder 2, %s11
    // Predicated region
    $region41: #{unet_stage_block.3} parent=5 // pred_check
      %p932 = pneg %p931
    $region42: #{unet_stage_block.3} parent=5 // pred_check_branch
      %934 = sbr.rel (%p932) target = $region44
    $region43: #{unet_stage_block.3} parent=5 // pred_region
      %s935 = ssub.s32 %s11, 2
      // Predicated region
      $region45: #{unet_stage_block.3} parent=43 // pred_check
        %p936 = pneg %p108
      $region46: #{unet_stage_block.3} parent=43 // pred_check_branch
        %938 = sbr.rel (%p936) target = $region48
      $region47: #{unet_stage_block.3} parent=43 // pred_region
        %s939 = smul.u32 32, %s17
        %p940 = scmp.lt.s32.totalorder %s939, 63
        %s941 = scalar_select %p940, %s939, 63
        %s942 = smul.addr %s941, 4
        %s943 = scalar_lea.vmem %s3, %s942
      $region48: #{unet_stage_block.3} parent=43 // pred_fallthru
        _
      // Predicated region
      $region49: #{unet_stage_block.3} parent=43 // pred_check
        %p944 = pneg %p134
      $region50: #{unet_stage_block.3} parent=43 // pred_check_branch
        %946 = sbr.rel (%p944) target = $region52
      $region51: #{unet_stage_block.3} parent=43 // pred_region
        %p947 = scmp.lt.s32.totalorder %s17, 1
        %s948 = scalar_select %p947, %s17, 1
        %s949 = smul.addr %s948, 2
        %s950 = scalar_lea.vmem %s4, %s949
      $region52: #{unet_stage_block.3} parent=43 // pred_fallthru
        _
    $region44: #{unet_stage_block.3} parent=5 // pred_fallthru
      _
  $region6: #{unet_stage_block.3} parent=0 // loop_footer
    %s15 = sadd.s32 1, %s11
  $region7: #{unet_stage_block.3} parent=0 // loop_footer_branch
    %10 = sbr.rel target = $region3
  $region8: #{unet_stage_block.3} parent=0 // loop_exit
    _

// kernel: unet_stage_block.4
$region0: #{unet_stage_block.4}
  #allocation0 [shape = 'u32[]', space=smem, size = 0x4, offset = 0x4, fixed_abs, tag = 'smem constant byte address 0x4 - core index']
  #allocation1 [shape = 'u32[144,128]{1,0:T(1,128)}', space=vmem, size = 0x12000, scoped, tag = 'internal scratch']
  %s0 = inlined_call_operand.vmem [shape: bf16[2048,4], index: 0, kind: input, shape index: {}]
  %s1 = inlined_call_operand.vmem [shape: bf16[4,4], index: 1, kind: input, shape index: {}]
  %s2 = inlined_call_operand.vmem [shape: f32[1,4], index: 2, kind: input, shape index: {}]
  %s3 = inlined_call_operand.vmem [shape: bf16[2048,4], index: 3, kind: output, shape index: {0}]
  %s4 = inlined_call_operand.vmem [shape: f32[2,2,4], index: 4, kind: output, shape index: {1}]
  %5 = xla_tuple %s3, %s4
  %s6 = sld [smem:[#allocation0]]
  $region53: #{unet_stage_block.4} parent=0
    _
  %s8 = ssub.s32 1, %s6
  %s9 = scalar_select 0, %s8, %s6
  loop: start=0, step=1, limit=4
  $region2: #{unet_stage_block.4} parent=0 // loop_pre_header
    _
  $region3: #{unet_stage_block.4} parent=0 // loop_header
    %s11 = sphi 0, %s15
    %p12 = scmp.ge.s32.totalorder %s11, 4
    %s21 = sphi 0, %s23
    %s24 = sphi 0, %s21
    %s25 = sphi 0, %s24
    %s41 = sphi 0, %s25
    %s45 = sphi 0, %s45
    %s47 = sphi 0, %s45
    %s48 = sphi 0, %s47
    %s62 = sphi 0, %s48
    %s66 = sphi 0, %s66
    %s68 = sphi 0, %s66
    %s69 = sphi 0, %s68
    %s83 = sphi 0, %s69
    %s89 = sphi 0, %s91
    %s92 = sphi 0, %s89
    %s93 = sphi 0, %s92
    %s109 = sphi 0, %s93
    %s115 = sphi 0, %s117
    %s118 = sphi 0, %s115
    %s119 = sphi 0, %s118
    %s135 = sphi 0, %s119
  $region4: #{unet_stage_block.4} parent=0 // loop_header_branch
    %14 = sbr.rel (%p12) target = $region8
  $region5: #{unet_stage_block.4} parent=0 // loop_body
    %s16 = ssub.s32 %s11, 1
    %s17 = ssub.s32 %s11, 2
    %s18 = sadd.s32 %s11, 1
    %s19 = ssub.s32 %s11, %s18
    %p20 = scmp.eq.s32.totalorder %s19, 0
    %s22 = sadd.s32 %s21, 1
    %s23 = scalar_select %p20, %s21, %s22
    %p26 = pneg %p20
    %p27 = scmp.eq.s32.totalorder %s11, 1
    %p28 = por %p26, %p27
    %p29 = scmp.ne.s32.totalorder %s21, %s24
    %p30 = scmp.eq.s32.totalorder %s11, 0
    %p31 = por %p29, %p30
    %p32 = scmp.ne.s32.totalorder %s21, %s24
    %p33 = scmp.eq.s32.totalorder %s16, 1
    %p34 = por %p32, %p33
    %p35 = scmp.ne.s32.totalorder %s24, %s25
    %p36 = scmp.eq.s32.totalorder %s16, 0
    %p37 = por %p35, %p36
    %p38 = scmp.ne.s32.totalorder %s24, %s25
    %p39 = scmp.eq.s32.totalorder %s17, 1
    %p40 = por %p38, %p39
    %p42 = scmp.ne.s32.totalorder %s25, %s41
    %p43 = scmp.eq.s32.totalorder %s17, 0
    %p44 = por %p42, %p43
    %s46 = sadd.s32 %s45, 1
    %p49 = scmp.eq.s32.totalorder %s11, 1
    %p50 = scmp.ne.s32.totalorder %s45, %s47
    %p51 = scmp.eq.s32.totalorder %s11, 0
    %p52 = por %p50, %p51
    %p53 = scmp.ne.s32.totalorder %s45, %s47
    %p54 = scmp.eq.s32.totalorder %s16, 1
    %p55 = por %p53, %p54
    %p56 = scmp.ne.s32.totalorder %s47, %s48
    %p57 = scmp.eq.s32.totalorder %s16, 0
    %p58 = por %p56, %p57
    %p59 = scmp.ne.s32.totalorder %s47, %s48
    %p60 = scmp.eq.s32.totalorder %s17, 1
    %p61 = por %p59, %p60
    %p63 = scmp.ne.s32.totalorder %s48, %s62
    %p64 = scmp.eq.s32.totalorder %s17, 0
    %p65 = por %p63, %p64
    %s67 = sadd.s32 %s66, 1
    %p70 = scmp.eq.s32.totalorder %s11, 1
    %p71 = scmp.ne.s32.totalorder %s66, %s68
    %p72 = scmp.eq.s32.totalorder %s11, 0
    %p73 = por %p71, %p72
    %p74 = scmp.ne.s32.totalorder %s66, %s68
    %p75 = scmp.eq.s32.totalorder %s16, 1
    %p76 = por %p74, %p75
    %p77 = scmp.ne.s32.totalorder %s68, %s69
    %p78 = scmp.eq.s32.totalorder %s16, 0
    %p79 = por %p77, %p78
    %p80 = scmp.ne.s32.totalorder %s68, %s69
    %p81 = scmp.eq.s32.totalorder %s17, 1
    %p82 = por %p80, %p81
    %p84 = scmp.ne.s32.totalorder %s69, %s83
    %p85 = scmp.eq.s32.totalorder %s17, 0
    %p86 = por %p84, %p85
    %s87 = ssub.s32 %s11, %s18
    %p88 = scmp.eq.s32.totalorder %s87, 0
    %s90 = sadd.s32 %s89, 1
    %s91 = scalar_select %p88, %s89, %s90
    %p94 = pneg %p88
    %p95 = scmp.eq.s32.totalorder %s11, 1
    %p96 = por %p94, %p95
    %p97 = scmp.ne.s32.totalorder %s89, %s92
    %p98 = scmp.eq.s32.totalorder %s11, 0
    %p99 = por %p97, %p98
    %p100 = scmp.ne.s32.totalorder %s89, %s92
    %p101 = scmp.eq.s32.totalorder %s16, 1
    %p102 = por %p100, %p101
    %p103 = scmp.ne.s32.totalorder %s92, %s93
    %p104 = scmp.eq.s32.totalorder %s16, 0
    %p105 = por %p103, %p104
    %p106 = scmp.ne.s32.totalorder %s92, %s93
    %p107 = scmp.eq.s32.totalorder %s17, 1
    %p108 = por %p106, %p107
    %p110 = scmp.ne.s32.totalorder %s93, %s109
    %p111 = scmp.eq.s32.totalorder %s17, 0
    %p112 = por %p110, %p111
    %s113 = ssub.s32 %s11, %s18
    %p114 = scmp.eq.s32.totalorder %s113, 0
    %s116 = sadd.s32 %s115, 1
    %s117 = scalar_select %p114, %s115, %s116
    %p120 = pneg %p114
    %p121 = scmp.eq.s32.totalorder %s11, 1
    %p122 = por %p120, %p121
    %p123 = scmp.ne.s32.totalorder %s115, %s118
    %p124 = scmp.eq.s32.totalorder %s11, 0
    %p125 = por %p123, %p124
    %p126 = scmp.ne.s32.totalorder %s115, %s118
    %p127 = scmp.eq.s32.totalorder %s16, 1
    %p128 = por %p126, %p127
    %p129 = scmp.ne.s32.totalorder %s118, %s119
    %p130 = scmp.eq.s32.totalorder %s16, 0
    %p131 = por %p129, %p130
    %p132 = scmp.ne.s32.totalorder %s118, %s119
    %p133 = scmp.eq.s32.totalorder %s17, 1
    %p134 = por %p132, %p133
    %p136 = scmp.ne.s32.totalorder %s119, %s135
    %p137 = scmp.eq.s32.totalorder %s17, 0
    %p138 = por %p136, %p137
    %p139 = scmp.le.s32.totalorder 1, %s11
    %p140 = scmp.lt.s32.totalorder %s11, 3
    %p141 = pnand %p139, %p140
    %p142 = pneg %p141
    // Predicated region
    $region9: #{unet_stage_block.4} parent=5 // pred_check
      _
    $region10: #{unet_stage_block.4} parent=5 // pred_check_branch
      %144 = sbr.rel (%p141) target = $region12
    $region11: #{unet_stage_block.4} parent=5 // pred_region
      %s145 = ssub.s32 %s11, 1
      // Predicated region
      $region13: #{unet_stage_block.4} parent=11 // pred_check
        %p146 = pneg %p58
      $region14: #{unet_stage_block.4} parent=11 // pred_check_branch
        %148 = sbr.rel (%p146) target = $region16
      $region15: #{unet_stage_block.4} parent=11 // pred_region
        _
      $region16: #{unet_stage_block.4} parent=11 // pred_fallthru
        _
      // Predicated region
      $region17: #{unet_stage_block.4} parent=11 // pred_check
        %p149 = pneg %p79
      $region18: #{unet_stage_block.4} parent=11 // pred_check_branch
        %151 = sbr.rel (%p149) target = $region20
      $region19: #{unet_stage_block.4} parent=11 // pred_region
        _
      $region20: #{unet_stage_block.4} parent=11 // pred_fallthru
        _
    $region12: #{unet_stage_block.4} parent=5 // pred_fallthru
      _
    %p152 = scmp.lt.s32.totalorder %s11, 2
    // Predicated region
    $region21: #{unet_stage_block.4} parent=5 // pred_check
      %p153 = pneg %p152
    $region22: #{unet_stage_block.4} parent=5 // pred_check_branch
      %155 = sbr.rel (%p153) target = $region24
    $region23: #{unet_stage_block.4} parent=5 // pred_region
      // Predicated region
      $region25: #{unet_stage_block.4} parent=23 // pred_check
        %p156 = pneg %p31
      $region26: #{unet_stage_block.4} parent=23 // pred_check_branch
        %158 = sbr.rel (%p156) target = $region28
      $region27: #{unet_stage_block.4} parent=23 // pred_region
        %s159 = smul.u32 128, %s11
        %p160 = scmp.lt.s32.totalorder %s159, 255
        %s161 = scalar_select %p160, %s159, 255
        %s162 = smul.addr %s161, 4
        %s163 = scalar_lea.vmem %s0, %s162
        %s164 = smul.u32 128, %s11
      $region28: #{unet_stage_block.4} parent=23 // pred_fallthru
        _
    $region24: #{unet_stage_block.4} parent=5 // pred_fallthru
      _
    %p165 = scmp.le.s32.totalorder 1, %s11
    %p166 = scmp.lt.s32.totalorder %s11, 3
    %p167 = pnand %p165, %p166
    %p168 = pneg %p167
    // Predicated region
    $region29: #{unet_stage_block.4} parent=5 // pred_check
      _
    $region30: #{unet_stage_block.4} parent=5 // pred_check_branch
      %170 = sbr.rel (%p167) target = $region32
    $region31: #{unet_stage_block.4} parent=5 // pred_region
      %s171 = ssub.s32 %s11, 1
      %s172 = smul.u32 128, %s16
      %p173 = scmp.lt.s32.totalorder %s172, 255
      %s174 = scalar_select %p173, %s172, 255
      %s175 = smul.addr %s174, 4
      %s176 = scalar_lea.vmem %s0, %s175
      %p177 = pneg %p37
      %p178 = pneg %p34
      %p179 = pneg %p58
      %p180 = pneg %p55
      %p181 = pneg %p79
      %p182 = pneg %p76
      %p183 = pneg %p105
      %p184 = pneg %p102
      %s185 = smul.u32 128, %s16
      %p186 = scmp.lt.s32.totalorder %s185, 255
      %s187 = scalar_select %p186, %s185, 255
      %s188 = smul.addr %s187, 4
      %s189 = scalar_lea.vmem %s3, %s188
      %p190 = pneg %p131
      %p191 = pneg %p128
      %p192 = scmp.lt.s32.totalorder %s16, 1
      %s193 = scalar_select %p192, %s16, 1
      %s194 = smul.addr %s193, 2
      %s195 = scalar_lea.vmem %s4, %s194
      %s196 = smul.u32 128, %s16
      %p197 = scmp.lt.s32.totalorder %s196, 255
      %s198 = scalar_select %p197, %s196, 255
      %s199 = smul.addr %s198, 4
      %s200 = scalar_lea.vmem %s0, %s199
      %s201 = smul.u32 128, %s16
      %s202 = smul.u32 128, %s16
      %p203 = scmp.lt.s32.totalorder %s202, 255
      %s204 = scalar_select %p203, %s202, 255
      %s205 = smul.addr %s204, 4
      %s206 = scalar_lea.vmem %s3, %s205
      %s207 = smul.u32 128, %s16
      %p208 = scmp.lt.s32.totalorder %s16, 1
      %s209 = scalar_select %p208, %s16, 1
      %s210 = smul.addr %s209, 2
      %s211 = scalar_lea.vmem %s4, %s210
      %v213 = vld [vmem:[%s200] sm:$0xf]
      %v214 = vld [vmem:[%s200 + $0x4] sm:$0xf]
      %v215 = vld [vmem:[%s200 + $0x8] sm:$0xf]
      %v216 = vld [vmem:[%s200 + $0xc] sm:$0xf]
      %v217 = vld [vmem:[%s200 + $0x10] sm:$0xf]
      %v218 = vld [vmem:[%s200 + $0x14] sm:$0xf]
      %v219 = vld [vmem:[%s200 + $0x18] sm:$0xf]
      %v220 = vld [vmem:[%s200 + $0x1c] sm:$0xf]
      %v221 = vld [vmem:[%s200 + $0x20] sm:$0xf]
      %v222 = vld [vmem:[%s200 + $0x24] sm:$0xf]
      %v223 = vld [vmem:[%s200 + $0x28] sm:$0xf]
      %v224 = vld [vmem:[%s200 + $0x2c] sm:$0xf]
      %v225 = vld [vmem:[%s200 + $0x30] sm:$0xf]
      %v226 = vld [vmem:[%s200 + $0x34] sm:$0xf]
      %v227 = vld [vmem:[%s200 + $0x38] sm:$0xf]
      %v228 = vld [vmem:[%s200 + $0x3c] sm:$0xf]
      %v229 = vld [vmem:[%s200 + $0x40] sm:$0xf]
      %v230 = vld [vmem:[%s200 + $0x44] sm:$0xf]
      %v231 = vld [vmem:[%s200 + $0x48] sm:$0xf]
      %v232 = vld [vmem:[%s200 + $0x4c] sm:$0xf]
      %v233 = vld [vmem:[%s200 + $0x50] sm:$0xf]
      %v234 = vld [vmem:[%s200 + $0x54] sm:$0xf]
      %v235 = vld [vmem:[%s200 + $0x58] sm:$0xf]
      %v236 = vld [vmem:[%s200 + $0x5c] sm:$0xf]
      %v237 = vld [vmem:[%s200 + $0x60] sm:$0xf]
      %v238 = vld [vmem:[%s200 + $0x64] sm:$0xf]
      %v239 = vld [vmem:[%s200 + $0x68] sm:$0xf]
      %v240 = vld [vmem:[%s200 + $0x6c] sm:$0xf]
      %v241 = vld [vmem:[%s200 + $0x70] sm:$0xf]
      %v242 = vld [vmem:[%s200 + $0x74] sm:$0xf]
      %v243 = vld [vmem:[%s200 + $0x78] sm:$0xf]
      %v244 = vld [vmem:[%s200 + $0x7c] sm:$0xf]
      %v245 = vld [vmem:[%s200 + $0x80] sm:$0xf]
      %v246 = vld [vmem:[%s200 + $0x84] sm:$0xf]
      %v247 = vld [vmem:[%s200 + $0x88] sm:$0xf]
      %v248 = vld [vmem:[%s200 + $0x8c] sm:$0xf]
      %v249 = vld [vmem:[%s200 + $0x90] sm:$0xf]
      %v250 = vld [vmem:[%s200 + $0x94] sm:$0xf]
      %v251 = vld [vmem:[%s200 + $0x98] sm:$0xf]
      %v252 = vld [vmem:[%s200 + $0x9c] sm:$0xf]
      %v253 = vld [vmem:[%s200 + $0xa0] sm:$0xf]
      %v254 = vld [vmem:[%s200 + $0xa4] sm:$0xf]
      %v255 = vld [vmem:[%s200 + $0xa8] sm:$0xf]
      %v256 = vld [vmem:[%s200 + $0xac] sm:$0xf]
      %v257 = vld [vmem:[%s200 + $0xb0] sm:$0xf]
      %v258 = vld [vmem:[%s200 + $0xb4] sm:$0xf]
      %v259 = vld [vmem:[%s200 + $0xb8] sm:$0xf]
      %v260 = vld [vmem:[%s200 + $0xbc] sm:$0xf]
      %v261 = vld [vmem:[%s200 + $0xc0] sm:$0xf]
      %v262 = vld [vmem:[%s200 + $0xc4] sm:$0xf]
      %v263 = vld [vmem:[%s200 + $0xc8] sm:$0xf]
      %v264 = vld [vmem:[%s200 + $0xcc] sm:$0xf]
      %v265 = vld [vmem:[%s200 + $0xd0] sm:$0xf]
      %v266 = vld [vmem:[%s200 + $0xd4] sm:$0xf]
      %v267 = vld [vmem:[%s200 + $0xd8] sm:$0xf]
      %v268 = vld [vmem:[%s200 + $0xdc] sm:$0xf]
      %v269 = vld [vmem:[%s200 + $0xe0] sm:$0xf]
      %v270 = vld [vmem:[%s200 + $0xe4] sm:$0xf]
      %v271 = vld [vmem:[%s200 + $0xe8] sm:$0xf]
      %v272 = vld [vmem:[%s200 + $0xec] sm:$0xf]
      %v273 = vld [vmem:[%s200 + $0xf0] sm:$0xf]
      %v274 = vld [vmem:[%s200 + $0xf4] sm:$0xf]
      %v275 = vld [vmem:[%s200 + $0xf8] sm:$0xf]
      %v276 = vld [vmem:[%s200 + $0xfc] sm:$0xf]
      %v277 = vld [vmem:[%s200 + $0x100] sm:$0xf]
      %v278 = vld [vmem:[%s200 + $0x104] sm:$0xf]
      %v279 = vld [vmem:[%s200 + $0x108] sm:$0xf]
      %v280 = vld [vmem:[%s200 + $0x10c] sm:$0xf]
      %v281 = vld [vmem:[%s200 + $0x110] sm:$0xf]
      %v282 = vld [vmem:[%s200 + $0x114] sm:$0xf]
      %v283 = vld [vmem:[%s200 + $0x118] sm:$0xf]
      %v284 = vld [vmem:[%s200 + $0x11c] sm:$0xf]
      %v285 = vld [vmem:[%s200 + $0x120] sm:$0xf]
      %v286 = vld [vmem:[%s200 + $0x124] sm:$0xf]
      %v287 = vld [vmem:[%s200 + $0x128] sm:$0xf]
      %v288 = vld [vmem:[%s200 + $0x12c] sm:$0xf]
      %v289 = vld [vmem:[%s200 + $0x130] sm:$0xf]
      %v290 = vld [vmem:[%s200 + $0x134] sm:$0xf]
      %v291 = vld [vmem:[%s200 + $0x138] sm:$0xf]
      %v292 = vld [vmem:[%s200 + $0x13c] sm:$0xf]
      %v293 = vld [vmem:[%s200 + $0x140] sm:$0xf]
      %v294 = vld [vmem:[%s200 + $0x144] sm:$0xf]
      %v295 = vld [vmem:[%s200 + $0x148] sm:$0xf]
      %v296 = vld [vmem:[%s200 + $0x14c] sm:$0xf]
      %v297 = vld [vmem:[%s200 + $0x150] sm:$0xf]
      %v298 = vld [vmem:[%s200 + $0x154] sm:$0xf]
      %v299 = vld [vmem:[%s200 + $0x158] sm:$0xf]
      %v300 = vld [vmem:[%s200 + $0x15c] sm:$0xf]
      %v301 = vld [vmem:[%s200 + $0x160] sm:$0xf]
      %v302 = vld [vmem:[%s200 + $0x164] sm:$0xf]
      %v303 = vld [vmem:[%s200 + $0x168] sm:$0xf]
      %v304 = vld [vmem:[%s200 + $0x16c] sm:$0xf]
      %v305 = vld [vmem:[%s200 + $0x170] sm:$0xf]
      %v306 = vld [vmem:[%s200 + $0x174] sm:$0xf]
      %v307 = vld [vmem:[%s200 + $0x178] sm:$0xf]
      %v308 = vld [vmem:[%s200 + $0x17c] sm:$0xf]
      %v309 = vld [vmem:[%s200 + $0x180] sm:$0xf]
      %v310 = vld [vmem:[%s200 + $0x184] sm:$0xf]
      %v311 = vld [vmem:[%s200 + $0x188] sm:$0xf]
      %v312 = vld [vmem:[%s200 + $0x18c] sm:$0xf]
      %v313 = vld [vmem:[%s200 + $0x190] sm:$0xf]
      %v314 = vld [vmem:[%s200 + $0x194] sm:$0xf]
      %v315 = vld [vmem:[%s200 + $0x198] sm:$0xf]
      %v316 = vld [vmem:[%s200 + $0x19c] sm:$0xf]
      %v317 = vld [vmem:[%s200 + $0x1a0] sm:$0xf]
      %v318 = vld [vmem:[%s200 + $0x1a4] sm:$0xf]
      %v319 = vld [vmem:[%s200 + $0x1a8] sm:$0xf]
      %v320 = vld [vmem:[%s200 + $0x1ac] sm:$0xf]
      %v321 = vld [vmem:[%s200 + $0x1b0] sm:$0xf]
      %v322 = vld [vmem:[%s200 + $0x1b4] sm:$0xf]
      %v323 = vld [vmem:[%s200 + $0x1b8] sm:$0xf]
      %v324 = vld [vmem:[%s200 + $0x1bc] sm:$0xf]
      %v325 = vld [vmem:[%s200 + $0x1c0] sm:$0xf]
      %v326 = vld [vmem:[%s200 + $0x1c4] sm:$0xf]
      %v327 = vld [vmem:[%s200 + $0x1c8] sm:$0xf]
      %v328 = vld [vmem:[%s200 + $0x1cc] sm:$0xf]
      %v329 = vld [vmem:[%s200 + $0x1d0] sm:$0xf]
      %v330 = vld [vmem:[%s200 + $0x1d4] sm:$0xf]
      %v331 = vld [vmem:[%s200 + $0x1d8] sm:$0xf]
      %v332 = vld [vmem:[%s200 + $0x1dc] sm:$0xf]
      %v333 = vld [vmem:[%s200 + $0x1e0] sm:$0xf]
      %v334 = vld [vmem:[%s200 + $0x1e4] sm:$0xf]
      %v335 = vld [vmem:[%s200 + $0x1e8] sm:$0xf]
      %v336 = vld [vmem:[%s200 + $0x1ec] sm:$0xf]
      %v337 = vld [vmem:[%s200 + $0x1f0] sm:$0xf]
      %v338 = vld [vmem:[%s200 + $0x1f4] sm:$0xf]
      %v339 = vld [vmem:[%s200 + $0x1f8] sm:$0xf]
      %v340 = vld [vmem:[%s200 + $0x1fc] sm:$0xf]
      %v341 = vld [vmem:[%s1] sm:$0x3]
      %v342 = vld [vmem:[%s2] sm:$0x1]
      %v344 = vlaneseq
      %v345 = vshrl.u32 %v344, 7
      %v346 = vsub.s32 0, %v345
      %v347 = vrot.slane %v342, %v346
      %v477 = vunpack.c.l.b16 %v213
      %v478 = vunpack.c.l.b16 %v214
      %v479 = vunpack.c.l.b16 %v215
      %v480 = vunpack.c.l.b16 %v216
      %v481 = vunpack.c.l.b16 %v217
      %v482 = vunpack.c.l.b16 %v218
      %v483 = vunpack.c.l.b16 %v219
      %v484 = vunpack.c.l.b16 %v220
      %v485 = vunpack.c.l.b16 %v221
      %v486 = vunpack.c.l.b16 %v222
      %v487 = vunpack.c.l.b16 %v223
      %v488 = vunpack.c.l.b16 %v224
      %v489 = vunpack.c.l.b16 %v225
      %v490 = vunpack.c.l.b16 %v226
      %v491 = vunpack.c.l.b16 %v227
      %v492 = vunpack.c.l.b16 %v228
      %v493 = vunpack.c.l.b16 %v229
      %v494 = vunpack.c.l.b16 %v230
      %v495 = vunpack.c.l.b16 %v231
      %v496 = vunpack.c.l.b16 %v232
      %v497 = vunpack.c.l.b16 %v233
      %v498 = vunpack.c.l.b16 %v234
      %v499 = vunpack.c.l.b16 %v235
      %v500 = vunpack.c.l.b16 %v236
      %v501 = vunpack.c.l.b16 %v237
      %v502 = vunpack.c.l.b16 %v238
      %v503 = vunpack.c.l.b16 %v239
      %v504 = vunpack.c.l.b16 %v240
      %v505 = vunpack.c.l.b16 %v241
      %v506 = vunpack.c.l.b16 %v242
      %v507 = vunpack.c.l.b16 %v243
      %v508 = vunpack.c.l.b16 %v244
      %v509 = vunpack.c.l.b16 %v245
      %v510 = vunpack.c.l.b16 %v246
      %v511 = vunpack.c.l.b16 %v247
      %v512 = vunpack.c.l.b16 %v248
      %v513 = vunpack.c.l.b16 %v249
      %v514 = vunpack.c.l.b16 %v250
      %v515 = vunpack.c.l.b16 %v251
      %v516 = vunpack.c.l.b16 %v252
      %v517 = vunpack.c.l.b16 %v253
      %v518 = vunpack.c.l.b16 %v254
      %v519 = vunpack.c.l.b16 %v255
      %v520 = vunpack.c.l.b16 %v256
      %v521 = vunpack.c.l.b16 %v257
      %v522 = vunpack.c.l.b16 %v258
      %v523 = vunpack.c.l.b16 %v259
      %v524 = vunpack.c.l.b16 %v260
      %v525 = vunpack.c.l.b16 %v261
      %v526 = vunpack.c.l.b16 %v262
      %v527 = vunpack.c.l.b16 %v263
      %v528 = vunpack.c.l.b16 %v264
      %v529 = vunpack.c.l.b16 %v265
      %v530 = vunpack.c.l.b16 %v266
      %v531 = vunpack.c.l.b16 %v267
      %v532 = vunpack.c.l.b16 %v268
      %v533 = vunpack.c.l.b16 %v269
      %v534 = vunpack.c.l.b16 %v270
      %v535 = vunpack.c.l.b16 %v271
      %v536 = vunpack.c.l.b16 %v272
      %v537 = vunpack.c.l.b16 %v273
      %v538 = vunpack.c.l.b16 %v274
      %v539 = vunpack.c.l.b16 %v275
      %v540 = vunpack.c.l.b16 %v276
      %v541 = vunpack.c.l.b16 %v277
      %v542 = vunpack.c.l.b16 %v278
      %v543 = vunpack.c.l.b16 %v279
      %v544 = vunpack.c.l.b16 %v280
      %v545 = vunpack.c.l.b16 %v281
      %v546 = vunpack.c.l.b16 %v282
      %v547 = vunpack.c.l.b16 %v283
      %v548 = vunpack.c.l.b16 %v284
      %v549 = vunpack.c.l.b16 %v285
      %v550 = vunpack.c.l.b16 %v286
      %v551 = vunpack.c.l.b16 %v287
      %v552 = vunpack.c.l.b16 %v288
      %v553 = vunpack.c.l.b16 %v289
      %v554 = vunpack.c.l.b16 %v290
      %v555 = vunpack.c.l.b16 %v291
      %v556 = vunpack.c.l.b16 %v292
      %v557 = vunpack.c.l.b16 %v293
      %v558 = vunpack.c.l.b16 %v294
      %v559 = vunpack.c.l.b16 %v295
      %v560 = vunpack.c.l.b16 %v296
      %v561 = vunpack.c.l.b16 %v297
      %v562 = vunpack.c.l.b16 %v298
      %v563 = vunpack.c.l.b16 %v299
      %v564 = vunpack.c.l.b16 %v300
      %v565 = vunpack.c.l.b16 %v301
      %v566 = vunpack.c.l.b16 %v302
      %v567 = vunpack.c.l.b16 %v303
      %v568 = vunpack.c.l.b16 %v304
      %v569 = vunpack.c.l.b16 %v305
      %v570 = vunpack.c.l.b16 %v306
      %v571 = vunpack.c.l.b16 %v307
      %v572 = vunpack.c.l.b16 %v308
      %v573 = vunpack.c.l.b16 %v309
      %v574 = vunpack.c.l.b16 %v310
      %v575 = vunpack.c.l.b16 %v311
      %v576 = vunpack.c.l.b16 %v312
      %v577 = vunpack.c.l.b16 %v313
      %v578 = vunpack.c.l.b16 %v314
      %v579 = vunpack.c.l.b16 %v315
      %v580 = vunpack.c.l.b16 %v316
      %v581 = vunpack.c.l.b16 %v317
      %v582 = vunpack.c.l.b16 %v318
      %v583 = vunpack.c.l.b16 %v319
      %v584 = vunpack.c.l.b16 %v320
      %v585 = vunpack.c.l.b16 %v321
      %v586 = vunpack.c.l.b16 %v322
      %v587 = vunpack.c.l.b16 %v323
      %v588 = vunpack.c.l.b16 %v324
      %v589 = vunpack.c.l.b16 %v325
      %v590 = vunpack.c.l.b16 %v326
      %v591 = vunpack.c.l.b16 %v327
      %v592 = vunpack.c.l.b16 %v328
      %v593 = vunpack.c.l.b16 %v329
      %v594 = vunpack.c.l.b16 %v330
      %v595 = vunpack.c.l.b16 %v331
      %v596 = vunpack.c.l.b16 %v332
      %v597 = vunpack.c.l.b16 %v333
      %v598 = vunpack.c.l.b16 %v334
      %v599 = vunpack.c.l.b16 %v335
      %v600 = vunpack.c.l.b16 %v336
      %v601 = vunpack.c.l.b16 %v337
      %v602 = vunpack.c.l.b16 %v338
      %v603 = vunpack.c.l.b16 %v339
      %v604 = vunpack.c.l.b16 %v340
      %v605 = vpack.c.b16 %v478, %v477
      %v606 = vpack.c.b16 %v480, %v479
      %v607 = vpack.c.b16 %v482, %v481
      %v608 = vpack.c.b16 %v484, %v483
      %v609 = vpack.c.b16 %v486, %v485
      %v610 = vpack.c.b16 %v488, %v487
      %v611 = vpack.c.b16 %v490, %v489
      %v612 = vpack.c.b16 %v492, %v491
      %v613 = vpack.c.b16 %v494, %v493
      %v614 = vpack.c.b16 %v496, %v495
      %v615 = vpack.c.b16 %v498, %v497
      %v616 = vpack.c.b16 %v500, %v499
      %v617 = vpack.c.b16 %v502, %v501
      %v618 = vpack.c.b16 %v504, %v503
      %v619 = vpack.c.b16 %v506, %v505
      %v620 = vpack.c.b16 %v508, %v507
      %v621 = vpack.c.b16 %v510, %v509
      %v622 = vpack.c.b16 %v512, %v511
      %v623 = vpack.c.b16 %v514, %v513
      %v624 = vpack.c.b16 %v516, %v515
      %v625 = vpack.c.b16 %v518, %v517
      %v626 = vpack.c.b16 %v520, %v519
      %v627 = vpack.c.b16 %v522, %v521
      %v628 = vpack.c.b16 %v524, %v523
      %v629 = vpack.c.b16 %v526, %v525
      %v630 = vpack.c.b16 %v528, %v527
      %v631 = vpack.c.b16 %v530, %v529
      %v632 = vpack.c.b16 %v532, %v531
      %v633 = vpack.c.b16 %v534, %v533
      %v634 = vpack.c.b16 %v536, %v535
      %v635 = vpack.c.b16 %v538, %v537
      %v636 = vpack.c.b16 %v540, %v539
      %v637 = vpack.c.b16 %v542, %v541
      %v638 = vpack.c.b16 %v544, %v543
      %v639 = vpack.c.b16 %v546, %v545
      %v640 = vpack.c.b16 %v548, %v547
      %v641 = vpack.c.b16 %v550, %v549
      %v642 = vpack.c.b16 %v552, %v551
      %v643 = vpack.c.b16 %v554, %v553
      %v644 = vpack.c.b16 %v556, %v555
      %v645 = vpack.c.b16 %v558, %v557
      %v646 = vpack.c.b16 %v560, %v559
      %v647 = vpack.c.b16 %v562, %v561
      %v648 = vpack.c.b16 %v564, %v563
      %v649 = vpack.c.b16 %v566, %v565
      %v650 = vpack.c.b16 %v568, %v567
      %v651 = vpack.c.b16 %v570, %v569
      %v652 = vpack.c.b16 %v572, %v571
      %v653 = vpack.c.b16 %v574, %v573
      %v654 = vpack.c.b16 %v576, %v575
      %v655 = vpack.c.b16 %v578, %v577
      %v656 = vpack.c.b16 %v580, %v579
      %v657 = vpack.c.b16 %v582, %v581
      %v658 = vpack.c.b16 %v584, %v583
      %v659 = vpack.c.b16 %v586, %v585
      %v660 = vpack.c.b16 %v588, %v587
      %v661 = vpack.c.b16 %v590, %v589
      %v662 = vpack.c.b16 %v592, %v591
      %v663 = vpack.c.b16 %v594, %v593
      %v664 = vpack.c.b16 %v596, %v595
      %v665 = vpack.c.b16 %v598, %v597
      %v666 = vpack.c.b16 %v600, %v599
      %v667 = vpack.c.b16 %v602, %v601
      %v668 = vpack.c.b16 %v604, %v603
      %vm669 = vcmask 31744
      %v671 = vsel %vm669, %v605, 0
      %v674 = vsel %vm669, %v606, 0
      %v677 = vsel %vm669, %v607, 0
      %v680 = vsel %vm669, %v608, 0
      %v683 = vsel %vm669, %v609, 0
      %v686 = vsel %vm669, %v610, 0
      %v689 = vsel %vm669, %v611, 0
      %v692 = vsel %vm669, %v612, 0
      %v695 = vsel %vm669, %v613, 0
      %v698 = vsel %vm669, %v614, 0
      %v701 = vsel %vm669, %v615, 0
      %v704 = vsel %vm669, %v616, 0
      %v707 = vsel %vm669, %v617, 0
      %v710 = vsel %vm669, %v618, 0
      %v713 = vsel %vm669, %v619, 0
      %v716 = vsel %vm669, %v620, 0
      %v719 = vsel %vm669, %v621, 0
      %v722 = vsel %vm669, %v622, 0
      %v725 = vsel %vm669, %v623, 0
      %v728 = vsel %vm669, %v624, 0
      %v731 = vsel %vm669, %v625, 0
      %v734 = vsel %vm669, %v626, 0
      %v737 = vsel %vm669, %v627, 0
      %v740 = vsel %vm669, %v628, 0
      %v743 = vsel %vm669, %v629, 0
      %v746 = vsel %vm669, %v630, 0
      %v749 = vsel %vm669, %v631, 0
      %v752 = vsel %vm669, %v632, 0
      %v755 = vsel %vm669, %v633, 0
      %v758 = vsel %vm669, %v634, 0
      %v761 = vsel %vm669, %v635, 0
      %v764 = vsel %vm669, %v636, 0
      %v767 = vsel %vm669, %v637, 0
      %v770 = vsel %vm669, %v638, 0
      %v773 = vsel %vm669, %v639, 0
      %v776 = vsel %vm669, %v640, 0
      %v779 = vsel %vm669, %v641, 0
      %v782 = vsel %vm669, %v642, 0
      %v785 = vsel %vm669, %v643, 0
      %v788 = vsel %vm669, %v644, 0
      %v791 = vsel %vm669, %v645, 0
      %v794 = vsel %vm669, %v646, 0
      %v797 = vsel %vm669, %v647, 0
      %v800 = vsel %vm669, %v648, 0
      %v803 = vsel %vm669, %v649, 0
      %v806 = vsel %vm669, %v650, 0
      %v809 = vsel %vm669, %v651, 0
      %v812 = vsel %vm669, %v652, 0
      %v815 = vsel %vm669, %v653, 0
      %v818 = vsel %vm669, %v654, 0
      %v821 = vsel %vm669, %v655, 0
      %v824 = vsel %vm669, %v656, 0
      %v827 = vsel %vm669, %v657, 0
      %v830 = vsel %vm669, %v658, 0
      %v833 = vsel %vm669, %v659, 0
      %v836 = vsel %vm669, %v660, 0
      %v839 = vsel %vm669, %v661, 0
      %v842 = vsel %vm669, %v662, 0
      %v845 = vsel %vm669, %v663, 0
      %v848 = vsel %vm669, %v664, 0
      %v851 = vsel %vm669, %v665, 0
      %v854 = vsel %vm669, %v666, 0
      %v857 = vsel %vm669, %v667, 0
      %v860 = vsel %vm669, %v668, 0
      %vm862 = vcmask 1041408
      %v864 = vsel %vm862, %v341, 0
      %866 = vmatprep.subr.bf16.mxu0 0
      %867 = vmatpush1.bf16.msra.mxu0 %v864
      %868 = vmatprep.subr.bf16.mxu0 0
      %869 = vmatpush1.bf16.msra.mxu0 0
      %870 = vmatprep.subr.bf16.mxu0 0
      %871 = vmatpush1.bf16.msra.mxu0 0
      %872 = vmatprep.subr.bf16.mxu0 0
      %873 = vmatpush1.bf16.msra.mxu0 0
      %874 = vmatprep.subr.bf16.mxu0 0
      %875 = vmatpush1.bf16.msra.mxu0 0
      %876 = vmatprep.subr.bf16.mxu0 0
      %877 = vmatpush1.bf16.msra.mxu0 0
      %878 = vmatprep.subr.bf16.mxu0 0
      %879 = vmatpush1.bf16.msra.mxu0 0
      %880 = vmatprep.subr.bf16.mxu0 0
      %881 = vmatpush1.bf16.msra.mxu0 0
      %882 = vmatprep.subr.bf16.mxu0 0
      %883 = vmatpush1.bf16.msra.mxu0 0
      %884 = vmatprep.subr.bf16.mxu0 0
      %885 = vmatpush1.bf16.msra.mxu0 0
      %886 = vmatprep.subr.bf16.mxu0 0
      %887 = vmatpush1.bf16.msra.mxu0 0
      %888 = vmatprep.subr.bf16.mxu0 0
      %889 = vmatpush1.bf16.msra.mxu0 0
      %890 = vmatprep.subr.bf16.mxu0 0
      %891 = vmatpush1.bf16.msra.mxu0 0
      %892 = vmatprep.subr.bf16.mxu0 0
      %893 = vmatpush1.bf16.msra.mxu0 0
      %894 = vmatprep.subr.bf16.mxu0 0
      %895 = vmatpush1.bf16.msra.mxu0 0
      %896 = vmatprep.subr.bf16.mxu0 0
      %897 = vmatpush1.bf16.msra.mxu0 0
      %898 = vmatprep.mubr.bf16.mxu0 0
      %899 = vmatmul.mubr.bf16.gmra.mrb[0].mxu0 %v671
      %v900 = vpop.f32.mrb[0].mxu0
      %v901 = vadd.f32 %v347, %v900
      %v902 = vpop.f32.mrb[0].mxu0
      %v903 = vpop.f32.mrb[0].mxu0
      %v904 = vadd.f32 %v347, %v903
      %v905 = vpop.f32.mrb[0].mxu0
      %906 = vmatprep.mubr.bf16.mxu0 0
      %907 = vmatmul.mubr.bf16.gmra.mrb[0].mxu0 %v674
      %v908 = vpop.f32.mrb[0].mxu0
      %v909 = vadd.f32 %v347, %v908
      %v910 = vpop.f32.mrb[0].mxu0
      %v911 = vpop.f32.mrb[0].mxu0
      %v912 = vadd.f32 %v347, %v911
      %v913 = vpop.f32.mrb[0].mxu0
      %914 = vmatprep.mubr.bf16.mxu0 0
      %915 = vmatmul.mubr.bf16.gmra.mrb[0].mxu0 %v677
      %v916 = vpop.f32.mrb[0].mxu0
      %v917 = vadd.f32 %v347, %v916
      %v918 = vpop.f32.mrb[0].mxu0
      %v919 = vpop.f32.mrb[0].mxu0
      %v920 = vadd.f32 %v347, %v919
      %v921 = vpop.f32.mrb[0].mxu0
      %922 = vmatprep.mubr.bf16.mxu0 0
      %923 = vmatmul.mubr.bf16.gmra.mrb[0].mxu0 %v680
      %v924 = vpop.f32.mrb[0].mxu0
      %v925 = vadd.f32 %v347, %v924
      %v926 = vpop.f32.mrb[0].mxu0
      %v927 = vpop.f32.mrb[0].mxu0
      %v928 = vadd.f32 %v347, %v927
      %v929 = vpop.f32.mrb[0].mxu0
      %930 = vmatprep.mubr.bf16.mxu0 0
      %931 = vmatmul.mubr.bf16.gmra.mrb[0].mxu0 %v683
      %v932 = vpop.f32.mrb[0].mxu0
      %v933 = vadd.f32 %v347, %v932
      %v934 = vpop.f32.mrb[0].mxu0
      %v935 = vpop.f32.mrb[0].mxu0
      %v936 = vadd.f32 %v347, %v935
      %v937 = vpop.f32.mrb[0].mxu0
      %938 = vmatprep.mubr.bf16.mxu0 0
      %939 = vmatmul.mubr.bf16.gmra.mrb[0].mxu0 %v686
      %v940 = vpop.f32.mrb[0].mxu0
      %v941 = vadd.f32 %v347, %v940
      %v942 = vpop.f32.mrb[0].mxu0
      %v943 = vpop.f32.mrb[0].mxu0
      %v944 = vadd.f32 %v347, %v943
      %v945 = vpop.f32.mrb[0].mxu0
      %946 = vmatprep.mubr.bf16.mxu0 0
      %947 = vmatmul.mubr.bf16.gmra.mrb[0].mxu0 %v689
      %v948 = vpop.f32.mrb[0].mxu0
      %v949 = vadd.f32 %v347, %v948
      %v950 = vpop.f32.mrb[0].mxu0
      %v951 = vpop.f32.mrb[0].mxu0
      %v952 = vadd.f32 %v347, %v951
      %v953 = vpop.f32.mrb[0].mxu0
      %954 = vmatprep.mubr.bf16.mxu0 0
      %955 = vmatmul.mubr.bf16.gmra.mrb[0].mxu0 %v692
      %v956 = vpop.f32.mrb[0].mxu0
      %v957 = vadd.f32 %v347, %v956
      %v958 = vpop.f32.mrb[0].mxu0
      %v959 = vpop.f32.mrb[0].mxu0
      %v960 = vadd.f32 %v347, %v959
      %v961 = vpop.f32.mrb[0].mxu0
      %962 = vmatprep.mubr.bf16.mxu0 0
      %963 = vmatmul.mubr.bf16.gmra.mrb[0].mxu0 %v695
      %v964 = vpop.f32.mrb[0].mxu0
      %v965 = vadd.f32 %v347, %v964
      %v966 = vpop.f32.mrb[0].mxu0
      %v967 = vpop.f32.mrb[0].mxu0
      %v968 = vadd.f32 %v347, %v967
      %v969 = vpop.f32.mrb[0].mxu0
      %970 = vmatprep.mubr.bf16.mxu0 0
      %971 = vmatmul.mubr.bf16.gmra.mrb[0].mxu0 %v698
      %v972 = vpop.f32.mrb[0].mxu0
      %v973 = vadd.f32 %v347, %v972
      %v974 = vpop.f32.mrb[0].mxu0
      %v975 = vpop.f32.mrb[0].mxu0
      %v976 = vadd.f32 %v347, %v975
      %v977 = vpop.f32.mrb[0].mxu0
      %978 = vmatprep.mubr.bf16.mxu0 0
      %979 = vmatmul.mubr.bf16.gmra.mrb[0].mxu0 %v701
      %v980 = vpop.f32.mrb[0].mxu0
      %v981 = vadd.f32 %v347, %v980
      %v982 = vpop.f32.mrb[0].mxu0
      %v983 = vpop.f32.mrb[0].mxu0
      %v984 = vadd.f32 %v347, %v983
      %v985 = vpop.f32.mrb[0].mxu0
      %986 = vmatprep.mubr.bf16.mxu0 0
      %987 = vmatmul.mubr.bf16.gmra.mrb[0].mxu0 %v704
      %v988 = vpop.f32.mrb[0].mxu0
      %v989 = vadd.f32 %v347, %v988
      %v990 = vpop.f32.mrb[0].mxu0
      %v991 = vpop.f32.mrb[0].mxu0
      %v992 = vadd.f32 %v347, %v991
      %v993 = vpop.f32.mrb[0].mxu0
      %994 = vmatprep.mubr.bf16.mxu0 0
      %995 = vmatmul.mubr.bf16.gmra.mrb[0].mxu0 %v707
      %v996 = vpop.f32.mrb[0].mxu0
      %v997 = vadd.f32 %v347, %v996
      %v998 = vpop.f32.mrb[0].mxu0
      %v999 = vpop.f32.mrb[0].mxu0
      %v1000 = vadd.f32 %v347, %v999
      %v1001 = vpop.f32.mrb[0].mxu0
      %1002 = vmatprep.mubr.bf16.mxu0 0
      %1003 = vmatmul.mubr.bf16.gmra.mrb[0].mxu0 %v710
      %v1004 = vpop.f32.mrb[0].mxu0
      %v1005 = vadd.f32 %v347, %v1004
      %v1006 = vpop.f32.mrb[0].mxu0
      %v1007 = vpop.f32.mrb[0].mxu0
      %v1008 = vadd.f32 %v347, %v1007
      %v1009 = vpop.f32.mrb[0].mxu0
      %1010 = vmatprep.mubr.bf16.mxu0 0
      %1011 = vmatmul.mubr.bf16.gmra.mrb[0].mxu0 %v713
      %v1012 = vpop.f32.mrb[0].mxu0
      %v1013 = vadd.f32 %v347, %v1012
      %v1014 = vpop.f32.mrb[0].mxu0
      %v1015 = vpop.f32.mrb[0].mxu0
      %v1016 = vadd.f32 %v347, %v1015
      %v1017 = vpop.f32.mrb[0].mxu0
      %1018 = vmatprep.mubr.bf16.mxu0 0
      %1019 = vmatmul.mubr.bf16.gmra.mrb[0].mxu0 %v716
      %v1020 = vpop.f32.mrb[0].mxu0
      %v1021 = vadd.f32 %v347, %v1020
      %v1022 = vpop.f32.mrb[0].mxu0
      %v1023 = vpop.f32.mrb[0].mxu0
      %v1024 = vadd.f32 %v347, %v1023
      %v1025 = vpop.f32.mrb[0].mxu0
      %1026 = vmatprep.mubr.bf16.mxu0 0
      %1027 = vmatmul.mubr.bf16.gmra.mrb[0].mxu0 %v719
      %v1028 = vpop.f32.mrb[0].mxu0
      %v1029 = vadd.f32 %v347, %v1028
      %v1030 = vpop.f32.mrb[0].mxu0
      %v1031 = vpop.f32.mrb[0].mxu0
      %v1032 = vadd.f32 %v347, %v1031
      %v1033 = vpop.f32.mrb[0].mxu0
      %1034 = vmatprep.mubr.bf16.mxu0 0
      %1035 = vmatmul.mubr.bf16.gmra.mrb[0].mxu0 %v722
      %v1036 = vpop.f32.mrb[0].mxu0
      %v1037 = vadd.f32 %v347, %v1036
      %v1038 = vpop.f32.mrb[0].mxu0
      %v1039 = vpop.f32.mrb[0].mxu0
      %v1040 = vadd.f32 %v347, %v1039
      %v1041 = vpop.f32.mrb[0].mxu0
      %1042 = vmatprep.mubr.bf16.mxu0 0
      %1043 = vmatmul.mubr.bf16.gmra.mrb[0].mxu0 %v725
      %v1044 = vpop.f32.mrb[0].mxu0
      %v1045 = vadd.f32 %v347, %v1044
      %v1046 = vpop.f32.mrb[0].mxu0
      %v1047 = vpop.f32.mrb[0].mxu0
      %v1048 = vadd.f32 %v347, %v1047
      %v1049 = vpop.f32.mrb[0].mxu0
      %1050 = vmatprep.mubr.bf16.mxu0 0
      %1051 = vmatmul.mubr.bf16.gmra.mrb[0].mxu0 %v728
      %v1052 = vpop.f32.mrb[0].mxu0
      %v1053 = vadd.f32 %v347, %v1052
      %v1054 = vpop.f32.mrb[0].mxu0
      %v1055 = vpop.f32.mrb[0].mxu0
      %v1056 = vadd.f32 %v347, %v1055
      %v1057 = vpop.f32.mrb[0].mxu0
      %1058 = vmatprep.mubr.bf16.mxu0 0
      %1059 = vmatmul.mubr.bf16.gmra.mrb[0].mxu0 %v731
      %v1060 = vpop.f32.mrb[0].mxu0
      %v1061 = vadd.f32 %v347, %v1060
      %v1062 = vpop.f32.mrb[0].mxu0
      %v1063 = vpop.f32.mrb[0].mxu0
      %v1064 = vadd.f32 %v347, %v1063
      %v1065 = vpop.f32.mrb[0].mxu0
      %1066 = vmatprep.mubr.bf16.mxu0 0
      %1067 = vmatmul.mubr.bf16.gmra.mrb[0].mxu0 %v734
      %v1068 = vpop.f32.mrb[0].mxu0
      %v1069 = vadd.f32 %v347, %v1068
      %v1070 = vpop.f32.mrb[0].mxu0
      %v1071 = vpop.f32.mrb[0].mxu0
      %v1072 = vadd.f32 %v347, %v1071
      %v1073 = vpop.f32.mrb[0].mxu0
      %1074 = vmatprep.mubr.bf16.mxu0 0
      %1075 = vmatmul.mubr.bf16.gmra.mrb[0].mxu0 %v737
      %v1076 = vpop.f32.mrb[0].mxu0
      %v1077 = vadd.f32 %v347, %v1076
      %v1078 = vpop.f32.mrb[0].mxu0
      %v1079 = vpop.f32.mrb[0].mxu0
      %v1080 = vadd.f32 %v347, %v1079
      %v1081 = vpop.f32.mrb[0].mxu0
      %1082 = vmatprep.mubr.bf16.mxu0 0
      %1083 = vmatmul.mubr.bf16.gmra.mrb[0].mxu0 %v740
      %v1084 = vpop.f32.mrb[0].mxu0
      %v1085 = vadd.f32 %v347, %v1084
      %v1086 = vpop.f32.mrb[0].mxu0
      %v1087 = vpop.f32.mrb[0].mxu0
      %v1088 = vadd.f32 %v347, %v1087
      %v1089 = vpop.f32.mrb[0].mxu0
      %1090 = vmatprep.mubr.bf16.mxu0 0
      %1091 = vmatmul.mubr.bf16.gmra.mrb[0].mxu0 %v743
      %v1092 = vpop.f32.mrb[0].mxu0
      %v1093 = vadd.f32 %v347, %v1092
      %v1094 = vpop.f32.mrb[0].mxu0
      %v1095 = vpop.f32.mrb[0].mxu0
      %v1096 = vadd.f32 %v347, %v1095
      %v1097 = vpop.f32.mrb[0].mxu0
      %1098 = vmatprep.mubr.bf16.mxu0 0
      %1099 = vmatmul.mubr.bf16.gmra.mrb[0].mxu0 %v746
      %v1100 = vpop.f32.mrb[0].mxu0
      %v1101 = vadd.f32 %v347, %v1100
      %v1102 = vpop.f32.mrb[0].mxu0
      %v1103 = vpop.f32.mrb[0].mxu0
      %v1104 = vadd.f32 %v347, %v1103
      %v1105 = vpop.f32.mrb[0].mxu0
      %1106 = vmatprep.mubr.bf16.mxu0 0
      %1107 = vmatmul.mubr.bf16.gmra.mrb[0].mxu0 %v749
      %v1108 = vpop.f32.mrb[0].mxu0
      %v1109 = vadd.f32 %v347, %v1108
      %v1110 = vpop.f32.mrb[0].mxu0
      %v1111 = vpop.f32.mrb[0].mxu0
      %v1112 = vadd.f32 %v347, %v1111
      %v1113 = vpop.f32.mrb[0].mxu0
      %1114 = vmatprep.mubr.bf16.mxu0 0
      %1115 = vmatmul.mubr.bf16.gmra.mrb[0].mxu0 %v752
      %v1116 = vpop.f32.mrb[0].mxu0
      %v1117 = vadd.f32 %v347, %v1116
      %v1118 = vpop.f32.mrb[0].mxu0
      %v1119 = vpop.f32.mrb[0].mxu0
      %v1120 = vadd.f32 %v347, %v1119
      %v1121 = vpop.f32.mrb[0].mxu0
      %1122 = vmatprep.mubr.bf16.mxu0 0
      %1123 = vmatmul.mubr.bf16.gmra.mrb[0].mxu0 %v755
      %v1124 = vpop.f32.mrb[0].mxu0
      %v1125 = vadd.f32 %v347, %v1124
      %v1126 = vpop.f32.mrb[0].mxu0
      %v1127 = vpop.f32.mrb[0].mxu0
      %v1128 = vadd.f32 %v347, %v1127
      %v1129 = vpop.f32.mrb[0].mxu0
      %1130 = vmatprep.mubr.bf16.mxu0 0
      %1131 = vmatmul.mubr.bf16.gmra.mrb[0].mxu0 %v758
      %v1132 = vpop.f32.mrb[0].mxu0
      %v1133 = vadd.f32 %v347, %v1132
      %v1134 = vpop.f32.mrb[0].mxu0
      %v1135 = vpop.f32.mrb[0].mxu0
      %v1136 = vadd.f32 %v347, %v1135
      %v1137 = vpop.f32.mrb[0].mxu0
      %1138 = vmatprep.mubr.bf16.mxu0 0
      %1139 = vmatmul.mubr.bf16.gmra.mrb[0].mxu0 %v761
      %v1140 = vpop.f32.mrb[0].mxu0
      %v1141 = vadd.f32 %v347, %v1140
      %v1142 = vpop.f32.mrb[0].mxu0
      %v1143 = vpop.f32.mrb[0].mxu0
      %v1144 = vadd.f32 %v347, %v1143
      %v1145 = vpop.f32.mrb[0].mxu0
      %1146 = vmatprep.mubr.bf16.mxu0 0
      %1147 = vmatmul.mubr.bf16.gmra.mrb[0].mxu0 %v764
      %v1148 = vpop.f32.mrb[0].mxu0
      %v1149 = vadd.f32 %v347, %v1148
      %v1150 = vpop.f32.mrb[0].mxu0
      %v1151 = vpop.f32.mrb[0].mxu0
      %v1152 = vadd.f32 %v347, %v1151
      %v1153 = vpop.f32.mrb[0].mxu0
      %1154 = vmatprep.mubr.bf16.mxu0 0
      %1155 = vmatmul.mubr.bf16.gmra.mrb[0].mxu0 %v767
      %v1156 = vpop.f32.mrb[0].mxu0
      %v1157 = vadd.f32 %v347, %v1156
      %v1158 = vpop.f32.mrb[0].mxu0
      %v1159 = vpop.f32.mrb[0].mxu0
      %v1160 = vadd.f32 %v347, %v1159
      %v1161 = vpop.f32.mrb[0].mxu0
      %1162 = vmatprep.mubr.bf16.mxu0 0
      %1163 = vmatmul.mubr.bf16.gmra.mrb[0].mxu0 %v770
      %v1164 = vpop.f32.mrb[0].mxu0
      %v1165 = vadd.f32 %v347, %v1164
      %v1166 = vpop.f32.mrb[0].mxu0
      %v1167 = vpop.f32.mrb[0].mxu0
      %v1168 = vadd.f32 %v347, %v1167
      %v1169 = vpop.f32.mrb[0].mxu0
      %1170 = vmatprep.mubr.bf16.mxu0 0
      %1171 = vmatmul.mubr.bf16.gmra.mrb[0].mxu0 %v773
      %v1172 = vpop.f32.mrb[0].mxu0
      %v1173 = vadd.f32 %v347, %v1172
      %v1174 = vpop.f32.mrb[0].mxu0
      %v1175 = vpop.f32.mrb[0].mxu0
      %v1176 = vadd.f32 %v347, %v1175
      %v1177 = vpop.f32.mrb[0].mxu0
      %1178 = vmatprep.mubr.bf16.mxu0 0
      %1179 = vmatmul.mubr.bf16.gmra.mrb[0].mxu0 %v776
      %v1180 = vpop.f32.mrb[0].mxu0
      %v1181 = vadd.f32 %v347, %v1180
      %v1182 = vpop.f32.mrb[0].mxu0
      %v1183 = vpop.f32.mrb[0].mxu0
      %v1184 = vadd.f32 %v347, %v1183
      %v1185 = vpop.f32.mrb[0].mxu0
      %1186 = vmatprep.mubr.bf16.mxu0 0
      %1187 = vmatmul.mubr.bf16.gmra.mrb[0].mxu0 %v779
      %v1188 = vpop.f32.mrb[0].mxu0
      %v1189 = vadd.f32 %v347, %v1188
      %v1190 = vpop.f32.mrb[0].mxu0
      %v1191 = vpop.f32.mrb[0].mxu0
      %v1192 = vadd.f32 %v347, %v1191
      %v1193 = vpop.f32.mrb[0].mxu0
      %1194 = vmatprep.mubr.bf16.mxu0 0
      %1195 = vmatmul.mubr.bf16.gmra.mrb[0].mxu0 %v782
      %v1196 = vpop.f32.mrb[0].mxu0
      %v1197 = vadd.f32 %v347, %v1196
      %v1198 = vpop.f32.mrb[0].mxu0
      %v1199 = vpop.f32.mrb[0].mxu0
      %v1200 = vadd.f32 %v347, %v1199
      %v1201 = vpop.f32.mrb[0].mxu0
      %1202 = vmatprep.mubr.bf16.mxu0 0
      %1203 = vmatmul.mubr.bf16.gmra.mrb[0].mxu0 %v785
      %v1204 = vpop.f32.mrb[0].mxu0
      %v1205 = vadd.f32 %v347, %v1204
      %v1206 = vpop.f32.mrb[0].mxu0
      %v1207 = vpop.f32.mrb[0].mxu0
      %v1208 = vadd.f32 %v347, %v1207
      %v1209 = vpop.f32.mrb[0].mxu0
      %1210 = vmatprep.mubr.bf16.mxu0 0
      %1211 = vmatmul.mubr.bf16.gmra.mrb[0].mxu0 %v788
      %v1212 = vpop.f32.mrb[0].mxu0
      %v1213 = vadd.f32 %v347, %v1212
      %v1214 = vpop.f32.mrb[0].mxu0
      %v1215 = vpop.f32.mrb[0].mxu0
      %v1216 = vadd.f32 %v347, %v1215
      %v1217 = vpop.f32.mrb[0].mxu0
      %1218 = vmatprep.mubr.bf16.mxu0 0
      %1219 = vmatmul.mubr.bf16.gmra.mrb[0].mxu0 %v791
      %v1220 = vpop.f32.mrb[0].mxu0
      %v1221 = vadd.f32 %v347, %v1220
      %v1222 = vpop.f32.mrb[0].mxu0
      %v1223 = vpop.f32.mrb[0].mxu0
      %v1224 = vadd.f32 %v347, %v1223
      %v1225 = vpop.f32.mrb[0].mxu0
      %1226 = vmatprep.mubr.bf16.mxu0 0
      %1227 = vmatmul.mubr.bf16.gmra.mrb[0].mxu0 %v794
      %v1228 = vpop.f32.mrb[0].mxu0
      %v1229 = vadd.f32 %v347, %v1228
      %v1230 = vpop.f32.mrb[0].mxu0
      %v1231 = vpop.f32.mrb[0].mxu0
      %v1232 = vadd.f32 %v347, %v1231
      %v1233 = vpop.f32.mrb[0].mxu0
      %1234 = vmatprep.mubr.bf16.mxu0 0
      %1235 = vmatmul.mubr.bf16.gmra.mrb[0].mxu0 %v797
      %v1236 = vpop.f32.mrb[0].mxu0
      %v1237 = vadd.f32 %v347, %v1236
      %v1238 = vpop.f32.mrb[0].mxu0
      %v1239 = vpop.f32.mrb[0].mxu0
      %v1240 = vadd.f32 %v347, %v1239
      %v1241 = vpop.f32.mrb[0].mxu0
      %1242 = vmatprep.mubr.bf16.mxu0 0
      %1243 = vmatmul.mubr.bf16.gmra.mrb[0].mxu0 %v800
      %v1244 = vpop.f32.mrb[0].mxu0
      %v1245 = vadd.f32 %v347, %v1244
      %v1246 = vpop.f32.mrb[0].mxu0
      %v1247 = vpop.f32.mrb[0].mxu0
      %v1248 = vadd.f32 %v347, %v1247
      %v1249 = vpop.f32.mrb[0].mxu0
      %1250 = vmatprep.mubr.bf16.mxu0 0
      %1251 = vmatmul.mubr.bf16.gmra.mrb[0].mxu0 %v803
      %v1252 = vpop.f32.mrb[0].mxu0
      %v1253 = vadd.f32 %v347, %v1252
      %v1254 = vpop.f32.mrb[0].mxu0
      %v1255 = vpop.f32.mrb[0].mxu0
      %v1256 = vadd.f32 %v347, %v1255
      %v1257 = vpop.f32.mrb[0].mxu0
      %1258 = vmatprep.mubr.bf16.mxu0 0
      %1259 = vmatmul.mubr.bf16.gmra.mrb[0].mxu0 %v806
      %v1260 = vpop.f32.mrb[0].mxu0
      %v1261 = vadd.f32 %v347, %v1260
      %v1262 = vpop.f32.mrb[0].mxu0
      %v1263 = vpop.f32.mrb[0].mxu0
      %v1264 = vadd.f32 %v347, %v1263
      %v1265 = vpop.f32.mrb[0].mxu0
      %1266 = vmatprep.mubr.bf16.mxu0 0
      %1267 = vmatmul.mubr.bf16.gmra.mrb[0].mxu0 %v809
      %v1268 = vpop.f32.mrb[0].mxu0
      %v1269 = vadd.f32 %v347, %v1268
      %v1270 = vpop.f32.mrb[0].mxu0
      %v1271 = vpop.f32.mrb[0].mxu0
      %v1272 = vadd.f32 %v347, %v1271
      %v1273 = vpop.f32.mrb[0].mxu0
      %1274 = vmatprep.mubr.bf16.mxu0 0
      %1275 = vmatmul.mubr.bf16.gmra.mrb[0].mxu0 %v812
      %v1276 = vpop.f32.mrb[0].mxu0
      %v1277 = vadd.f32 %v347, %v1276
      %v1278 = vpop.f32.mrb[0].mxu0
      %v1279 = vpop.f32.mrb[0].mxu0
      %v1280 = vadd.f32 %v347, %v1279
      %v1281 = vpop.f32.mrb[0].mxu0
      %1282 = vmatprep.mubr.bf16.mxu0 0
      %1283 = vmatmul.mubr.bf16.gmra.mrb[0].mxu0 %v815
      %v1284 = vpop.f32.mrb[0].mxu0
      %v1285 = vadd.f32 %v347, %v1284
      %v1286 = vpop.f32.mrb[0].mxu0
      %v1287 = vpop.f32.mrb[0].mxu0
      %v1288 = vadd.f32 %v347, %v1287
      %v1289 = vpop.f32.mrb[0].mxu0
      %1290 = vmatprep.mubr.bf16.mxu0 0
      %1291 = vmatmul.mubr.bf16.gmra.mrb[0].mxu0 %v818
      %v1292 = vpop.f32.mrb[0].mxu0
      %v1293 = vadd.f32 %v347, %v1292
      %v1294 = vpop.f32.mrb[0].mxu0
      %v1295 = vpop.f32.mrb[0].mxu0
      %v1296 = vadd.f32 %v347, %v1295
      %v1297 = vpop.f32.mrb[0].mxu0
      %1298 = vmatprep.mubr.bf16.mxu0 0
      %1299 = vmatmul.mubr.bf16.gmra.mrb[0].mxu0 %v821
      %v1300 = vpop.f32.mrb[0].mxu0
      %v1301 = vadd.f32 %v347, %v1300
      %v1302 = vpop.f32.mrb[0].mxu0
      %v1303 = vpop.f32.mrb[0].mxu0
      %v1304 = vadd.f32 %v347, %v1303
      %v1305 = vpop.f32.mrb[0].mxu0
      %1306 = vmatprep.mubr.bf16.mxu0 0
      %1307 = vmatmul.mubr.bf16.gmra.mrb[0].mxu0 %v824
      %v1308 = vpop.f32.mrb[0].mxu0
      %v1309 = vadd.f32 %v347, %v1308
      %v1310 = vpop.f32.mrb[0].mxu0
      %v1311 = vpop.f32.mrb[0].mxu0
      %v1312 = vadd.f32 %v347, %v1311
      %v1313 = vpop.f32.mrb[0].mxu0
      %1314 = vmatprep.mubr.bf16.mxu0 0
      %1315 = vmatmul.mubr.bf16.gmra.mrb[0].mxu0 %v827
      %v1316 = vpop.f32.mrb[0].mxu0
      %v1317 = vadd.f32 %v347, %v1316
      %v1318 = vpop.f32.mrb[0].mxu0
      %v1319 = vpop.f32.mrb[0].mxu0
      %v1320 = vadd.f32 %v347, %v1319
      %v1321 = vpop.f32.mrb[0].mxu0
      %1322 = vmatprep.mubr.bf16.mxu0 0
      %1323 = vmatmul.mubr.bf16.gmra.mrb[0].mxu0 %v830
      %v1324 = vpop.f32.mrb[0].mxu0
      %v1325 = vadd.f32 %v347, %v1324
      %v1326 = vpop.f32.mrb[0].mxu0
      %v1327 = vpop.f32.mrb[0].mxu0
      %v1328 = vadd.f32 %v347, %v1327
      %v1329 = vpop.f32.mrb[0].mxu0
      %1330 = vmatprep.mubr.bf16.mxu0 0
      %1331 = vmatmul.mubr.bf16.gmra.mrb[0].mxu0 %v833
      %v1332 = vpop.f32.mrb[0].mxu0
      %v1333 = vadd.f32 %v347, %v1332
      %v1334 = vpop.f32.mrb[0].mxu0
      %v1335 = vpop.f32.mrb[0].mxu0
      %v1336 = vadd.f32 %v347, %v1335
      %v1337 = vpop.f32.mrb[0].mxu0
      %1338 = vmatprep.mubr.bf16.mxu0 0
      %1339 = vmatmul.mubr.bf16.gmra.mrb[0].mxu0 %v836
      %v1340 = vpop.f32.mrb[0].mxu0
      %v1341 = vadd.f32 %v347, %v1340
      %v1342 = vpop.f32.mrb[0].mxu0
      %v1343 = vpop.f32.mrb[0].mxu0
      %v1344 = vadd.f32 %v347, %v1343
      %v1345 = vpop.f32.mrb[0].mxu0
      %1346 = vmatprep.mubr.bf16.mxu0 0
      %1347 = vmatmul.mubr.bf16.gmra.mrb[0].mxu0 %v839
      %v1348 = vpop.f32.mrb[0].mxu0
      %v1349 = vadd.f32 %v347, %v1348
      %v1350 = vpop.f32.mrb[0].mxu0
      %v1351 = vpop.f32.mrb[0].mxu0
      %v1352 = vadd.f32 %v347, %v1351
      %v1353 = vpop.f32.mrb[0].mxu0
      %1354 = vmatprep.mubr.bf16.mxu0 0
      %1355 = vmatmul.mubr.bf16.gmra.mrb[0].mxu0 %v842
      %v1356 = vpop.f32.mrb[0].mxu0
      %v1357 = vadd.f32 %v347, %v1356
      %v1358 = vpop.f32.mrb[0].mxu0
      %v1359 = vpop.f32.mrb[0].mxu0
      %v1360 = vadd.f32 %v347, %v1359
      %v1361 = vpop.f32.mrb[0].mxu0
      %1362 = vmatprep.mubr.bf16.mxu0 0
      %1363 = vmatmul.mubr.bf16.gmra.mrb[0].mxu0 %v845
      %v1364 = vpop.f32.mrb[0].mxu0
      %v1365 = vadd.f32 %v347, %v1364
      %v1366 = vpop.f32.mrb[0].mxu0
      %v1367 = vpop.f32.mrb[0].mxu0
      %v1368 = vadd.f32 %v347, %v1367
      %v1369 = vpop.f32.mrb[0].mxu0
      %1370 = vmatprep.mubr.bf16.mxu0 0
      %1371 = vmatmul.mubr.bf16.gmra.mrb[0].mxu0 %v848
      %v1372 = vpop.f32.mrb[0].mxu0
      %v1373 = vadd.f32 %v347, %v1372
      %v1374 = vpop.f32.mrb[0].mxu0
      %v1375 = vpop.f32.mrb[0].mxu0
      %v1376 = vadd.f32 %v347, %v1375
      %v1377 = vpop.f32.mrb[0].mxu0
      %1378 = vmatprep.mubr.bf16.mxu0 0
      %1379 = vmatmul.mubr.bf16.gmra.mrb[0].mxu0 %v851
      %v1380 = vpop.f32.mrb[0].mxu0
      %v1381 = vadd.f32 %v347, %v1380
      %v1382 = vpop.f32.mrb[0].mxu0
      %v1383 = vpop.f32.mrb[0].mxu0
      %v1384 = vadd.f32 %v347, %v1383
      %v1385 = vpop.f32.mrb[0].mxu0
      %1386 = vmatprep.mubr.bf16.mxu0 0
      %1387 = vmatmul.mubr.bf16.gmra.mrb[0].mxu0 %v854
      %v1388 = vpop.f32.mrb[0].mxu0
      %v1389 = vadd.f32 %v347, %v1388
      %v1390 = vpop.f32.mrb[0].mxu0
      %v1391 = vpop.f32.mrb[0].mxu0
      %v1392 = vadd.f32 %v347, %v1391
      %v1393 = vpop.f32.mrb[0].mxu0
      %1394 = vmatprep.mubr.bf16.mxu0 0
      %1395 = vmatmul.mubr.bf16.gmra.mrb[0].mxu0 %v857
      %v1396 = vpop.f32.mrb[0].mxu0
      %v1397 = vadd.f32 %v347, %v1396
      %v1398 = vpop.f32.mrb[0].mxu0
      %v1399 = vpop.f32.mrb[0].mxu0
      %v1400 = vadd.f32 %v347, %v1399
      %v1401 = vpop.f32.mrb[0].mxu0
      %1402 = vmatprep.mubr.bf16.mxu0 0
      %1403 = vmatmul.mubr.bf16.gmra.mrb[0].mxu0 %v860
      %v1404 = vpop.f32.mrb[0].mxu0
      %v1405 = vadd.f32 %v347, %v1404
      %v1406 = vpop.f32.mrb[0].mxu0
      %v1407 = vpop.f32.mrb[0].mxu0
      %v1408 = vadd.f32 %v347, %v1407
      %v1409 = vpop.f32.mrb[0].mxu0
      %1410 = vdwg.mxu0
      %v1411 = vmax.f32 %v901, 0.0
      %v1412 = vmax.f32 %v904, 0.0
      %v1413 = vmax.f32 %v909, 0.0
      %v1414 = vmax.f32 %v912, 0.0
      %v1415 = vmax.f32 %v917, 0.0
      %v1416 = vmax.f32 %v920, 0.0
      %v1417 = vmax.f32 %v925, 0.0
      %v1418 = vmax.f32 %v928, 0.0
      %v1419 = vmax.f32 %v933, 0.0
      %v1420 = vmax.f32 %v936, 0.0
      %v1421 = vmax.f32 %v941, 0.0
      %v1422 = vmax.f32 %v944, 0.0
      %v1423 = vmax.f32 %v949, 0.0
      %v1424 = vmax.f32 %v952, 0.0
      %v1425 = vmax.f32 %v957, 0.0
      %v1426 = vmax.f32 %v960, 0.0
      %v1427 = vmax.f32 %v965, 0.0
      %v1428 = vmax.f32 %v968, 0.0
      %v1429 = vmax.f32 %v973, 0.0
      %v1430 = vmax.f32 %v976, 0.0
      %v1431 = vmax.f32 %v981, 0.0
      %v1432 = vmax.f32 %v984, 0.0
      %v1433 = vmax.f32 %v989, 0.0
      %v1434 = vmax.f32 %v992, 0.0
      %v1435 = vmax.f32 %v997, 0.0
      %v1436 = vmax.f32 %v1000, 0.0
      %v1437 = vmax.f32 %v1005, 0.0
      %v1438 = vmax.f32 %v1008, 0.0
      %v1439 = vmax.f32 %v1013, 0.0
      %v1440 = vmax.f32 %v1016, 0.0
      %v1441 = vmax.f32 %v1021, 0.0
      %v1442 = vmax.f32 %v1024, 0.0
      %v1443 = vmax.f32 %v1029, 0.0
      %v1444 = vmax.f32 %v1032, 0.0
      %v1445 = vmax.f32 %v1037, 0.0
      %v1446 = vmax.f32 %v1040, 0.0
      %v1447 = vmax.f32 %v1045, 0.0
      %v1448 = vmax.f32 %v1048, 0.0
      %v1449 = vmax.f32 %v1053, 0.0
      %v1450 = vmax.f32 %v1056, 0.0
      %v1451 = vmax.f32 %v1061, 0.0
      %v1452 = vmax.f32 %v1064, 0.0
      %v1453 = vmax.f32 %v1069, 0.0
      %v1454 = vmax.f32 %v1072, 0.0
      %v1455 = vmax.f32 %v1077, 0.0
      %v1456 = vmax.f32 %v1080, 0.0
      %v1457 = vmax.f32 %v1085, 0.0
      %v1458 = vmax.f32 %v1088, 0.0
      %v1459 = vmax.f32 %v1093, 0.0
      %v1460 = vmax.f32 %v1096, 0.0
      %v1461 = vmax.f32 %v1101, 0.0
      %v1462 = vmax.f32 %v1104, 0.0
      %v1463 = vmax.f32 %v1109, 0.0
      %v1464 = vmax.f32 %v1112, 0.0
      %v1465 = vmax.f32 %v1117, 0.0
      %v1466 = vmax.f32 %v1120, 0.0
      %v1467 = vmax.f32 %v1125, 0.0
      %v1468 = vmax.f32 %v1128, 0.0
      %v1469 = vmax.f32 %v1133, 0.0
      %v1470 = vmax.f32 %v1136, 0.0
      %v1471 = vmax.f32 %v1141, 0.0
      %v1472 = vmax.f32 %v1144, 0.0
      %v1473 = vmax.f32 %v1149, 0.0
      %v1474 = vmax.f32 %v1152, 0.0
      %v1475 = vmax.f32 %v1157, 0.0
      %v1476 = vmax.f32 %v1160, 0.0
      %v1477 = vmax.f32 %v1165, 0.0
      %v1478 = vmax.f32 %v1168, 0.0
      %v1479 = vmax.f32 %v1173, 0.0
      %v1480 = vmax.f32 %v1176, 0.0
      %v1481 = vmax.f32 %v1181, 0.0
      %v1482 = vmax.f32 %v1184, 0.0
      %v1483 = vmax.f32 %v1189, 0.0
      %v1484 = vmax.f32 %v1192, 0.0
      %v1485 = vmax.f32 %v1197, 0.0
      %v1486 = vmax.f32 %v1200, 0.0
      %v1487 = vmax.f32 %v1205, 0.0
      %v1488 = vmax.f32 %v1208, 0.0
      %v1489 = vmax.f32 %v1213, 0.0
      %v1490 = vmax.f32 %v1216, 0.0
      %v1491 = vmax.f32 %v1221, 0.0
      %v1492 = vmax.f32 %v1224, 0.0
      %v1493 = vmax.f32 %v1229, 0.0
      %v1494 = vmax.f32 %v1232, 0.0
      %v1495 = vmax.f32 %v1237, 0.0
      %v1496 = vmax.f32 %v1240, 0.0
      %v1497 = vmax.f32 %v1245, 0.0
      %v1498 = vmax.f32 %v1248, 0.0
      %v1499 = vmax.f32 %v1253, 0.0
      %v1500 = vmax.f32 %v1256, 0.0
      %v1501 = vmax.f32 %v1261, 0.0
      %v1502 = vmax.f32 %v1264, 0.0
      %v1503 = vmax.f32 %v1269, 0.0
      %v1504 = vmax.f32 %v1272, 0.0
      %v1505 = vmax.f32 %v1277, 0.0
      %v1506 = vmax.f32 %v1280, 0.0
      %v1507 = vmax.f32 %v1285, 0.0
      %v1508 = vmax.f32 %v1288, 0.0
      %v1509 = vmax.f32 %v1293, 0.0
      %v1510 = vmax.f32 %v1296, 0.0
      %v1511 = vmax.f32 %v1301, 0.0
      %v1512 = vmax.f32 %v1304, 0.0
      %v1513 = vmax.f32 %v1309, 0.0
      %v1514 = vmax.f32 %v1312, 0.0
      %v1515 = vmax.f32 %v1317, 0.0
      %v1516 = vmax.f32 %v1320, 0.0
      %v1517 = vmax.f32 %v1325, 0.0
      %v1518 = vmax.f32 %v1328, 0.0
      %v1519 = vmax.f32 %v1333, 0.0
      %v1520 = vmax.f32 %v1336, 0.0
      %v1521 = vmax.f32 %v1341, 0.0
      %v1522 = vmax.f32 %v1344, 0.0
      %v1523 = vmax.f32 %v1349, 0.0
      %v1524 = vmax.f32 %v1352, 0.0
      %v1525 = vmax.f32 %v1357, 0.0
      %v1526 = vmax.f32 %v1360, 0.0
      %v1527 = vmax.f32 %v1365, 0.0
      %v1528 = vmax.f32 %v1368, 0.0
      %v1529 = vmax.f32 %v1373, 0.0
      %v1530 = vmax.f32 %v1376, 0.0
      %v1531 = vmax.f32 %v1381, 0.0
      %v1532 = vmax.f32 %v1384, 0.0
      %v1533 = vmax.f32 %v1389, 0.0
      %v1534 = vmax.f32 %v1392, 0.0
      %v1535 = vmax.f32 %v1397, 0.0
      %v1536 = vmax.f32 %v1400, 0.0
      %v1537 = vmax.f32 %v1405, 0.0
      %v1538 = vmax.f32 %v1408, 0.0
      %v1539 = vpack.c.bf16 %v1412, %v1411
      %v1540 = vpack.c.bf16 %v1414, %v1413
      %v1541 = vpack.c.bf16 %v1416, %v1415
      %v1542 = vpack.c.bf16 %v1418, %v1417
      %v1543 = vpack.c.bf16 %v1420, %v1419
      %v1544 = vpack.c.bf16 %v1422, %v1421
      %v1545 = vpack.c.bf16 %v1424, %v1423
      %v1546 = vpack.c.bf16 %v1426, %v1425
      %v1547 = vpack.c.bf16 %v1428, %v1427
      %v1548 = vpack.c.bf16 %v1430, %v1429
      %v1549 = vpack.c.bf16 %v1432, %v1431
      %v1550 = vpack.c.bf16 %v1434, %v1433
      %v1551 = vpack.c.bf16 %v1436, %v1435
      %v1552 = vpack.c.bf16 %v1438, %v1437
      %v1553 = vpack.c.bf16 %v1440, %v1439
      %v1554 = vpack.c.bf16 %v1442, %v1441
      %v1555 = vpack.c.bf16 %v1444, %v1443
      %v1556 = vpack.c.bf16 %v1446, %v1445
      %v1557 = vpack.c.bf16 %v1448, %v1447
      %v1558 = vpack.c.bf16 %v1450, %v1449
      %v1559 = vpack.c.bf16 %v1452, %v1451
      %v1560 = vpack.c.bf16 %v1454, %v1453
      %v1561 = vpack.c.bf16 %v1456, %v1455
      %v1562 = vpack.c.bf16 %v1458, %v1457
      %v1563 = vpack.c.bf16 %v1460, %v1459
      %v1564 = vpack.c.bf16 %v1462, %v1461
      %v1565 = vpack.c.bf16 %v1464, %v1463
      %v1566 = vpack.c.bf16 %v1466, %v1465
      %v1567 = vpack.c.bf16 %v1468, %v1467
      %v1568 = vpack.c.bf16 %v1470, %v1469
      %v1569 = vpack.c.bf16 %v1472, %v1471
      %v1570 = vpack.c.bf16 %v1474, %v1473
      %v1571 = vpack.c.bf16 %v1476, %v1475
      %v1572 = vpack.c.bf16 %v1478, %v1477
      %v1573 = vpack.c.bf16 %v1480, %v1479
      %v1574 = vpack.c.bf16 %v1482, %v1481
      %v1575 = vpack.c.bf16 %v1484, %v1483
      %v1576 = vpack.c.bf16 %v1486, %v1485
      %v1577 = vpack.c.bf16 %v1488, %v1487
      %v1578 = vpack.c.bf16 %v1490, %v1489
      %v1579 = vpack.c.bf16 %v1492, %v1491
      %v1580 = vpack.c.bf16 %v1494, %v1493
      %v1581 = vpack.c.bf16 %v1496, %v1495
      %v1582 = vpack.c.bf16 %v1498, %v1497
      %v1583 = vpack.c.bf16 %v1500, %v1499
      %v1584 = vpack.c.bf16 %v1502, %v1501
      %v1585 = vpack.c.bf16 %v1504, %v1503
      %v1586 = vpack.c.bf16 %v1506, %v1505
      %v1587 = vpack.c.bf16 %v1508, %v1507
      %v1588 = vpack.c.bf16 %v1510, %v1509
      %v1589 = vpack.c.bf16 %v1512, %v1511
      %v1590 = vpack.c.bf16 %v1514, %v1513
      %v1591 = vpack.c.bf16 %v1516, %v1515
      %v1592 = vpack.c.bf16 %v1518, %v1517
      %v1593 = vpack.c.bf16 %v1520, %v1519
      %v1594 = vpack.c.bf16 %v1522, %v1521
      %v1595 = vpack.c.bf16 %v1524, %v1523
      %v1596 = vpack.c.bf16 %v1526, %v1525
      %v1597 = vpack.c.bf16 %v1528, %v1527
      %v1598 = vpack.c.bf16 %v1530, %v1529
      %v1599 = vpack.c.bf16 %v1532, %v1531
      %v1600 = vpack.c.bf16 %v1534, %v1533
      %v1601 = vpack.c.bf16 %v1536, %v1535
      %v1602 = vpack.c.bf16 %v1538, %v1537
      %v1667 = vunpack.c.l.b16 %v1539
      %v1668 = vunpack.c.h.b16 %v1539
      %v1669 = vunpack.c.l.b16 %v1540
      %v1670 = vunpack.c.h.b16 %v1540
      %v1671 = vunpack.c.l.b16 %v1541
      %v1672 = vunpack.c.h.b16 %v1541
      %v1673 = vunpack.c.l.b16 %v1542
      %v1674 = vunpack.c.h.b16 %v1542
      %v1675 = vunpack.c.l.b16 %v1543
      %v1676 = vunpack.c.h.b16 %v1543
      %v1677 = vunpack.c.l.b16 %v1544
      %v1678 = vunpack.c.h.b16 %v1544
      %v1679 = vunpack.c.l.b16 %v1545
      %v1680 = vunpack.c.h.b16 %v1545
      %v1681 = vunpack.c.l.b16 %v1546
      %v1682 = vunpack.c.h.b16 %v1546
      %v1683 = vunpack.c.l.b16 %v1547
      %v1684 = vunpack.c.h.b16 %v1547
      %v1685 = vunpack.c.l.b16 %v1548
      %v1686 = vunpack.c.h.b16 %v1548
      %v1687 = vunpack.c.l.b16 %v1549
      %v1688 = vunpack.c.h.b16 %v1549
      %v1689 = vunpack.c.l.b16 %v1550
      %v1690 = vunpack.c.h.b16 %v1550
      %v1691 = vunpack.c.l.b16 %v1551
      %v1692 = vunpack.c.h.b16 %v1551
      %v1693 = vunpack.c.l.b16 %v1552
      %v1694 = vunpack.c.h.b16 %v1552
      %v1695 = vunpack.c.l.b16 %v1553
      %v1696 = vunpack.c.h.b16 %v1553
      %v1697 = vunpack.c.l.b16 %v1554
      %v1698 = vunpack.c.h.b16 %v1554
      %v1699 = vunpack.c.l.b16 %v1555
      %v1700 = vunpack.c.h.b16 %v1555
      %v1701 = vunpack.c.l.b16 %v1556
      %v1702 = vunpack.c.h.b16 %v1556
      %v1703 = vunpack.c.l.b16 %v1557
      %v1704 = vunpack.c.h.b16 %v1557
      %v1705 = vunpack.c.l.b16 %v1558
      %v1706 = vunpack.c.h.b16 %v1558
      %v1707 = vunpack.c.l.b16 %v1559
      %v1708 = vunpack.c.h.b16 %v1559
      %v1709 = vunpack.c.l.b16 %v1560
      %v1710 = vunpack.c.h.b16 %v1560
      %v1711 = vunpack.c.l.b16 %v1561
      %v1712 = vunpack.c.h.b16 %v1561
      %v1713 = vunpack.c.l.b16 %v1562
      %v1714 = vunpack.c.h.b16 %v1562
      %v1715 = vunpack.c.l.b16 %v1563
      %v1716 = vunpack.c.h.b16 %v1563
      %v1717 = vunpack.c.l.b16 %v1564
      %v1718 = vunpack.c.h.b16 %v1564
      %v1719 = vunpack.c.l.b16 %v1565
      %v1720 = vunpack.c.h.b16 %v1565
      %v1721 = vunpack.c.l.b16 %v1566
      %v1722 = vunpack.c.h.b16 %v1566
      %v1723 = vunpack.c.l.b16 %v1567
      %v1724 = vunpack.c.h.b16 %v1567
      %v1725 = vunpack.c.l.b16 %v1568
      %v1726 = vunpack.c.h.b16 %v1568
      %v1727 = vunpack.c.l.b16 %v1569
      %v1728 = vunpack.c.h.b16 %v1569
      %v1729 = vunpack.c.l.b16 %v1570
      %v1730 = vunpack.c.h.b16 %v1570
      %v1731 = vunpack.c.l.b16 %v1571
      %v1732 = vunpack.c.h.b16 %v1571
      %v1733 = vunpack.c.l.b16 %v1572
      %v1734 = vunpack.c.h.b16 %v1572
      %v1735 = vunpack.c.l.b16 %v1573
      %v1736 = vunpack.c.h.b16 %v1573
      %v1737 = vunpack.c.l.b16 %v1574
      %v1738 = vunpack.c.h.b16 %v1574
      %v1739 = vunpack.c.l.b16 %v1575
      %v1740 = vunpack.c.h.b16 %v1575
      %v1741 = vunpack.c.l.b16 %v1576
      %v1742 = vunpack.c.h.b16 %v1576
      %v1743 = vunpack.c.l.b16 %v1577
      %v1744 = vunpack.c.h.b16 %v1577
      %v1745 = vunpack.c.l.b16 %v1578
      %v1746 = vunpack.c.h.b16 %v1578
      %v1747 = vunpack.c.l.b16 %v1579
      %v1748 = vunpack.c.h.b16 %v1579
      %v1749 = vunpack.c.l.b16 %v1580
      %v1750 = vunpack.c.h.b16 %v1580
      %v1751 = vunpack.c.l.b16 %v1581
      %v1752 = vunpack.c.h.b16 %v1581
      %v1753 = vunpack.c.l.b16 %v1582
      %v1754 = vunpack.c.h.b16 %v1582
      %v1755 = vunpack.c.l.b16 %v1583
      %v1756 = vunpack.c.h.b16 %v1583
      %v1757 = vunpack.c.l.b16 %v1584
      %v1758 = vunpack.c.h.b16 %v1584
      %v1759 = vunpack.c.l.b16 %v1585
      %v1760 = vunpack.c.h.b16 %v1585
      %v1761 = vunpack.c.l.b16 %v1586
      %v1762 = vunpack.c.h.b16 %v1586
      %v1763 = vunpack.c.l.b16 %v1587
      %v1764 = vunpack.c.h.b16 %v1587
      %v1765 = vunpack.c.l.b16 %v1588
      %v1766 = vunpack.c.h.b16 %v1588
      %v1767 = vunpack.c.l.b16 %v1589
      %v1768 = vunpack.c.h.b16 %v1589
      %v1769 = vunpack.c.l.b16 %v1590
      %v1770 = vunpack.c.h.b16 %v1590
      %v1771 = vunpack.c.l.b16 %v1591
      %v1772 = vunpack.c.h.b16 %v1591
      %v1773 = vunpack.c.l.b16 %v1592
      %v1774 = vunpack.c.h.b16 %v1592
      %v1775 = vunpack.c.l.b16 %v1593
      %v1776 = vunpack.c.h.b16 %v1593
      %v1777 = vunpack.c.l.b16 %v1594
      %v1778 = vunpack.c.h.b16 %v1594
      %v1779 = vunpack.c.l.b16 %v1595
      %v1780 = vunpack.c.h.b16 %v1595
      %v1781 = vunpack.c.l.b16 %v1596
      %v1782 = vunpack.c.h.b16 %v1596
      %v1783 = vunpack.c.l.b16 %v1597
      %v1784 = vunpack.c.h.b16 %v1597
      %v1785 = vunpack.c.l.b16 %v1598
      %v1786 = vunpack.c.h.b16 %v1598
      %v1787 = vunpack.c.l.b16 %v1599
      %v1788 = vunpack.c.h.b16 %v1599
      %v1789 = vunpack.c.l.b16 %v1600
      %v1790 = vunpack.c.h.b16 %v1600
      %v1791 = vunpack.c.l.b16 %v1601
      %v1792 = vunpack.c.h.b16 %v1601
      %v1793 = vunpack.c.l.b16 %v1602
      %v1794 = vunpack.c.h.b16 %v1602
      %v1795 = vpack.c.b16 %v1667, %v1667
      %v1796 = vpack.c.b16 %v1668, %v1668
      %v1797 = vpack.c.b16 %v1669, %v1669
      %v1798 = vpack.c.b16 %v1670, %v1670
      %v1799 = vpack.c.b16 %v1671, %v1671
      %v1800 = vpack.c.b16 %v1672, %v1672
      %v1801 = vpack.c.b16 %v1673, %v1673
      %v1802 = vpack.c.b16 %v1674, %v1674
      %v1803 = vpack.c.b16 %v1675, %v1675
      %v1804 = vpack.c.b16 %v1676, %v1676
      %v1805 = vpack.c.b16 %v1677, %v1677
      %v1806 = vpack.c.b16 %v1678, %v1678
      %v1807 = vpack.c.b16 %v1679, %v1679
      %v1808 = vpack.c.b16 %v1680, %v1680
      %v1809 = vpack.c.b16 %v1681, %v1681
      %v1810 = vpack.c.b16 %v1682, %v1682
      %v1811 = vpack.c.b16 %v1683, %v1683
      %v1812 = vpack.c.b16 %v1684, %v1684
      %v1813 = vpack.c.b16 %v1685, %v1685
      %v1814 = vpack.c.b16 %v1686, %v1686
      %v1815 = vpack.c.b16 %v1687, %v1687
      %v1816 = vpack.c.b16 %v1688, %v1688
      %v1817 = vpack.c.b16 %v1689, %v1689
      %v1818 = vpack.c.b16 %v1690, %v1690
      %v1819 = vpack.c.b16 %v1691, %v1691
      %v1820 = vpack.c.b16 %v1692, %v1692
      %v1821 = vpack.c.b16 %v1693, %v1693
      %v1822 = vpack.c.b16 %v1694, %v1694
      %v1823 = vpack.c.b16 %v1695, %v1695
      %v1824 = vpack.c.b16 %v1696, %v1696
      %v1825 = vpack.c.b16 %v1697, %v1697
      %v1826 = vpack.c.b16 %v1698, %v1698
      %v1827 = vpack.c.b16 %v1699, %v1699
      %v1828 = vpack.c.b16 %v1700, %v1700
      %v1829 = vpack.c.b16 %v1701, %v1701
      %v1830 = vpack.c.b16 %v1702, %v1702
      %v1831 = vpack.c.b16 %v1703, %v1703
      %v1832 = vpack.c.b16 %v1704, %v1704
      %v1833 = vpack.c.b16 %v1705, %v1705
      %v1834 = vpack.c.b16 %v1706, %v1706
      %v1835 = vpack.c.b16 %v1707, %v1707
      %v1836 = vpack.c.b16 %v1708, %v1708
      %v1837 = vpack.c.b16 %v1709, %v1709
      %v1838 = vpack.c.b16 %v1710, %v1710
      %v1839 = vpack.c.b16 %v1711, %v1711
      %v1840 = vpack.c.b16 %v1712, %v1712
      %v1841 = vpack.c.b16 %v1713, %v1713
      %v1842 = vpack.c.b16 %v1714, %v1714
      %v1843 = vpack.c.b16 %v1715, %v1715
      %v1844 = vpack.c.b16 %v1716, %v1716
      %v1845 = vpack.c.b16 %v1717, %v1717
      %v1846 = vpack.c.b16 %v1718, %v1718
      %v1847 = vpack.c.b16 %v1719, %v1719
      %v1848 = vpack.c.b16 %v1720, %v1720
      %v1849 = vpack.c.b16 %v1721, %v1721
      %v1850 = vpack.c.b16 %v1722, %v1722
      %v1851 = vpack.c.b16 %v1723, %v1723
      %v1852 = vpack.c.b16 %v1724, %v1724
      %v1853 = vpack.c.b16 %v1725, %v1725
      %v1854 = vpack.c.b16 %v1726, %v1726
      %v1855 = vpack.c.b16 %v1727, %v1727
      %v1856 = vpack.c.b16 %v1728, %v1728
      %v1857 = vpack.c.b16 %v1729, %v1729
      %v1858 = vpack.c.b16 %v1730, %v1730
      %v1859 = vpack.c.b16 %v1731, %v1731
      %v1860 = vpack.c.b16 %v1732, %v1732
      %v1861 = vpack.c.b16 %v1733, %v1733
      %v1862 = vpack.c.b16 %v1734, %v1734
      %v1863 = vpack.c.b16 %v1735, %v1735
      %v1864 = vpack.c.b16 %v1736, %v1736
      %v1865 = vpack.c.b16 %v1737, %v1737
      %v1866 = vpack.c.b16 %v1738, %v1738
      %v1867 = vpack.c.b16 %v1739, %v1739
      %v1868 = vpack.c.b16 %v1740, %v1740
      %v1869 = vpack.c.b16 %v1741, %v1741
      %v1870 = vpack.c.b16 %v1742, %v1742
      %v1871 = vpack.c.b16 %v1743, %v1743
      %v1872 = vpack.c.b16 %v1744, %v1744
      %v1873 = vpack.c.b16 %v1745, %v1745
      %v1874 = vpack.c.b16 %v1746, %v1746
      %v1875 = vpack.c.b16 %v1747, %v1747
      %v1876 = vpack.c.b16 %v1748, %v1748
      %v1877 = vpack.c.b16 %v1749, %v1749
      %v1878 = vpack.c.b16 %v1750, %v1750
      %v1879 = vpack.c.b16 %v1751, %v1751
      %v1880 = vpack.c.b16 %v1752, %v1752
      %v1881 = vpack.c.b16 %v1753, %v1753
      %v1882 = vpack.c.b16 %v1754, %v1754
      %v1883 = vpack.c.b16 %v1755, %v1755
      %v1884 = vpack.c.b16 %v1756, %v1756
      %v1885 = vpack.c.b16 %v1757, %v1757
      %v1886 = vpack.c.b16 %v1758, %v1758
      %v1887 = vpack.c.b16 %v1759, %v1759
      %v1888 = vpack.c.b16 %v1760, %v1760
      %v1889 = vpack.c.b16 %v1761, %v1761
      %v1890 = vpack.c.b16 %v1762, %v1762
      %v1891 = vpack.c.b16 %v1763, %v1763
      %v1892 = vpack.c.b16 %v1764, %v1764
      %v1893 = vpack.c.b16 %v1765, %v1765
      %v1894 = vpack.c.b16 %v1766, %v1766
      %v1895 = vpack.c.b16 %v1767, %v1767
      %v1896 = vpack.c.b16 %v1768, %v1768
      %v1897 = vpack.c.b16 %v1769, %v1769
      %v1898 = vpack.c.b16 %v1770, %v1770
      %v1899 = vpack.c.b16 %v1771, %v1771
      %v1900 = vpack.c.b16 %v1772, %v1772
      %v1901 = vpack.c.b16 %v1773, %v1773
      %v1902 = vpack.c.b16 %v1774, %v1774
      %v1903 = vpack.c.b16 %v1775, %v1775
      %v1904 = vpack.c.b16 %v1776, %v1776
      %v1905 = vpack.c.b16 %v1777, %v1777
      %v1906 = vpack.c.b16 %v1778, %v1778
      %v1907 = vpack.c.b16 %v1779, %v1779
      %v1908 = vpack.c.b16 %v1780, %v1780
      %v1909 = vpack.c.b16 %v1781, %v1781
      %v1910 = vpack.c.b16 %v1782, %v1782
      %v1911 = vpack.c.b16 %v1783, %v1783
      %v1912 = vpack.c.b16 %v1784, %v1784
      %v1913 = vpack.c.b16 %v1785, %v1785
      %v1914 = vpack.c.b16 %v1786, %v1786
      %v1915 = vpack.c.b16 %v1787, %v1787
      %v1916 = vpack.c.b16 %v1788, %v1788
      %v1917 = vpack.c.b16 %v1789, %v1789
      %v1918 = vpack.c.b16 %v1790, %v1790
      %v1919 = vpack.c.b16 %v1791, %v1791
      %v1920 = vpack.c.b16 %v1792, %v1792
      %v1921 = vpack.c.b16 %v1793, %v1793
      %v1922 = vpack.c.b16 %v1794, %v1794
      %vm2051 = vcmask 27648
      %2052 = vst.msk [vmem:[%s206] sm:$0xf] %vm2051, %v1795
      %2053 = vst.msk [vmem:[%s206 + $0x4] sm:$0xf] %vm2051, %v1796
      %2054 = vst.msk [vmem:[%s206 + $0x8] sm:$0xf] %vm2051, %v1797
      %2055 = vst.msk [vmem:[%s206 + $0xc] sm:$0xf] %vm2051, %v1798
      %2056 = vst.msk [vmem:[%s206 + $0x10] sm:$0xf] %vm2051, %v1799
      %2057 = vst.msk [vmem:[%s206 + $0x14] sm:$0xf] %vm2051, %v1800
      %2058 = vst.msk [vmem:[%s206 + $0x18] sm:$0xf] %vm2051, %v1801
      %2059 = vst.msk [vmem:[%s206 + $0x1c] sm:$0xf] %vm2051, %v1802
      %2060 = vst.msk [vmem:[%s206 + $0x20] sm:$0xf] %vm2051, %v1803
      %2061 = vst.msk [vmem:[%s206 + $0x24] sm:$0xf] %vm2051, %v1804
      %2062 = vst.msk [vmem:[%s206 + $0x28] sm:$0xf] %vm2051, %v1805
      %2063 = vst.msk [vmem:[%s206 + $0x2c] sm:$0xf] %vm2051, %v1806
      %2064 = vst.msk [vmem:[%s206 + $0x30] sm:$0xf] %vm2051, %v1807
      %2065 = vst.msk [vmem:[%s206 + $0x34] sm:$0xf] %vm2051, %v1808
      %2066 = vst.msk [vmem:[%s206 + $0x38] sm:$0xf] %vm2051, %v1809
      %2067 = vst.msk [vmem:[%s206 + $0x3c] sm:$0xf] %vm2051, %v1810
      %2068 = vst.msk [vmem:[%s206 + $0x40] sm:$0xf] %vm2051, %v1811
      %2069 = vst.msk [vmem:[%s206 + $0x44] sm:$0xf] %vm2051, %v1812
      %2070 = vst.msk [vmem:[%s206 + $0x48] sm:$0xf] %vm2051, %v1813
      %2071 = vst.msk [vmem:[%s206 + $0x4c] sm:$0xf] %vm2051, %v1814
      %2072 = vst.msk [vmem:[%s206 + $0x50] sm:$0xf] %vm2051, %v1815
      %2073 = vst.msk [vmem:[%s206 + $0x54] sm:$0xf] %vm2051, %v1816
      %2074 = vst.msk [vmem:[%s206 + $0x58] sm:$0xf] %vm2051, %v1817
      %2075 = vst.msk [vmem:[%s206 + $0x5c] sm:$0xf] %vm2051, %v1818
      %2076 = vst.msk [vmem:[%s206 + $0x60] sm:$0xf] %vm2051, %v1819
      %2077 = vst.msk [vmem:[%s206 + $0x64] sm:$0xf] %vm2051, %v1820
      %2078 = vst.msk [vmem:[%s206 + $0x68] sm:$0xf] %vm2051, %v1821
      %2079 = vst.msk [vmem:[%s206 + $0x6c] sm:$0xf] %vm2051, %v1822
      %2080 = vst.msk [vmem:[%s206 + $0x70] sm:$0xf] %vm2051, %v1823
      %2081 = vst.msk [vmem:[%s206 + $0x74] sm:$0xf] %vm2051, %v1824
      %2082 = vst.msk [vmem:[%s206 + $0x78] sm:$0xf] %vm2051, %v1825
      %2083 = vst.msk [vmem:[%s206 + $0x7c] sm:$0xf] %vm2051, %v1826
      %2084 = vst.msk [vmem:[%s206 + $0x80] sm:$0xf] %vm2051, %v1827
      %2085 = vst.msk [vmem:[%s206 + $0x84] sm:$0xf] %vm2051, %v1828
      %2086 = vst.msk [vmem:[%s206 + $0x88] sm:$0xf] %vm2051, %v1829
      %2087 = vst.msk [vmem:[%s206 + $0x8c] sm:$0xf] %vm2051, %v1830
      %2088 = vst.msk [vmem:[%s206 + $0x90] sm:$0xf] %vm2051, %v1831
      %2089 = vst.msk [vmem:[%s206 + $0x94] sm:$0xf] %vm2051, %v1832
      %2090 = vst.msk [vmem:[%s206 + $0x98] sm:$0xf] %vm2051, %v1833
      %2091 = vst.msk [vmem:[%s206 + $0x9c] sm:$0xf] %vm2051, %v1834
      %2092 = vst.msk [vmem:[%s206 + $0xa0] sm:$0xf] %vm2051, %v1835
      %2093 = vst.msk [vmem:[%s206 + $0xa4] sm:$0xf] %vm2051, %v1836
      %2094 = vst.msk [vmem:[%s206 + $0xa8] sm:$0xf] %vm2051, %v1837
      %2095 = vst.msk [vmem:[%s206 + $0xac] sm:$0xf] %vm2051, %v1838
      %2096 = vst.msk [vmem:[%s206 + $0xb0] sm:$0xf] %vm2051, %v1839
      %2097 = vst.msk [vmem:[%s206 + $0xb4] sm:$0xf] %vm2051, %v1840
      %2098 = vst.msk [vmem:[%s206 + $0xb8] sm:$0xf] %vm2051, %v1841
      %2099 = vst.msk [vmem:[%s206 + $0xbc] sm:$0xf] %vm2051, %v1842
      %2100 = vst.msk [vmem:[%s206 + $0xc0] sm:$0xf] %vm2051, %v1843
      %2101 = vst.msk [vmem:[%s206 + $0xc4] sm:$0xf] %vm2051, %v1844
      %2102 = vst.msk [vmem:[%s206 + $0xc8] sm:$0xf] %vm2051, %v1845
      %2103 = vst.msk [vmem:[%s206 + $0xcc] sm:$0xf] %vm2051, %v1846
      %2104 = vst.msk [vmem:[%s206 + $0xd0] sm:$0xf] %vm2051, %v1847
      %2105 = vst.msk [vmem:[%s206 + $0xd4] sm:$0xf] %vm2051, %v1848
      %2106 = vst.msk [vmem:[%s206 + $0xd8] sm:$0xf] %vm2051, %v1849
      %2107 = vst.msk [vmem:[%s206 + $0xdc] sm:$0xf] %vm2051, %v1850
      %2108 = vst.msk [vmem:[%s206 + $0xe0] sm:$0xf] %vm2051, %v1851
      %2109 = vst.msk [vmem:[%s206 + $0xe4] sm:$0xf] %vm2051, %v1852
      %2110 = vst.msk [vmem:[%s206 + $0xe8] sm:$0xf] %vm2051, %v1853
      %2111 = vst.msk [vmem:[%s206 + $0xec] sm:$0xf] %vm2051, %v1854
      %2112 = vst.msk [vmem:[%s206 + $0xf0] sm:$0xf] %vm2051, %v1855
      %2113 = vst.msk [vmem:[%s206 + $0xf4] sm:$0xf] %vm2051, %v1856
      %2114 = vst.msk [vmem:[%s206 + $0xf8] sm:$0xf] %vm2051, %v1857
      %2115 = vst.msk [vmem:[%s206 + $0xfc] sm:$0xf] %vm2051, %v1858
      %2116 = vst.msk [vmem:[%s206 + $0x100] sm:$0xf] %vm2051, %v1859
      %2117 = vst.msk [vmem:[%s206 + $0x104] sm:$0xf] %vm2051, %v1860
      %2118 = vst.msk [vmem:[%s206 + $0x108] sm:$0xf] %vm2051, %v1861
      %2119 = vst.msk [vmem:[%s206 + $0x10c] sm:$0xf] %vm2051, %v1862
      %2120 = vst.msk [vmem:[%s206 + $0x110] sm:$0xf] %vm2051, %v1863
      %2121 = vst.msk [vmem:[%s206 + $0x114] sm:$0xf] %vm2051, %v1864
      %2122 = vst.msk [vmem:[%s206 + $0x118] sm:$0xf] %vm2051, %v1865
      %2123 = vst.msk [vmem:[%s206 + $0x11c] sm:$0xf] %vm2051, %v1866
      %2124 = vst.msk [vmem:[%s206 + $0x120] sm:$0xf] %vm2051, %v1867
      %2125 = vst.msk [vmem:[%s206 + $0x124] sm:$0xf] %vm2051, %v1868
      %2126 = vst.msk [vmem:[%s206 + $0x128] sm:$0xf] %vm2051, %v1869
      %2127 = vst.msk [vmem:[%s206 + $0x12c] sm:$0xf] %vm2051, %v1870
      %2128 = vst.msk [vmem:[%s206 + $0x130] sm:$0xf] %vm2051, %v1871
      %2129 = vst.msk [vmem:[%s206 + $0x134] sm:$0xf] %vm2051, %v1872
      %2130 = vst.msk [vmem:[%s206 + $0x138] sm:$0xf] %vm2051, %v1873
      %2131 = vst.msk [vmem:[%s206 + $0x13c] sm:$0xf] %vm2051, %v1874
      %2132 = vst.msk [vmem:[%s206 + $0x140] sm:$0xf] %vm2051, %v1875
      %2133 = vst.msk [vmem:[%s206 + $0x144] sm:$0xf] %vm2051, %v1876
      %2134 = vst.msk [vmem:[%s206 + $0x148] sm:$0xf] %vm2051, %v1877
      %2135 = vst.msk [vmem:[%s206 + $0x14c] sm:$0xf] %vm2051, %v1878
      %2136 = vst.msk [vmem:[%s206 + $0x150] sm:$0xf] %vm2051, %v1879
      %2137 = vst.msk [vmem:[%s206 + $0x154] sm:$0xf] %vm2051, %v1880
      %2138 = vst.msk [vmem:[%s206 + $0x158] sm:$0xf] %vm2051, %v1881
      %2139 = vst.msk [vmem:[%s206 + $0x15c] sm:$0xf] %vm2051, %v1882
      %2140 = vst.msk [vmem:[%s206 + $0x160] sm:$0xf] %vm2051, %v1883
      %2141 = vst.msk [vmem:[%s206 + $0x164] sm:$0xf] %vm2051, %v1884
      %2142 = vst.msk [vmem:[%s206 + $0x168] sm:$0xf] %vm2051, %v1885
      %2143 = vst.msk [vmem:[%s206 + $0x16c] sm:$0xf] %vm2051, %v1886
      %2144 = vst.msk [vmem:[%s206 + $0x170] sm:$0xf] %vm2051, %v1887
      %2145 = vst.msk [vmem:[%s206 + $0x174] sm:$0xf] %vm2051, %v1888
      %2146 = vst.msk [vmem:[%s206 + $0x178] sm:$0xf] %vm2051, %v1889
      %2147 = vst.msk [vmem:[%s206 + $0x17c] sm:$0xf] %vm2051, %v1890
      %2148 = vst.msk [vmem:[%s206 + $0x180] sm:$0xf] %vm2051, %v1891
      %2149 = vst.msk [vmem:[%s206 + $0x184] sm:$0xf] %vm2051, %v1892
      %2150 = vst.msk [vmem:[%s206 + $0x188] sm:$0xf] %vm2051, %v1893
      %2151 = vst.msk [vmem:[%s206 + $0x18c] sm:$0xf] %vm2051, %v1894
      %2152 = vst.msk [vmem:[%s206 + $0x190] sm:$0xf] %vm2051, %v1895
      %2153 = vst.msk [vmem:[%s206 + $0x194] sm:$0xf] %vm2051, %v1896
      %2154 = vst.msk [vmem:[%s206 + $0x198] sm:$0xf] %vm2051, %v1897
      %2155 = vst.msk [vmem:[%s206 + $0x19c] sm:$0xf] %vm2051, %v1898
      %2156 = vst.msk [vmem:[%s206 + $0x1a0] sm:$0xf] %vm2051, %v1899
      %2157 = vst.msk [vmem:[%s206 + $0x1a4] sm:$0xf] %vm2051, %v1900
      %2158 = vst.msk [vmem:[%s206 + $0x1a8] sm:$0xf] %vm2051, %v1901
      %2159 = vst.msk [vmem:[%s206 + $0x1ac] sm:$0xf] %vm2051, %v1902
      %2160 = vst.msk [vmem:[%s206 + $0x1b0] sm:$0xf] %vm2051, %v1903
      %2161 = vst.msk [vmem:[%s206 + $0x1b4] sm:$0xf] %vm2051, %v1904
      %2162 = vst.msk [vmem:[%s206 + $0x1b8] sm:$0xf] %vm2051, %v1905
      %2163 = vst.msk [vmem:[%s206 + $0x1bc] sm:$0xf] %vm2051, %v1906
      %2164 = vst.msk [vmem:[%s206 + $0x1c0] sm:$0xf] %vm2051, %v1907
      %2165 = vst.msk [vmem:[%s206 + $0x1c4] sm:$0xf] %vm2051, %v1908
      %2166 = vst.msk [vmem:[%s206 + $0x1c8] sm:$0xf] %vm2051, %v1909
      %2167 = vst.msk [vmem:[%s206 + $0x1cc] sm:$0xf] %vm2051, %v1910
      %2168 = vst.msk [vmem:[%s206 + $0x1d0] sm:$0xf] %vm2051, %v1911
      %2169 = vst.msk [vmem:[%s206 + $0x1d4] sm:$0xf] %vm2051, %v1912
      %2170 = vst.msk [vmem:[%s206 + $0x1d8] sm:$0xf] %vm2051, %v1913
      %2171 = vst.msk [vmem:[%s206 + $0x1dc] sm:$0xf] %vm2051, %v1914
      %2172 = vst.msk [vmem:[%s206 + $0x1e0] sm:$0xf] %vm2051, %v1915
      %2173 = vst.msk [vmem:[%s206 + $0x1e4] sm:$0xf] %vm2051, %v1916
      %2174 = vst.msk [vmem:[%s206 + $0x1e8] sm:$0xf] %vm2051, %v1917
      %2175 = vst.msk [vmem:[%s206 + $0x1ec] sm:$0xf] %vm2051, %v1918
      %2176 = vst.msk [vmem:[%s206 + $0x1f0] sm:$0xf] %vm2051, %v1919
      %2177 = vst.msk [vmem:[%s206 + $0x1f4] sm:$0xf] %vm2051, %v1920
      %2178 = vst.msk [vmem:[%s206 + $0x1f8] sm:$0xf] %vm2051, %v1921
      %2179 = vst.msk [vmem:[%s206 + $0x1fc] sm:$0xf] %vm2051, %v1922
      %v2180 = vsel %vm669, %v1411, 0.0
      %v2181 = vsel %vm669, %v1412, 0.0
      %v2182 = vadd.f32 %v2180, %v2181
      %v2183 = vsel %vm669, %v1413, 0.0
      %v2184 = vadd.f32 %v2182, %v2183
      %v2185 = vsel %vm669, %v1414, 0.0
      %v2186 = vadd.f32 %v2184, %v2185
      %v2187 = vsel %vm669, %v1415, 0.0
      %v2188 = vadd.f32 %v2186, %v2187
      %v2189 = vsel %vm669, %v1416, 0.0
      %v2190 = vadd.f32 %v2188, %v2189
      %v2191 = vsel %vm669, %v1417, 0.0
      %v2192 = vadd.f32 %v2190, %v2191
      %v2193 = vsel %vm669, %v1418, 0.0
      %v2194 = vadd.f32 %v2192, %v2193
      %v2195 = vsel %vm669, %v1419, 0.0
      %v2196 = vadd.f32 %v2194, %v2195
      %v2197 = vsel %vm669, %v1420, 0.0
      %v2198 = vadd.f32 %v2196, %v2197
      %v2199 = vsel %vm669, %v1421, 0.0
      %v2200 = vadd.f32 %v2198, %v2199
      %v2201 = vsel %vm669, %v1422, 0.0
      %v2202 = vadd.f32 %v2200, %v2201
      %v2203 = vsel %vm669, %v1423, 0.0
      %v2204 = vadd.f32 %v2202, %v2203
      %v2205 = vsel %vm669, %v1424, 0.0
      %v2206 = vadd.f32 %v2204, %v2205
      %v2207 = vsel %vm669, %v1425, 0.0
      %v2208 = vadd.f32 %v2206, %v2207
      %v2209 = vsel %vm669, %v1426, 0.0
      %v2210 = vadd.f32 %v2208, %v2209
      %v2211 = vsel %vm669, %v1427, 0.0
      %v2212 = vadd.f32 %v2210, %v2211
      %v2213 = vsel %vm669, %v1428, 0.0
      %v2214 = vadd.f32 %v2212, %v2213
      %v2215 = vsel %vm669, %v1429, 0.0
      %v2216 = vadd.f32 %v2214, %v2215
      %v2217 = vsel %vm669, %v1430, 0.0
      %v2218 = vadd.f32 %v2216, %v2217
      %v2219 = vsel %vm669, %v1431, 0.0
      %v2220 = vadd.f32 %v2218, %v2219
      %v2221 = vsel %vm669, %v1432, 0.0
      %v2222 = vadd.f32 %v2220, %v2221
      %v2223 = vsel %vm669, %v1433, 0.0
      %v2224 = vadd.f32 %v2222, %v2223
      %v2225 = vsel %vm669, %v1434, 0.0
      %v2226 = vadd.f32 %v2224, %v2225
      %v2227 = vsel %vm669, %v1435, 0.0
      %v2228 = vadd.f32 %v2226, %v2227
      %v2229 = vsel %vm669, %v1436, 0.0
      %v2230 = vadd.f32 %v2228, %v2229
      %v2231 = vsel %vm669, %v1437, 0.0
      %v2232 = vadd.f32 %v2230, %v2231
      %v2233 = vsel %vm669, %v1438, 0.0
      %v2234 = vadd.f32 %v2232, %v2233
      %v2235 = vsel %vm669, %v1439, 0.0
      %v2236 = vadd.f32 %v2234, %v2235
      %v2237 = vsel %vm669, %v1440, 0.0
      %v2238 = vadd.f32 %v2236, %v2237
      %v2239 = vsel %vm669, %v1441, 0.0
      %v2240 = vadd.f32 %v2238, %v2239
      %v2241 = vsel %vm669, %v1442, 0.0
      %v2242 = vadd.f32 %v2240, %v2241
      %v2243 = vsel %vm669, %v1443, 0.0
      %v2244 = vadd.f32 %v2242, %v2243
      %v2245 = vsel %vm669, %v1444, 0.0
      %v2246 = vadd.f32 %v2244, %v2245
      %v2247 = vsel %vm669, %v1445, 0.0
      %v2248 = vadd.f32 %v2246, %v2247
      %v2249 = vsel %vm669, %v1446, 0.0
      %v2250 = vadd.f32 %v2248, %v2249
      %v2251 = vsel %vm669, %v1447, 0.0
      %v2252 = vadd.f32 %v2250, %v2251
      %v2253 = vsel %vm669, %v1448, 0.0
      %v2254 = vadd.f32 %v2252, %v2253
      %v2255 = vsel %vm669, %v1449, 0.0
      %v2256 = vadd.f32 %v2254, %v2255
      %v2257 = vsel %vm669, %v1450, 0.0
      %v2258 = vadd.f32 %v2256, %v2257
      %v2259 = vsel %vm669, %v1451, 0.0
      %v2260 = vadd.f32 %v2258, %v2259
      %v2261 = vsel %vm669, %v1452, 0.0
      %v2262 = vadd.f32 %v2260, %v2261
      %v2263 = vsel %vm669, %v1453, 0.0
      %v2264 = vadd.f32 %v2262, %v2263
      %v2265 = vsel %vm669, %v1454, 0.0
      %v2266 = vadd.f32 %v2264, %v2265
      %v2267 = vsel %vm669, %v1455, 0.0
      %v2268 = vadd.f32 %v2266, %v2267
      %v2269 = vsel %vm669, %v1456, 0.0
      %v2270 = vadd.f32 %v2268, %v2269
      %v2271 = vsel %vm669, %v1457, 0.0
      %v2272 = vadd.f32 %v2270, %v2271
      %v2273 = vsel %vm669, %v1458, 0.0
      %v2274 = vadd.f32 %v2272, %v2273
      %v2275 = vsel %vm669, %v1459, 0.0
      %v2276 = vadd.f32 %v2274, %v2275
      %v2277 = vsel %vm669, %v1460, 0.0
      %v2278 = vadd.f32 %v2276, %v2277
      %v2279 = vsel %vm669, %v1461, 0.0
      %v2280 = vadd.f32 %v2278, %v2279
      %v2281 = vsel %vm669, %v1462, 0.0
      %v2282 = vadd.f32 %v2280, %v2281
      %v2283 = vsel %vm669, %v1463, 0.0
      %v2284 = vadd.f32 %v2282, %v2283
      %v2285 = vsel %vm669, %v1464, 0.0
      %v2286 = vadd.f32 %v2284, %v2285
      %v2287 = vsel %vm669, %v1465, 0.0
      %v2288 = vadd.f32 %v2286, %v2287
      %v2289 = vsel %vm669, %v1466, 0.0
      %v2290 = vadd.f32 %v2288, %v2289
      %v2291 = vsel %vm669, %v1467, 0.0
      %v2292 = vadd.f32 %v2290, %v2291
      %v2293 = vsel %vm669, %v1468, 0.0
      %v2294 = vadd.f32 %v2292, %v2293
      %v2295 = vsel %vm669, %v1469, 0.0
      %v2296 = vadd.f32 %v2294, %v2295
      %v2297 = vsel %vm669, %v1470, 0.0
      %v2298 = vadd.f32 %v2296, %v2297
      %v2299 = vsel %vm669, %v1471, 0.0
      %v2300 = vadd.f32 %v2298, %v2299
      %v2301 = vsel %vm669, %v1472, 0.0
      %v2302 = vadd.f32 %v2300, %v2301
      %v2303 = vsel %vm669, %v1473, 0.0
      %v2304 = vadd.f32 %v2302, %v2303
      %v2305 = vsel %vm669, %v1474, 0.0
      %v2306 = vadd.f32 %v2304, %v2305
      %v2307 = vsel %vm669, %v1475, 0.0
      %v2308 = vadd.f32 %v2306, %v2307
      %v2309 = vsel %vm669, %v1476, 0.0
      %v2310 = vadd.f32 %v2308, %v2309
      %v2311 = vsel %vm669, %v1477, 0.0
      %v2312 = vadd.f32 %v2310, %v2311
      %v2313 = vsel %vm669, %v1478, 0.0
      %v2314 = vadd.f32 %v2312, %v2313
      %v2315 = vsel %vm669, %v1479, 0.0
      %v2316 = vadd.f32 %v2314, %v2315
      %v2317 = vsel %vm669, %v1480, 0.0
      %v2318 = vadd.f32 %v2316, %v2317
      %v2319 = vsel %vm669, %v1481, 0.0
      %v2320 = vadd.f32 %v2318, %v2319
      %v2321 = vsel %vm669, %v1482, 0.0
      %v2322 = vadd.f32 %v2320, %v2321
      %v2323 = vsel %vm669, %v1483, 0.0
      %v2324 = vadd.f32 %v2322, %v2323
      %v2325 = vsel %vm669, %v1484, 0.0
      %v2326 = vadd.f32 %v2324, %v2325
      %v2327 = vsel %vm669, %v1485, 0.0
      %v2328 = vadd.f32 %v2326, %v2327
      %v2329 = vsel %vm669, %v1486, 0.0
      %v2330 = vadd.f32 %v2328, %v2329
      %v2331 = vsel %vm669, %v1487, 0.0
      %v2332 = vadd.f32 %v2330, %v2331
      %v2333 = vsel %vm669, %v1488, 0.0
      %v2334 = vadd.f32 %v2332, %v2333
      %v2335 = vsel %vm669, %v1489, 0.0
      %v2336 = vadd.f32 %v2334, %v2335
      %v2337 = vsel %vm669, %v1490, 0.0
      %v2338 = vadd.f32 %v2336, %v2337
      %v2339 = vsel %vm669, %v1491, 0.0
      %v2340 = vadd.f32 %v2338, %v2339
      %v2341 = vsel %vm669, %v1492, 0.0
      %v2342 = vadd.f32 %v2340, %v2341
      %v2343 = vsel %vm669, %v1493, 0.0
      %v2344 = vadd.f32 %v2342, %v2343
      %v2345 = vsel %vm669, %v1494, 0.0
      %v2346 = vadd.f32 %v2344, %v2345
      %v2347 = vsel %vm669, %v1495, 0.0
      %v2348 = vadd.f32 %v2346, %v2347
      %v2349 = vsel %vm669, %v1496, 0.0
      %v2350 = vadd.f32 %v2348, %v2349
      %v2351 = vsel %vm669, %v1497, 0.0
      %v2352 = vadd.f32 %v2350, %v2351
      %v2353 = vsel %vm669, %v1498, 0.0
      %v2354 = vadd.f32 %v2352, %v2353
      %v2355 = vsel %vm669, %v1499, 0.0
      %v2356 = vadd.f32 %v2354, %v2355
      %v2357 = vsel %vm669, %v1500, 0.0
      %v2358 = vadd.f32 %v2356, %v2357
      %v2359 = vsel %vm669, %v1501, 0.0
      %v2360 = vadd.f32 %v2358, %v2359
      %v2361 = vsel %vm669, %v1502, 0.0
      %v2362 = vadd.f32 %v2360, %v2361
      %v2363 = vsel %vm669, %v1503, 0.0
      %v2364 = vadd.f32 %v2362, %v2363
      %v2365 = vsel %vm669, %v1504, 0.0
      %v2366 = vadd.f32 %v2364, %v2365
      %v2367 = vsel %vm669, %v1505, 0.0
      %v2368 = vadd.f32 %v2366, %v2367
      %v2369 = vsel %vm669, %v1506, 0.0
      %v2370 = vadd.f32 %v2368, %v2369
      %v2371 = vsel %vm669, %v1507, 0.0
      %v2372 = vadd.f32 %v2370, %v2371
      %v2373 = vsel %vm669, %v1508, 0.0
      %v2374 = vadd.f32 %v2372, %v2373
      %v2375 = vsel %vm669, %v1509, 0.0
      %v2376 = vadd.f32 %v2374, %v2375
      %v2377 = vsel %vm669, %v1510, 0.0
      %v2378 = vadd.f32 %v2376, %v2377
      %v2379 = vsel %vm669, %v1511, 0.0
      %v2380 = vadd.f32 %v2378, %v2379
      %v2381 = vsel %vm669, %v1512, 0.0
      %v2382 = vadd.f32 %v2380, %v2381
      %v2383 = vsel %vm669, %v1513, 0.0
      %v2384 = vadd.f32 %v2382, %v2383
      %v2385 = vsel %vm669, %v1514, 0.0
      %v2386 = vadd.f32 %v2384, %v2385
      %v2387 = vsel %vm669, %v1515, 0.0
      %v2388 = vadd.f32 %v2386, %v2387
      %v2389 = vsel %vm669, %v1516, 0.0
      %v2390 = vadd.f32 %v2388, %v2389
      %v2391 = vsel %vm669, %v1517, 0.0
      %v2392 = vadd.f32 %v2390, %v2391
      %v2393 = vsel %vm669, %v1518, 0.0
      %v2394 = vadd.f32 %v2392, %v2393
      %v2395 = vsel %vm669, %v1519, 0.0
      %v2396 = vadd.f32 %v2394, %v2395
      %v2397 = vsel %vm669, %v1520, 0.0
      %v2398 = vadd.f32 %v2396, %v2397
      %v2399 = vsel %vm669, %v1521, 0.0
      %v2400 = vadd.f32 %v2398, %v2399
      %v2401 = vsel %vm669, %v1522, 0.0
      %v2402 = vadd.f32 %v2400, %v2401
      %v2403 = vsel %vm669, %v1523, 0.0
      %v2404 = vadd.f32 %v2402, %v2403
      %v2405 = vsel %vm669, %v1524, 0.0
      %v2406 = vadd.f32 %v2404, %v2405
      %v2407 = vsel %vm669, %v1525, 0.0
      %v2408 = vadd.f32 %v2406, %v2407
      %v2409 = vsel %vm669, %v1526, 0.0
      %v2410 = vadd.f32 %v2408, %v2409
      %v2411 = vsel %vm669, %v1527, 0.0
      %v2412 = vadd.f32 %v2410, %v2411
      %v2413 = vsel %vm669, %v1528, 0.0
      %v2414 = vadd.f32 %v2412, %v2413
      %v2415 = vsel %vm669, %v1529, 0.0
      %v2416 = vadd.f32 %v2414, %v2415
      %v2417 = vsel %vm669, %v1530, 0.0
      %v2418 = vadd.f32 %v2416, %v2417
      %v2419 = vsel %vm669, %v1531, 0.0
      %v2420 = vadd.f32 %v2418, %v2419
      %v2421 = vsel %vm669, %v1532, 0.0
      %v2422 = vadd.f32 %v2420, %v2421
      %v2423 = vsel %vm669, %v1533, 0.0
      %v2424 = vadd.f32 %v2422, %v2423
      %v2425 = vsel %vm669, %v1534, 0.0
      %v2426 = vadd.f32 %v2424, %v2425
      %v2427 = vsel %vm669, %v1535, 0.0
      %v2428 = vadd.f32 %v2426, %v2427
      %v2429 = vsel %vm669, %v1536, 0.0
      %v2430 = vadd.f32 %v2428, %v2429
      %v2431 = vsel %vm669, %v1537, 0.0
      %v2432 = vadd.f32 %v2430, %v2431
      %v2433 = vsel %vm669, %v1538, 0.0
      %v2434 = vadd.f32 %v2432, %v2433
      %v2435 = vrot.slane %v2434, 4
      %v2436 = vadd.f32 %v2434, %v2435
      %v2437 = vrot.slane %v2436, 2
      %v2438 = vadd.f32 %v2436, %v2437
      %v2439 = vrot.slane %v2438, 1
      %v2440 = vadd.f32 %v2438, %v2439
      %v2441 = vmul.f32 %v1411, %v1411
      %v2442 = vmul.f32 %v1412, %v1412
      %v2443 = vmul.f32 %v1413, %v1413
      %v2444 = vmul.f32 %v1414, %v1414
      %v2445 = vmul.f32 %v1415, %v1415
      %v2446 = vmul.f32 %v1416, %v1416
      %v2447 = vmul.f32 %v1417, %v1417
      %v2448 = vmul.f32 %v1418, %v1418
      %v2449 = vmul.f32 %v1419, %v1419
      %v2450 = vmul.f32 %v1420, %v1420
      %v2451 = vmul.f32 %v1421, %v1421
      %v2452 = vmul.f32 %v1422, %v1422
      %v2453 = vmul.f32 %v1423, %v1423
      %v2454 = vmul.f32 %v1424, %v1424
      %v2455 = vmul.f32 %v1425, %v1425
      %v2456 = vmul.f32 %v1426, %v1426
      %v2457 = vmul.f32 %v1427, %v1427
      %v2458 = vmul.f32 %v1428, %v1428
      %v2459 = vmul.f32 %v1429, %v1429
      %v2460 = vmul.f32 %v1430, %v1430
      %v2461 = vmul.f32 %v1431, %v1431
      %v2462 = vmul.f32 %v1432, %v1432
      %v2463 = vmul.f32 %v1433, %v1433
      %v2464 = vmul.f32 %v1434, %v1434
      %v2465 = vmul.f32 %v1435, %v1435
      %v2466 = vmul.f32 %v1436, %v1436
      %v2467 = vmul.f32 %v1437, %v1437
      %v2468 = vmul.f32 %v1438, %v1438
      %v2469 = vmul.f32 %v1439, %v1439
      %v2470 = vmul.f32 %v1440, %v1440
      %v2471 = vmul.f32 %v1441, %v1441
      %v2472 = vmul.f32 %v1442, %v1442
      %v2473 = vmul.f32 %v1443, %v1443
      %v2474 = vmul.f32 %v1444, %v1444
      %v2475 = vmul.f32 %v1445, %v1445
      %v2476 = vmul.f32 %v1446, %v1446
      %v2477 = vmul.f32 %v1447, %v1447
      %v2478 = vmul.f32 %v1448, %v1448
      %v2479 = vmul.f32 %v1449, %v1449
      %v2480 = vmul.f32 %v1450, %v1450
      %v2481 = vmul.f32 %v1451, %v1451
      %v2482 = vmul.f32 %v1452, %v1452
      %v2483 = vmul.f32 %v1453, %v1453
      %v2484 = vmul.f32 %v1454, %v1454
      %v2485 = vmul.f32 %v1455, %v1455
      %v2486 = vmul.f32 %v1456, %v1456
      %v2487 = vmul.f32 %v1457, %v1457
      %v2488 = vmul.f32 %v1458, %v1458
      %v2489 = vmul.f32 %v1459, %v1459
      %v2490 = vmul.f32 %v1460, %v1460
      %v2491 = vmul.f32 %v1461, %v1461
      %v2492 = vmul.f32 %v1462, %v1462
      %v2493 = vmul.f32 %v1463, %v1463
      %v2494 = vmul.f32 %v1464, %v1464
      %v2495 = vmul.f32 %v1465, %v1465
      %v2496 = vmul.f32 %v1466, %v1466
      %v2497 = vmul.f32 %v1467, %v1467
      %v2498 = vmul.f32 %v1468, %v1468
      %v2499 = vmul.f32 %v1469, %v1469
      %v2500 = vmul.f32 %v1470, %v1470
      %v2501 = vmul.f32 %v1471, %v1471
      %v2502 = vmul.f32 %v1472, %v1472
      %v2503 = vmul.f32 %v1473, %v1473
      %v2504 = vmul.f32 %v1474, %v1474
      %v2505 = vmul.f32 %v1475, %v1475
      %v2506 = vmul.f32 %v1476, %v1476
      %v2507 = vmul.f32 %v1477, %v1477
      %v2508 = vmul.f32 %v1478, %v1478
      %v2509 = vmul.f32 %v1479, %v1479
      %v2510 = vmul.f32 %v1480, %v1480
      %v2511 = vmul.f32 %v1481, %v1481
      %v2512 = vmul.f32 %v1482, %v1482
      %v2513 = vmul.f32 %v1483, %v1483
      %v2514 = vmul.f32 %v1484, %v1484
      %v2515 = vmul.f32 %v1485, %v1485
      %v2516 = vmul.f32 %v1486, %v1486
      %v2517 = vmul.f32 %v1487, %v1487
      %v2518 = vmul.f32 %v1488, %v1488
      %v2519 = vmul.f32 %v1489, %v1489
      %v2520 = vmul.f32 %v1490, %v1490
      %v2521 = vmul.f32 %v1491, %v1491
      %v2522 = vmul.f32 %v1492, %v1492
      %v2523 = vmul.f32 %v1493, %v1493
      %v2524 = vmul.f32 %v1494, %v1494
      %v2525 = vmul.f32 %v1495, %v1495
      %v2526 = vmul.f32 %v1496, %v1496
      %v2527 = vmul.f32 %v1497, %v1497
      %v2528 = vmul.f32 %v1498, %v1498
      %v2529 = vmul.f32 %v1499, %v1499
      %v2530 = vmul.f32 %v1500, %v1500
      %v2531 = vmul.f32 %v1501, %v1501
      %v2532 = vmul.f32 %v1502, %v1502
      %v2533 = vmul.f32 %v1503, %v1503
      %v2534 = vmul.f32 %v1504, %v1504
      %v2535 = vmul.f32 %v1505, %v1505
      %v2536 = vmul.f32 %v1506, %v1506
      %v2537 = vmul.f32 %v1507, %v1507
      %v2538 = vmul.f32 %v1508, %v1508
      %v2539 = vmul.f32 %v1509, %v1509
      %v2540 = vmul.f32 %v1510, %v1510
      %v2541 = vmul.f32 %v1511, %v1511
      %v2542 = vmul.f32 %v1512, %v1512
      %v2543 = vmul.f32 %v1513, %v1513
      %v2544 = vmul.f32 %v1514, %v1514
      %v2545 = vmul.f32 %v1515, %v1515
      %v2546 = vmul.f32 %v1516, %v1516
      %v2547 = vmul.f32 %v1517, %v1517
      %v2548 = vmul.f32 %v1518, %v1518
      %v2549 = vmul.f32 %v1519, %v1519
      %v2550 = vmul.f32 %v1520, %v1520
      %v2551 = vmul.f32 %v1521, %v1521
      %v2552 = vmul.f32 %v1522, %v1522
      %v2553 = vmul.f32 %v1523, %v1523
      %v2554 = vmul.f32 %v1524, %v1524
      %v2555 = vmul.f32 %v1525, %v1525
      %v2556 = vmul.f32 %v1526, %v1526
      %v2557 = vmul.f32 %v1527, %v1527
      %v2558 = vmul.f32 %v1528, %v1528
      %v2559 = vmul.f32 %v1529, %v1529
      %v2560 = vmul.f32 %v1530, %v1530
      %v2561 = vmul.f32 %v1531, %v1531
      %v2562 = vmul.f32 %v1532, %v1532
      %v2563 = vmul.f32 %v1533, %v1533
      %v2564 = vmul.f32 %v1534, %v1534
      %v2565 = vmul.f32 %v1535, %v1535
      %v2566 = vmul.f32 %v1536, %v1536
      %v2567 = vmul.f32 %v1537, %v1537
      %v2568 = vmul.f32 %v1538, %v1538
      %v2569 = vsel %vm669, %v2441, 0.0
      %v2570 = vsel %vm669, %v2442, 0.0
      %v2571 = vadd.f32 %v2569, %v2570
      %v2572 = vsel %vm669, %v2443, 0.0
      %v2573 = vadd.f32 %v2571, %v2572
      %v2574 = vsel %vm669, %v2444, 0.0
      %v2575 = vadd.f32 %v2573, %v2574
      %v2576 = vsel %vm669, %v2445, 0.0
      %v2577 = vadd.f32 %v2575, %v2576
      %v2578 = vsel %vm669, %v2446, 0.0
      %v2579 = vadd.f32 %v2577, %v2578
      %v2580 = vsel %vm669, %v2447, 0.0
      %v2581 = vadd.f32 %v2579, %v2580
      %v2582 = vsel %vm669, %v2448, 0.0
      %v2583 = vadd.f32 %v2581, %v2582
      %v2584 = vsel %vm669, %v2449, 0.0
      %v2585 = vadd.f32 %v2583, %v2584
      %v2586 = vsel %vm669, %v2450, 0.0
      %v2587 = vadd.f32 %v2585, %v2586
      %v2588 = vsel %vm669, %v2451, 0.0
      %v2589 = vadd.f32 %v2587, %v2588
      %v2590 = vsel %vm669, %v2452, 0.0
      %v2591 = vadd.f32 %v2589, %v2590
      %v2592 = vsel %vm669, %v2453, 0.0
      %v2593 = vadd.f32 %v2591, %v2592
      %v2594 = vsel %vm669, %v2454, 0.0
      %v2595 = vadd.f32 %v2593, %v2594
      %v2596 = vsel %vm669, %v2455, 0.0
      %v2597 = vadd.f32 %v2595, %v2596
      %v2598 = vsel %vm669, %v2456, 0.0
      %v2599 = vadd.f32 %v2597, %v2598
      %v2600 = vsel %vm669, %v2457, 0.0
      %v2601 = vadd.f32 %v2599, %v2600
      %v2602 = vsel %vm669, %v2458, 0.0
      %v2603 = vadd.f32 %v2601, %v2602
      %v2604 = vsel %vm669, %v2459, 0.0
      %v2605 = vadd.f32 %v2603, %v2604
      %v2606 = vsel %vm669, %v2460, 0.0
      %v2607 = vadd.f32 %v2605, %v2606
      %v2608 = vsel %vm669, %v2461, 0.0
      %v2609 = vadd.f32 %v2607, %v2608
      %v2610 = vsel %vm669, %v2462, 0.0
      %v2611 = vadd.f32 %v2609, %v2610
      %v2612 = vsel %vm669, %v2463, 0.0
      %v2613 = vadd.f32 %v2611, %v2612
      %v2614 = vsel %vm669, %v2464, 0.0
      %v2615 = vadd.f32 %v2613, %v2614
      %v2616 = vsel %vm669, %v2465, 0.0
      %v2617 = vadd.f32 %v2615, %v2616
      %v2618 = vsel %vm669, %v2466, 0.0
      %v2619 = vadd.f32 %v2617, %v2618
      %v2620 = vsel %vm669, %v2467, 0.0
      %v2621 = vadd.f32 %v2619, %v2620
      %v2622 = vsel %vm669, %v2468, 0.0
      %v2623 = vadd.f32 %v2621, %v2622
      %v2624 = vsel %vm669, %v2469, 0.0
      %v2625 = vadd.f32 %v2623, %v2624
      %v2626 = vsel %vm669, %v2470, 0.0
      %v2627 = vadd.f32 %v2625, %v2626
      %v2628 = vsel %vm669, %v2471, 0.0
      %v2629 = vadd.f32 %v2627, %v2628
      %v2630 = vsel %vm669, %v2472, 0.0
      %v2631 = vadd.f32 %v2629, %v2630
      %v2632 = vsel %vm669, %v2473, 0.0
      %v2633 = vadd.f32 %v2631, %v2632
      %v2634 = vsel %vm669, %v2474, 0.0
      %v2635 = vadd.f32 %v2633, %v2634
      %v2636 = vsel %vm669, %v2475, 0.0
      %v2637 = vadd.f32 %v2635, %v2636
      %v2638 = vsel %vm669, %v2476, 0.0
      %v2639 = vadd.f32 %v2637, %v2638
      %v2640 = vsel %vm669, %v2477, 0.0
      %v2641 = vadd.f32 %v2639, %v2640
      %v2642 = vsel %vm669, %v2478, 0.0
      %v2643 = vadd.f32 %v2641, %v2642
      %v2644 = vsel %vm669, %v2479, 0.0
      %v2645 = vadd.f32 %v2643, %v2644
      %v2646 = vsel %vm669, %v2480, 0.0
      %v2647 = vadd.f32 %v2645, %v2646
      %v2648 = vsel %vm669, %v2481, 0.0
      %v2649 = vadd.f32 %v2647, %v2648
      %v2650 = vsel %vm669, %v2482, 0.0
      %v2651 = vadd.f32 %v2649, %v2650
      %v2652 = vsel %vm669, %v2483, 0.0
      %v2653 = vadd.f32 %v2651, %v2652
      %v2654 = vsel %vm669, %v2484, 0.0
      %v2655 = vadd.f32 %v2653, %v2654
      %v2656 = vsel %vm669, %v2485, 0.0
      %v2657 = vadd.f32 %v2655, %v2656
      %v2658 = vsel %vm669, %v2486, 0.0
      %v2659 = vadd.f32 %v2657, %v2658
      %v2660 = vsel %vm669, %v2487, 0.0
      %v2661 = vadd.f32 %v2659, %v2660
      %v2662 = vsel %vm669, %v2488, 0.0
      %v2663 = vadd.f32 %v2661, %v2662
      %v2664 = vsel %vm669, %v2489, 0.0
      %v2665 = vadd.f32 %v2663, %v2664
      %v2666 = vsel %vm669, %v2490, 0.0
      %v2667 = vadd.f32 %v2665, %v2666
      %v2668 = vsel %vm669, %v2491, 0.0
      %v2669 = vadd.f32 %v2667, %v2668
      %v2670 = vsel %vm669, %v2492, 0.0
      %v2671 = vadd.f32 %v2669, %v2670
      %v2672 = vsel %vm669, %v2493, 0.0
      %v2673 = vadd.f32 %v2671, %v2672
      %v2674 = vsel %vm669, %v2494, 0.0
      %v2675 = vadd.f32 %v2673, %v2674
      %v2676 = vsel %vm669, %v2495, 0.0
      %v2677 = vadd.f32 %v2675, %v2676
      %v2678 = vsel %vm669, %v2496, 0.0
      %v2679 = vadd.f32 %v2677, %v2678
      %v2680 = vsel %vm669, %v2497, 0.0
      %v2681 = vadd.f32 %v2679, %v2680
      %v2682 = vsel %vm669, %v2498, 0.0
      %v2683 = vadd.f32 %v2681, %v2682
      %v2684 = vsel %vm669, %v2499, 0.0
      %v2685 = vadd.f32 %v2683, %v2684
      %v2686 = vsel %vm669, %v2500, 0.0
      %v2687 = vadd.f32 %v2685, %v2686
      %v2688 = vsel %vm669, %v2501, 0.0
      %v2689 = vadd.f32 %v2687, %v2688
      %v2690 = vsel %vm669, %v2502, 0.0
      %v2691 = vadd.f32 %v2689, %v2690
      %v2692 = vsel %vm669, %v2503, 0.0
      %v2693 = vadd.f32 %v2691, %v2692
      %v2694 = vsel %vm669, %v2504, 0.0
      %v2695 = vadd.f32 %v2693, %v2694
      %v2696 = vsel %vm669, %v2505, 0.0
      %v2697 = vadd.f32 %v2695, %v2696
      %v2698 = vsel %vm669, %v2506, 0.0
      %v2699 = vadd.f32 %v2697, %v2698
      %v2700 = vsel %vm669, %v2507, 0.0
      %v2701 = vadd.f32 %v2699, %v2700
      %v2702 = vsel %vm669, %v2508, 0.0
      %v2703 = vadd.f32 %v2701, %v2702
      %v2704 = vsel %vm669, %v2509, 0.0
      %v2705 = vadd.f32 %v2703, %v2704
      %v2706 = vsel %vm669, %v2510, 0.0
      %v2707 = vadd.f32 %v2705, %v2706
      %v2708 = vsel %vm669, %v2511, 0.0
      %v2709 = vadd.f32 %v2707, %v2708
      %v2710 = vsel %vm669, %v2512, 0.0
      %v2711 = vadd.f32 %v2709, %v2710
      %v2712 = vsel %vm669, %v2513, 0.0
      %v2713 = vadd.f32 %v2711, %v2712
      %v2714 = vsel %vm669, %v2514, 0.0
      %v2715 = vadd.f32 %v2713, %v2714
      %v2716 = vsel %vm669, %v2515, 0.0
      %v2717 = vadd.f32 %v2715, %v2716
      %v2718 = vsel %vm669, %v2516, 0.0
      %v2719 = vadd.f32 %v2717, %v2718
      %v2720 = vsel %vm669, %v2517, 0.0
      %v2721 = vadd.f32 %v2719, %v2720
      %v2722 = vsel %vm669, %v2518, 0.0
      %v2723 = vadd.f32 %v2721, %v2722
      %v2724 = vsel %vm669, %v2519, 0.0
      %v2725 = vadd.f32 %v2723, %v2724
      %v2726 = vsel %vm669, %v2520, 0.0
      %v2727 = vadd.f32 %v2725, %v2726
      %v2728 = vsel %vm669, %v2521, 0.0
      %v2729 = vadd.f32 %v2727, %v2728
      %v2730 = vsel %vm669, %v2522, 0.0
      %v2731 = vadd.f32 %v2729, %v2730
      %v2732 = vsel %vm669, %v2523, 0.0
      %v2733 = vadd.f32 %v2731, %v2732
      %v2734 = vsel %vm669, %v2524, 0.0
      %v2735 = vadd.f32 %v2733, %v2734
      %v2736 = vsel %vm669, %v2525, 0.0
      %v2737 = vadd.f32 %v2735, %v2736
      %v2738 = vsel %vm669, %v2526, 0.0
      %v2739 = vadd.f32 %v2737, %v2738
      %v2740 = vsel %vm669, %v2527, 0.0
      %v2741 = vadd.f32 %v2739, %v2740
      %v2742 = vsel %vm669, %v2528, 0.0
      %v2743 = vadd.f32 %v2741, %v2742
      %v2744 = vsel %vm669, %v2529, 0.0
      %v2745 = vadd.f32 %v2743, %v2744
      %v2746 = vsel %vm669, %v2530, 0.0
      %v2747 = vadd.f32 %v2745, %v2746
      %v2748 = vsel %vm669, %v2531, 0.0
      %v2749 = vadd.f32 %v2747, %v2748
      %v2750 = vsel %vm669, %v2532, 0.0
      %v2751 = vadd.f32 %v2749, %v2750
      %v2752 = vsel %vm669, %v2533, 0.0
      %v2753 = vadd.f32 %v2751, %v2752
      %v2754 = vsel %vm669, %v2534, 0.0
      %v2755 = vadd.f32 %v2753, %v2754
      %v2756 = vsel %vm669, %v2535, 0.0
      %v2757 = vadd.f32 %v2755, %v2756
      %v2758 = vsel %vm669, %v2536, 0.0
      %v2759 = vadd.f32 %v2757, %v2758
      %v2760 = vsel %vm669, %v2537, 0.0
      %v2761 = vadd.f32 %v2759, %v2760
      %v2762 = vsel %vm669, %v2538, 0.0
      %v2763 = vadd.f32 %v2761, %v2762
      %v2764 = vsel %vm669, %v2539, 0.0
      %v2765 = vadd.f32 %v2763, %v2764
      %v2766 = vsel %vm669, %v2540, 0.0
      %v2767 = vadd.f32 %v2765, %v2766
      %v2768 = vsel %vm669, %v2541, 0.0
      %v2769 = vadd.f32 %v2767, %v2768
      %v2770 = vsel %vm669, %v2542, 0.0
      %v2771 = vadd.f32 %v2769, %v2770
      %v2772 = vsel %vm669, %v2543, 0.0
      %v2773 = vadd.f32 %v2771, %v2772
      %v2774 = vsel %vm669, %v2544, 0.0
      %v2775 = vadd.f32 %v2773, %v2774
      %v2776 = vsel %vm669, %v2545, 0.0
      %v2777 = vadd.f32 %v2775, %v2776
      %v2778 = vsel %vm669, %v2546, 0.0
      %v2779 = vadd.f32 %v2777, %v2778
      %v2780 = vsel %vm669, %v2547, 0.0
      %v2781 = vadd.f32 %v2779, %v2780
      %v2782 = vsel %vm669, %v2548, 0.0
      %v2783 = vadd.f32 %v2781, %v2782
      %v2784 = vsel %vm669, %v2549, 0.0
      %v2785 = vadd.f32 %v2783, %v2784
      %v2786 = vsel %vm669, %v2550, 0.0
      %v2787 = vadd.f32 %v2785, %v2786
      %v2788 = vsel %vm669, %v2551, 0.0
      %v2789 = vadd.f32 %v2787, %v2788
      %v2790 = vsel %vm669, %v2552, 0.0
      %v2791 = vadd.f32 %v2789, %v2790
      %v2792 = vsel %vm669, %v2553, 0.0
      %v2793 = vadd.f32 %v2791, %v2792
      %v2794 = vsel %vm669, %v2554, 0.0
      %v2795 = vadd.f32 %v2793, %v2794
      %v2796 = vsel %vm669, %v2555, 0.0
      %v2797 = vadd.f32 %v2795, %v2796
      %v2798 = vsel %vm669, %v2556, 0.0
      %v2799 = vadd.f32 %v2797, %v2798
      %v2800 = vsel %vm669, %v2557, 0.0
      %v2801 = vadd.f32 %v2799, %v2800
      %v2802 = vsel %vm669, %v2558, 0.0
      %v2803 = vadd.f32 %v2801, %v2802
      %v2804 = vsel %vm669, %v2559, 0.0
      %v2805 = vadd.f32 %v2803, %v2804
      %v2806 = vsel %vm669, %v2560, 0.0
      %v2807 = vadd.f32 %v2805, %v2806
      %v2808 = vsel %vm669, %v2561, 0.0
      %v2809 = vadd.f32 %v2807, %v2808
      %v2810 = vsel %vm669, %v2562, 0.0
      %v2811 = vadd.f32 %v2809, %v2810
      %v2812 = vsel %vm669, %v2563, 0.0
      %v2813 = vadd.f32 %v2811, %v2812
      %v2814 = vsel %vm669, %v2564, 0.0
      %v2815 = vadd.f32 %v2813, %v2814
      %v2816 = vsel %vm669, %v2565, 0.0
      %v2817 = vadd.f32 %v2815, %v2816
      %v2818 = vsel %vm669, %v2566, 0.0
      %v2819 = vadd.f32 %v2817, %v2818
      %v2820 = vsel %vm669, %v2567, 0.0
      %v2821 = vadd.f32 %v2819, %v2820
      %v2822 = vsel %vm669, %v2568, 0.0
      %v2823 = vadd.f32 %v2821, %v2822
      %v2824 = vrot.slane %v2823, 4
      %v2825 = vadd.f32 %v2823, %v2824
      %v2826 = vrot.slane %v2825, 2
      %v2827 = vadd.f32 %v2825, %v2826
      %v2828 = vrot.slane %v2827, 1
      %v2829 = vadd.f32 %v2827, %v2828
      %vm2830 = vcmask 1040384
      %v2831 = vsel %vm2830, %v2440, %v2829
      %vm2832 = vcmask 25600
      %2833 = vst.msk [vmem:[%s211] sm:$0x3] %vm2832, %v2831
      %s2834 = smul.u32 128, %s16
      %p2835 = scmp.lt.s32.totalorder %s2834, 255
      %s2836 = scalar_select %p2835, %s2834, 255
      %s2837 = smul.addr %s2836, 4
      %s2838 = scalar_lea.vmem %s3, %s2837
      %p2839 = scmp.lt.s32.totalorder %s16, 1
      %s2840 = scalar_select %p2839, %s16, 1
      %s2841 = smul.addr %s2840, 2
      %s2842 = scalar_lea.vmem %s4, %s2841
      // Predicated region
      $region33: #{unet_stage_block.4} parent=31 // pred_check
        %p2843 = pneg %p102
      $region34: #{unet_stage_block.4} parent=31 // pred_check_branch
        %2845 = sbr.rel (%p2843) target = $region36
      $region35: #{unet_stage_block.4} parent=31 // pred_region
        %s2846 = smul.u32 128, %s16
      $region36: #{unet_stage_block.4} parent=31 // pred_fallthru
        _
      // Predicated region
      $region37: #{unet_stage_block.4} parent=31 // pred_check
        %p2847 = pneg %p128
      $region38: #{unet_stage_block.4} parent=31 // pred_check_branch
        %2849 = sbr.rel (%p2847) target = $region40
      $region39: #{unet_stage_block.4} parent=31 // pred_region
        _
      $region40: #{unet_stage_block.4} parent=31 // pred_fallthru
        _
    $region32: #{unet_stage_block.4} parent=5 // pred_fallthru
      _
    %p2850 = scmp.le.s32.totalorder 2, %s11
    // Predicated region
    $region41: #{unet_stage_block.4} parent=5 // pred_check
      %p2851 = pneg %p2850
    $region42: #{unet_stage_block.4} parent=5 // pred_check_branch
      %2853 = sbr.rel (%p2851) target = $region44
    $region43: #{unet_stage_block.4} parent=5 // pred_region
      %s2854 = ssub.s32 %s11, 2
      // Predicated region
      $region45: #{unet_stage_block.4} parent=43 // pred_check
        %p2855 = pneg %p108
      $region46: #{unet_stage_block.4} parent=43 // pred_check_branch
        %2857 = sbr.rel (%p2855) target = $region48
      $region47: #{unet_stage_block.4} parent=43 // pred_region
        %s2858 = smul.u32 128, %s17
        %p2859 = scmp.lt.s32.totalorder %s2858, 255
        %s2860 = scalar_select %p2859, %s2858, 255
        %s2861 = smul.addr %s2860, 4
        %s2862 = scalar_lea.vmem %s3, %s2861
      $region48: #{unet_stage_block.4} parent=43 // pred_fallthru
        _
      // Predicated region
      $region49: #{unet_stage_block.4} parent=43 // pred_check
        %p2863 = pneg %p134
      $region50: #{unet_stage_block.4} parent=43 // pred_check_branch
        %2865 = sbr.rel (%p2863) target = $region52
      $region51: #{unet_stage_block.4} parent=43 // pred_region
        %p2866 = scmp.lt.s32.totalorder %s17, 1
        %s2867 = scalar_select %p2866, %s17, 1
        %s2868 = smul.addr %s2867, 2
        %s2869 = scalar_lea.vmem %s4, %s2868
      $region52: #{unet_stage_block.4} parent=43 // pred_fallthru
        _
    $region44: #{unet_stage_block.4} parent=5 // pred_fallthru
      _
  $region6: #{unet_stage_block.4} parent=0 // loop_footer
    %s15 = sadd.s32 1, %s11
  $region7: #{unet_stage_block.4} parent=0 // loop_footer_branch
    %10 = sbr.rel target = $region3
  $region8: #{unet_stage_block.4} parent=0 // loop_exit
    _

// kernel: unet_stage_block.5
$region0: #{unet_stage_block.5}
  #allocation0 [shape = 'u32[]', space=smem, size = 0x4, offset = 0x4, fixed_abs, tag = 'smem constant byte address 0x4 - core index']
  #allocation1 [shape = 'u32[144,128]{1,0:T(1,128)}', space=vmem, size = 0x12000, scoped, tag = 'internal scratch']
  #allocation2 [shape = 'f32[18,34,8]{2,1,0:T(8,128)}', space=vmem, size = 0x5a000, scoped, tag = 'scratch operand']
  #allocation3 [shape = 'f32[18,34,8]{2,1,0:T(8,128)}', space=vmem, size = 0x5a000, scoped, tag = 'scratch operand']
  %s0 = inlined_call_operand.vmem [shape: bf16[2,32,32,14], index: 0, kind: input, shape index: {}, may-alias: {0,1,2}]
  %s1 = inlined_call_operand.vmem [shape: bf16[2,32,32,14], index: 1, kind: input, shape index: {}, may-alias: {0,1,2}]
  %s2 = inlined_call_operand.vmem [shape: bf16[2,32,32,14], index: 2, kind: input, shape index: {}, may-alias: {0,1,2}]
  %s3 = inlined_call_operand.vmem [shape: bf16[2,32,32,4], index: 3, kind: input, shape index: {}]
  %s4 = inlined_call_operand.vmem [shape: bf16[2,32,32,4], index: 4, kind: input, shape index: {}]
  %s5 = inlined_call_operand.vmem [shape: bf16[14,8], index: 5, kind: input, shape index: {}]
  %s6 = inlined_call_operand.vmem [shape: bf16[14,8], index: 6, kind: input, shape index: {}]
  %s7 = inlined_call_operand.vmem [shape: f32[1,8], index: 7, kind: input, shape index: {}]
  %s8 = inlined_call_operand.vmem [shape: f32[1,8], index: 8, kind: input, shape index: {}]
  %s9 = inlined_call_operand.vmem [shape: f32[2,9,8], index: 9, kind: input, shape index: {}]
  %s10 = inlined_call_operand.vmem [shape: f32[1,8], index: 10, kind: input, shape index: {}]
  %s11 = inlined_call_operand.vmem [shape: f32[2,8], index: 11, kind: input, shape index: {}]
  %s12 = inlined_call_operand.vmem [shape: f32[2,32,32,8], index: 12, kind: output, shape index: {}]
  %s13 = sld [smem:[#allocation0]]
  $region89: #{unet_stage_block.5} parent=0
    _
  %s15 = ssub.s32 1, %s13
  %s16 = scalar_select 0, %s15, %s13
  loop: start=0, step=1, limit=6
  $region2: #{unet_stage_block.5} parent=0 // loop_pre_header
    _
  $region3: #{unet_stage_block.5} parent=0 // loop_header
    %s18 = sphi 0, %s22
    %p19 = scmp.ge.s32.totalorder %s18, 6
    %s25 = sphi 0, %s37
    %s26 = sphi 0, %s33
    %s27 = sphi 0, %s25
    %s28 = sphi 0, %s26
    %s29 = sphi 0, %s27
    %s30 = sphi 0, %s28
    %s50 = sphi 0, %s52
    %s53 = sphi 0, %s50
    %s54 = sphi 0, %s53
    %s70 = sphi 0, %s54
    %s78 = sphi 0, %s80
    %s81 = sphi 0, %s78
    %s82 = sphi 0, %s81
    %s98 = sphi 0, %s82
    %s114 = sphi 0, %s116
    %s117 = sphi 0, %s114
    %s118 = sphi 0, %s117
    %s134 = sphi 0, %s118
    %s142 = sphi 0, %s144
    %s145 = sphi 0, %s142
    %s146 = sphi 0, %s145
    %s162 = sphi 0, %s146
    %s170 = sphi 0, %s172
    %s173 = sphi 0, %s170
    %s174 = sphi 0, %s173
    %s190 = sphi 0, %s174
    %s194 = sphi 0, %s194
    %s196 = sphi 0, %s194
    %s197 = sphi 0, %s196
    %s211 = sphi 0, %s197
    %s215 = sphi 0, %s215
    %s217 = sphi 0, %s215
    %s218 = sphi 0, %s217
    %s232 = sphi 0, %s218
    %s236 = sphi 0, %s236
    %s238 = sphi 0, %s236
    %s239 = sphi 0, %s238
    %s253 = sphi 0, %s239
    %s257 = sphi 0, %s257
    %s259 = sphi 0, %s257
    %s260 = sphi 0, %s259
    %s274 = sphi 0, %s260
    %s278 = sphi 0, %s278
    %s280 = sphi 0, %s278
    %s281 = sphi 0, %s280
    %s295 = sphi 0, %s281
    %s299 = sphi 0, %s299
    %s301 = sphi 0, %s299
    %s302 = sphi 0, %s301
    %s316 = sphi 0, %s302
    %s320 = sphi 0, %s320
    %s322 = sphi 0, %s320
    %s323 = sphi 0, %s322
    %s337 = sphi 0, %s323
    %s345 = sphi 0, %s347
    %s348 = sphi 0, %s345
    %s349 = sphi 0, %s348
    %s365 = sphi 0, %s349
  $region4: #{unet_stage_block.5} parent=0 // loop_header_branch
    %21 = sbr.rel (%p19) target = $region8
  $region5: #{unet_stage_block.5} parent=0 // loop_body
    %s23 = ssub.s32 %s18, 1
    %s24 = ssub.s32 %s18, 2
    %s31 = sadd.s32 1, %s26
    %p32 = scmp.ge.s32.totalorder %s31, 2
    %s33 = scalar_select %p32, 0, %s31
    %s34 = sadd.s32 1, %s25
    %s35 = scalar_select %p32, %s34, %s25
    %p36 = scmp.ge.s32.totalorder %s35, 2
    %s37 = scalar_select %p36, 0, %s35
    %s38 = smul.u32 %s26, 16
    %s39 = ssub.s32 %s38, 1
    %p40 = scmp.gt.s32.totalorder %s39, 0
    %s41 = scalar_select %p40, %s39, 0
    %s42 = smul.u32 %s33, 16
    %s43 = ssub.s32 %s42, 1
    %p44 = scmp.gt.s32.totalorder %s43, 0
    %s45 = scalar_select %p44, %s43, 0
    %s46 = ssub.s32 %s25, %s37
    %s47 = ssub.s32 %s41, %s45
    %s48 = sor.u32 %s46, %s47
    %p49 = scmp.eq.s32.totalorder %s48, 0
    %s51 = sadd.s32 %s50, 1
    %s52 = scalar_select %p49, %s50, %s51
    %p55 = pneg %p49
    %p56 = scmp.eq.s32.totalorder %s18, 3
    %p57 = por %p55, %p56
    %p58 = scmp.ne.s32.totalorder %s50, %s53
    %p59 = scmp.eq.s32.totalorder %s18, 0
    %p60 = por %p58, %p59
    %p61 = scmp.ne.s32.totalorder %s50, %s53
    %p62 = scmp.eq.s32.totalorder %s23, 3
    %p63 = por %p61, %p62
    %p64 = scmp.ne.s32.totalorder %s53, %s54
    %p65 = scmp.eq.s32.totalorder %s23, 0
    %p66 = por %p64, %p65
    %p67 = scmp.ne.s32.totalorder %s53, %s54
    %p68 = scmp.eq.s32.totalorder %s24, 3
    %p69 = por %p67, %p68
    %p71 = scmp.ne.s32.totalorder %s54, %s70
    %p72 = scmp.eq.s32.totalorder %s24, 0
    %p73 = por %p71, %p72
    %s74 = ssub.s32 %s25, %s37
    %s75 = ssub.s32 %s26, %s33
    %s76 = sor.u32 %s74, %s75
    %p77 = scmp.eq.s32.totalorder %s76, 0
    %s79 = sadd.s32 %s78, 1
    %s80 = scalar_select %p77, %s78, %s79
    %p83 = pneg %p77
    %p84 = scmp.eq.s32.totalorder %s18, 3
    %p85 = por %p83, %p84
    %p86 = scmp.ne.s32.totalorder %s78, %s81
    %p87 = scmp.eq.s32.totalorder %s18, 0
    %p88 = por %p86, %p87
    %p89 = scmp.ne.s32.totalorder %s78, %s81
    %p90 = scmp.eq.s32.totalorder %s23, 3
    %p91 = por %p89, %p90
    %p92 = scmp.ne.s32.totalorder %s81, %s82
    %p93 = scmp.eq.s32.totalorder %s23, 0
    %p94 = por %p92, %p93
    %p95 = scmp.ne.s32.totalorder %s81, %s82
    %p96 = scmp.eq.s32.totalorder %s24, 3
    %p97 = por %p95, %p96
    %p99 = scmp.ne.s32.totalorder %s82, %s98
    %p100 = scmp.eq.s32.totalorder %s24, 0
    %p101 = por %p99, %p100
    %s102 = smul.u32 %s26, 16
    %s103 = sadd.s32 %s102, 16
    %p104 = scmp.lt.s32.totalorder %s103, 31
    %s105 = scalar_select %p104, %s103, 31
    %s106 = smul.u32 %s33, 16
    %s107 = sadd.s32 %s106, 16
    %p108 = scmp.lt.s32.totalorder %s107, 31
    %s109 = scalar_select %p108, %s107, 31
    %s110 = ssub.s32 %s25, %s37
    %s111 = ssub.s32 %s105, %s109
    %s112 = sor.u32 %s110, %s111
    %p113 = scmp.eq.s32.totalorder %s112, 0
    %s115 = sadd.s32 %s114, 1
    %s116 = scalar_select %p113, %s114, %s115
    %p119 = pneg %p113
    %p120 = scmp.eq.s32.totalorder %s18, 3
    %p121 = por %p119, %p120
    %p122 = scmp.ne.s32.totalorder %s114, %s117
    %p123 = scmp.eq.s32.totalorder %s18, 0
    %p124 = por %p122, %p123
    %p125 = scmp.ne.s32.totalorder %s114, %s117
    %p126 = scmp.eq.s32.totalorder %s23, 3
    %p127 = por %p125, %p126
    %p128 = scmp.ne.s32.totalorder %s117, %s118
    %p129 = scmp.eq.s32.totalorder %s23, 0
    %p130 = por %p128, %p129
    %p131 = scmp.ne.s32.totalorder %s117, %s118
    %p132 = scmp.eq.s32.totalorder %s24, 3
    %p133 = por %p131, %p132
    %p135 = scmp.ne.s32.totalorder %s118, %s134
    %p136 = scmp.eq.s32.totalorder %s24, 0
    %p137 = por %p135, %p136
    %s138 = ssub.s32 %s25, %s37
    %s139 = ssub.s32 %s26, %s33
    %s140 = sor.u32 %s138, %s139
    %p141 = scmp.eq.s32.totalorder %s140, 0
    %s143 = sadd.s32 %s142, 1
    %s144 = scalar_select %p141, %s142, %s143
    %p147 = pneg %p141
    %p148 = scmp.eq.s32.totalorder %s18, 3
    %p149 = por %p147, %p148
    %p150 = scmp.ne.s32.totalorder %s142, %s145
    %p151 = scmp.eq.s32.totalorder %s18, 0
    %p152 = por %p150, %p151
    %p153 = scmp.ne.s32.totalorder %s142, %s145
    %p154 = scmp.eq.s32.totalorder %s23, 3
    %p155 = por %p153, %p154
    %p156 = scmp.ne.s32.totalorder %s145, %s146
    %p157 = scmp.eq.s32.totalorder %s23, 0
    %p158 = por %p156, %p157
    %p159 = scmp.ne.s32.totalorder %s145, %s146
    %p160 = scmp.eq.s32.totalorder %s24, 3
    %p161 = por %p159, %p160
    %p163 = scmp.ne.s32.totalorder %s146, %s162
    %p164 = scmp.eq.s32.totalorder %s24, 0
    %p165 = por %p163, %p164
    %s166 = ssub.s32 %s25, %s37
    %s167 = ssub.s32 %s26, %s33
    %s168 = sor.u32 %s166, %s167
    %p169 = scmp.eq.s32.totalorder %s168, 0
    %s171 = sadd.s32 %s170, 1
    %s172 = scalar_select %p169, %s170, %s171
    %p175 = pneg %p169
    %p176 = scmp.eq.s32.totalorder %s18, 3
    %p177 = por %p175, %p176
    %p178 = scmp.ne.s32.totalorder %s170, %s173
    %p179 = scmp.eq.s32.totalorder %s18, 0
    %p180 = por %p178, %p179
    %p181 = scmp.ne.s32.totalorder %s170, %s173
    %p182 = scmp.eq.s32.totalorder %s23, 3
    %p183 = por %p181, %p182
    %p184 = scmp.ne.s32.totalorder %s173, %s174
    %p185 = scmp.eq.s32.totalorder %s23, 0
    %p186 = por %p184, %p185
    %p187 = scmp.ne.s32.totalorder %s173, %s174
    %p188 = scmp.eq.s32.totalorder %s24, 3
    %p189 = por %p187, %p188
    %p191 = scmp.ne.s32.totalorder %s174, %s190
    %p192 = scmp.eq.s32.totalorder %s24, 0
    %p193 = por %p191, %p192
    %s195 = sadd.s32 %s194, 1
    %p198 = scmp.eq.s32.totalorder %s18, 3
    %p199 = scmp.ne.s32.totalorder %s194, %s196
    %p200 = scmp.eq.s32.totalorder %s18, 0
    %p201 = por %p199, %p200
    %p202 = scmp.ne.s32.totalorder %s194, %s196
    %p203 = scmp.eq.s32.totalorder %s23, 3
    %p204 = por %p202, %p203
    %p205 = scmp.ne.s32.totalorder %s196, %s197
    %p206 = scmp.eq.s32.totalorder %s23, 0
    %p207 = por %p205, %p206
    %p208 = scmp.ne.s32.totalorder %s196, %s197
    %p209 = scmp.eq.s32.totalorder %s24, 3
    %p210 = por %p208, %p209
    %p212 = scmp.ne.s32.totalorder %s197, %s211
    %p213 = scmp.eq.s32.totalorder %s24, 0
    %p214 = por %p212, %p213
    %s216 = sadd.s32 %s215, 1
    %p219 = scmp.eq.s32.totalorder %s18, 3
    %p220 = scmp.ne.s32.totalorder %s215, %s217
    %p221 = scmp.eq.s32.totalorder %s18, 0
    %p222 = por %p220, %p221
    %p223 = scmp.ne.s32.totalorder %s215, %s217
    %p224 = scmp.eq.s32.totalorder %s23, 3
    %p225 = por %p223, %p224
    %p226 = scmp.ne.s32.totalorder %s217, %s218
    %p227 = scmp.eq.s32.totalorder %s23, 0
    %p228 = por %p226, %p227
    %p229 = scmp.ne.s32.totalorder %s217, %s218
    %p230 = scmp.eq.s32.totalorder %s24, 3
    %p231 = por %p229, %p230
    %p233 = scmp.ne.s32.totalorder %s218, %s232
    %p234 = scmp.eq.s32.totalorder %s24, 0
    %p235 = por %p233, %p234
    %s237 = sadd.s32 %s236, 1
    %p240 = scmp.eq.s32.totalorder %s18, 3
    %p241 = scmp.ne.s32.totalorder %s236, %s238
    %p242 = scmp.eq.s32.totalorder %s18, 0
    %p243 = por %p241, %p242
    %p244 = scmp.ne.s32.totalorder %s236, %s238
    %p245 = scmp.eq.s32.totalorder %s23, 3
    %p246 = por %p244, %p245
    %p247 = scmp.ne.s32.totalorder %s238, %s239
    %p248 = scmp.eq.s32.totalorder %s23, 0
    %p249 = por %p247, %p248
    %p250 = scmp.ne.s32.totalorder %s238, %s239
    %p251 = scmp.eq.s32.totalorder %s24, 3
    %p252 = por %p250, %p251
    %p254 = scmp.ne.s32.totalorder %s239, %s253
    %p255 = scmp.eq.s32.totalorder %s24, 0
    %p256 = por %p254, %p255
    %s258 = sadd.s32 %s257, 1
    %p261 = scmp.eq.s32.totalorder %s18, 3
    %p262 = scmp.ne.s32.totalorder %s257, %s259
    %p263 = scmp.eq.s32.totalorder %s18, 0
    %p264 = por %p262, %p263
    %p265 = scmp.ne.s32.totalorder %s257, %s259
    %p266 = scmp.eq.s32.totalorder %s23, 3
    %p267 = por %p265, %p266
    %p268 = scmp.ne.s32.totalorder %s259, %s260
    %p269 = scmp.eq.s32.totalorder %s23, 0
    %p270 = por %p268, %p269
    %p271 = scmp.ne.s32.totalorder %s259, %s260
    %p272 = scmp.eq.s32.totalorder %s24, 3
    %p273 = por %p271, %p272
    %p275 = scmp.ne.s32.totalorder %s260, %s274
    %p276 = scmp.eq.s32.totalorder %s24, 0
    %p277 = por %p275, %p276
    %s279 = sadd.s32 %s278, 1
    %p282 = scmp.eq.s32.totalorder %s18, 3
    %p283 = scmp.ne.s32.totalorder %s278, %s280
    %p284 = scmp.eq.s32.totalorder %s18, 0
    %p285 = por %p283, %p284
    %p286 = scmp.ne.s32.totalorder %s278, %s280
    %p287 = scmp.eq.s32.totalorder %s23, 3
    %p288 = por %p286, %p287
    %p289 = scmp.ne.s32.totalorder %s280, %s281
    %p290 = scmp.eq.s32.totalorder %s23, 0
    %p291 = por %p289, %p290
    %p292 = scmp.ne.s32.totalorder %s280, %s281
    %p293 = scmp.eq.s32.totalorder %s24, 3
    %p294 = por %p292, %p293
    %p296 = scmp.ne.s32.totalorder %s281, %s295
    %p297 = scmp.eq.s32.totalorder %s24, 0
    %p298 = por %p296, %p297
    %s300 = sadd.s32 %s299, 1
    %p303 = scmp.eq.s32.totalorder %s18, 3
    %p304 = scmp.ne.s32.totalorder %s299, %s301
    %p305 = scmp.eq.s32.totalorder %s18, 0
    %p306 = por %p304, %p305
    %p307 = scmp.ne.s32.totalorder %s299, %s301
    %p308 = scmp.eq.s32.totalorder %s23, 3
    %p309 = por %p307, %p308
    %p310 = scmp.ne.s32.totalorder %s301, %s302
    %p311 = scmp.eq.s32.totalorder %s23, 0
    %p312 = por %p310, %p311
    %p313 = scmp.ne.s32.totalorder %s301, %s302
    %p314 = scmp.eq.s32.totalorder %s24, 3
    %p315 = por %p313, %p314
    %p317 = scmp.ne.s32.totalorder %s302, %s316
    %p318 = scmp.eq.s32.totalorder %s24, 0
    %p319 = por %p317, %p318
    %s321 = sadd.s32 %s320, 1
    %p324 = scmp.eq.s32.totalorder %s18, 3
    %p325 = scmp.ne.s32.totalorder %s320, %s322
    %p326 = scmp.eq.s32.totalorder %s18, 0
    %p327 = por %p325, %p326
    %p328 = scmp.ne.s32.totalorder %s320, %s322
    %p329 = scmp.eq.s32.totalorder %s23, 3
    %p330 = por %p328, %p329
    %p331 = scmp.ne.s32.totalorder %s322, %s323
    %p332 = scmp.eq.s32.totalorder %s23, 0
    %p333 = por %p331, %p332
    %p334 = scmp.ne.s32.totalorder %s322, %s323
    %p335 = scmp.eq.s32.totalorder %s24, 3
    %p336 = por %p334, %p335
    %p338 = scmp.ne.s32.totalorder %s323, %s337
    %p339 = scmp.eq.s32.totalorder %s24, 0
    %p340 = por %p338, %p339
    %s341 = ssub.s32 %s25, %s37
    %s342 = ssub.s32 %s26, %s33
    %s343 = sor.u32 %s341, %s342
    %p344 = scmp.eq.s32.totalorder %s343, 0
    %s346 = sadd.s32 %s345, 1
    %s347 = scalar_select %p344, %s345, %s346
    %p350 = pneg %p344
    %p351 = scmp.eq.s32.totalorder %s18, 3
    %p352 = por %p350, %p351
    %p353 = scmp.ne.s32.totalorder %s345, %s348
    %p354 = scmp.eq.s32.totalorder %s18, 0
    %p355 = por %p353, %p354
    %p356 = scmp.ne.s32.totalorder %s345, %s348
    %p357 = scmp.eq.s32.totalorder %s23, 3
    %p358 = por %p356, %p357
    %p359 = scmp.ne.s32.totalorder %s348, %s349
    %p360 = scmp.eq.s32.totalorder %s23, 0
    %p361 = por %p359, %p360
    %p362 = scmp.ne.s32.totalorder %s348, %s349
    %p363 = scmp.eq.s32.totalorder %s24, 3
    %p364 = por %p362, %p363
    %p366 = scmp.ne.s32.totalorder %s349, %s365
    %p367 = scmp.eq.s32.totalorder %s24, 0
    %p368 = por %p366, %p367
    %p369 = scmp.le.s32.totalorder 1, %s18
    %p370 = scmp.lt.s32.totalorder %s18, 5
    %p371 = pnand %p369, %p370
    %p372 = pneg %p371
    // Predicated region
    $region9: #{unet_stage_block.5} parent=5 // pred_check
      _
    $region10: #{unet_stage_block.5} parent=5 // pred_check_branch
      %374 = sbr.rel (%p371) target = $region12
    $region11: #{unet_stage_block.5} parent=5 // pred_region
      %s375 = ssub.s32 %s18, 1
      // Predicated region
      $region13: #{unet_stage_block.5} parent=11 // pred_check
        %p376 = pneg %p207
      $region14: #{unet_stage_block.5} parent=11 // pred_check_branch
        %378 = sbr.rel (%p376) target = $region16
      $region15: #{unet_stage_block.5} parent=11 // pred_region
        _
      $region16: #{unet_stage_block.5} parent=11 // pred_fallthru
        _
      // Predicated region
      $region17: #{unet_stage_block.5} parent=11 // pred_check
        %p379 = pneg %p228
      $region18: #{unet_stage_block.5} parent=11 // pred_check_branch
        %381 = sbr.rel (%p379) target = $region20
      $region19: #{unet_stage_block.5} parent=11 // pred_region
        _
      $region20: #{unet_stage_block.5} parent=11 // pred_fallthru
        _
      // Predicated region
      $region21: #{unet_stage_block.5} parent=11 // pred_check
        %p382 = pneg %p249
      $region22: #{unet_stage_block.5} parent=11 // pred_check_branch
        %384 = sbr.rel (%p382) target = $region24
      $region23: #{unet_stage_block.5} parent=11 // pred_region
        _
      $region24: #{unet_stage_block.5} parent=11 // pred_fallthru
        _
      // Predicated region
      $region25: #{unet_stage_block.5} parent=11 // pred_check
        %p385 = pneg %p270
      $region26: #{unet_stage_block.5} parent=11 // pred_check_branch
        %387 = sbr.rel (%p385) target = $region28
      $region27: #{unet_stage_block.5} parent=11 // pred_region
        _
      $region28: #{unet_stage_block.5} parent=11 // pred_fallthru
        _
      // Predicated region
      $region29: #{unet_stage_block.5} parent=11 // pred_check
        %p388 = pneg %p291
      $region30: #{unet_stage_block.5} parent=11 // pred_check_branch
        %390 = sbr.rel (%p388) target = $region32
      $region31: #{unet_stage_block.5} parent=11 // pred_region
        _
      $region32: #{unet_stage_block.5} parent=11 // pred_fallthru
        _
      // Predicated region
      $region33: #{unet_stage_block.5} parent=11 // pred_check
        %p391 = pneg %p312
      $region34: #{unet_stage_block.5} parent=11 // pred_check_branch
        %393 = sbr.rel (%p391) target = $region36
      $region35: #{unet_stage_block.5} parent=11 // pred_region
        _
      $region36: #{unet_stage_block.5} parent=11 // pred_fallthru
        _
      // Predicated region
      $region37: #{unet_stage_block.5} parent=11 // pred_check
        %p394 = pneg %p333
      $region38: #{unet_stage_block.5} parent=11 // pred_check_branch
        %396 = sbr.rel (%p394) target = $region40
      $region39: #{unet_stage_block.5} parent=11 // pred_region
        _
      $region40: #{unet_stage_block.5} parent=11 // pred_fallthru
        _
    $region12: #{unet_stage_block.5} parent=5 // pred_fallthru
      _
    %p397 = scmp.lt.s32.totalorder %s18, 4
    // Predicated region
    $region41: #{unet_stage_block.5} parent=5 // pred_check
      %p398 = pneg %p397
    $region42: #{unet_stage_block.5} parent=5 // pred_check_branch
      %400 = sbr.rel (%p398) target = $region44
    $region43: #{unet_stage_block.5} parent=5 // pred_region
      // Predicated region
      $region45: #{unet_stage_block.5} parent=43 // pred_check
        %p401 = pneg %p60
      $region46: #{unet_stage_block.5} parent=43 // pred_check_branch
        %403 = sbr.rel (%p401) target = $region48
      $region47: #{unet_stage_block.5} parent=43 // pred_region
        %s404 = smul.u32 %s26, 16
        %s405 = ssub.s32 %s404, 1
        %p406 = scmp.gt.s32.totalorder %s405, 0
        %s407 = scalar_select %p406, %s405, 0
        %p408 = scmp.lt.s32.totalorder %s25, 1
        %s409 = scalar_select %p408, %s25, 1
        %p410 = scmp.lt.s32.totalorder %s407, 31
        %s411 = scalar_select %p410, %s407, 31
        %s412 = smul.addr %s411, 4
        %s413 = smul.addr %s409, 128
        %s414 = sadd.s32 %s412, %s413
        %s415 = smul.addr %s414, 4
        %s416 = scalar_lea.vmem %s0, %s415
        %s417 = smul.u32 %s26, 16
        %s418 = ssub.s32 %s417, 1
        %p419 = scmp.gt.s32.totalorder %s418, 0
        %s420 = scalar_select %p419, %s418, 0
      $region48: #{unet_stage_block.5} parent=43 // pred_fallthru
        _
      // Predicated region
      $region49: #{unet_stage_block.5} parent=43 // pred_check
        %p421 = pneg %p88
      $region50: #{unet_stage_block.5} parent=43 // pred_check_branch
        %423 = sbr.rel (%p421) target = $region52
      $region51: #{unet_stage_block.5} parent=43 // pred_region
        %s424 = smul.u32 16, %s26
        %p425 = scmp.lt.s32.totalorder %s25, 1
        %s426 = scalar_select %p425, %s25, 1
        %p427 = scmp.lt.s32.totalorder %s424, 31
        %s428 = scalar_select %p427, %s424, 31
        %s429 = smul.addr %s428, 4
        %s430 = smul.addr %s426, 128
        %s431 = sadd.s32 %s429, %s430
        %s432 = smul.addr %s431, 4
        %s433 = scalar_lea.vmem %s1, %s432
        %s434 = smul.u32 16, %s26
      $region52: #{unet_stage_block.5} parent=43 // pred_fallthru
        _
      // Predicated region
      $region53: #{unet_stage_block.5} parent=43 // pred_check
        %p435 = pneg %p124
      $region54: #{unet_stage_block.5} parent=43 // pred_check_branch
        %437 = sbr.rel (%p435) target = $region56
      $region55: #{unet_stage_block.5} parent=43 // pred_region
        %s438 = smul.u32 %s26, 16
        %s439 = sadd.s32 %s438, 16
        %p440 = scmp.lt.s32.totalorder %s439, 31
        %s441 = scalar_select %p440, %s439, 31
        %p442 = scmp.lt.s32.totalorder %s25, 1
        %s443 = scalar_select %p442, %s25, 1
        %p444 = scmp.lt.s32.totalorder %s441, 31
        %s445 = scalar_select %p444, %s441, 31
        %s446 = smul.addr %s445, 4
        %s447 = smul.addr %s443, 128
        %s448 = sadd.s32 %s446, %s447
        %s449 = smul.addr %s448, 4
        %s450 = scalar_lea.vmem %s2, %s449
        %s451 = smul.u32 %s26, 16
        %s452 = sadd.s32 %s451, 16
        %p453 = scmp.lt.s32.totalorder %s452, 31
        %s454 = scalar_select %p453, %s452, 31
      $region56: #{unet_stage_block.5} parent=43 // pred_fallthru
        _
      // Predicated region
      $region57: #{unet_stage_block.5} parent=43 // pred_check
        %p455 = pneg %p152
      $region58: #{unet_stage_block.5} parent=43 // pred_check_branch
        %457 = sbr.rel (%p455) target = $region60
      $region59: #{unet_stage_block.5} parent=43 // pred_region
        %s458 = smul.u32 16, %s26
        %p459 = scmp.lt.s32.totalorder %s25, 1
        %s460 = scalar_select %p459, %s25, 1
        %p461 = scmp.lt.s32.totalorder %s458, 31
        %s462 = scalar_select %p461, %s458, 31
        %s463 = smul.addr %s462, 4
        %s464 = smul.addr %s460, 128
        %s465 = sadd.s32 %s463, %s464
        %s466 = smul.addr %s465, 4
        %s467 = scalar_lea.vmem %s3, %s466
        %s468 = smul.u32 16, %s26
      $region60: #{unet_stage_block.5} parent=43 // pred_fallthru
        _
      // Predicated region
      $region61: #{unet_stage_block.5} parent=43 // pred_check
        %p469 = pneg %p180
      $region62: #{unet_stage_block.5} parent=43 // pred_check_branch
        %471 = sbr.rel (%p469) target = $region64
      $region63: #{unet_stage_block.5} parent=43 // pred_region
        %s472 = smul.u32 16, %s26
        %p473 = scmp.lt.s32.totalorder %s25, 1
        %s474 = scalar_select %p473, %s25, 1
        %p475 = scmp.lt.s32.totalorder %s472, 31
        %s476 = scalar_select %p475, %s472, 31
        %s477 = smul.addr %s476, 4
        %s478 = smul.addr %s474, 128
        %s479 = sadd.s32 %s477, %s478
        %s480 = smul.addr %s479, 4
        %s481 = scalar_lea.vmem %s4, %s480
        %s482 = smul.u32 16, %s26
      $region64: #{unet_stage_block.5} parent=43 // pred_fallthru
        _
    $region44: #{unet_stage_block.5} parent=5 // pred_fallthru
      _
    %p483 = scmp.le.s32.totalorder 1, %s18
    %p484 = scmp.lt.s32.totalorder %s18, 5
    %p485 = pnand %p483, %p484
    %p486 = pneg %p485
    // Predicated region
    $region65: #{unet_stage_block.5} parent=5 // pred_check
      _
    $region66: #{unet_stage_block.5} parent=5 // pred_check_branch
      %488 = sbr.rel (%p485) target = $region68
    $region67: #{unet_stage_block.5} parent=5 // pred_region
      %s489 = ssub.s32 %s18, 1
      %s490 = smul.u32 %s28, 16
      %s491 = ssub.s32 %s490, 1
      %p492 = scmp.gt.s32.totalorder %s491, 0
      %s493 = scalar_select %p492, %s491, 0
      %p494 = scmp.lt.s32.totalorder %s27, 1
      %s495 = scalar_select %p494, %s27, 1
      %p496 = scmp.lt.s32.totalorder %s493, 31
      %s497 = scalar_select %p496, %s493, 31
      %s498 = smul.addr %s497, 4
      %s499 = smul.addr %s495, 128
      %s500 = sadd.s32 %s498, %s499
      %s501 = smul.addr %s500, 4
      %s502 = scalar_lea.vmem %s0, %s501
      %p503 = pneg %p66
      %p504 = pneg %p63
      %s505 = smul.u32 16, %s28
      %p506 = scmp.lt.s32.totalorder %s27, 1
      %s507 = scalar_select %p506, %s27, 1
      %p508 = scmp.lt.s32.totalorder %s505, 31
      %s509 = scalar_select %p508, %s505, 31
      %s510 = smul.addr %s509, 4
      %s511 = smul.addr %s507, 128
      %s512 = sadd.s32 %s510, %s511
      %s513 = smul.addr %s512, 4
      %s514 = scalar_lea.vmem %s1, %s513
      %p515 = pneg %p94
      %p516 = pneg %p91
      %s517 = smul.u32 %s28, 16
      %s518 = sadd.s32 %s517, 16
      %p519 = scmp.lt.s32.totalorder %s518, 31
      %s520 = scalar_select %p519, %s518, 31
      %p521 = scmp.lt.s32.totalorder %s27, 1
      %s522 = scalar_select %p521, %s27, 1
      %p523 = scmp.lt.s32.totalorder %s520, 31
      %s524 = scalar_select %p523, %s520, 31
      %s525 = smul.addr %s524, 4
      %s526 = smul.addr %s522, 128
      %s527 = sadd.s32 %s525, %s526
      %s528 = smul.addr %s527, 4
      %s529 = scalar_lea.vmem %s2, %s528
      %p530 = pneg %p130
      %p531 = pneg %p127
      %s532 = smul.u32 16, %s28
      %p533 = scmp.lt.s32.totalorder %s27, 1
      %s534 = scalar_select %p533, %s27, 1
      %p535 = scmp.lt.s32.totalorder %s532, 31
      %s536 = scalar_select %p535, %s532, 31
      %s537 = smul.addr %s536, 4
      %s538 = smul.addr %s534, 128
      %s539 = sadd.s32 %s537, %s538
      %s540 = smul.addr %s539, 4
      %s541 = scalar_lea.vmem %s3, %s540
      %p542 = pneg %p158
      %p543 = pneg %p155
      %s544 = smul.u32 16, %s28
      %p545 = scmp.lt.s32.totalorder %s27, 1
      %s546 = scalar_select %p545, %s27, 1
      %p547 = scmp.lt.s32.totalorder %s544, 31
      %s548 = scalar_select %p547, %s544, 31
      %s549 = smul.addr %s548, 4
      %s550 = smul.addr %s546, 128
      %s551 = sadd.s32 %s549, %s550
      %s552 = smul.addr %s551, 4
      %s553 = scalar_lea.vmem %s4, %s552
      %p554 = pneg %p186
      %p555 = pneg %p183
      %p556 = pneg %p207
      %p557 = pneg %p204
      %p558 = pneg %p228
      %p559 = pneg %p225
      %p560 = pneg %p249
      %p561 = pneg %p246
      %p562 = pneg %p270
      %p563 = pneg %p267
      %p564 = pneg %p291
      %p565 = pneg %p288
      %p566 = pneg %p312
      %p567 = pneg %p309
      %p568 = pneg %p333
      %p569 = pneg %p330
      %p570 = pneg %p361
      %p571 = pneg %p358
      %s572 = smul.u32 16, %s28
      %p573 = scmp.lt.s32.totalorder %s27, 1
      %s574 = scalar_select %p573, %s27, 1
      %p575 = scmp.lt.s32.totalorder %s572, 31
      %s576 = scalar_select %p575, %s572, 31
      %s577 = smul.addr %s576, 4
      %s578 = smul.addr %s574, 128
      %s579 = sadd.s32 %s577, %s578
      %s580 = smul.addr %s579, 8
      %s581 = scalar_lea.vmem %s12, %s580
      %s582 = smul.u32 %s28, 16
      %s583 = ssub.s32 %s582, 1
      %p584 = scmp.gt.s32.totalorder %s583, 0
      %s585 = scalar_select %p584, %s583, 0
      %p586 = scmp.lt.s32.totalorder %s27, 1
      %s587 = scalar_select %p586, %s27, 1
      %p588 = scmp.lt.s32.totalorder %s585, 31
      %s589 = scalar_select %p588, %s585, 31
      %s590 = smul.addr %s589, 4
      %s591 = smul.addr %s587, 128
      %s592 = sadd.s32 %s590, %s591
      %s593 = smul.addr %s592, 4
      %s594 = scalar_lea.vmem %s0, %s593
      %s595 = smul.u32 %s28, 16
      %s596 = ssub.s32 %s595, 1
      %p597 = scmp.gt.s32.totalorder %s596, 0
      %s598 = scalar_select %p597, %s596, 0
      %s599 = smul.u32 16, %s28
      %p600 = scmp.lt.s32.totalorder %s27, 1
      %s601 = scalar_select %p600, %s27, 1
      %p602 = scmp.lt.s32.totalorder %s599, 31
      %s603 = scalar_select %p602, %s599, 31
      %s604 = smul.addr %s603, 4
      %s605 = smul.addr %s601, 128
      %s606 = sadd.s32 %s604, %s605
      %s607 = smul.addr %s606, 4
      %s608 = scalar_lea.vmem %s1, %s607
      %s609 = smul.u32 16, %s28
      %s610 = smul.u32 %s28, 16
      %s611 = sadd.s32 %s610, 16
      %p612 = scmp.lt.s32.totalorder %s611, 31
      %s613 = scalar_select %p612, %s611, 31
      %p614 = scmp.lt.s32.totalorder %s27, 1
      %s615 = scalar_select %p614, %s27, 1
      %p616 = scmp.lt.s32.totalorder %s613, 31
      %s617 = scalar_select %p616, %s613, 31
      %s618 = smul.addr %s617, 4
      %s619 = smul.addr %s615, 128
      %s620 = sadd.s32 %s618, %s619
      %s621 = smul.addr %s620, 4
      %s622 = scalar_lea.vmem %s2, %s621
      %s623 = smul.u32 %s28, 16
      %s624 = sadd.s32 %s623, 16
      %p625 = scmp.lt.s32.totalorder %s624, 31
      %s626 = scalar_select %p625, %s624, 31
      %s627 = smul.u32 16, %s28
      %p628 = scmp.lt.s32.totalorder %s27, 1
      %s629 = scalar_select %p628, %s27, 1
      %p630 = scmp.lt.s32.totalorder %s627, 31
      %s631 = scalar_select %p630, %s627, 31
      %s632 = smul.addr %s631, 4
      %s633 = smul.addr %s629, 128
      %s634 = sadd.s32 %s632, %s633
      %s635 = smul.addr %s634, 4
      %s636 = scalar_lea.vmem %s3, %s635
      %s637 = smul.u32 16, %s28
      %s638 = smul.u32 16, %s28
      %p639 = scmp.lt.s32.totalorder %s27, 1
      %s640 = scalar_select %p639, %s27, 1
      %p641 = scmp.lt.s32.totalorder %s638, 31
      %s642 = scalar_select %p641, %s638, 31
      %s643 = smul.addr %s642, 4
      %s644 = smul.addr %s640, 128
      %s645 = sadd.s32 %s643, %s644
      %s646 = smul.addr %s645, 4
      %s647 = scalar_lea.vmem %s4, %s646
      %s648 = smul.u32 16, %s28
      %s649 = smul.u32 16, %s28
      %p650 = scmp.lt.s32.totalorder %s27, 1
      %s651 = scalar_select %p650, %s27, 1
      %p652 = scmp.lt.s32.totalorder %s649, 31
      %s653 = scalar_select %p652, %s649, 31
      %s654 = smul.addr %s653, 4
      %s655 = smul.addr %s651, 128
      %s656 = sadd.s32 %s654, %s655
      %s657 = smul.addr %s656, 8
      %s658 = scalar_lea.vmem %s12, %s657
      %s659 = smul.u32 16, %s28
      %v661 = vld [vmem:[%s594] sm:$0xf]
      %v662 = vld [vmem:[%s594 + $0x4] sm:$0xf]
      %v663 = vld [vmem:[%s594 + $0x8] sm:$0xf]
      %v664 = vld [vmem:[%s594 + $0xc] sm:$0xf]
      %v665 = vld [vmem:[%s608] sm:$0xf]
      %v666 = vld [vmem:[%s608 + $0x4] sm:$0xf]
      %v667 = vld [vmem:[%s608 + $0x8] sm:$0xf]
      %v668 = vld [vmem:[%s608 + $0xc] sm:$0xf]
      %v669 = vld [vmem:[%s608 + $0x10] sm:$0xf]
      %v670 = vld [vmem:[%s608 + $0x14] sm:$0xf]
      %v671 = vld [vmem:[%s608 + $0x18] sm:$0xf]
      %v672 = vld [vmem:[%s608 + $0x1c] sm:$0xf]
      %v673 = vld [vmem:[%s608 + $0x20] sm:$0xf]
      %v674 = vld [vmem:[%s608 + $0x24] sm:$0xf]
      %v675 = vld [vmem:[%s608 + $0x28] sm:$0xf]
      %v676 = vld [vmem:[%s608 + $0x2c] sm:$0xf]
      %v677 = vld [vmem:[%s608 + $0x30] sm:$0xf]
      %v678 = vld [vmem:[%s608 + $0x34] sm:$0xf]
      %v679 = vld [vmem:[%s608 + $0x38] sm:$0xf]
      %v680 = vld [vmem:[%s608 + $0x3c] sm:$0xf]
      %v681 = vld [vmem:[%s608 + $0x40] sm:$0xf]
      %v682 = vld [vmem:[%s608 + $0x44] sm:$0xf]
      %v683 = vld [vmem:[%s608 + $0x48] sm:$0xf]
      %v684 = vld [vmem:[%s608 + $0x4c] sm:$0xf]
      %v685 = vld [vmem:[%s608 + $0x50] sm:$0xf]
      %v686 = vld [vmem:[%s608 + $0x54] sm:$0xf]
      %v687 = vld [vmem:[%s608 + $0x58] sm:$0xf]
      %v688 = vld [vmem:[%s608 + $0x5c] sm:$0xf]
      %v689 = vld [vmem:[%s608 + $0x60] sm:$0xf]
      %v690 = vld [vmem:[%s608 + $0x64] sm:$0xf]
      %v691 = vld [vmem:[%s608 + $0x68] sm:$0xf]
      %v692 = vld [vmem:[%s608 + $0x6c] sm:$0xf]
      %v693 = vld [vmem:[%s608 + $0x70] sm:$0xf]
      %v694 = vld [vmem:[%s608 + $0x74] sm:$0xf]
      %v695 = vld [vmem:[%s608 + $0x78] sm:$0xf]
      %v696 = vld [vmem:[%s608 + $0x7c] sm:$0xf]
      %v697 = vld [vmem:[%s608 + $0x80] sm:$0xf]
      %v698 = vld [vmem:[%s608 + $0x84] sm:$0xf]
      %v699 = vld [vmem:[%s608 + $0x88] sm:$0xf]
      %v700 = vld [vmem:[%s608 + $0x8c] sm:$0xf]
      %v701 = vld [vmem:[%s608 + $0x90] sm:$0xf]
      %v702 = vld [vmem:[%s608 + $0x94] sm:$0xf]
      %v703 = vld [vmem:[%s608 + $0x98] sm:$0xf]
      %v704 = vld [vmem:[%s608 + $0x9c] sm:$0xf]
      %v705 = vld [vmem:[%s608 + $0xa0] sm:$0xf]
      %v706 = vld [vmem:[%s608 + $0xa4] sm:$0xf]
      %v707 = vld [vmem:[%s608 + $0xa8] sm:$0xf]
      %v708 = vld [vmem:[%s608 + $0xac] sm:$0xf]
      %v709 = vld [vmem:[%s608 + $0xb0] sm:$0xf]
      %v710 = vld [vmem:[%s608 + $0xb4] sm:$0xf]
      %v711 = vld [vmem:[%s608 + $0xb8] sm:$0xf]
      %v712 = vld [vmem:[%s608 + $0xbc] sm:$0xf]
      %v713 = vld [vmem:[%s608 + $0xc0] sm:$0xf]
      %v714 = vld [vmem:[%s608 + $0xc4] sm:$0xf]
      %v715 = vld [vmem:[%s608 + $0xc8] sm:$0xf]
      %v716 = vld [vmem:[%s608 + $0xcc] sm:$0xf]
      %v717 = vld [vmem:[%s608 + $0xd0] sm:$0xf]
      %v718 = vld [vmem:[%s608 + $0xd4] sm:$0xf]
      %v719 = vld [vmem:[%s608 + $0xd8] sm:$0xf]
      %v720 = vld [vmem:[%s608 + $0xdc] sm:$0xf]
      %v721 = vld [vmem:[%s608 + $0xe0] sm:$0xf]
      %v722 = vld [vmem:[%s608 + $0xe4] sm:$0xf]
      %v723 = vld [vmem:[%s608 + $0xe8] sm:$0xf]
      %v724 = vld [vmem:[%s608 + $0xec] sm:$0xf]
      %v725 = vld [vmem:[%s608 + $0xf0] sm:$0xf]
      %v726 = vld [vmem:[%s608 + $0xf4] sm:$0xf]
      %v727 = vld [vmem:[%s608 + $0xf8] sm:$0xf]
      %v728 = vld [vmem:[%s608 + $0xfc] sm:$0xf]
      %v729 = vld [vmem:[%s622] sm:$0xf]
      %v730 = vld [vmem:[%s622 + $0x4] sm:$0xf]
      %v731 = vld [vmem:[%s622 + $0x8] sm:$0xf]
      %v732 = vld [vmem:[%s622 + $0xc] sm:$0xf]
      %v733 = vld [vmem:[%s5] sm:$0xf]
      %v734 = vld [vmem:[%s5 + $0x4] sm:$0x7]
      %v735 = vld [vmem:[%s7] sm:$0x1]
      %v737 = vlaneseq
      %v738 = vshrl.u32 %v737, 7
      %v739 = vsub.s32 0, %v738
      %v740 = vrot.slane %v735, %v739
      %v814 = vunpack.c.l.b16 %v661
      %v815 = vunpack.c.l.b16 %v662
      %v816 = vunpack.c.l.b16 %v663
      %v817 = vunpack.c.l.b16 %v664
      %v818 = vunpack.c.l.b16 %v665
      %v819 = vunpack.c.l.b16 %v666
      %v820 = vunpack.c.l.b16 %v667
      %v821 = vunpack.c.l.b16 %v668
      %v822 = vunpack.c.l.b16 %v669
      %v823 = vunpack.c.l.b16 %v670
      %v824 = vunpack.c.l.b16 %v671
      %v825 = vunpack.c.l.b16 %v672
      %v826 = vunpack.c.l.b16 %v673
      %v827 = vunpack.c.l.b16 %v674
      %v828 = vunpack.c.l.b16 %v675
      %v829 = vunpack.c.l.b16 %v676
      %v830 = vunpack.c.l.b16 %v677
      %v831 = vunpack.c.l.b16 %v678
      %v832 = vunpack.c.l.b16 %v679
      %v833 = vunpack.c.l.b16 %v680
      %v834 = vunpack.c.l.b16 %v681
      %v835 = vunpack.c.l.b16 %v682
      %v836 = vunpack.c.l.b16 %v683
      %v837 = vunpack.c.l.b16 %v684
      %v838 = vunpack.c.l.b16 %v685
      %v839 = vunpack.c.l.b16 %v686
      %v840 = vunpack.c.l.b16 %v687
      %v841 = vunpack.c.l.b16 %v688
      %v842 = vunpack.c.l.b16 %v689
      %v843 = vunpack.c.l.b16 %v690
      %v844 = vunpack.c.l.b16 %v691
      %v845 = vunpack.c.l.b16 %v692
      %v846 = vunpack.c.l.b16 %v693
      %v847 = vunpack.c.l.b16 %v694
      %v848 = vunpack.c.l.b16 %v695
      %v849 = vunpack.c.l.b16 %v696
      %v850 = vunpack.c.l.b16 %v697
      %v851 = vunpack.c.l.b16 %v698
      %v852 = vunpack.c.l.b16 %v699
      %v853 = vunpack.c.l.b16 %v700
      %v854 = vunpack.c.l.b16 %v701
      %v855 = vunpack.c.l.b16 %v702
      %v856 = vunpack.c.l.b16 %v703
      %v857 = vunpack.c.l.b16 %v704
      %v858 = vunpack.c.l.b16 %v705
      %v859 = vunpack.c.l.b16 %v706
      %v860 = vunpack.c.l.b16 %v707
      %v861 = vunpack.c.l.b16 %v708
      %v862 = vunpack.c.l.b16 %v709
      %v863 = vunpack.c.l.b16 %v710
      %v864 = vunpack.c.l.b16 %v711
      %v865 = vunpack.c.l.b16 %v712
      %v866 = vunpack.c.l.b16 %v713
      %v867 = vunpack.c.l.b16 %v714
      %v868 = vunpack.c.l.b16 %v715
      %v869 = vunpack.c.l.b16 %v716
      %v870 = vunpack.c.l.b16 %v717
      %v871 = vunpack.c.l.b16 %v718
      %v872 = vunpack.c.l.b16 %v719
      %v873 = vunpack.c.l.b16 %v720
      %v874 = vunpack.c.l.b16 %v721
      %v875 = vunpack.c.l.b16 %v722
      %v876 = vunpack.c.l.b16 %v723
      %v877 = vunpack.c.l.b16 %v724
      %v878 = vunpack.c.l.b16 %v725
      %v879 = vunpack.c.l.b16 %v726
      %v880 = vunpack.c.l.b16 %v727
      %v881 = vunpack.c.l.b16 %v728
      %v882 = vunpack.c.l.b16 %v729
      %v883 = vunpack.c.l.b16 %v730
      %v884 = vunpack.c.l.b16 %v731
      %v885 = vunpack.c.l.b16 %v732
      %v886 = vpack.c.b16 %v815, %v814
      %v887 = vpack.c.b16 %v817, %v816
      %v888 = vpack.c.b16 %v819, %v818
      %v889 = vpack.c.b16 %v821, %v820
      %v890 = vpack.c.b16 %v823, %v822
      %v891 = vpack.c.b16 %v825, %v824
      %v892 = vpack.c.b16 %v827, %v826
      %v893 = vpack.c.b16 %v829, %v828
      %v894 = vpack.c.b16 %v831, %v830
      %v895 = vpack.c.b16 %v833, %v832
      %v896 = vpack.c.b16 %v835, %v834
      %v897 = vpack.c.b16 %v837, %v836
      %v898 = vpack.c.b16 %v839, %v838
      %v899 = vpack.c.b16 %v841, %v840
      %v900 = vpack.c.b16 %v843, %v842
      %v901 = vpack.c.b16 %v845, %v844
      %v902 = vpack.c.b16 %v847, %v846
      %v903 = vpack.c.b16 %v849, %v848
      %v904 = vpack.c.b16 %v851, %v850
      %v905 = vpack.c.b16 %v853, %v852
      %v906 = vpack.c.b16 %v855, %v854
      %v907 = vpack.c.b16 %v857, %v856
      %v908 = vpack.c.b16 %v859, %v858
      %v909 = vpack.c.b16 %v861, %v860
      %v910 = vpack.c.b16 %v863, %v862
      %v911 = vpack.c.b16 %v865, %v864
      %v912 = vpack.c.b16 %v867, %v866
      %v913 = vpack.c.b16 %v869, %v868
      %v914 = vpack.c.b16 %v871, %v870
      %v915 = vpack.c.b16 %v873, %v872
      %v916 = vpack.c.b16 %v875, %v874
      %v917 = vpack.c.b16 %v877, %v876
      %v918 = vpack.c.b16 %v879, %v878
      %v919 = vpack.c.b16 %v881, %v880
      %v920 = vpack.c.b16 %v883, %v882
      %v921 = vpack.c.b16 %v885, %v884
      %v924 = vunpack.c.l.b16 %v733
      %v925 = vunpack.c.l.b16 %v734
      %v926 = vpack.c.b16 %v925, %v924
      %vm927 = vcmask 113664
      %v929 = vsel %vm927, %v886, 0
      %v932 = vsel %vm927, %v887, 0
      %v935 = vsel %vm927, %v888, 0
      %v938 = vsel %vm927, %v889, 0
      %v941 = vsel %vm927, %v890, 0
      %v944 = vsel %vm927, %v891, 0
      %v947 = vsel %vm927, %v892, 0
      %v950 = vsel %vm927, %v893, 0
      %v953 = vsel %vm927, %v894, 0
      %v956 = vsel %vm927, %v895, 0
      %v959 = vsel %vm927, %v896, 0
      %v962 = vsel %vm927, %v897, 0
      %v965 = vsel %vm927, %v898, 0
      %v968 = vsel %vm927, %v899, 0
      %v971 = vsel %vm927, %v900, 0
      %v974 = vsel %vm927, %v901, 0
      %v977 = vsel %vm927, %v902, 0
      %v980 = vsel %vm927, %v903, 0
      %v983 = vsel %vm927, %v904, 0
      %v986 = vsel %vm927, %v905, 0
      %v989 = vsel %vm927, %v906, 0
      %v992 = vsel %vm927, %v907, 0
      %v995 = vsel %vm927, %v908, 0
      %v998 = vsel %vm927, %v909, 0
      %v1001 = vsel %vm927, %v910, 0
      %v1004 = vsel %vm927, %v911, 0
      %v1007 = vsel %vm927, %v912, 0
      %v1010 = vsel %vm927, %v913, 0
      %v1013 = vsel %vm927, %v914, 0
      %v1016 = vsel %vm927, %v915, 0
      %v1019 = vsel %vm927, %v916, 0
      %v1022 = vsel %vm927, %v917, 0
      %v1025 = vsel %vm927, %v918, 0
      %v1028 = vsel %vm927, %v919, 0
      %v1031 = vsel %vm927, %v920, 0
      %v1034 = vsel %vm927, %v921, 0
      %vm1036 = vcmask 1046528
      %v1038 = vsel %vm1036, %v926, 0
      %1040 = vmatprep.subr.bf16.mxu0 0
      %1041 = vmatpush1.bf16.msra.mxu0 %v1038
      %1042 = vmatprep.subr.bf16.mxu0 0
      %1043 = vmatpush1.bf16.msra.mxu0 0
      %1044 = vmatprep.subr.bf16.mxu0 0
      %1045 = vmatpush1.bf16.msra.mxu0 0
      %1046 = vmatprep.subr.bf16.mxu0 0
      %1047 = vmatpush1.bf16.msra.mxu0 0
      %1048 = vmatprep.subr.bf16.mxu0 0
      %1049 = vmatpush1.bf16.msra.mxu0 0
      %1050 = vmatprep.subr.bf16.mxu0 0
      %1051 = vmatpush1.bf16.msra.mxu0 0
      %1052 = vmatprep.subr.bf16.mxu0 0
      %1053 = vmatpush1.bf16.msra.mxu0 0
      %1054 = vmatprep.subr.bf16.mxu0 0
      %1055 = vmatpush1.bf16.msra.mxu0 0
      %1056 = vmatprep.subr.bf16.mxu0 0
      %1057 = vmatpush1.bf16.msra.mxu0 0
      %1058 = vmatprep.subr.bf16.mxu0 0
      %1059 = vmatpush1.bf16.msra.mxu0 0
      %1060 = vmatprep.subr.bf16.mxu0 0
      %1061 = vmatpush1.bf16.msra.mxu0 0
      %1062 = vmatprep.subr.bf16.mxu0 0
      %1063 = vmatpush1.bf16.msra.mxu0 0
      %1064 = vmatprep.subr.bf16.mxu0 0
      %1065 = vmatpush1.bf16.msra.mxu0 0
      %1066 = vmatprep.subr.bf16.mxu0 0
      %1067 = vmatpush1.bf16.msra.mxu0 0
      %1068 = vmatprep.subr.bf16.mxu0 0
      %1069 = vmatpush1.bf16.msra.mxu0 0
      %1070 = vmatprep.subr.bf16.mxu0 0
      %1071 = vmatpush1.bf16.msra.mxu0 0
      %1072 = vmatprep.mubr.bf16.mxu0 0
      %1073 = vmatmul.mubr.bf16.gmra.mrb[0].mxu0 %v929
      %v1074 = vpop.f32.mrb[0].mxu0
      %v1075 = vadd.f32 %v740, %v1074
      %v1076 = vpop.f32.mrb[0].mxu0
      %v1077 = vpop.f32.mrb[0].mxu0
      %v1078 = vadd.f32 %v740, %v1077
      %v1079 = vpop.f32.mrb[0].mxu0
      %1080 = vmatprep.mubr.bf16.mxu0 0
      %1081 = vmatmul.mubr.bf16.gmra.mrb[0].mxu0 %v932
      %v1082 = vpop.f32.mrb[0].mxu0
      %v1083 = vadd.f32 %v740, %v1082
      %v1084 = vpop.f32.mrb[0].mxu0
      %v1085 = vpop.f32.mrb[0].mxu0
      %v1086 = vadd.f32 %v740, %v1085
      %v1087 = vpop.f32.mrb[0].mxu0
      %1088 = vmatprep.mubr.bf16.mxu0 0
      %1089 = vmatmul.mubr.bf16.gmra.mrb[0].mxu0 %v935
      %v1090 = vpop.f32.mrb[0].mxu0
      %v1091 = vadd.f32 %v740, %v1090
      %v1092 = vpop.f32.mrb[0].mxu0
      %v1093 = vpop.f32.mrb[0].mxu0
      %v1094 = vadd.f32 %v740, %v1093
      %v1095 = vpop.f32.mrb[0].mxu0
      %1096 = vmatprep.mubr.bf16.mxu0 0
      %1097 = vmatmul.mubr.bf16.gmra.mrb[0].mxu0 %v938
      %v1098 = vpop.f32.mrb[0].mxu0
      %v1099 = vadd.f32 %v740, %v1098
      %v1100 = vpop.f32.mrb[0].mxu0
      %v1101 = vpop.f32.mrb[0].mxu0
      %v1102 = vadd.f32 %v740, %v1101
      %v1103 = vpop.f32.mrb[0].mxu0
      %1104 = vmatprep.mubr.bf16.mxu0 0
      %1105 = vmatmul.mubr.bf16.gmra.mrb[0].mxu0 %v941
      %v1106 = vpop.f32.mrb[0].mxu0
      %v1107 = vadd.f32 %v740, %v1106
      %v1108 = vpop.f32.mrb[0].mxu0
      %v1109 = vpop.f32.mrb[0].mxu0
      %v1110 = vadd.f32 %v740, %v1109
      %v1111 = vpop.f32.mrb[0].mxu0
      %1112 = vmatprep.mubr.bf16.mxu0 0
      %1113 = vmatmul.mubr.bf16.gmra.mrb[0].mxu0 %v944
      %v1114 = vpop.f32.mrb[0].mxu0
      %v1115 = vadd.f32 %v740, %v1114
      %v1116 = vpop.f32.mrb[0].mxu0
      %v1117 = vpop.f32.mrb[0].mxu0
      %v1118 = vadd.f32 %v740, %v1117
      %v1119 = vpop.f32.mrb[0].mxu0
      %1120 = vmatprep.mubr.bf16.mxu0 0
      %1121 = vmatmul.mubr.bf16.gmra.mrb[0].mxu0 %v947
      %v1122 = vpop.f32.mrb[0].mxu0
      %v1123 = vadd.f32 %v740, %v1122
      %v1124 = vpop.f32.mrb[0].mxu0
      %v1125 = vpop.f32.mrb[0].mxu0
      %v1126 = vadd.f32 %v740, %v1125
      %v1127 = vpop.f32.mrb[0].mxu0
      %1128 = vmatprep.mubr.bf16.mxu0 0
      %1129 = vmatmul.mubr.bf16.gmra.mrb[0].mxu0 %v950
      %v1130 = vpop.f32.mrb[0].mxu0
      %v1131 = vadd.f32 %v740, %v1130
      %v1132 = vpop.f32.mrb[0].mxu0
      %v1133 = vpop.f32.mrb[0].mxu0
      %v1134 = vadd.f32 %v740, %v1133
      %v1135 = vpop.f32.mrb[0].mxu0
      %1136 = vmatprep.mubr.bf16.mxu0 0
      %1137 = vmatmul.mubr.bf16.gmra.mrb[0].mxu0 %v953
      %v1138 = vpop.f32.mrb[0].mxu0
      %v1139 = vadd.f32 %v740, %v1138
      %v1140 = vpop.f32.mrb[0].mxu0
      %v1141 = vpop.f32.mrb[0].mxu0
      %v1142 = vadd.f32 %v740, %v1141
      %v1143 = vpop.f32.mrb[0].mxu0
      %1144 = vmatprep.mubr.bf16.mxu0 0
      %1145 = vmatmul.mubr.bf16.gmra.mrb[0].mxu0 %v956
      %v1146 = vpop.f32.mrb[0].mxu0
      %v1147 = vadd.f32 %v740, %v1146
      %v1148 = vpop.f32.mrb[0].mxu0
      %v1149 = vpop.f32.mrb[0].mxu0
      %v1150 = vadd.f32 %v740, %v1149
      %v1151 = vpop.f32.mrb[0].mxu0
      %1152 = vmatprep.mubr.bf16.mxu0 0
      %1153 = vmatmul.mubr.bf16.gmra.mrb[0].mxu0 %v959
      %v1154 = vpop.f32.mrb[0].mxu0
      %v1155 = vadd.f32 %v740, %v1154
      %v1156 = vpop.f32.mrb[0].mxu0
      %v1157 = vpop.f32.mrb[0].mxu0
      %v1158 = vadd.f32 %v740, %v1157
      %v1159 = vpop.f32.mrb[0].mxu0
      %1160 = vmatprep.mubr.bf16.mxu0 0
      %1161 = vmatmul.mubr.bf16.gmra.mrb[0].mxu0 %v962
      %v1162 = vpop.f32.mrb[0].mxu0
      %v1163 = vadd.f32 %v740, %v1162
      %v1164 = vpop.f32.mrb[0].mxu0
      %v1165 = vpop.f32.mrb[0].mxu0
      %v1166 = vadd.f32 %v740, %v1165
      %v1167 = vpop.f32.mrb[0].mxu0
      %1168 = vmatprep.mubr.bf16.mxu0 0
      %1169 = vmatmul.mubr.bf16.gmra.mrb[0].mxu0 %v965
      %v1170 = vpop.f32.mrb[0].mxu0
      %v1171 = vadd.f32 %v740, %v1170
      %v1172 = vpop.f32.mrb[0].mxu0
      %v1173 = vpop.f32.mrb[0].mxu0
      %v1174 = vadd.f32 %v740, %v1173
      %v1175 = vpop.f32.mrb[0].mxu0
      %1176 = vmatprep.mubr.bf16.mxu0 0
      %1177 = vmatmul.mubr.bf16.gmra.mrb[0].mxu0 %v968
      %v1178 = vpop.f32.mrb[0].mxu0
      %v1179 = vadd.f32 %v740, %v1178
      %v1180 = vpop.f32.mrb[0].mxu0
      %v1181 = vpop.f32.mrb[0].mxu0
      %v1182 = vadd.f32 %v740, %v1181
      %v1183 = vpop.f32.mrb[0].mxu0
      %1184 = vmatprep.mubr.bf16.mxu0 0
      %1185 = vmatmul.mubr.bf16.gmra.mrb[0].mxu0 %v971
      %v1186 = vpop.f32.mrb[0].mxu0
      %v1187 = vadd.f32 %v740, %v1186
      %v1188 = vpop.f32.mrb[0].mxu0
      %v1189 = vpop.f32.mrb[0].mxu0
      %v1190 = vadd.f32 %v740, %v1189
      %v1191 = vpop.f32.mrb[0].mxu0
      %1192 = vmatprep.mubr.bf16.mxu0 0
      %1193 = vmatmul.mubr.bf16.gmra.mrb[0].mxu0 %v974
      %v1194 = vpop.f32.mrb[0].mxu0
      %v1195 = vadd.f32 %v740, %v1194
      %v1196 = vpop.f32.mrb[0].mxu0
      %v1197 = vpop.f32.mrb[0].mxu0
      %v1198 = vadd.f32 %v740, %v1197
      %v1199 = vpop.f32.mrb[0].mxu0
      %1200 = vmatprep.mubr.bf16.mxu0 0
      %1201 = vmatmul.mubr.bf16.gmra.mrb[0].mxu0 %v977
      %v1202 = vpop.f32.mrb[0].mxu0
      %v1203 = vadd.f32 %v740, %v1202
      %v1204 = vpop.f32.mrb[0].mxu0
      %v1205 = vpop.f32.mrb[0].mxu0
      %v1206 = vadd.f32 %v740, %v1205
      %v1207 = vpop.f32.mrb[0].mxu0
      %1208 = vmatprep.mubr.bf16.mxu0 0
      %1209 = vmatmul.mubr.bf16.gmra.mrb[0].mxu0 %v980
      %v1210 = vpop.f32.mrb[0].mxu0
      %v1211 = vadd.f32 %v740, %v1210
      %v1212 = vpop.f32.mrb[0].mxu0
      %v1213 = vpop.f32.mrb[0].mxu0
      %v1214 = vadd.f32 %v740, %v1213
      %v1215 = vpop.f32.mrb[0].mxu0
      %1216 = vmatprep.mubr.bf16.mxu0 0
      %1217 = vmatmul.mubr.bf16.gmra.mrb[0].mxu0 %v983
      %v1218 = vpop.f32.mrb[0].mxu0
      %v1219 = vadd.f32 %v740, %v1218
      %v1220 = vpop.f32.mrb[0].mxu0
      %v1221 = vpop.f32.mrb[0].mxu0
      %v1222 = vadd.f32 %v740, %v1221
      %v1223 = vpop.f32.mrb[0].mxu0
      %1224 = vmatprep.mubr.bf16.mxu0 0
      %1225 = vmatmul.mubr.bf16.gmra.mrb[0].mxu0 %v986
      %v1226 = vpop.f32.mrb[0].mxu0
      %v1227 = vadd.f32 %v740, %v1226
      %v1228 = vpop.f32.mrb[0].mxu0
      %v1229 = vpop.f32.mrb[0].mxu0
      %v1230 = vadd.f32 %v740, %v1229
      %v1231 = vpop.f32.mrb[0].mxu0
      %1232 = vmatprep.mubr.bf16.mxu0 0
      %1233 = vmatmul.mubr.bf16.gmra.mrb[0].mxu0 %v989
      %v1234 = vpop.f32.mrb[0].mxu0
      %v1235 = vadd.f32 %v740, %v1234
      %v1236 = vpop.f32.mrb[0].mxu0
      %v1237 = vpop.f32.mrb[0].mxu0
      %v1238 = vadd.f32 %v740, %v1237
      %v1239 = vpop.f32.mrb[0].mxu0
      %1240 = vmatprep.mubr.bf16.mxu0 0
      %1241 = vmatmul.mubr.bf16.gmra.mrb[0].mxu0 %v992
      %v1242 = vpop.f32.mrb[0].mxu0
      %v1243 = vadd.f32 %v740, %v1242
      %v1244 = vpop.f32.mrb[0].mxu0
      %v1245 = vpop.f32.mrb[0].mxu0
      %v1246 = vadd.f32 %v740, %v1245
      %v1247 = vpop.f32.mrb[0].mxu0
      %1248 = vmatprep.mubr.bf16.mxu0 0
      %1249 = vmatmul.mubr.bf16.gmra.mrb[0].mxu0 %v995
      %v1250 = vpop.f32.mrb[0].mxu0
      %v1251 = vadd.f32 %v740, %v1250
      %v1252 = vpop.f32.mrb[0].mxu0
      %v1253 = vpop.f32.mrb[0].mxu0
      %v1254 = vadd.f32 %v740, %v1253
      %v1255 = vpop.f32.mrb[0].mxu0
      %1256 = vmatprep.mubr.bf16.mxu0 0
      %1257 = vmatmul.mubr.bf16.gmra.mrb[0].mxu0 %v998
      %v1258 = vpop.f32.mrb[0].mxu0
      %v1259 = vadd.f32 %v740, %v1258
      %v1260 = vpop.f32.mrb[0].mxu0
      %v1261 = vpop.f32.mrb[0].mxu0
      %v1262 = vadd.f32 %v740, %v1261
      %v1263 = vpop.f32.mrb[0].mxu0
      %1264 = vmatprep.mubr.bf16.mxu0 0
      %1265 = vmatmul.mubr.bf16.gmra.mrb[0].mxu0 %v1001
      %v1266 = vpop.f32.mrb[0].mxu0
      %v1267 = vadd.f32 %v740, %v1266
      %v1268 = vpop.f32.mrb[0].mxu0
      %v1269 = vpop.f32.mrb[0].mxu0
      %v1270 = vadd.f32 %v740, %v1269
      %v1271 = vpop.f32.mrb[0].mxu0
      %1272 = vmatprep.mubr.bf16.mxu0 0
      %1273 = vmatmul.mubr.bf16.gmra.mrb[0].mxu0 %v1004
      %v1274 = vpop.f32.mrb[0].mxu0
      %v1275 = vadd.f32 %v740, %v1274
      %v1276 = vpop.f32.mrb[0].mxu0
      %v1277 = vpop.f32.mrb[0].mxu0
      %v1278 = vadd.f32 %v740, %v1277
      %v1279 = vpop.f32.mrb[0].mxu0
      %1280 = vmatprep.mubr.bf16.mxu0 0
      %1281 = vmatmul.mubr.bf16.gmra.mrb[0].mxu0 %v1007
      %v1282 = vpop.f32.mrb[0].mxu0
      %v1283 = vadd.f32 %v740, %v1282
      %v1284 = vpop.f32.mrb[0].mxu0
      %v1285 = vpop.f32.mrb[0].mxu0
      %v1286 = vadd.f32 %v740, %v1285
      %v1287 = vpop.f32.mrb[0].mxu0
      %1288 = vmatprep.mubr.bf16.mxu0 0
      %1289 = vmatmul.mubr.bf16.gmra.mrb[0].mxu0 %v1010
      %v1290 = vpop.f32.mrb[0].mxu0
      %v1291 = vadd.f32 %v740, %v1290
      %v1292 = vpop.f32.mrb[0].mxu0
      %v1293 = vpop.f32.mrb[0].mxu0
      %v1294 = vadd.f32 %v740, %v1293
      %v1295 = vpop.f32.mrb[0].mxu0
      %1296 = vmatprep.mubr.bf16.mxu0 0
      %1297 = vmatmul.mubr.bf16.gmra.mrb[0].mxu0 %v1013
      %v1298 = vpop.f32.mrb[0].mxu0
      %v1299 = vadd.f32 %v740, %v1298
      %v1300 = vpop.f32.mrb[0].mxu0
      %v1301 = vpop.f32.mrb[0].mxu0
      %v1302 = vadd.f32 %v740, %v1301
      %v1303 = vpop.f32.mrb[0].mxu0
      %1304 = vmatprep.mubr.bf16.mxu0 0
      %1305 = vmatmul.mubr.bf16.gmra.mrb[0].mxu0 %v1016
      %v1306 = vpop.f32.mrb[0].mxu0
      %v1307 = vadd.f32 %v740, %v1306
      %v1308 = vpop.f32.mrb[0].mxu0
      %v1309 = vpop.f32.mrb[0].mxu0
      %v1310 = vadd.f32 %v740, %v1309
      %v1311 = vpop.f32.mrb[0].mxu0
      %1312 = vmatprep.mubr.bf16.mxu0 0
      %1313 = vmatmul.mubr.bf16.gmra.mrb[0].mxu0 %v1019
      %v1314 = vpop.f32.mrb[0].mxu0
      %v1315 = vadd.f32 %v740, %v1314
      %v1316 = vpop.f32.mrb[0].mxu0
      %v1317 = vpop.f32.mrb[0].mxu0
      %v1318 = vadd.f32 %v740, %v1317
      %v1319 = vpop.f32.mrb[0].mxu0
      %1320 = vmatprep.mubr.bf16.mxu0 0
      %1321 = vmatmul.mubr.bf16.gmra.mrb[0].mxu0 %v1022
      %v1322 = vpop.f32.mrb[0].mxu0
      %v1323 = vadd.f32 %v740, %v1322
      %v1324 = vpop.f32.mrb[0].mxu0
      %v1325 = vpop.f32.mrb[0].mxu0
      %v1326 = vadd.f32 %v740, %v1325
      %v1327 = vpop.f32.mrb[0].mxu0
      %1328 = vmatprep.mubr.bf16.mxu0 0
      %1329 = vmatmul.mubr.bf16.gmra.mrb[0].mxu0 %v1025
      %v1330 = vpop.f32.mrb[0].mxu0
      %v1331 = vadd.f32 %v740, %v1330
      %v1332 = vpop.f32.mrb[0].mxu0
      %v1333 = vpop.f32.mrb[0].mxu0
      %v1334 = vadd.f32 %v740, %v1333
      %v1335 = vpop.f32.mrb[0].mxu0
      %1336 = vmatprep.mubr.bf16.mxu0 0
      %1337 = vmatmul.mubr.bf16.gmra.mrb[0].mxu0 %v1028
      %v1338 = vpop.f32.mrb[0].mxu0
      %v1339 = vadd.f32 %v740, %v1338
      %v1340 = vpop.f32.mrb[0].mxu0
      %v1341 = vpop.f32.mrb[0].mxu0
      %v1342 = vadd.f32 %v740, %v1341
      %v1343 = vpop.f32.mrb[0].mxu0
      %1344 = vmatprep.mubr.bf16.mxu0 0
      %1345 = vmatmul.mubr.bf16.gmra.mrb[0].mxu0 %v1031
      %v1346 = vpop.f32.mrb[0].mxu0
      %v1347 = vadd.f32 %v740, %v1346
      %v1348 = vpop.f32.mrb[0].mxu0
      %v1349 = vpop.f32.mrb[0].mxu0
      %v1350 = vadd.f32 %v740, %v1349
      %v1351 = vpop.f32.mrb[0].mxu0
      %1352 = vmatprep.mubr.bf16.mxu0 0
      %1353 = vmatmul.mubr.bf16.gmra.mrb[0].mxu0 %v1034
      %v1354 = vpop.f32.mrb[0].mxu0
      %v1355 = vadd.f32 %v740, %v1354
      %v1356 = vpop.f32.mrb[0].mxu0
      %v1357 = vpop.f32.mrb[0].mxu0
      %v1358 = vadd.f32 %v740, %v1357
      %v1359 = vpop.f32.mrb[0].mxu0
      %1360 = vdwg.mxu0
      %v1361 = vld [vmem:[%s6] sm:$0xf]
      %v1362 = vld [vmem:[%s6 + $0x4] sm:$0x7]
      %v1363 = vld [vmem:[%s8] sm:$0x1]
      %v1365 = vlaneseq
      %v1366 = vshrl.u32 %v1365, 7
      %v1367 = vsub.s32 0, %v1366
      %v1368 = vrot.slane %v1363, %v1367
      %v1372 = vunpack.c.l.b16 %v1361
      %v1373 = vunpack.c.l.b16 %v1362
      %v1374 = vpack.c.b16 %v1373, %v1372
      %v1376 = vsel %vm1036, %v1374, 0
      %1378 = vmatprep.subr.bf16.mxu0 0
      %1379 = vmatpush1.bf16.msra.mxu0 %v1376
      %1380 = vmatprep.subr.bf16.mxu0 0
      %1381 = vmatpush1.bf16.msra.mxu0 0
      %1382 = vmatprep.subr.bf16.mxu0 0
      %1383 = vmatpush1.bf16.msra.mxu0 0
      %1384 = vmatprep.subr.bf16.mxu0 0
      %1385 = vmatpush1.bf16.msra.mxu0 0
      %1386 = vmatprep.subr.bf16.mxu0 0
      %1387 = vmatpush1.bf16.msra.mxu0 0
      %1388 = vmatprep.subr.bf16.mxu0 0
      %1389 = vmatpush1.bf16.msra.mxu0 0
      %1390 = vmatprep.subr.bf16.mxu0 0
      %1391 = vmatpush1.bf16.msra.mxu0 0
      %1392 = vmatprep.subr.bf16.mxu0 0
      %1393 = vmatpush1.bf16.msra.mxu0 0
      %1394 = vmatprep.subr.bf16.mxu0 0
      %1395 = vmatpush1.bf16.msra.mxu0 0
      %1396 = vmatprep.subr.bf16.mxu0 0
      %1397 = vmatpush1.bf16.msra.mxu0 0
      %1398 = vmatprep.subr.bf16.mxu0 0
      %1399 = vmatpush1.bf16.msra.mxu0 0
      %1400 = vmatprep.subr.bf16.mxu0 0
      %1401 = vmatpush1.bf16.msra.mxu0 0
      %1402 = vmatprep.subr.bf16.mxu0 0
      %1403 = vmatpush1.bf16.msra.mxu0 0
      %1404 = vmatprep.subr.bf16.mxu0 0
      %1405 = vmatpush1.bf16.msra.mxu0 0
      %1406 = vmatprep.subr.bf16.mxu0 0
      %1407 = vmatpush1.bf16.msra.mxu0 0
      %1408 = vmatprep.subr.bf16.mxu0 0
      %1409 = vmatpush1.bf16.msra.mxu0 0
      %1410 = vmatprep.mubr.bf16.mxu0 0
      %1411 = vmatmul.mubr.bf16.gmra.mrb[0].mxu0 %v929
      %v1412 = vpop.f32.mrb[0].mxu0
      %v1413 = vadd.f32 %v1368, %v1412
      %v1414 = vpop.f32.mrb[0].mxu0
      %v1415 = vpop.f32.mrb[0].mxu0
      %v1416 = vadd.f32 %v1368, %v1415
      %v1417 = vpop.f32.mrb[0].mxu0
      %1418 = vmatprep.mubr.bf16.mxu0 0
      %1419 = vmatmul.mubr.bf16.gmra.mrb[0].mxu0 %v932
      %v1420 = vpop.f32.mrb[0].mxu0
      %v1421 = vadd.f32 %v1368, %v1420
      %v1422 = vpop.f32.mrb[0].mxu0
      %v1423 = vpop.f32.mrb[0].mxu0
      %v1424 = vadd.f32 %v1368, %v1423
      %v1425 = vpop.f32.mrb[0].mxu0
      %1426 = vmatprep.mubr.bf16.mxu0 0
      %1427 = vmatmul.mubr.bf16.gmra.mrb[0].mxu0 %v935
      %v1428 = vpop.f32.mrb[0].mxu0
      %v1429 = vadd.f32 %v1368, %v1428
      %v1430 = vpop.f32.mrb[0].mxu0
      %v1431 = vpop.f32.mrb[0].mxu0
      %v1432 = vadd.f32 %v1368, %v1431
      %v1433 = vpop.f32.mrb[0].mxu0
      %1434 = vmatprep.mubr.bf16.mxu0 0
      %1435 = vmatmul.mubr.bf16.gmra.mrb[0].mxu0 %v938
      %v1436 = vpop.f32.mrb[0].mxu0
      %v1437 = vadd.f32 %v1368, %v1436
      %v1438 = vpop.f32.mrb[0].mxu0
      %v1439 = vpop.f32.mrb[0].mxu0
      %v1440 = vadd.f32 %v1368, %v1439
      %v1441 = vpop.f32.mrb[0].mxu0
      %1442 = vmatprep.mubr.bf16.mxu0 0
      %1443 = vmatmul.mubr.bf16.gmra.mrb[0].mxu0 %v941
      %v1444 = vpop.f32.mrb[0].mxu0
      %v1445 = vadd.f32 %v1368, %v1444
      %v1446 = vpop.f32.mrb[0].mxu0
      %v1447 = vpop.f32.mrb[0].mxu0
      %v1448 = vadd.f32 %v1368, %v1447
      %v1449 = vpop.f32.mrb[0].mxu0
      %1450 = vmatprep.mubr.bf16.mxu0 0
      %1451 = vmatmul.mubr.bf16.gmra.mrb[0].mxu0 %v944
      %v1452 = vpop.f32.mrb[0].mxu0
      %v1453 = vadd.f32 %v1368, %v1452
      %v1454 = vpop.f32.mrb[0].mxu0
      %v1455 = vpop.f32.mrb[0].mxu0
      %v1456 = vadd.f32 %v1368, %v1455
      %v1457 = vpop.f32.mrb[0].mxu0
      %1458 = vmatprep.mubr.bf16.mxu0 0
      %1459 = vmatmul.mubr.bf16.gmra.mrb[0].mxu0 %v947
      %v1460 = vpop.f32.mrb[0].mxu0
      %v1461 = vadd.f32 %v1368, %v1460
      %v1462 = vpop.f32.mrb[0].mxu0
      %v1463 = vpop.f32.mrb[0].mxu0
      %v1464 = vadd.f32 %v1368, %v1463
      %v1465 = vpop.f32.mrb[0].mxu0
      %1466 = vmatprep.mubr.bf16.mxu0 0
      %1467 = vmatmul.mubr.bf16.gmra.mrb[0].mxu0 %v950
      %v1468 = vpop.f32.mrb[0].mxu0
      %v1469 = vadd.f32 %v1368, %v1468
      %v1470 = vpop.f32.mrb[0].mxu0
      %v1471 = vpop.f32.mrb[0].mxu0
      %v1472 = vadd.f32 %v1368, %v1471
      %v1473 = vpop.f32.mrb[0].mxu0
      %1474 = vmatprep.mubr.bf16.mxu0 0
      %1475 = vmatmul.mubr.bf16.gmra.mrb[0].mxu0 %v953
      %v1476 = vpop.f32.mrb[0].mxu0
      %v1477 = vadd.f32 %v1368, %v1476
      %v1478 = vpop.f32.mrb[0].mxu0
      %v1479 = vpop.f32.mrb[0].mxu0
      %v1480 = vadd.f32 %v1368, %v1479
      %v1481 = vpop.f32.mrb[0].mxu0
      %1482 = vmatprep.mubr.bf16.mxu0 0
      %1483 = vmatmul.mubr.bf16.gmra.mrb[0].mxu0 %v956
      %v1484 = vpop.f32.mrb[0].mxu0
      %v1485 = vadd.f32 %v1368, %v1484
      %v1486 = vpop.f32.mrb[0].mxu0
      %v1487 = vpop.f32.mrb[0].mxu0
      %v1488 = vadd.f32 %v1368, %v1487
      %v1489 = vpop.f32.mrb[0].mxu0
      %1490 = vmatprep.mubr.bf16.mxu0 0
      %1491 = vmatmul.mubr.bf16.gmra.mrb[0].mxu0 %v959
      %v1492 = vpop.f32.mrb[0].mxu0
      %v1493 = vadd.f32 %v1368, %v1492
      %v1494 = vpop.f32.mrb[0].mxu0
      %v1495 = vpop.f32.mrb[0].mxu0
      %v1496 = vadd.f32 %v1368, %v1495
      %v1497 = vpop.f32.mrb[0].mxu0
      %1498 = vmatprep.mubr.bf16.mxu0 0
      %1499 = vmatmul.mubr.bf16.gmra.mrb[0].mxu0 %v962
      %v1500 = vpop.f32.mrb[0].mxu0
      %v1501 = vadd.f32 %v1368, %v1500
      %v1502 = vpop.f32.mrb[0].mxu0
      %v1503 = vpop.f32.mrb[0].mxu0
      %v1504 = vadd.f32 %v1368, %v1503
      %v1505 = vpop.f32.mrb[0].mxu0
      %1506 = vmatprep.mubr.bf16.mxu0 0
      %1507 = vmatmul.mubr.bf16.gmra.mrb[0].mxu0 %v965
      %v1508 = vpop.f32.mrb[0].mxu0
      %v1509 = vadd.f32 %v1368, %v1508
      %v1510 = vpop.f32.mrb[0].mxu0
      %v1511 = vpop.f32.mrb[0].mxu0
      %v1512 = vadd.f32 %v1368, %v1511
      %v1513 = vpop.f32.mrb[0].mxu0
      %1514 = vmatprep.mubr.bf16.mxu0 0
      %1515 = vmatmul.mubr.bf16.gmra.mrb[0].mxu0 %v968
      %v1516 = vpop.f32.mrb[0].mxu0
      %v1517 = vadd.f32 %v1368, %v1516
      %v1518 = vpop.f32.mrb[0].mxu0
      %v1519 = vpop.f32.mrb[0].mxu0
      %v1520 = vadd.f32 %v1368, %v1519
      %v1521 = vpop.f32.mrb[0].mxu0
      %1522 = vmatprep.mubr.bf16.mxu0 0
      %1523 = vmatmul.mubr.bf16.gmra.mrb[0].mxu0 %v971
      %v1524 = vpop.f32.mrb[0].mxu0
      %v1525 = vadd.f32 %v1368, %v1524
      %v1526 = vpop.f32.mrb[0].mxu0
      %v1527 = vpop.f32.mrb[0].mxu0
      %v1528 = vadd.f32 %v1368, %v1527
      %v1529 = vpop.f32.mrb[0].mxu0
      %1530 = vmatprep.mubr.bf16.mxu0 0
      %1531 = vmatmul.mubr.bf16.gmra.mrb[0].mxu0 %v974
      %v1532 = vpop.f32.mrb[0].mxu0
      %v1533 = vadd.f32 %v1368, %v1532
      %v1534 = vpop.f32.mrb[0].mxu0
      %v1535 = vpop.f32.mrb[0].mxu0
      %v1536 = vadd.f32 %v1368, %v1535
      %v1537 = vpop.f32.mrb[0].mxu0
      %1538 = vmatprep.mubr.bf16.mxu0 0
      %1539 = vmatmul.mubr.bf16.gmra.mrb[0].mxu0 %v977
      %v1540 = vpop.f32.mrb[0].mxu0
      %v1541 = vadd.f32 %v1368, %v1540
      %v1542 = vpop.f32.mrb[0].mxu0
      %v1543 = vpop.f32.mrb[0].mxu0
      %v1544 = vadd.f32 %v1368, %v1543
      %v1545 = vpop.f32.mrb[0].mxu0
      %1546 = vmatprep.mubr.bf16.mxu0 0
      %1547 = vmatmul.mubr.bf16.gmra.mrb[0].mxu0 %v980
      %v1548 = vpop.f32.mrb[0].mxu0
      %v1549 = vadd.f32 %v1368, %v1548
      %v1550 = vpop.f32.mrb[0].mxu0
      %v1551 = vpop.f32.mrb[0].mxu0
      %v1552 = vadd.f32 %v1368, %v1551
      %v1553 = vpop.f32.mrb[0].mxu0
      %1554 = vmatprep.mubr.bf16.mxu0 0
      %1555 = vmatmul.mubr.bf16.gmra.mrb[0].mxu0 %v983
      %v1556 = vpop.f32.mrb[0].mxu0
      %v1557 = vadd.f32 %v1368, %v1556
      %v1558 = vpop.f32.mrb[0].mxu0
      %v1559 = vpop.f32.mrb[0].mxu0
      %v1560 = vadd.f32 %v1368, %v1559
      %v1561 = vpop.f32.mrb[0].mxu0
      %1562 = vmatprep.mubr.bf16.mxu0 0
      %1563 = vmatmul.mubr.bf16.gmra.mrb[0].mxu0 %v986
      %v1564 = vpop.f32.mrb[0].mxu0
      %v1565 = vadd.f32 %v1368, %v1564
      %v1566 = vpop.f32.mrb[0].mxu0
      %v1567 = vpop.f32.mrb[0].mxu0
      %v1568 = vadd.f32 %v1368, %v1567
      %v1569 = vpop.f32.mrb[0].mxu0
      %1570 = vmatprep.mubr.bf16.mxu0 0
      %1571 = vmatmul.mubr.bf16.gmra.mrb[0].mxu0 %v989
      %v1572 = vpop.f32.mrb[0].mxu0
      %v1573 = vadd.f32 %v1368, %v1572
      %v1574 = vpop.f32.mrb[0].mxu0
      %v1575 = vpop.f32.mrb[0].mxu0
      %v1576 = vadd.f32 %v1368, %v1575
      %v1577 = vpop.f32.mrb[0].mxu0
      %1578 = vmatprep.mubr.bf16.mxu0 0
      %1579 = vmatmul.mubr.bf16.gmra.mrb[0].mxu0 %v992
      %v1580 = vpop.f32.mrb[0].mxu0
      %v1581 = vadd.f32 %v1368, %v1580
      %v1582 = vpop.f32.mrb[0].mxu0
      %v1583 = vpop.f32.mrb[0].mxu0
      %v1584 = vadd.f32 %v1368, %v1583
      %v1585 = vpop.f32.mrb[0].mxu0
      %1586 = vmatprep.mubr.bf16.mxu0 0
      %1587 = vmatmul.mubr.bf16.gmra.mrb[0].mxu0 %v995
      %v1588 = vpop.f32.mrb[0].mxu0
      %v1589 = vadd.f32 %v1368, %v1588
      %v1590 = vpop.f32.mrb[0].mxu0
      %v1591 = vpop.f32.mrb[0].mxu0
      %v1592 = vadd.f32 %v1368, %v1591
      %v1593 = vpop.f32.mrb[0].mxu0
      %1594 = vmatprep.mubr.bf16.mxu0 0
      %1595 = vmatmul.mubr.bf16.gmra.mrb[0].mxu0 %v998
      %v1596 = vpop.f32.mrb[0].mxu0
      %v1597 = vadd.f32 %v1368, %v1596
      %v1598 = vpop.f32.mrb[0].mxu0
      %v1599 = vpop.f32.mrb[0].mxu0
      %v1600 = vadd.f32 %v1368, %v1599
      %v1601 = vpop.f32.mrb[0].mxu0
      %1602 = vmatprep.mubr.bf16.mxu0 0
      %1603 = vmatmul.mubr.bf16.gmra.mrb[0].mxu0 %v1001
      %v1604 = vpop.f32.mrb[0].mxu0
      %v1605 = vadd.f32 %v1368, %v1604
      %v1606 = vpop.f32.mrb[0].mxu0
      %v1607 = vpop.f32.mrb[0].mxu0
      %v1608 = vadd.f32 %v1368, %v1607
      %v1609 = vpop.f32.mrb[0].mxu0
      %1610 = vmatprep.mubr.bf16.mxu0 0
      %1611 = vmatmul.mubr.bf16.gmra.mrb[0].mxu0 %v1004
      %v1612 = vpop.f32.mrb[0].mxu0
      %v1613 = vadd.f32 %v1368, %v1612
      %v1614 = vpop.f32.mrb[0].mxu0
      %v1615 = vpop.f32.mrb[0].mxu0
      %v1616 = vadd.f32 %v1368, %v1615
      %v1617 = vpop.f32.mrb[0].mxu0
      %1618 = vmatprep.mubr.bf16.mxu0 0
      %1619 = vmatmul.mubr.bf16.gmra.mrb[0].mxu0 %v1007
      %v1620 = vpop.f32.mrb[0].mxu0
      %v1621 = vadd.f32 %v1368, %v1620
      %v1622 = vpop.f32.mrb[0].mxu0
      %v1623 = vpop.f32.mrb[0].mxu0
      %v1624 = vadd.f32 %v1368, %v1623
      %v1625 = vpop.f32.mrb[0].mxu0
      %1626 = vmatprep.mubr.bf16.mxu0 0
      %1627 = vmatmul.mubr.bf16.gmra.mrb[0].mxu0 %v1010
      %v1628 = vpop.f32.mrb[0].mxu0
      %v1629 = vadd.f32 %v1368, %v1628
      %v1630 = vpop.f32.mrb[0].mxu0
      %v1631 = vpop.f32.mrb[0].mxu0
      %v1632 = vadd.f32 %v1368, %v1631
      %v1633 = vpop.f32.mrb[0].mxu0
      %1634 = vmatprep.mubr.bf16.mxu0 0
      %1635 = vmatmul.mubr.bf16.gmra.mrb[0].mxu0 %v1013
      %v1636 = vpop.f32.mrb[0].mxu0
      %v1637 = vadd.f32 %v1368, %v1636
      %v1638 = vpop.f32.mrb[0].mxu0
      %v1639 = vpop.f32.mrb[0].mxu0
      %v1640 = vadd.f32 %v1368, %v1639
      %v1641 = vpop.f32.mrb[0].mxu0
      %1642 = vmatprep.mubr.bf16.mxu0 0
      %1643 = vmatmul.mubr.bf16.gmra.mrb[0].mxu0 %v1016
      %v1644 = vpop.f32.mrb[0].mxu0
      %v1645 = vadd.f32 %v1368, %v1644
      %v1646 = vpop.f32.mrb[0].mxu0
      %v1647 = vpop.f32.mrb[0].mxu0
      %v1648 = vadd.f32 %v1368, %v1647
      %v1649 = vpop.f32.mrb[0].mxu0
      %1650 = vmatprep.mubr.bf16.mxu0 0
      %1651 = vmatmul.mubr.bf16.gmra.mrb[0].mxu0 %v1019
      %v1652 = vpop.f32.mrb[0].mxu0
      %v1653 = vadd.f32 %v1368, %v1652
      %v1654 = vpop.f32.mrb[0].mxu0
      %v1655 = vpop.f32.mrb[0].mxu0
      %v1656 = vadd.f32 %v1368, %v1655
      %v1657 = vpop.f32.mrb[0].mxu0
      %1658 = vmatprep.mubr.bf16.mxu0 0
      %1659 = vmatmul.mubr.bf16.gmra.mrb[0].mxu0 %v1022
      %v1660 = vpop.f32.mrb[0].mxu0
      %v1661 = vadd.f32 %v1368, %v1660
      %v1662 = vpop.f32.mrb[0].mxu0
      %v1663 = vpop.f32.mrb[0].mxu0
      %v1664 = vadd.f32 %v1368, %v1663
      %v1665 = vpop.f32.mrb[0].mxu0
      %1666 = vmatprep.mubr.bf16.mxu0 0
      %1667 = vmatmul.mubr.bf16.gmra.mrb[0].mxu0 %v1025
      %v1668 = vpop.f32.mrb[0].mxu0
      %v1669 = vadd.f32 %v1368, %v1668
      %v1670 = vpop.f32.mrb[0].mxu0
      %v1671 = vpop.f32.mrb[0].mxu0
      %v1672 = vadd.f32 %v1368, %v1671
      %v1673 = vpop.f32.mrb[0].mxu0
      %1674 = vmatprep.mubr.bf16.mxu0 0
      %1675 = vmatmul.mubr.bf16.gmra.mrb[0].mxu0 %v1028
      %v1676 = vpop.f32.mrb[0].mxu0
      %v1677 = vadd.f32 %v1368, %v1676
      %v1678 = vpop.f32.mrb[0].mxu0
      %v1679 = vpop.f32.mrb[0].mxu0
      %v1680 = vadd.f32 %v1368, %v1679
      %v1681 = vpop.f32.mrb[0].mxu0
      %1682 = vmatprep.mubr.bf16.mxu0 0
      %1683 = vmatmul.mubr.bf16.gmra.mrb[0].mxu0 %v1031
      %v1684 = vpop.f32.mrb[0].mxu0
      %v1685 = vadd.f32 %v1368, %v1684
      %v1686 = vpop.f32.mrb[0].mxu0
      %v1687 = vpop.f32.mrb[0].mxu0
      %v1688 = vadd.f32 %v1368, %v1687
      %v1689 = vpop.f32.mrb[0].mxu0
      %1690 = vmatprep.mubr.bf16.mxu0 0
      %1691 = vmatmul.mubr.bf16.gmra.mrb[0].mxu0 %v1034
      %v1692 = vpop.f32.mrb[0].mxu0
      %v1693 = vadd.f32 %v1368, %v1692
      %v1694 = vpop.f32.mrb[0].mxu0
      %v1695 = vpop.f32.mrb[0].mxu0
      %v1696 = vadd.f32 %v1368, %v1695
      %v1697 = vpop.f32.mrb[0].mxu0
      %1698 = vdwg.mxu0
      %vm1699 = vcmask 57344
      %1700 = vst.msk [vmem:[#allocation2] sm:$0x1] %vm1699, 0.0
      %1701 = vst.msk [vmem:[#allocation2 + $0x28] sm:$0x1] %vm1699, 0.0
      %1702 = vst.msk [vmem:[#allocation2 + $0x50] sm:$0x1] %vm1699, 0.0
      %1703 = vst.msk [vmem:[#allocation2 + $0x78] sm:$0x1] %vm1699, 0.0
      %1704 = vst.msk [vmem:[#allocation2 + $0xa0] sm:$0x1] %vm1699, 0.0
      %1705 = vst.msk [vmem:[#allocation2 + $0xc8] sm:$0x1] %vm1699, 0.0
      %1706 = vst.msk [vmem:[#allocation2 + $0xf0] sm:$0x1] %vm1699, 0.0
      %1707 = vst.msk [vmem:[#allocation2 + $0x118] sm:$0x1] %vm1699, 0.0
      %1708 = vst.msk [vmem:[#allocation2 + $0x140] sm:$0x1] %vm1699, 0.0
      %1709 = vst.msk [vmem:[#allocation2 + $0x168] sm:$0x1] %vm1699, 0.0
      %1710 = vst.msk [vmem:[#allocation2 + $0x190] sm:$0x1] %vm1699, 0.0
      %1711 = vst.msk [vmem:[#allocation2 + $0x1b8] sm:$0x1] %vm1699, 0.0
      %1712 = vst.msk [vmem:[#allocation2 + $0x1e0] sm:$0x1] %vm1699, 0.0
      %1713 = vst.msk [vmem:[#allocation2 + $0x208] sm:$0x1] %vm1699, 0.0
      %1714 = vst.msk [vmem:[#allocation2 + $0x230] sm:$0x1] %vm1699, 0.0
      %1715 = vst.msk [vmem:[#allocation2 + $0x258] sm:$0x1] %vm1699, 0.0
      %1716 = vst.msk [vmem:[#allocation2 + $0x280] sm:$0x1] %vm1699, 0.0
      %1717 = vst.msk [vmem:[#allocation2 + $0x2a8] sm:$0x1] %vm1699, 0.0
      %1718 = vst.msk [vmem:[#allocation2 + $0x21] sm:$0x1] %vm1699, 0.0
      %1719 = vst.msk [vmem:[#allocation2 + $0x49] sm:$0x1] %vm1699, 0.0
      %1720 = vst.msk [vmem:[#allocation2 + $0x71] sm:$0x1] %vm1699, 0.0
      %1721 = vst.msk [vmem:[#allocation2 + $0x99] sm:$0x1] %vm1699, 0.0
      %1722 = vst.msk [vmem:[#allocation2 + $0xc1] sm:$0x1] %vm1699, 0.0
      %1723 = vst.msk [vmem:[#allocation2 + $0xe9] sm:$0x1] %vm1699, 0.0
      %1724 = vst.msk [vmem:[#allocation2 + $0x111] sm:$0x1] %vm1699, 0.0
      %1725 = vst.msk [vmem:[#allocation2 + $0x139] sm:$0x1] %vm1699, 0.0
      %1726 = vst.msk [vmem:[#allocation2 + $0x161] sm:$0x1] %vm1699, 0.0
      %1727 = vst.msk [vmem:[#allocation2 + $0x189] sm:$0x1] %vm1699, 0.0
      %1728 = vst.msk [vmem:[#allocation2 + $0x1b1] sm:$0x1] %vm1699, 0.0
      %1729 = vst.msk [vmem:[#allocation2 + $0x1d9] sm:$0x1] %vm1699, 0.0
      %1730 = vst.msk [vmem:[#allocation2 + $0x201] sm:$0x1] %vm1699, 0.0
      %1731 = vst.msk [vmem:[#allocation2 + $0x229] sm:$0x1] %vm1699, 0.0
      %1732 = vst.msk [vmem:[#allocation2 + $0x251] sm:$0x1] %vm1699, 0.0
      %1733 = vst.msk [vmem:[#allocation2 + $0x279] sm:$0x1] %vm1699, 0.0
      %1734 = vst.msk [vmem:[#allocation2 + $0x2a1] sm:$0x1] %vm1699, 0.0
      %1735 = vst.msk [vmem:[#allocation2 + $0x2c9] sm:$0x1] %vm1699, 0.0
      %1736 = vst.msk [vmem:[#allocation3] sm:$0x1] %vm1699, 0.0
      %1737 = vst.msk [vmem:[#allocation3 + $0x28] sm:$0x1] %vm1699, 0.0
      %1738 = vst.msk [vmem:[#allocation3 + $0x50] sm:$0x1] %vm1699, 0.0
      %1739 = vst.msk [vmem:[#allocation3 + $0x78] sm:$0x1] %vm1699, 0.0
      %1740 = vst.msk [vmem:[#allocation3 + $0xa0] sm:$0x1] %vm1699, 0.0
      %1741 = vst.msk [vmem:[#allocation3 + $0xc8] sm:$0x1] %vm1699, 0.0
      %1742 = vst.msk [vmem:[#allocation3 + $0xf0] sm:$0x1] %vm1699, 0.0
      %1743 = vst.msk [vmem:[#allocation3 + $0x118] sm:$0x1] %vm1699, 0.0
      %1744 = vst.msk [vmem:[#allocation3 + $0x140] sm:$0x1] %vm1699, 0.0
      %1745 = vst.msk [vmem:[#allocation3 + $0x168] sm:$0x1] %vm1699, 0.0
      %1746 = vst.msk [vmem:[#allocation3 + $0x190] sm:$0x1] %vm1699, 0.0
      %1747 = vst.msk [vmem:[#allocation3 + $0x1b8] sm:$0x1] %vm1699, 0.0
      %1748 = vst.msk [vmem:[#allocation3 + $0x1e0] sm:$0x1] %vm1699, 0.0
      %1749 = vst.msk [vmem:[#allocation3 + $0x208] sm:$0x1] %vm1699, 0.0
      %1750 = vst.msk [vmem:[#allocation3 + $0x230] sm:$0x1] %vm1699, 0.0
      %1751 = vst.msk [vmem:[#allocation3 + $0x258] sm:$0x1] %vm1699, 0.0
      %1752 = vst.msk [vmem:[#allocation3 + $0x280] sm:$0x1] %vm1699, 0.0
      %1753 = vst.msk [vmem:[#allocation3 + $0x2a8] sm:$0x1] %vm1699, 0.0
      %1754 = vst.msk [vmem:[#allocation3 + $0x21] sm:$0x1] %vm1699, 0.0
      %1755 = vst.msk [vmem:[#allocation3 + $0x49] sm:$0x1] %vm1699, 0.0
      %1756 = vst.msk [vmem:[#allocation3 + $0x71] sm:$0x1] %vm1699, 0.0
      %1757 = vst.msk [vmem:[#allocation3 + $0x99] sm:$0x1] %vm1699, 0.0
      %1758 = vst.msk [vmem:[#allocation3 + $0xc1] sm:$0x1] %vm1699, 0.0
      %1759 = vst.msk [vmem:[#allocation3 + $0xe9] sm:$0x1] %vm1699, 0.0
      %1760 = vst.msk [vmem:[#allocation3 + $0x111] sm:$0x1] %vm1699, 0.0
      %1761 = vst.msk [vmem:[#allocation3 + $0x139] sm:$0x1] %vm1699, 0.0
      %1762 = vst.msk [vmem:[#allocation3 + $0x161] sm:$0x1] %vm1699, 0.0
      %1763 = vst.msk [vmem:[#allocation3 + $0x189] sm:$0x1] %vm1699, 0.0
      %1764 = vst.msk [vmem:[#allocation3 + $0x1b1] sm:$0x1] %vm1699, 0.0
      %1765 = vst.msk [vmem:[#allocation3 + $0x1d9] sm:$0x1] %vm1699, 0.0
      %1766 = vst.msk [vmem:[#allocation3 + $0x201] sm:$0x1] %vm1699, 0.0
      %1767 = vst.msk [vmem:[#allocation3 + $0x229] sm:$0x1] %vm1699, 0.0
      %1768 = vst.msk [vmem:[#allocation3 + $0x251] sm:$0x1] %vm1699, 0.0
      %1769 = vst.msk [vmem:[#allocation3 + $0x279] sm:$0x1] %vm1699, 0.0
      %1770 = vst.msk [vmem:[#allocation3 + $0x2a1] sm:$0x1] %vm1699, 0.0
      %1771 = vst.msk [vmem:[#allocation3 + $0x2c9] sm:$0x1] %vm1699, 0.0
      %vm1772 = vcmask 64512
      %1773 = vst.msk [vmem:[#allocation2 + $0x1] sm:$0xff] %vm1772, %v1075
      %1774 = vst.msk [vmem:[#allocation2 + $0x9] sm:$0xff] %vm1772, %v1078
      %1775 = vst.msk [vmem:[#allocation2 + $0x11] sm:$0xff] %vm1772, %v1083
      %1776 = vst.msk [vmem:[#allocation2 + $0x19] sm:$0xff] %vm1772, %v1086
      %1777 = vst.msk [vmem:[#allocation2 + $0x29] sm:$0xff] %vm1772, %v1091
      %1778 = vst.msk [vmem:[#allocation2 + $0x31] sm:$0xff] %vm1772, %v1094
      %1779 = vst.msk [vmem:[#allocation2 + $0x39] sm:$0xff] %vm1772, %v1099
      %1780 = vst.msk [vmem:[#allocation2 + $0x41] sm:$0xff] %vm1772, %v1102
      %1781 = vst.msk [vmem:[#allocation2 + $0x51] sm:$0xff] %vm1772, %v1107
      %1782 = vst.msk [vmem:[#allocation2 + $0x59] sm:$0xff] %vm1772, %v1110
      %1783 = vst.msk [vmem:[#allocation2 + $0x61] sm:$0xff] %vm1772, %v1115
      %1784 = vst.msk [vmem:[#allocation2 + $0x69] sm:$0xff] %vm1772, %v1118
      %1785 = vst.msk [vmem:[#allocation2 + $0x79] sm:$0xff] %vm1772, %v1123
      %1786 = vst.msk [vmem:[#allocation2 + $0x81] sm:$0xff] %vm1772, %v1126
      %1787 = vst.msk [vmem:[#allocation2 + $0x89] sm:$0xff] %vm1772, %v1131
      %1788 = vst.msk [vmem:[#allocation2 + $0x91] sm:$0xff] %vm1772, %v1134
      %1789 = vst.msk [vmem:[#allocation2 + $0xa1] sm:$0xff] %vm1772, %v1139
      %1790 = vst.msk [vmem:[#allocation2 + $0xa9] sm:$0xff] %vm1772, %v1142
      %1791 = vst.msk [vmem:[#allocation2 + $0xb1] sm:$0xff] %vm1772, %v1147
      %1792 = vst.msk [vmem:[#allocation2 + $0xb9] sm:$0xff] %vm1772, %v1150
      %1793 = vst.msk [vmem:[#allocation2 + $0xc9] sm:$0xff] %vm1772, %v1155
      %1794 = vst.msk [vmem:[#allocation2 + $0xd1] sm:$0xff] %vm1772, %v1158
      %1795 = vst.msk [vmem:[#allocation2 + $0xd9] sm:$0xff] %vm1772, %v1163
      %1796 = vst.msk [vmem:[#allocation2 + $0xe1] sm:$0xff] %vm1772, %v1166
      %1797 = vst.msk [vmem:[#allocation2 + $0xf1] sm:$0xff] %vm1772, %v1171
      %1798 = vst.msk [vmem:[#allocation2 + $0xf9] sm:$0xff] %vm1772, %v1174
      %1799 = vst.msk [vmem:[#allocation2 + $0x101] sm:$0xff] %vm1772, %v1179
      %1800 = vst.msk [vmem:[#allocation2 + $0x109] sm:$0xff] %vm1772, %v1182
      %1801 = vst.msk [vmem:[#allocation2 + $0x119] sm:$0xff] %vm1772, %v1187
      %1802 = vst.msk [vmem:[#allocation2 + $0x121] sm:$0xff] %vm1772, %v1190
      %1803 = vst.msk [vmem:[#allocation2 + $0x129] sm:$0xff] %vm1772, %v1195
      %1804 = vst.msk [vmem:[#allocation2 + $0x131] sm:$0xff] %vm1772, %v1198
      %1805 = vst.msk [vmem:[#allocation2 + $0x141] sm:$0xff] %vm1772, %v1203
      %1806 = vst.msk [vmem:[#allocation2 + $0x149] sm:$0xff] %vm1772, %v1206
      %1807 = vst.msk [vmem:[#allocation2 + $0x151] sm:$0xff] %vm1772, %v1211
      %1808 = vst.msk [vmem:[#allocation2 + $0x159] sm:$0xff] %vm1772, %v1214
      %1809 = vst.msk [vmem:[#allocation2 + $0x169] sm:$0xff] %vm1772, %v1219
      %1810 = vst.msk [vmem:[#allocation2 + $0x171] sm:$0xff] %vm1772, %v1222
      %1811 = vst.msk [vmem:[#allocation2 + $0x179] sm:$0xff] %vm1772, %v1227
      %1812 = vst.msk [vmem:[#allocation2 + $0x181] sm:$0xff] %vm1772, %v1230
      %1813 = vst.msk [vmem:[#allocation2 + $0x191] sm:$0xff] %vm1772, %v1235
      %1814 = vst.msk [vmem:[#allocation2 + $0x199] sm:$0xff] %vm1772, %v1238
      %1815 = vst.msk [vmem:[#allocation2 + $0x1a1] sm:$0xff] %vm1772, %v1243
      %1816 = vst.msk [vmem:[#allocation2 + $0x1a9] sm:$0xff] %vm1772, %v1246
      %1817 = vst.msk [vmem:[#allocation2 + $0x1b9] sm:$0xff] %vm1772, %v1251
      %1818 = vst.msk [vmem:[#allocation2 + $0x1c1] sm:$0xff] %vm1772, %v1254
      %1819 = vst.msk [vmem:[#allocation2 + $0x1c9] sm:$0xff] %vm1772, %v1259
      %1820 = vst.msk [vmem:[#allocation2 + $0x1d1] sm:$0xff] %vm1772, %v1262
      %1821 = vst.msk [vmem:[#allocation2 + $0x1e1] sm:$0xff] %vm1772, %v1267
      %1822 = vst.msk [vmem:[#allocation2 + $0x1e9] sm:$0xff] %vm1772, %v1270
      %1823 = vst.msk [vmem:[#allocation2 + $0x1f1] sm:$0xff] %vm1772, %v1275
      %1824 = vst.msk [vmem:[#allocation2 + $0x1f9] sm:$0xff] %vm1772, %v1278
      %1825 = vst.msk [vmem:[#allocation2 + $0x209] sm:$0xff] %vm1772, %v1283
      %1826 = vst.msk [vmem:[#allocation2 + $0x211] sm:$0xff] %vm1772, %v1286
      %1827 = vst.msk [vmem:[#allocation2 + $0x219] sm:$0xff] %vm1772, %v1291
      %1828 = vst.msk [vmem:[#allocation2 + $0x221] sm:$0xff] %vm1772, %v1294
      %1829 = vst.msk [vmem:[#allocation2 + $0x231] sm:$0xff] %vm1772, %v1299
      %1830 = vst.msk [vmem:[#allocation2 + $0x239] sm:$0xff] %vm1772, %v1302
      %1831 = vst.msk [vmem:[#allocation2 + $0x241] sm:$0xff] %vm1772, %v1307
      %1832 = vst.msk [vmem:[#allocation2 + $0x249] sm:$0xff] %vm1772, %v1310
      %1833 = vst.msk [vmem:[#allocation2 + $0x259] sm:$0xff] %vm1772, %v1315
      %1834 = vst.msk [vmem:[#allocation2 + $0x261] sm:$0xff] %vm1772, %v1318
      %1835 = vst.msk [vmem:[#allocation2 + $0x269] sm:$0xff] %vm1772, %v1323
      %1836 = vst.msk [vmem:[#allocation2 + $0x271] sm:$0xff] %vm1772, %v1326
      %1837 = vst.msk [vmem:[#allocation2 + $0x281] sm:$0xff] %vm1772, %v1331
      %1838 = vst.msk [vmem:[#allocation2 + $0x289] sm:$0xff] %vm1772, %v1334
      %1839 = vst.msk [vmem:[#allocation2 + $0x291] sm:$0xff] %vm1772, %v1339
      %1840 = vst.msk [vmem:[#allocation2 + $0x299] sm:$0xff] %vm1772, %v1342
      %1841 = vst.msk [vmem:[#allocation2 + $0x2a9] sm:$0xff] %vm1772, %v1347
      %1842 = vst.msk [vmem:[#allocation2 + $0x2b1] sm:$0xff] %vm1772, %v1350
      %1843 = vst.msk [vmem:[#allocation2 + $0x2b9] sm:$0xff] %vm1772, %v1355
      %1844 = vst.msk [vmem:[#allocation2 + $0x2c1] sm:$0xff] %vm1772, %v1358
      %1845 = vst.msk [vmem:[#allocation3 + $0x1] sm:$0xff] %vm1772, %v1413
      %1846 = vst.msk [vmem:[#allocation3 + $0x9] sm:$0xff] %vm1772, %v1416
      %1847 = vst.msk [vmem:[#allocation3 + $0x11] sm:$0xff] %vm1772, %v1421
      %1848 = vst.msk [vmem:[#allocation3 + $0x19] sm:$0xff] %vm1772, %v1424
      %1849 = vst.msk [vmem:[#allocation3 + $0x29] sm:$0xff] %vm1772, %v1429
      %1850 = vst.msk [vmem:[#allocation3 + $0x31] sm:$0xff] %vm1772, %v1432
      %1851 = vst.msk [vmem:[#allocation3 + $0x39] sm:$0xff] %vm1772, %v1437
      %1852 = vst.msk [vmem:[#allocation3 + $0x41] sm:$0xff] %vm1772, %v1440
      %1853 = vst.msk [vmem:[#allocation3 + $0x51] sm:$0xff] %vm1772, %v1445
      %1854 = vst.msk [vmem:[#allocation3 + $0x59] sm:$0xff] %vm1772, %v1448
      %1855 = vst.msk [vmem:[#allocation3 + $0x61] sm:$0xff] %vm1772, %v1453
      %1856 = vst.msk [vmem:[#allocation3 + $0x69] sm:$0xff] %vm1772, %v1456
      %1857 = vst.msk [vmem:[#allocation3 + $0x79] sm:$0xff] %vm1772, %v1461
      %1858 = vst.msk [vmem:[#allocation3 + $0x81] sm:$0xff] %vm1772, %v1464
      %1859 = vst.msk [vmem:[#allocation3 + $0x89] sm:$0xff] %vm1772, %v1469
      %1860 = vst.msk [vmem:[#allocation3 + $0x91] sm:$0xff] %vm1772, %v1472
      %1861 = vst.msk [vmem:[#allocation3 + $0xa1] sm:$0xff] %vm1772, %v1477
      %1862 = vst.msk [vmem:[#allocation3 + $0xa9] sm:$0xff] %vm1772, %v1480
      %1863 = vst.msk [vmem:[#allocation3 + $0xb1] sm:$0xff] %vm1772, %v1485
      %1864 = vst.msk [vmem:[#allocation3 + $0xb9] sm:$0xff] %vm1772, %v1488
      %1865 = vst.msk [vmem:[#allocation3 + $0xc9] sm:$0xff] %vm1772, %v1493
      %1866 = vst.msk [vmem:[#allocation3 + $0xd1] sm:$0xff] %vm1772, %v1496
      %1867 = vst.msk [vmem:[#allocation3 + $0xd9] sm:$0xff] %vm1772, %v1501
      %1868 = vst.msk [vmem:[#allocation3 + $0xe1] sm:$0xff] %vm1772, %v1504
      %1869 = vst.msk [vmem:[#allocation3 + $0xf1] sm:$0xff] %vm1772, %v1509
      %1870 = vst.msk [vmem:[#allocation3 + $0xf9] sm:$0xff] %vm1772, %v1512
      %1871 = vst.msk [vmem:[#allocation3 + $0x101] sm:$0xff] %vm1772, %v1517
      %1872 = vst.msk [vmem:[#allocation3 + $0x109] sm:$0xff] %vm1772, %v1520
      %1873 = vst.msk [vmem:[#allocation3 + $0x119] sm:$0xff] %vm1772, %v1525
      %1874 = vst.msk [vmem:[#allocation3 + $0x121] sm:$0xff] %vm1772, %v1528
      %1875 = vst.msk [vmem:[#allocation3 + $0x129] sm:$0xff] %vm1772, %v1533
      %1876 = vst.msk [vmem:[#allocation3 + $0x131] sm:$0xff] %vm1772, %v1536
      %1877 = vst.msk [vmem:[#allocation3 + $0x141] sm:$0xff] %vm1772, %v1541
      %1878 = vst.msk [vmem:[#allocation3 + $0x149] sm:$0xff] %vm1772, %v1544
      %1879 = vst.msk [vmem:[#allocation3 + $0x151] sm:$0xff] %vm1772, %v1549
      %1880 = vst.msk [vmem:[#allocation3 + $0x159] sm:$0xff] %vm1772, %v1552
      %1881 = vst.msk [vmem:[#allocation3 + $0x169] sm:$0xff] %vm1772, %v1557
      %1882 = vst.msk [vmem:[#allocation3 + $0x171] sm:$0xff] %vm1772, %v1560
      %1883 = vst.msk [vmem:[#allocation3 + $0x179] sm:$0xff] %vm1772, %v1565
      %1884 = vst.msk [vmem:[#allocation3 + $0x181] sm:$0xff] %vm1772, %v1568
      %1885 = vst.msk [vmem:[#allocation3 + $0x191] sm:$0xff] %vm1772, %v1573
      %1886 = vst.msk [vmem:[#allocation3 + $0x199] sm:$0xff] %vm1772, %v1576
      %1887 = vst.msk [vmem:[#allocation3 + $0x1a1] sm:$0xff] %vm1772, %v1581
      %1888 = vst.msk [vmem:[#allocation3 + $0x1a9] sm:$0xff] %vm1772, %v1584
      %1889 = vst.msk [vmem:[#allocation3 + $0x1b9] sm:$0xff] %vm1772, %v1589
      %1890 = vst.msk [vmem:[#allocation3 + $0x1c1] sm:$0xff] %vm1772, %v1592
      %1891 = vst.msk [vmem:[#allocation3 + $0x1c9] sm:$0xff] %vm1772, %v1597
      %1892 = vst.msk [vmem:[#allocation3 + $0x1d1] sm:$0xff] %vm1772, %v1600
      %1893 = vst.msk [vmem:[#allocation3 + $0x1e1] sm:$0xff] %vm1772, %v1605
      %1894 = vst.msk [vmem:[#allocation3 + $0x1e9] sm:$0xff] %vm1772, %v1608
      %1895 = vst.msk [vmem:[#allocation3 + $0x1f1] sm:$0xff] %vm1772, %v1613
      %1896 = vst.msk [vmem:[#allocation3 + $0x1f9] sm:$0xff] %vm1772, %v1616
      %1897 = vst.msk [vmem:[#allocation3 + $0x209] sm:$0xff] %vm1772, %v1621
      %1898 = vst.msk [vmem:[#allocation3 + $0x211] sm:$0xff] %vm1772, %v1624
      %1899 = vst.msk [vmem:[#allocation3 + $0x219] sm:$0xff] %vm1772, %v1629
      %1900 = vst.msk [vmem:[#allocation3 + $0x221] sm:$0xff] %vm1772, %v1632
      %1901 = vst.msk [vmem:[#allocation3 + $0x231] sm:$0xff] %vm1772, %v1637
      %1902 = vst.msk [vmem:[#allocation3 + $0x239] sm:$0xff] %vm1772, %v1640
      %1903 = vst.msk [vmem:[#allocation3 + $0x241] sm:$0xff] %vm1772, %v1645
      %1904 = vst.msk [vmem:[#allocation3 + $0x249] sm:$0xff] %vm1772, %v1648
      %1905 = vst.msk [vmem:[#allocation3 + $0x259] sm:$0xff] %vm1772, %v1653
      %1906 = vst.msk [vmem:[#allocation3 + $0x261] sm:$0xff] %vm1772, %v1656
      %1907 = vst.msk [vmem:[#allocation3 + $0x269] sm:$0xff] %vm1772, %v1661
      %1908 = vst.msk [vmem:[#allocation3 + $0x271] sm:$0xff] %vm1772, %v1664
      %1909 = vst.msk [vmem:[#allocation3 + $0x281] sm:$0xff] %vm1772, %v1669
      %1910 = vst.msk [vmem:[#allocation3 + $0x289] sm:$0xff] %vm1772, %v1672
      %1911 = vst.msk [vmem:[#allocation3 + $0x291] sm:$0xff] %vm1772, %v1677
      %1912 = vst.msk [vmem:[#allocation3 + $0x299] sm:$0xff] %vm1772, %v1680
      %1913 = vst.msk [vmem:[#allocation3 + $0x2a9] sm:$0xff] %vm1772, %v1685
      %1914 = vst.msk [vmem:[#allocation3 + $0x2b1] sm:$0xff] %vm1772, %v1688
      %1915 = vst.msk [vmem:[#allocation3 + $0x2b9] sm:$0xff] %vm1772, %v1693
      %1916 = vst.msk [vmem:[#allocation3 + $0x2c1] sm:$0xff] %vm1772, %v1696
      %p1917 = scmp.eq.s32.totalorder %s28, 0
      // Predicated region
      $region69: #{unet_stage_block.5} parent=67 // pred_check
        %p1918 = pneg %p1917
      $region70: #{unet_stage_block.5} parent=67 // pred_check_branch
        %1920 = sbr.rel (%p1918) target = $region72
      $region71: #{unet_stage_block.5} parent=67 // pred_region
        %1921 = vst.msk [vmem:[#allocation2] sm:$0xff] %vm1772, 0.0
        %1922 = vst.msk [vmem:[#allocation2 + $0x8] sm:$0xff] %vm1772, 0.0
        %1923 = vst.msk [vmem:[#allocation2 + $0x10] sm:$0xff] %vm1772, 0.0
        %1924 = vst.msk [vmem:[#allocation2 + $0x18] sm:$0xff] %vm1772, 0.0
        %vm1925 = vcmask 58368
        %1926 = vst.msk [vmem:[#allocation2 + $0x20] sm:$0x3] %vm1925, 0.0
        %1927 = vst.msk [vmem:[#allocation3] sm:$0xff] %vm1772, 0.0
        %1928 = vst.msk [vmem:[#allocation3 + $0x8] sm:$0xff] %vm1772, 0.0
        %1929 = vst.msk [vmem:[#allocation3 + $0x10] sm:$0xff] %vm1772, 0.0
        %1930 = vst.msk [vmem:[#allocation3 + $0x18] sm:$0xff] %vm1772, 0.0
        %1931 = vst.msk [vmem:[#allocation3 + $0x20] sm:$0x3] %vm1925, 0.0
      $region72: #{unet_stage_block.5} parent=67 // pred_fallthru
        _
      %p1932 = scmp.eq.s32.totalorder %s28, 1
      // Predicated region
      $region73: #{unet_stage_block.5} parent=67 // pred_check
        %p1933 = pneg %p1932
      $region74: #{unet_stage_block.5} parent=67 // pred_check_branch
        %1935 = sbr.rel (%p1933) target = $region76
      $region75: #{unet_stage_block.5} parent=67 // pred_region
        %s1936 = scalar_lea.vmem [#allocation2], 680
        %1937 = vst.msk [vmem:[%s1936] sm:$0xff] %vm1772, 0.0
        %1938 = vst.msk [vmem:[%s1936 + $0x8] sm:$0xff] %vm1772, 0.0
        %1939 = vst.msk [vmem:[%s1936 + $0x10] sm:$0xff] %vm1772, 0.0
        %1940 = vst.msk [vmem:[%s1936 + $0x18] sm:$0xff] %vm1772, 0.0
        %vm1941 = vcmask 58368
        %1942 = vst.msk [vmem:[%s1936 + $0x20] sm:$0x3] %vm1941, 0.0
        %s1943 = scalar_lea.vmem [#allocation3], 680
        %1944 = vst.msk [vmem:[%s1943] sm:$0xff] %vm1772, 0.0
        %1945 = vst.msk [vmem:[%s1943 + $0x8] sm:$0xff] %vm1772, 0.0
        %1946 = vst.msk [vmem:[%s1943 + $0x10] sm:$0xff] %vm1772, 0.0
        %1947 = vst.msk [vmem:[%s1943 + $0x18] sm:$0xff] %vm1772, 0.0
        %1948 = vst.msk [vmem:[%s1943 + $0x20] sm:$0x3] %vm1941, 0.0
      $region76: #{unet_stage_block.5} parent=67 // pred_fallthru
        _
      %v1949 = vld [vmem:[%s9] sm:$0xff]
      %v1950 = vld [vmem:[%s9 + $0x8] sm:$0x1]
      %s1951 = scalar_lea.vmem %s9, 16
      %v1952 = vld [vmem:[%s1951] sm:$0xff]
      %v1953 = vld [vmem:[%s1951 + $0x8] sm:$0x1]
      %v1954 = vld [vmem:[#allocation2] sm:$0xff]
      %v1955 = vld [vmem:[#allocation2 + $0x8] sm:$0xff]
      %v1956 = vld [vmem:[#allocation2 + $0x10] sm:$0xff]
      %v1957 = vld [vmem:[#allocation2 + $0x18] sm:$0xff]
      %v1958 = vld [vmem:[#allocation2 + $0x28] sm:$0xff]
      %v1959 = vld [vmem:[#allocation2 + $0x30] sm:$0xff]
      %v1960 = vld [vmem:[#allocation2 + $0x38] sm:$0xff]
      %v1961 = vld [vmem:[#allocation2 + $0x40] sm:$0xff]
      %v1962 = vld [vmem:[#allocation2 + $0x50] sm:$0xff]
      %v1963 = vld [vmem:[#allocation2 + $0x58] sm:$0xff]
      %v1964 = vld [vmem:[#allocation2 + $0x60] sm:$0xff]
      %v1965 = vld [vmem:[#allocation2 + $0x68] sm:$0xff]
      %v1966 = vld [vmem:[#allocation2 + $0x78] sm:$0xff]
      %v1967 = vld [vmem:[#allocation2 + $0x80] sm:$0xff]
      %v1968 = vld [vmem:[#allocation2 + $0x88] sm:$0xff]
      %v1969 = vld [vmem:[#allocation2 + $0x90] sm:$0xff]
      %v1970 = vld [vmem:[#allocation2 + $0xa0] sm:$0xff]
      %v1971 = vld [vmem:[#allocation2 + $0xa8] sm:$0xff]
      %v1972 = vld [vmem:[#allocation2 + $0xb0] sm:$0xff]
      %v1973 = vld [vmem:[#allocation2 + $0xb8] sm:$0xff]
      %v1974 = vld [vmem:[#allocation2 + $0xc8] sm:$0xff]
      %v1975 = vld [vmem:[#allocation2 + $0xd0] sm:$0xff]
      %v1976 = vld [vmem:[#allocation2 + $0xd8] sm:$0xff]
      %v1977 = vld [vmem:[#allocation2 + $0xe0] sm:$0xff]
      %v1978 = vld [vmem:[#allocation2 + $0xf0] sm:$0xff]
      %v1979 = vld [vmem:[#allocation2 + $0xf8] sm:$0xff]
      %v1980 = vld [vmem:[#allocation2 + $0x100] sm:$0xff]
      %v1981 = vld [vmem:[#allocation2 + $0x108] sm:$0xff]
      %v1982 = vld [vmem:[#allocation2 + $0x118] sm:$0xff]
      %v1983 = vld [vmem:[#allocation2 + $0x120] sm:$0xff]
      %v1984 = vld [vmem:[#allocation2 + $0x128] sm:$0xff]
      %v1985 = vld [vmem:[#allocation2 + $0x130] sm:$0xff]
      %v1986 = vld [vmem:[#allocation2 + $0x140] sm:$0xff]
      %v1987 = vld [vmem:[#allocation2 + $0x148] sm:$0xff]
      %v1988 = vld [vmem:[#allocation2 + $0x150] sm:$0xff]
      %v1989 = vld [vmem:[#allocation2 + $0x158] sm:$0xff]
      %v1990 = vld [vmem:[#allocation2 + $0x168] sm:$0xff]
      %v1991 = vld [vmem:[#allocation2 + $0x170] sm:$0xff]
      %v1992 = vld [vmem:[#allocation2 + $0x178] sm:$0xff]
      %v1993 = vld [vmem:[#allocation2 + $0x180] sm:$0xff]
      %v1994 = vld [vmem:[#allocation2 + $0x190] sm:$0xff]
      %v1995 = vld [vmem:[#allocation2 + $0x198] sm:$0xff]
      %v1996 = vld [vmem:[#allocation2 + $0x1a0] sm:$0xff]
      %v1997 = vld [vmem:[#allocation2 + $0x1a8] sm:$0xff]
      %v1998 = vld [vmem:[#allocation2 + $0x1b8] sm:$0xff]
      %v1999 = vld [vmem:[#allocation2 + $0x1c0] sm:$0xff]
      %v2000 = vld [vmem:[#allocation2 + $0x1c8] sm:$0xff]
      %v2001 = vld [vmem:[#allocation2 + $0x1d0] sm:$0xff]
      %v2002 = vld [vmem:[#allocation2 + $0x1e0] sm:$0xff]
      %v2003 = vld [vmem:[#allocation2 + $0x1e8] sm:$0xff]
      %v2004 = vld [vmem:[#allocation2 + $0x1f0] sm:$0xff]
      %v2005 = vld [vmem:[#allocation2 + $0x1f8] sm:$0xff]
      %v2006 = vld [vmem:[#allocation2 + $0x208] sm:$0xff]
      %v2007 = vld [vmem:[#allocation2 + $0x210] sm:$0xff]
      %v2008 = vld [vmem:[#allocation2 + $0x218] sm:$0xff]
      %v2009 = vld [vmem:[#allocation2 + $0x220] sm:$0xff]
      %v2010 = vld [vmem:[#allocation2 + $0x230] sm:$0xff]
      %v2011 = vld [vmem:[#allocation2 + $0x238] sm:$0xff]
      %v2012 = vld [vmem:[#allocation2 + $0x240] sm:$0xff]
      %v2013 = vld [vmem:[#allocation2 + $0x248] sm:$0xff]
      %v2014 = vld [vmem:[#allocation2 + $0x258] sm:$0xff]
      %v2015 = vld [vmem:[#allocation2 + $0x260] sm:$0xff]
      %v2016 = vld [vmem:[#allocation2 + $0x268] sm:$0xff]
      %v2017 = vld [vmem:[#allocation2 + $0x270] sm:$0xff]
      %v2018 = vlaneseq
      %v2019 = vshrl.u32 %v2018, 7
      %v2020 = vsub.s32 0, %v2019
      %v2021 = vrot.slane %v1949, %v2020
      %v2022 = vmul.f32 %v1954, %v2021
      %v2023 = vmul.f32 %v1955, %v2021
      %v2024 = vmul.f32 %v1956, %v2021
      %v2025 = vmul.f32 %v1957, %v2021
      %v2026 = vmul.f32 %v1958, %v2021
      %v2027 = vmul.f32 %v1959, %v2021
      %v2028 = vmul.f32 %v1960, %v2021
      %v2029 = vmul.f32 %v1961, %v2021
      %v2030 = vmul.f32 %v1962, %v2021
      %v2031 = vmul.f32 %v1963, %v2021
      %v2032 = vmul.f32 %v1964, %v2021
      %v2033 = vmul.f32 %v1965, %v2021
      %v2034 = vmul.f32 %v1966, %v2021
      %v2035 = vmul.f32 %v1967, %v2021
      %v2036 = vmul.f32 %v1968, %v2021
      %v2037 = vmul.f32 %v1969, %v2021
      %v2038 = vmul.f32 %v1970, %v2021
      %v2039 = vmul.f32 %v1971, %v2021
      %v2040 = vmul.f32 %v1972, %v2021
      %v2041 = vmul.f32 %v1973, %v2021
      %v2042 = vmul.f32 %v1974, %v2021
      %v2043 = vmul.f32 %v1975, %v2021
      %v2044 = vmul.f32 %v1976, %v2021
      %v2045 = vmul.f32 %v1977, %v2021
      %v2046 = vmul.f32 %v1978, %v2021
      %v2047 = vmul.f32 %v1979, %v2021
      %v2048 = vmul.f32 %v1980, %v2021
      %v2049 = vmul.f32 %v1981, %v2021
      %v2050 = vmul.f32 %v1982, %v2021
      %v2051 = vmul.f32 %v1983, %v2021
      %v2052 = vmul.f32 %v1984, %v2021
      %v2053 = vmul.f32 %v1985, %v2021
      %v2054 = vmul.f32 %v1986, %v2021
      %v2055 = vmul.f32 %v1987, %v2021
      %v2056 = vmul.f32 %v1988, %v2021
      %v2057 = vmul.f32 %v1989, %v2021
      %v2058 = vmul.f32 %v1990, %v2021
      %v2059 = vmul.f32 %v1991, %v2021
      %v2060 = vmul.f32 %v1992, %v2021
      %v2061 = vmul.f32 %v1993, %v2021
      %v2062 = vmul.f32 %v1994, %v2021
      %v2063 = vmul.f32 %v1995, %v2021
      %v2064 = vmul.f32 %v1996, %v2021
      %v2065 = vmul.f32 %v1997, %v2021
      %v2066 = vmul.f32 %v1998, %v2021
      %v2067 = vmul.f32 %v1999, %v2021
      %v2068 = vmul.f32 %v2000, %v2021
      %v2069 = vmul.f32 %v2001, %v2021
      %v2070 = vmul.f32 %v2002, %v2021
      %v2071 = vmul.f32 %v2003, %v2021
      %v2072 = vmul.f32 %v2004, %v2021
      %v2073 = vmul.f32 %v2005, %v2021
      %v2074 = vmul.f32 %v2006, %v2021
      %v2075 = vmul.f32 %v2007, %v2021
      %v2076 = vmul.f32 %v2008, %v2021
      %v2077 = vmul.f32 %v2009, %v2021
      %v2078 = vmul.f32 %v2010, %v2021
      %v2079 = vmul.f32 %v2011, %v2021
      %v2080 = vmul.f32 %v2012, %v2021
      %v2081 = vmul.f32 %v2013, %v2021
      %v2082 = vmul.f32 %v2014, %v2021
      %v2083 = vmul.f32 %v2015, %v2021
      %v2084 = vmul.f32 %v2016, %v2021
      %v2085 = vmul.f32 %v2017, %v2021
      %v2086 = vadd.f32 %v2022, 0.0
      %v2087 = vadd.f32 %v2023, 0.0
      %v2088 = vadd.f32 %v2024, 0.0
      %v2089 = vadd.f32 %v2025, 0.0
      %v2090 = vadd.f32 %v2026, 0.0
      %v2091 = vadd.f32 %v2027, 0.0
      %v2092 = vadd.f32 %v2028, 0.0
      %v2093 = vadd.f32 %v2029, 0.0
      %v2094 = vadd.f32 %v2030, 0.0
      %v2095 = vadd.f32 %v2031, 0.0
      %v2096 = vadd.f32 %v2032, 0.0
      %v2097 = vadd.f32 %v2033, 0.0
      %v2098 = vadd.f32 %v2034, 0.0
      %v2099 = vadd.f32 %v2035, 0.0
      %v2100 = vadd.f32 %v2036, 0.0
      %v2101 = vadd.f32 %v2037, 0.0
      %v2102 = vadd.f32 %v2038, 0.0
      %v2103 = vadd.f32 %v2039, 0.0
      %v2104 = vadd.f32 %v2040, 0.0
      %v2105 = vadd.f32 %v2041, 0.0
      %v2106 = vadd.f32 %v2042, 0.0
      %v2107 = vadd.f32 %v2043, 0.0
      %v2108 = vadd.f32 %v2044, 0.0
      %v2109 = vadd.f32 %v2045, 0.0
      %v2110 = vadd.f32 %v2046, 0.0
      %v2111 = vadd.f32 %v2047, 0.0
      %v2112 = vadd.f32 %v2048, 0.0
      %v2113 = vadd.f32 %v2049, 0.0
      %v2114 = vadd.f32 %v2050, 0.0
      %v2115 = vadd.f32 %v2051, 0.0
      %v2116 = vadd.f32 %v2052, 0.0
      %v2117 = vadd.f32 %v2053, 0.0
      %v2118 = vadd.f32 %v2054, 0.0
      %v2119 = vadd.f32 %v2055, 0.0
      %v2120 = vadd.f32 %v2056, 0.0
      %v2121 = vadd.f32 %v2057, 0.0
      %v2122 = vadd.f32 %v2058, 0.0
      %v2123 = vadd.f32 %v2059, 0.0
      %v2124 = vadd.f32 %v2060, 0.0
      %v2125 = vadd.f32 %v2061, 0.0
      %v2126 = vadd.f32 %v2062, 0.0
      %v2127 = vadd.f32 %v2063, 0.0
      %v2128 = vadd.f32 %v2064, 0.0
      %v2129 = vadd.f32 %v2065, 0.0
      %v2130 = vadd.f32 %v2066, 0.0
      %v2131 = vadd.f32 %v2067, 0.0
      %v2132 = vadd.f32 %v2068, 0.0
      %v2133 = vadd.f32 %v2069, 0.0
      %v2134 = vadd.f32 %v2070, 0.0
      %v2135 = vadd.f32 %v2071, 0.0
      %v2136 = vadd.f32 %v2072, 0.0
      %v2137 = vadd.f32 %v2073, 0.0
      %v2138 = vadd.f32 %v2074, 0.0
      %v2139 = vadd.f32 %v2075, 0.0
      %v2140 = vadd.f32 %v2076, 0.0
      %v2141 = vadd.f32 %v2077, 0.0
      %v2142 = vadd.f32 %v2078, 0.0
      %v2143 = vadd.f32 %v2079, 0.0
      %v2144 = vadd.f32 %v2080, 0.0
      %v2145 = vadd.f32 %v2081, 0.0
      %v2146 = vadd.f32 %v2082, 0.0
      %v2147 = vadd.f32 %v2083, 0.0
      %v2148 = vadd.f32 %v2084, 0.0
      %v2149 = vadd.f32 %v2085, 0.0
      %v2150 = vld [vmem:[#allocation3] sm:$0xff]
      %v2151 = vld [vmem:[#allocation3 + $0x8] sm:$0xff]
      %v2152 = vld [vmem:[#allocation3 + $0x10] sm:$0xff]
      %v2153 = vld [vmem:[#allocation3 + $0x18] sm:$0xff]
      %v2154 = vld [vmem:[#allocation3 + $0x28] sm:$0xff]
      %v2155 = vld [vmem:[#allocation3 + $0x30] sm:$0xff]
      %v2156 = vld [vmem:[#allocation3 + $0x38] sm:$0xff]
      %v2157 = vld [vmem:[#allocation3 + $0x40] sm:$0xff]
      %v2158 = vld [vmem:[#allocation3 + $0x50] sm:$0xff]
      %v2159 = vld [vmem:[#allocation3 + $0x58] sm:$0xff]
      %v2160 = vld [vmem:[#allocation3 + $0x60] sm:$0xff]
      %v2161 = vld [vmem:[#allocation3 + $0x68] sm:$0xff]
      %v2162 = vld [vmem:[#allocation3 + $0x78] sm:$0xff]
      %v2163 = vld [vmem:[#allocation3 + $0x80] sm:$0xff]
      %v2164 = vld [vmem:[#allocation3 + $0x88] sm:$0xff]
      %v2165 = vld [vmem:[#allocation3 + $0x90] sm:$0xff]
      %v2166 = vld [vmem:[#allocation3 + $0xa0] sm:$0xff]
      %v2167 = vld [vmem:[#allocation3 + $0xa8] sm:$0xff]
      %v2168 = vld [vmem:[#allocation3 + $0xb0] sm:$0xff]
      %v2169 = vld [vmem:[#allocation3 + $0xb8] sm:$0xff]
      %v2170 = vld [vmem:[#allocation3 + $0xc8] sm:$0xff]
      %v2171 = vld [vmem:[#allocation3 + $0xd0] sm:$0xff]
      %v2172 = vld [vmem:[#allocation3 + $0xd8] sm:$0xff]
      %v2173 = vld [vmem:[#allocation3 + $0xe0] sm:$0xff]
      %v2174 = vld [vmem:[#allocation3 + $0xf0] sm:$0xff]
      %v2175 = vld [vmem:[#allocation3 + $0xf8] sm:$0xff]
      %v2176 = vld [vmem:[#allocation3 + $0x100] sm:$0xff]
      %v2177 = vld [vmem:[#allocation3 + $0x108] sm:$0xff]
      %v2178 = vld [vmem:[#allocation3 + $0x118] sm:$0xff]
      %v2179 = vld [vmem:[#allocation3 + $0x120] sm:$0xff]
      %v2180 = vld [vmem:[#allocation3 + $0x128] sm:$0xff]
      %v2181 = vld [vmem:[#allocation3 + $0x130] sm:$0xff]
      %v2182 = vld [vmem:[#allocation3 + $0x140] sm:$0xff]
      %v2183 = vld [vmem:[#allocation3 + $0x148] sm:$0xff]
      %v2184 = vld [vmem:[#allocation3 + $0x150] sm:$0xff]
      %v2185 = vld [vmem:[#allocation3 + $0x158] sm:$0xff]
      %v2186 = vld [vmem:[#allocation3 + $0x168] sm:$0xff]
      %v2187 = vld [vmem:[#allocation3 + $0x170] sm:$0xff]
      %v2188 = vld [vmem:[#allocation3 + $0x178] sm:$0xff]
      %v2189 = vld [vmem:[#allocation3 + $0x180] sm:$0xff]
      %v2190 = vld [vmem:[#allocation3 + $0x190] sm:$0xff]
      %v2191 = vld [vmem:[#allocation3 + $0x198] sm:$0xff]
      %v2192 = vld [vmem:[#allocation3 + $0x1a0] sm:$0xff]
      %v2193 = vld [vmem:[#allocation3 + $0x1a8] sm:$0xff]
      %v2194 = vld [vmem:[#allocation3 + $0x1b8] sm:$0xff]
      %v2195 = vld [vmem:[#allocation3 + $0x1c0] sm:$0xff]
      %v2196 = vld [vmem:[#allocation3 + $0x1c8] sm:$0xff]
      %v2197 = vld [vmem:[#allocation3 + $0x1d0] sm:$0xff]
      %v2198 = vld [vmem:[#allocation3 + $0x1e0] sm:$0xff]
      %v2199 = vld [vmem:[#allocation3 + $0x1e8] sm:$0xff]
      %v2200 = vld [vmem:[#allocation3 + $0x1f0] sm:$0xff]
      %v2201 = vld [vmem:[#allocation3 + $0x1f8] sm:$0xff]
      %v2202 = vld [vmem:[#allocation3 + $0x208] sm:$0xff]
      %v2203 = vld [vmem:[#allocation3 + $0x210] sm:$0xff]
      %v2204 = vld [vmem:[#allocation3 + $0x218] sm:$0xff]
      %v2205 = vld [vmem:[#allocation3 + $0x220] sm:$0xff]
      %v2206 = vld [vmem:[#allocation3 + $0x230] sm:$0xff]
      %v2207 = vld [vmem:[#allocation3 + $0x238] sm:$0xff]
      %v2208 = vld [vmem:[#allocation3 + $0x240] sm:$0xff]
      %v2209 = vld [vmem:[#allocation3 + $0x248] sm:$0xff]
      %v2210 = vld [vmem:[#allocation3 + $0x258] sm:$0xff]
      %v2211 = vld [vmem:[#allocation3 + $0x260] sm:$0xff]
      %v2212 = vld [vmem:[#allocation3 + $0x268] sm:$0xff]
      %v2213 = vld [vmem:[#allocation3 + $0x270] sm:$0xff]
      %v2214 = vlaneseq
      %v2215 = vshrl.u32 %v2214, 7
      %v2216 = vsub.s32 0, %v2215
      %v2217 = vrot.slane %v1952, %v2216
      %v2218 = vmul.f32 %v2150, %v2217
      %v2219 = vmul.f32 %v2151, %v2217
      %v2220 = vmul.f32 %v2152, %v2217
      %v2221 = vmul.f32 %v2153, %v2217
      %v2222 = vmul.f32 %v2154, %v2217
      %v2223 = vmul.f32 %v2155, %v2217
      %v2224 = vmul.f32 %v2156, %v2217
      %v2225 = vmul.f32 %v2157, %v2217
      %v2226 = vmul.f32 %v2158, %v2217
      %v2227 = vmul.f32 %v2159, %v2217
      %v2228 = vmul.f32 %v2160, %v2217
      %v2229 = vmul.f32 %v2161, %v2217
      %v2230 = vmul.f32 %v2162, %v2217
      %v2231 = vmul.f32 %v2163, %v2217
      %v2232 = vmul.f32 %v2164, %v2217
      %v2233 = vmul.f32 %v2165, %v2217
      %v2234 = vmul.f32 %v2166, %v2217
      %v2235 = vmul.f32 %v2167, %v2217
      %v2236 = vmul.f32 %v2168, %v2217
      %v2237 = vmul.f32 %v2169, %v2217
      %v2238 = vmul.f32 %v2170, %v2217
      %v2239 = vmul.f32 %v2171, %v2217
      %v2240 = vmul.f32 %v2172, %v2217
      %v2241 = vmul.f32 %v2173, %v2217
      %v2242 = vmul.f32 %v2174, %v2217
      %v2243 = vmul.f32 %v2175, %v2217
      %v2244 = vmul.f32 %v2176, %v2217
      %v2245 = vmul.f32 %v2177, %v2217
      %v2246 = vmul.f32 %v2178, %v2217
      %v2247 = vmul.f32 %v2179, %v2217
      %v2248 = vmul.f32 %v2180, %v2217
      %v2249 = vmul.f32 %v2181, %v2217
      %v2250 = vmul.f32 %v2182, %v2217
      %v2251 = vmul.f32 %v2183, %v2217
      %v2252 = vmul.f32 %v2184, %v2217
      %v2253 = vmul.f32 %v2185, %v2217
      %v2254 = vmul.f32 %v2186, %v2217
      %v2255 = vmul.f32 %v2187, %v2217
      %v2256 = vmul.f32 %v2188, %v2217
      %v2257 = vmul.f32 %v2189, %v2217
      %v2258 = vmul.f32 %v2190, %v2217
      %v2259 = vmul.f32 %v2191, %v2217
      %v2260 = vmul.f32 %v2192, %v2217
      %v2261 = vmul.f32 %v2193, %v2217
      %v2262 = vmul.f32 %v2194, %v2217
      %v2263 = vmul.f32 %v2195, %v2217
      %v2264 = vmul.f32 %v2196, %v2217
      %v2265 = vmul.f32 %v2197, %v2217
      %v2266 = vmul.f32 %v2198, %v2217
      %v2267 = vmul.f32 %v2199, %v2217
      %v2268 = vmul.f32 %v2200, %v2217
      %v2269 = vmul.f32 %v2201, %v2217
      %v2270 = vmul.f32 %v2202, %v2217
      %v2271 = vmul.f32 %v2203, %v2217
      %v2272 = vmul.f32 %v2204, %v2217
      %v2273 = vmul.f32 %v2205, %v2217
      %v2274 = vmul.f32 %v2206, %v2217
      %v2275 = vmul.f32 %v2207, %v2217
      %v2276 = vmul.f32 %v2208, %v2217
      %v2277 = vmul.f32 %v2209, %v2217
      %v2278 = vmul.f32 %v2210, %v2217
      %v2279 = vmul.f32 %v2211, %v2217
      %v2280 = vmul.f32 %v2212, %v2217
      %v2281 = vmul.f32 %v2213, %v2217
      %v2282 = vadd.f32 %v2086, %v2218
      %v2283 = vadd.f32 %v2087, %v2219
      %v2284 = vadd.f32 %v2088, %v2220
      %v2285 = vadd.f32 %v2089, %v2221
      %v2286 = vadd.f32 %v2090, %v2222
      %v2287 = vadd.f32 %v2091, %v2223
      %v2288 = vadd.f32 %v2092, %v2224
      %v2289 = vadd.f32 %v2093, %v2225
      %v2290 = vadd.f32 %v2094, %v2226
      %v2291 = vadd.f32 %v2095, %v2227
      %v2292 = vadd.f32 %v2096, %v2228
      %v2293 = vadd.f32 %v2097, %v2229
      %v2294 = vadd.f32 %v2098, %v2230
      %v2295 = vadd.f32 %v2099, %v2231
      %v2296 = vadd.f32 %v2100, %v2232
      %v2297 = vadd.f32 %v2101, %v2233
      %v2298 = vadd.f32 %v2102, %v2234
      %v2299 = vadd.f32 %v2103, %v2235
      %v2300 = vadd.f32 %v2104, %v2236
      %v2301 = vadd.f32 %v2105, %v2237
      %v2302 = vadd.f32 %v2106, %v2238
      %v2303 = vadd.f32 %v2107, %v2239
      %v2304 = vadd.f32 %v2108, %v2240
      %v2305 = vadd.f32 %v2109, %v2241
      %v2306 = vadd.f32 %v2110, %v2242
      %v2307 = vadd.f32 %v2111, %v2243
      %v2308 = vadd.f32 %v2112, %v2244
      %v2309 = vadd.f32 %v2113, %v2245
      %v2310 = vadd.f32 %v2114, %v2246
      %v2311 = vadd.f32 %v2115, %v2247
      %v2312 = vadd.f32 %v2116, %v2248
      %v2313 = vadd.f32 %v2117, %v2249
      %v2314 = vadd.f32 %v2118, %v2250
      %v2315 = vadd.f32 %v2119, %v2251
      %v2316 = vadd.f32 %v2120, %v2252
      %v2317 = vadd.f32 %v2121, %v2253
      %v2318 = vadd.f32 %v2122, %v2254
      %v2319 = vadd.f32 %v2123, %v2255
      %v2320 = vadd.f32 %v2124, %v2256
      %v2321 = vadd.f32 %v2125, %v2257
      %v2322 = vadd.f32 %v2126, %v2258
      %v2323 = vadd.f32 %v2127, %v2259
      %v2324 = vadd.f32 %v2128, %v2260
      %v2325 = vadd.f32 %v2129, %v2261
      %v2326 = vadd.f32 %v2130, %v2262
      %v2327 = vadd.f32 %v2131, %v2263
      %v2328 = vadd.f32 %v2132, %v2264
      %v2329 = vadd.f32 %v2133, %v2265
      %v2330 = vadd.f32 %v2134, %v2266
      %v2331 = vadd.f32 %v2135, %v2267
      %v2332 = vadd.f32 %v2136, %v2268
      %v2333 = vadd.f32 %v2137, %v2269
      %v2334 = vadd.f32 %v2138, %v2270
      %v2335 = vadd.f32 %v2139, %v2271
      %v2336 = vadd.f32 %v2140, %v2272
      %v2337 = vadd.f32 %v2141, %v2273
      %v2338 = vadd.f32 %v2142, %v2274
      %v2339 = vadd.f32 %v2143, %v2275
      %v2340 = vadd.f32 %v2144, %v2276
      %v2341 = vadd.f32 %v2145, %v2277
      %v2342 = vadd.f32 %v2146, %v2278
      %v2343 = vadd.f32 %v2147, %v2279
      %v2344 = vadd.f32 %v2148, %v2280
      %v2345 = vadd.f32 %v2149, %v2281
      %v2346 = vld [vmem:[#allocation2 + $0x1] sm:$0xff]
      %v2347 = vld [vmem:[#allocation2 + $0x9] sm:$0xff]
      %v2348 = vld [vmem:[#allocation2 + $0x11] sm:$0xff]
      %v2349 = vld [vmem:[#allocation2 + $0x19] sm:$0xff]
      %v2350 = vld [vmem:[#allocation2 + $0x29] sm:$0xff]
      %v2351 = vld [vmem:[#allocation2 + $0x31] sm:$0xff]
      %v2352 = vld [vmem:[#allocation2 + $0x39] sm:$0xff]
      %v2353 = vld [vmem:[#allocation2 + $0x41] sm:$0xff]
      %v2354 = vld [vmem:[#allocation2 + $0x51] sm:$0xff]
      %v2355 = vld [vmem:[#allocation2 + $0x59] sm:$0xff]
      %v2356 = vld [vmem:[#allocation2 + $0x61] sm:$0xff]
      %v2357 = vld [vmem:[#allocation2 + $0x69] sm:$0xff]
      %v2358 = vld [vmem:[#allocation2 + $0x79] sm:$0xff]
      %v2359 = vld [vmem:[#allocation2 + $0x81] sm:$0xff]
      %v2360 = vld [vmem:[#allocation2 + $0x89] sm:$0xff]
      %v2361 = vld [vmem:[#allocation2 + $0x91] sm:$0xff]
      %v2362 = vld [vmem:[#allocation2 + $0xa1] sm:$0xff]
      %v2363 = vld [vmem:[#allocation2 + $0xa9] sm:$0xff]
      %v2364 = vld [vmem:[#allocation2 + $0xb1] sm:$0xff]
      %v2365 = vld [vmem:[#allocation2 + $0xb9] sm:$0xff]
      %v2366 = vld [vmem:[#allocation2 + $0xc9] sm:$0xff]
      %v2367 = vld [vmem:[#allocation2 + $0xd1] sm:$0xff]
      %v2368 = vld [vmem:[#allocation2 + $0xd9] sm:$0xff]
      %v2369 = vld [vmem:[#allocation2 + $0xe1] sm:$0xff]
      %v2370 = vld [vmem:[#allocation2 + $0xf1] sm:$0xff]
      %v2371 = vld [vmem:[#allocation2 + $0xf9] sm:$0xff]
      %v2372 = vld [vmem:[#allocation2 + $0x101] sm:$0xff]
      %v2373 = vld [vmem:[#allocation2 + $0x109] sm:$0xff]
      %v2374 = vld [vmem:[#allocation2 + $0x119] sm:$0xff]
      %v2375 = vld [vmem:[#allocation2 + $0x121] sm:$0xff]
      %v2376 = vld [vmem:[#allocation2 + $0x129] sm:$0xff]
      %v2377 = vld [vmem:[#allocation2 + $0x131] sm:$0xff]
      %v2378 = vld [vmem:[#allocation2 + $0x141] sm:$0xff]
      %v2379 = vld [vmem:[#allocation2 + $0x149] sm:$0xff]
      %v2380 = vld [vmem:[#allocation2 + $0x151] sm:$0xff]
      %v2381 = vld [vmem:[#allocation2 + $0x159] sm:$0xff]
      %v2382 = vld [vmem:[#allocation2 + $0x169] sm:$0xff]
      %v2383 = vld [vmem:[#allocation2 + $0x171] sm:$0xff]
      %v2384 = vld [vmem:[#allocation2 + $0x179] sm:$0xff]
      %v2385 = vld [vmem:[#allocation2 + $0x181] sm:$0xff]
      %v2386 = vld [vmem:[#allocation2 + $0x191] sm:$0xff]
      %v2387 = vld [vmem:[#allocation2 + $0x199] sm:$0xff]
      %v2388 = vld [vmem:[#allocation2 + $0x1a1] sm:$0xff]
      %v2389 = vld [vmem:[#allocation2 + $0x1a9] sm:$0xff]
      %v2390 = vld [vmem:[#allocation2 + $0x1b9] sm:$0xff]
      %v2391 = vld [vmem:[#allocation2 + $0x1c1] sm:$0xff]
      %v2392 = vld [vmem:[#allocation2 + $0x1c9] sm:$0xff]
      %v2393 = vld [vmem:[#allocation2 + $0x1d1] sm:$0xff]
      %v2394 = vld [vmem:[#allocation2 + $0x1e1] sm:$0xff]
      %v2395 = vld [vmem:[#allocation2 + $0x1e9] sm:$0xff]
      %v2396 = vld [vmem:[#allocation2 + $0x1f1] sm:$0xff]
      %v2397 = vld [vmem:[#allocation2 + $0x1f9] sm:$0xff]
      %v2398 = vld [vmem:[#allocation2 + $0x209] sm:$0xff]
      %v2399 = vld [vmem:[#allocation2 + $0x211] sm:$0xff]
      %v2400 = vld [vmem:[#allocation2 + $0x219] sm:$0xff]
      %v2401 = vld [vmem:[#allocation2 + $0x221] sm:$0xff]
      %v2402 = vld [vmem:[#allocation2 + $0x231] sm:$0xff]
      %v2403 = vld [vmem:[#allocation2 + $0x239] sm:$0xff]
      %v2404 = vld [vmem:[#allocation2 + $0x241] sm:$0xff]
      %v2405 = vld [vmem:[#allocation2 + $0x249] sm:$0xff]
      %v2406 = vld [vmem:[#allocation2 + $0x259] sm:$0xff]
      %v2407 = vld [vmem:[#allocation2 + $0x261] sm:$0xff]
      %v2408 = vld [vmem:[#allocation2 + $0x269] sm:$0xff]
      %v2409 = vld [vmem:[#allocation2 + $0x271] sm:$0xff]
      %v2410 = vlaneseq
      %v2411 = vshrl.u32 %v2410, 7
      %v2412 = vsub.s32 1, %v2411
      %v2413 = vrot.slane %v1949, %v2412
      %v2414 = vmul.f32 %v2346, %v2413
      %v2415 = vmul.f32 %v2347, %v2413
      %v2416 = vmul.f32 %v2348, %v2413
      %v2417 = vmul.f32 %v2349, %v2413
      %v2418 = vmul.f32 %v2350, %v2413
      %v2419 = vmul.f32 %v2351, %v2413
      %v2420 = vmul.f32 %v2352, %v2413
      %v2421 = vmul.f32 %v2353, %v2413
      %v2422 = vmul.f32 %v2354, %v2413
      %v2423 = vmul.f32 %v2355, %v2413
      %v2424 = vmul.f32 %v2356, %v2413
      %v2425 = vmul.f32 %v2357, %v2413
      %v2426 = vmul.f32 %v2358, %v2413
      %v2427 = vmul.f32 %v2359, %v2413
      %v2428 = vmul.f32 %v2360, %v2413
      %v2429 = vmul.f32 %v2361, %v2413
      %v2430 = vmul.f32 %v2362, %v2413
      %v2431 = vmul.f32 %v2363, %v2413
      %v2432 = vmul.f32 %v2364, %v2413
      %v2433 = vmul.f32 %v2365, %v2413
      %v2434 = vmul.f32 %v2366, %v2413
      %v2435 = vmul.f32 %v2367, %v2413
      %v2436 = vmul.f32 %v2368, %v2413
      %v2437 = vmul.f32 %v2369, %v2413
      %v2438 = vmul.f32 %v2370, %v2413
      %v2439 = vmul.f32 %v2371, %v2413
      %v2440 = vmul.f32 %v2372, %v2413
      %v2441 = vmul.f32 %v2373, %v2413
      %v2442 = vmul.f32 %v2374, %v2413
      %v2443 = vmul.f32 %v2375, %v2413
      %v2444 = vmul.f32 %v2376, %v2413
      %v2445 = vmul.f32 %v2377, %v2413
      %v2446 = vmul.f32 %v2378, %v2413
      %v2447 = vmul.f32 %v2379, %v2413
      %v2448 = vmul.f32 %v2380, %v2413
      %v2449 = vmul.f32 %v2381, %v2413
      %v2450 = vmul.f32 %v2382, %v2413
      %v2451 = vmul.f32 %v2383, %v2413
      %v2452 = vmul.f32 %v2384, %v2413
      %v2453 = vmul.f32 %v2385, %v2413
      %v2454 = vmul.f32 %v2386, %v2413
      %v2455 = vmul.f32 %v2387, %v2413
      %v2456 = vmul.f32 %v2388, %v2413
      %v2457 = vmul.f32 %v2389, %v2413
      %v2458 = vmul.f32 %v2390, %v2413
      %v2459 = vmul.f32 %v2391, %v2413
      %v2460 = vmul.f32 %v2392, %v2413
      %v2461 = vmul.f32 %v2393, %v2413
      %v2462 = vmul.f32 %v2394, %v2413
      %v2463 = vmul.f32 %v2395, %v2413
      %v2464 = vmul.f32 %v2396, %v2413
      %v2465 = vmul.f32 %v2397, %v2413
      %v2466 = vmul.f32 %v2398, %v2413
      %v2467 = vmul.f32 %v2399, %v2413
      %v2468 = vmul.f32 %v2400, %v2413
      %v2469 = vmul.f32 %v2401, %v2413
      %v2470 = vmul.f32 %v2402, %v2413
      %v2471 = vmul.f32 %v2403, %v2413
      %v2472 = vmul.f32 %v2404, %v2413
      %v2473 = vmul.f32 %v2405, %v2413
      %v2474 = vmul.f32 %v2406, %v2413
      %v2475 = vmul.f32 %v2407, %v2413
      %v2476 = vmul.f32 %v2408, %v2413
      %v2477 = vmul.f32 %v2409, %v2413
      %v2478 = vadd.f32 %v2282, %v2414
      %v2479 = vadd.f32 %v2283, %v2415
      %v2480 = vadd.f32 %v2284, %v2416
      %v2481 = vadd.f32 %v2285, %v2417
      %v2482 = vadd.f32 %v2286, %v2418
      %v2483 = vadd.f32 %v2287, %v2419
      %v2484 = vadd.f32 %v2288, %v2420
      %v2485 = vadd.f32 %v2289, %v2421
      %v2486 = vadd.f32 %v2290, %v2422
      %v2487 = vadd.f32 %v2291, %v2423
      %v2488 = vadd.f32 %v2292, %v2424
      %v2489 = vadd.f32 %v2293, %v2425
      %v2490 = vadd.f32 %v2294, %v2426
      %v2491 = vadd.f32 %v2295, %v2427
      %v2492 = vadd.f32 %v2296, %v2428
      %v2493 = vadd.f32 %v2297, %v2429
      %v2494 = vadd.f32 %v2298, %v2430
      %v2495 = vadd.f32 %v2299, %v2431
      %v2496 = vadd.f32 %v2300, %v2432
      %v2497 = vadd.f32 %v2301, %v2433
      %v2498 = vadd.f32 %v2302, %v2434
      %v2499 = vadd.f32 %v2303, %v2435
      %v2500 = vadd.f32 %v2304, %v2436
      %v2501 = vadd.f32 %v2305, %v2437
      %v2502 = vadd.f32 %v2306, %v2438
      %v2503 = vadd.f32 %v2307, %v2439
      %v2504 = vadd.f32 %v2308, %v2440
      %v2505 = vadd.f32 %v2309, %v2441
      %v2506 = vadd.f32 %v2310, %v2442
      %v2507 = vadd.f32 %v2311, %v2443
      %v2508 = vadd.f32 %v2312, %v2444
      %v2509 = vadd.f32 %v2313, %v2445
      %v2510 = vadd.f32 %v2314, %v2446
      %v2511 = vadd.f32 %v2315, %v2447
      %v2512 = vadd.f32 %v2316, %v2448
      %v2513 = vadd.f32 %v2317, %v2449
      %v2514 = vadd.f32 %v2318, %v2450
      %v2515 = vadd.f32 %v2319, %v2451
      %v2516 = vadd.f32 %v2320, %v2452
      %v2517 = vadd.f32 %v2321, %v2453
      %v2518 = vadd.f32 %v2322, %v2454
      %v2519 = vadd.f32 %v2323, %v2455
      %v2520 = vadd.f32 %v2324, %v2456
      %v2521 = vadd.f32 %v2325, %v2457
      %v2522 = vadd.f32 %v2326, %v2458
      %v2523 = vadd.f32 %v2327, %v2459
      %v2524 = vadd.f32 %v2328, %v2460
      %v2525 = vadd.f32 %v2329, %v2461
      %v2526 = vadd.f32 %v2330, %v2462
      %v2527 = vadd.f32 %v2331, %v2463
      %v2528 = vadd.f32 %v2332, %v2464
      %v2529 = vadd.f32 %v2333, %v2465
      %v2530 = vadd.f32 %v2334, %v2466
      %v2531 = vadd.f32 %v2335, %v2467
      %v2532 = vadd.f32 %v2336, %v2468
      %v2533 = vadd.f32 %v2337, %v2469
      %v2534 = vadd.f32 %v2338, %v2470
      %v2535 = vadd.f32 %v2339, %v2471
      %v2536 = vadd.f32 %v2340, %v2472
      %v2537 = vadd.f32 %v2341, %v2473
      %v2538 = vadd.f32 %v2342, %v2474
      %v2539 = vadd.f32 %v2343, %v2475
      %v2540 = vadd.f32 %v2344, %v2476
      %v2541 = vadd.f32 %v2345, %v2477
      %v2542 = vld [vmem:[#allocation3 + $0x1] sm:$0xff]
      %v2543 = vld [vmem:[#allocation3 + $0x9] sm:$0xff]
      %v2544 = vld [vmem:[#allocation3 + $0x11] sm:$0xff]
      %v2545 = vld [vmem:[#allocation3 + $0x19] sm:$0xff]
      %v2546 = vld [vmem:[#allocation3 + $0x29] sm:$0xff]
      %v2547 = vld [vmem:[#allocation3 + $0x31] sm:$0xff]
      %v2548 = vld [vmem:[#allocation3 + $0x39] sm:$0xff]
      %v2549 = vld [vmem:[#allocation3 + $0x41] sm:$0xff]
      %v2550 = vld [vmem:[#allocation3 + $0x51] sm:$0xff]
      %v2551 = vld [vmem:[#allocation3 + $0x59] sm:$0xff]
      %v2552 = vld [vmem:[#allocation3 + $0x61] sm:$0xff]
      %v2553 = vld [vmem:[#allocation3 + $0x69] sm:$0xff]
      %v2554 = vld [vmem:[#allocation3 + $0x79] sm:$0xff]
      %v2555 = vld [vmem:[#allocation3 + $0x81] sm:$0xff]
      %v2556 = vld [vmem:[#allocation3 + $0x89] sm:$0xff]
      %v2557 = vld [vmem:[#allocation3 + $0x91] sm:$0xff]
      %v2558 = vld [vmem:[#allocation3 + $0xa1] sm:$0xff]
      %v2559 = vld [vmem:[#allocation3 + $0xa9] sm:$0xff]
      %v2560 = vld [vmem:[#allocation3 + $0xb1] sm:$0xff]
      %v2561 = vld [vmem:[#allocation3 + $0xb9] sm:$0xff]
      %v2562 = vld [vmem:[#allocation3 + $0xc9] sm:$0xff]
      %v2563 = vld [vmem:[#allocation3 + $0xd1] sm:$0xff]
      %v2564 = vld [vmem:[#allocation3 + $0xd9] sm:$0xff]
      %v2565 = vld [vmem:[#allocation3 + $0xe1] sm:$0xff]
      %v2566 = vld [vmem:[#allocation3 + $0xf1] sm:$0xff]
      %v2567 = vld [vmem:[#allocation3 + $0xf9] sm:$0xff]
      %v2568 = vld [vmem:[#allocation3 + $0x101] sm:$0xff]
      %v2569 = vld [vmem:[#allocation3 + $0x109] sm:$0xff]
      %v2570 = vld [vmem:[#allocation3 + $0x119] sm:$0xff]
      %v2571 = vld [vmem:[#allocation3 + $0x121] sm:$0xff]
      %v2572 = vld [vmem:[#allocation3 + $0x129] sm:$0xff]
      %v2573 = vld [vmem:[#allocation3 + $0x131] sm:$0xff]
      %v2574 = vld [vmem:[#allocation3 + $0x141] sm:$0xff]
      %v2575 = vld [vmem:[#allocation3 + $0x149] sm:$0xff]
      %v2576 = vld [vmem:[#allocation3 + $0x151] sm:$0xff]
      %v2577 = vld [vmem:[#allocation3 + $0x159] sm:$0xff]
      %v2578 = vld [vmem:[#allocation3 + $0x169] sm:$0xff]
      %v2579 = vld [vmem:[#allocation3 + $0x171] sm:$0xff]
      %v2580 = vld [vmem:[#allocation3 + $0x179] sm:$0xff]
      %v2581 = vld [vmem:[#allocation3 + $0x181] sm:$0xff]
      %v2582 = vld [vmem:[#allocation3 + $0x191] sm:$0xff]
      %v2583 = vld [vmem:[#allocation3 + $0x199] sm:$0xff]
      %v2584 = vld [vmem:[#allocation3 + $0x1a1] sm:$0xff]
      %v2585 = vld [vmem:[#allocation3 + $0x1a9] sm:$0xff]
      %v2586 = vld [vmem:[#allocation3 + $0x1b9] sm:$0xff]
      %v2587 = vld [vmem:[#allocation3 + $0x1c1] sm:$0xff]
      %v2588 = vld [vmem:[#allocation3 + $0x1c9] sm:$0xff]
      %v2589 = vld [vmem:[#allocation3 + $0x1d1] sm:$0xff]
      %v2590 = vld [vmem:[#allocation3 + $0x1e1] sm:$0xff]
      %v2591 = vld [vmem:[#allocation3 + $0x1e9] sm:$0xff]
      %v2592 = vld [vmem:[#allocation3 + $0x1f1] sm:$0xff]
      %v2593 = vld [vmem:[#allocation3 + $0x1f9] sm:$0xff]
      %v2594 = vld [vmem:[#allocation3 + $0x209] sm:$0xff]
      %v2595 = vld [vmem:[#allocation3 + $0x211] sm:$0xff]
      %v2596 = vld [vmem:[#allocation3 + $0x219] sm:$0xff]
      %v2597 = vld [vmem:[#allocation3 + $0x221] sm:$0xff]
      %v2598 = vld [vmem:[#allocation3 + $0x231] sm:$0xff]
      %v2599 = vld [vmem:[#allocation3 + $0x239] sm:$0xff]
      %v2600 = vld [vmem:[#allocation3 + $0x241] sm:$0xff]
      %v2601 = vld [vmem:[#allocation3 + $0x249] sm:$0xff]
      %v2602 = vld [vmem:[#allocation3 + $0x259] sm:$0xff]
      %v2603 = vld [vmem:[#allocation3 + $0x261] sm:$0xff]
      %v2604 = vld [vmem:[#allocation3 + $0x269] sm:$0xff]
      %v2605 = vld [vmem:[#allocation3 + $0x271] sm:$0xff]
      %v2606 = vlaneseq
      %v2607 = vshrl.u32 %v2606, 7
      %v2608 = vsub.s32 1, %v2607
      %v2609 = vrot.slane %v1952, %v2608
      %v2610 = vmul.f32 %v2542, %v2609
      %v2611 = vmul.f32 %v2543, %v2609
      %v2612 = vmul.f32 %v2544, %v2609
      %v2613 = vmul.f32 %v2545, %v2609
      %v2614 = vmul.f32 %v2546, %v2609
      %v2615 = vmul.f32 %v2547, %v2609
      %v2616 = vmul.f32 %v2548, %v2609
      %v2617 = vmul.f32 %v2549, %v2609
      %v2618 = vmul.f32 %v2550, %v2609
      %v2619 = vmul.f32 %v2551, %v2609
      %v2620 = vmul.f32 %v2552, %v2609
      %v2621 = vmul.f32 %v2553, %v2609
      %v2622 = vmul.f32 %v2554, %v2609
      %v2623 = vmul.f32 %v2555, %v2609
      %v2624 = vmul.f32 %v2556, %v2609
      %v2625 = vmul.f32 %v2557, %v2609
      %v2626 = vmul.f32 %v2558, %v2609
      %v2627 = vmul.f32 %v2559, %v2609
      %v2628 = vmul.f32 %v2560, %v2609
      %v2629 = vmul.f32 %v2561, %v2609
      %v2630 = vmul.f32 %v2562, %v2609
      %v2631 = vmul.f32 %v2563, %v2609
      %v2632 = vmul.f32 %v2564, %v2609
      %v2633 = vmul.f32 %v2565, %v2609
      %v2634 = vmul.f32 %v2566, %v2609
      %v2635 = vmul.f32 %v2567, %v2609
      %v2636 = vmul.f32 %v2568, %v2609
      %v2637 = vmul.f32 %v2569, %v2609
      %v2638 = vmul.f32 %v2570, %v2609
      %v2639 = vmul.f32 %v2571, %v2609
      %v2640 = vmul.f32 %v2572, %v2609
      %v2641 = vmul.f32 %v2573, %v2609
      %v2642 = vmul.f32 %v2574, %v2609
      %v2643 = vmul.f32 %v2575, %v2609
      %v2644 = vmul.f32 %v2576, %v2609
      %v2645 = vmul.f32 %v2577, %v2609
      %v2646 = vmul.f32 %v2578, %v2609
      %v2647 = vmul.f32 %v2579, %v2609
      %v2648 = vmul.f32 %v2580, %v2609
      %v2649 = vmul.f32 %v2581, %v2609
      %v2650 = vmul.f32 %v2582, %v2609
      %v2651 = vmul.f32 %v2583, %v2609
      %v2652 = vmul.f32 %v2584, %v2609
      %v2653 = vmul.f32 %v2585, %v2609
      %v2654 = vmul.f32 %v2586, %v2609
      %v2655 = vmul.f32 %v2587, %v2609
      %v2656 = vmul.f32 %v2588, %v2609
      %v2657 = vmul.f32 %v2589, %v2609
      %v2658 = vmul.f32 %v2590, %v2609
      %v2659 = vmul.f32 %v2591, %v2609
      %v2660 = vmul.f32 %v2592, %v2609
      %v2661 = vmul.f32 %v2593, %v2609
      %v2662 = vmul.f32 %v2594, %v2609
      %v2663 = vmul.f32 %v2595, %v2609
      %v2664 = vmul.f32 %v2596, %v2609
      %v2665 = vmul.f32 %v2597, %v2609
      %v2666 = vmul.f32 %v2598, %v2609
      %v2667 = vmul.f32 %v2599, %v2609
      %v2668 = vmul.f32 %v2600, %v2609
      %v2669 = vmul.f32 %v2601, %v2609
      %v2670 = vmul.f32 %v2602, %v2609
      %v2671 = vmul.f32 %v2603, %v2609
      %v2672 = vmul.f32 %v2604, %v2609
      %v2673 = vmul.f32 %v2605, %v2609
      %v2674 = vadd.f32 %v2478, %v2610
      %v2675 = vadd.f32 %v2479, %v2611
      %v2676 = vadd.f32 %v2480, %v2612
      %v2677 = vadd.f32 %v2481, %v2613
      %v2678 = vadd.f32 %v2482, %v2614
      %v2679 = vadd.f32 %v2483, %v2615
      %v2680 = vadd.f32 %v2484, %v2616
      %v2681 = vadd.f32 %v2485, %v2617
      %v2682 = vadd.f32 %v2486, %v2618
      %v2683 = vadd.f32 %v2487, %v2619
      %v2684 = vadd.f32 %v2488, %v2620
      %v2685 = vadd.f32 %v2489, %v2621
      %v2686 = vadd.f32 %v2490, %v2622
      %v2687 = vadd.f32 %v2491, %v2623
      %v2688 = vadd.f32 %v2492, %v2624
      %v2689 = vadd.f32 %v2493, %v2625
      %v2690 = vadd.f32 %v2494, %v2626
      %v2691 = vadd.f32 %v2495, %v2627
      %v2692 = vadd.f32 %v2496, %v2628
      %v2693 = vadd.f32 %v2497, %v2629
      %v2694 = vadd.f32 %v2498, %v2630
      %v2695 = vadd.f32 %v2499, %v2631
      %v2696 = vadd.f32 %v2500, %v2632
      %v2697 = vadd.f32 %v2501, %v2633
      %v2698 = vadd.f32 %v2502, %v2634
      %v2699 = vadd.f32 %v2503, %v2635
      %v2700 = vadd.f32 %v2504, %v2636
      %v2701 = vadd.f32 %v2505, %v2637
      %v2702 = vadd.f32 %v2506, %v2638
      %v2703 = vadd.f32 %v2507, %v2639
      %v2704 = vadd.f32 %v2508, %v2640
      %v2705 = vadd.f32 %v2509, %v2641
      %v2706 = vadd.f32 %v2510, %v2642
      %v2707 = vadd.f32 %v2511, %v2643
      %v2708 = vadd.f32 %v2512, %v2644
      %v2709 = vadd.f32 %v2513, %v2645
      %v2710 = vadd.f32 %v2514, %v2646
      %v2711 = vadd.f32 %v2515, %v2647
      %v2712 = vadd.f32 %v2516, %v2648
      %v2713 = vadd.f32 %v2517, %v2649
      %v2714 = vadd.f32 %v2518, %v2650
      %v2715 = vadd.f32 %v2519, %v2651
      %v2716 = vadd.f32 %v2520, %v2652
      %v2717 = vadd.f32 %v2521, %v2653
      %v2718 = vadd.f32 %v2522, %v2654
      %v2719 = vadd.f32 %v2523, %v2655
      %v2720 = vadd.f32 %v2524, %v2656
      %v2721 = vadd.f32 %v2525, %v2657
      %v2722 = vadd.f32 %v2526, %v2658
      %v2723 = vadd.f32 %v2527, %v2659
      %v2724 = vadd.f32 %v2528, %v2660
      %v2725 = vadd.f32 %v2529, %v2661
      %v2726 = vadd.f32 %v2530, %v2662
      %v2727 = vadd.f32 %v2531, %v2663
      %v2728 = vadd.f32 %v2532, %v2664
      %v2729 = vadd.f32 %v2533, %v2665
      %v2730 = vadd.f32 %v2534, %v2666
      %v2731 = vadd.f32 %v2535, %v2667
      %v2732 = vadd.f32 %v2536, %v2668
      %v2733 = vadd.f32 %v2537, %v2669
      %v2734 = vadd.f32 %v2538, %v2670
      %v2735 = vadd.f32 %v2539, %v2671
      %v2736 = vadd.f32 %v2540, %v2672
      %v2737 = vadd.f32 %v2541, %v2673
      %v2738 = vld [vmem:[#allocation2 + $0x2] sm:$0xff]
      %v2739 = vld [vmem:[#allocation2 + $0xa] sm:$0xff]
      %v2740 = vld [vmem:[#allocation2 + $0x12] sm:$0xff]
      %v2741 = vld [vmem:[#allocation2 + $0x1a] sm:$0xff]
      %v2742 = vld [vmem:[#allocation2 + $0x2a] sm:$0xff]
      %v2743 = vld [vmem:[#allocation2 + $0x32] sm:$0xff]
      %v2744 = vld [vmem:[#allocation2 + $0x3a] sm:$0xff]
      %v2745 = vld [vmem:[#allocation2 + $0x42] sm:$0xff]
      %v2746 = vld [vmem:[#allocation2 + $0x52] sm:$0xff]
      %v2747 = vld [vmem:[#allocation2 + $0x5a] sm:$0xff]
      %v2748 = vld [vmem:[#allocation2 + $0x62] sm:$0xff]
      %v2749 = vld [vmem:[#allocation2 + $0x6a] sm:$0xff]
      %v2750 = vld [vmem:[#allocation2 + $0x7a] sm:$0xff]
      %v2751 = vld [vmem:[#allocation2 + $0x82] sm:$0xff]
      %v2752 = vld [vmem:[#allocation2 + $0x8a] sm:$0xff]
      %v2753 = vld [vmem:[#allocation2 + $0x92] sm:$0xff]
      %v2754 = vld [vmem:[#allocation2 + $0xa2] sm:$0xff]
      %v2755 = vld [vmem:[#allocation2 + $0xaa] sm:$0xff]
      %v2756 = vld [vmem:[#allocation2 + $0xb2] sm:$0xff]
      %v2757 = vld [vmem:[#allocation2 + $0xba] sm:$0xff]
      %v2758 = vld [vmem:[#allocation2 + $0xca] sm:$0xff]
      %v2759 = vld [vmem:[#allocation2 + $0xd2] sm:$0xff]
      %v2760 = vld [vmem:[#allocation2 + $0xda] sm:$0xff]
      %v2761 = vld [vmem:[#allocation2 + $0xe2] sm:$0xff]
      %v2762 = vld [vmem:[#allocation2 + $0xf2] sm:$0xff]
      %v2763 = vld [vmem:[#allocation2 + $0xfa] sm:$0xff]
      %v2764 = vld [vmem:[#allocation2 + $0x102] sm:$0xff]
      %v2765 = vld [vmem:[#allocation2 + $0x10a] sm:$0xff]
      %v2766 = vld [vmem:[#allocation2 + $0x11a] sm:$0xff]
      %v2767 = vld [vmem:[#allocation2 + $0x122] sm:$0xff]
      %v2768 = vld [vmem:[#allocation2 + $0x12a] sm:$0xff]
      %v2769 = vld [vmem:[#allocation2 + $0x132] sm:$0xff]
      %v2770 = vld [vmem:[#allocation2 + $0x142] sm:$0xff]
      %v2771 = vld [vmem:[#allocation2 + $0x14a] sm:$0xff]
      %v2772 = vld [vmem:[#allocation2 + $0x152] sm:$0xff]
      %v2773 = vld [vmem:[#allocation2 + $0x15a] sm:$0xff]
      %v2774 = vld [vmem:[#allocation2 + $0x16a] sm:$0xff]
      %v2775 = vld [vmem:[#allocation2 + $0x172] sm:$0xff]
      %v2776 = vld [vmem:[#allocation2 + $0x17a] sm:$0xff]
      %v2777 = vld [vmem:[#allocation2 + $0x182] sm:$0xff]
      %v2778 = vld [vmem:[#allocation2 + $0x192] sm:$0xff]
      %v2779 = vld [vmem:[#allocation2 + $0x19a] sm:$0xff]
      %v2780 = vld [vmem:[#allocation2 + $0x1a2] sm:$0xff]
      %v2781 = vld [vmem:[#allocation2 + $0x1aa] sm:$0xff]
      %v2782 = vld [vmem:[#allocation2 + $0x1ba] sm:$0xff]
      %v2783 = vld [vmem:[#allocation2 + $0x1c2] sm:$0xff]
      %v2784 = vld [vmem:[#allocation2 + $0x1ca] sm:$0xff]
      %v2785 = vld [vmem:[#allocation2 + $0x1d2] sm:$0xff]
      %v2786 = vld [vmem:[#allocation2 + $0x1e2] sm:$0xff]
      %v2787 = vld [vmem:[#allocation2 + $0x1ea] sm:$0xff]
      %v2788 = vld [vmem:[#allocation2 + $0x1f2] sm:$0xff]
      %v2789 = vld [vmem:[#allocation2 + $0x1fa] sm:$0xff]
      %v2790 = vld [vmem:[#allocation2 + $0x20a] sm:$0xff]
      %v2791 = vld [vmem:[#allocation2 + $0x212] sm:$0xff]
      %v2792 = vld [vmem:[#allocation2 + $0x21a] sm:$0xff]
      %v2793 = vld [vmem:[#allocation2 + $0x222] sm:$0xff]
      %v2794 = vld [vmem:[#allocation2 + $0x232] sm:$0xff]
      %v2795 = vld [vmem:[#allocation2 + $0x23a] sm:$0xff]
      %v2796 = vld [vmem:[#allocation2 + $0x242] sm:$0xff]
      %v2797 = vld [vmem:[#allocation2 + $0x24a] sm:$0xff]
      %v2798 = vld [vmem:[#allocation2 + $0x25a] sm:$0xff]
      %v2799 = vld [vmem:[#allocation2 + $0x262] sm:$0xff]
      %v2800 = vld [vmem:[#allocation2 + $0x26a] sm:$0xff]
      %v2801 = vld [vmem:[#allocation2 + $0x272] sm:$0xff]
      %v2802 = vlaneseq
      %v2803 = vshrl.u32 %v2802, 7
      %v2804 = vsub.s32 2, %v2803
      %v2805 = vrot.slane %v1949, %v2804
      %v2806 = vmul.f32 %v2738, %v2805
      %v2807 = vmul.f32 %v2739, %v2805
      %v2808 = vmul.f32 %v2740, %v2805
      %v2809 = vmul.f32 %v2741, %v2805
      %v2810 = vmul.f32 %v2742, %v2805
      %v2811 = vmul.f32 %v2743, %v2805
      %v2812 = vmul.f32 %v2744, %v2805
      %v2813 = vmul.f32 %v2745, %v2805
      %v2814 = vmul.f32 %v2746, %v2805
      %v2815 = vmul.f32 %v2747, %v2805
      %v2816 = vmul.f32 %v2748, %v2805
      %v2817 = vmul.f32 %v2749, %v2805
      %v2818 = vmul.f32 %v2750, %v2805
      %v2819 = vmul.f32 %v2751, %v2805
      %v2820 = vmul.f32 %v2752, %v2805
      %v2821 = vmul.f32 %v2753, %v2805
      %v2822 = vmul.f32 %v2754, %v2805
      %v2823 = vmul.f32 %v2755, %v2805
      %v2824 = vmul.f32 %v2756, %v2805
      %v2825 = vmul.f32 %v2757, %v2805
      %v2826 = vmul.f32 %v2758, %v2805
      %v2827 = vmul.f32 %v2759, %v2805
      %v2828 = vmul.f32 %v2760, %v2805
      %v2829 = vmul.f32 %v2761, %v2805
      %v2830 = vmul.f32 %v2762, %v2805
      %v2831 = vmul.f32 %v2763, %v2805
      %v2832 = vmul.f32 %v2764, %v2805
      %v2833 = vmul.f32 %v2765, %v2805
      %v2834 = vmul.f32 %v2766, %v2805
      %v2835 = vmul.f32 %v2767, %v2805
      %v2836 = vmul.f32 %v2768, %v2805
      %v2837 = vmul.f32 %v2769, %v2805
      %v2838 = vmul.f32 %v2770, %v2805
      %v2839 = vmul.f32 %v2771, %v2805
      %v2840 = vmul.f32 %v2772, %v2805
      %v2841 = vmul.f32 %v2773, %v2805
      %v2842 = vmul.f32 %v2774, %v2805
      %v2843 = vmul.f32 %v2775, %v2805
      %v2844 = vmul.f32 %v2776, %v2805
      %v2845 = vmul.f32 %v2777, %v2805
      %v2846 = vmul.f32 %v2778, %v2805
      %v2847 = vmul.f32 %v2779, %v2805
      %v2848 = vmul.f32 %v2780, %v2805
      %v2849 = vmul.f32 %v2781, %v2805
      %v2850 = vmul.f32 %v2782, %v2805
      %v2851 = vmul.f32 %v2783, %v2805
      %v2852 = vmul.f32 %v2784, %v2805
      %v2853 = vmul.f32 %v2785, %v2805
      %v2854 = vmul.f32 %v2786, %v2805
      %v2855 = vmul.f32 %v2787, %v2805
      %v2856 = vmul.f32 %v2788, %v2805
      %v2857 = vmul.f32 %v2789, %v2805
      %v2858 = vmul.f32 %v2790, %v2805
      %v2859 = vmul.f32 %v2791, %v2805
      %v2860 = vmul.f32 %v2792, %v2805
      %v2861 = vmul.f32 %v2793, %v2805
      %v2862 = vmul.f32 %v2794, %v2805
      %v2863 = vmul.f32 %v2795, %v2805
      %v2864 = vmul.f32 %v2796, %v2805
      %v2865 = vmul.f32 %v2797, %v2805
      %v2866 = vmul.f32 %v2798, %v2805
      %v2867 = vmul.f32 %v2799, %v2805
      %v2868 = vmul.f32 %v2800, %v2805
      %v2869 = vmul.f32 %v2801, %v2805
      %v2870 = vadd.f32 %v2674, %v2806
      %v2871 = vadd.f32 %v2675, %v2807
      %v2872 = vadd.f32 %v2676, %v2808
      %v2873 = vadd.f32 %v2677, %v2809
      %v2874 = vadd.f32 %v2678, %v2810
      %v2875 = vadd.f32 %v2679, %v2811
      %v2876 = vadd.f32 %v2680, %v2812
      %v2877 = vadd.f32 %v2681, %v2813
      %v2878 = vadd.f32 %v2682, %v2814
      %v2879 = vadd.f32 %v2683, %v2815
      %v2880 = vadd.f32 %v2684, %v2816
      %v2881 = vadd.f32 %v2685, %v2817
      %v2882 = vadd.f32 %v2686, %v2818
      %v2883 = vadd.f32 %v2687, %v2819
      %v2884 = vadd.f32 %v2688, %v2820
      %v2885 = vadd.f32 %v2689, %v2821
      %v2886 = vadd.f32 %v2690, %v2822
      %v2887 = vadd.f32 %v2691, %v2823
      %v2888 = vadd.f32 %v2692, %v2824
      %v2889 = vadd.f32 %v2693, %v2825
      %v2890 = vadd.f32 %v2694, %v2826
      %v2891 = vadd.f32 %v2695, %v2827
      %v2892 = vadd.f32 %v2696, %v2828
      %v2893 = vadd.f32 %v2697, %v2829
      %v2894 = vadd.f32 %v2698, %v2830
      %v2895 = vadd.f32 %v2699, %v2831
      %v2896 = vadd.f32 %v2700, %v2832
      %v2897 = vadd.f32 %v2701, %v2833
      %v2898 = vadd.f32 %v2702, %v2834
      %v2899 = vadd.f32 %v2703, %v2835
      %v2900 = vadd.f32 %v2704, %v2836
      %v2901 = vadd.f32 %v2705, %v2837
      %v2902 = vadd.f32 %v2706, %v2838
      %v2903 = vadd.f32 %v2707, %v2839
      %v2904 = vadd.f32 %v2708, %v2840
      %v2905 = vadd.f32 %v2709, %v2841
      %v2906 = vadd.f32 %v2710, %v2842
      %v2907 = vadd.f32 %v2711, %v2843
      %v2908 = vadd.f32 %v2712, %v2844
      %v2909 = vadd.f32 %v2713, %v2845
      %v2910 = vadd.f32 %v2714, %v2846
      %v2911 = vadd.f32 %v2715, %v2847
      %v2912 = vadd.f32 %v2716, %v2848
      %v2913 = vadd.f32 %v2717, %v2849
      %v2914 = vadd.f32 %v2718, %v2850
      %v2915 = vadd.f32 %v2719, %v2851
      %v2916 = vadd.f32 %v2720, %v2852
      %v2917 = vadd.f32 %v2721, %v2853
      %v2918 = vadd.f32 %v2722, %v2854
      %v2919 = vadd.f32 %v2723, %v2855
      %v2920 = vadd.f32 %v2724, %v2856
      %v2921 = vadd.f32 %v2725, %v2857
      %v2922 = vadd.f32 %v2726, %v2858
      %v2923 = vadd.f32 %v2727, %v2859
      %v2924 = vadd.f32 %v2728, %v2860
      %v2925 = vadd.f32 %v2729, %v2861
      %v2926 = vadd.f32 %v2730, %v2862
      %v2927 = vadd.f32 %v2731, %v2863
      %v2928 = vadd.f32 %v2732, %v2864
      %v2929 = vadd.f32 %v2733, %v2865
      %v2930 = vadd.f32 %v2734, %v2866
      %v2931 = vadd.f32 %v2735, %v2867
      %v2932 = vadd.f32 %v2736, %v2868
      %v2933 = vadd.f32 %v2737, %v2869
      %v2934 = vld [vmem:[#allocation3 + $0x2] sm:$0xff]
      %v2935 = vld [vmem:[#allocation3 + $0xa] sm:$0xff]
      %v2936 = vld [vmem:[#allocation3 + $0x12] sm:$0xff]
      %v2937 = vld [vmem:[#allocation3 + $0x1a] sm:$0xff]
      %v2938 = vld [vmem:[#allocation3 + $0x2a] sm:$0xff]
      %v2939 = vld [vmem:[#allocation3 + $0x32] sm:$0xff]
      %v2940 = vld [vmem:[#allocation3 + $0x3a] sm:$0xff]
      %v2941 = vld [vmem:[#allocation3 + $0x42] sm:$0xff]
      %v2942 = vld [vmem:[#allocation3 + $0x52] sm:$0xff]
      %v2943 = vld [vmem:[#allocation3 + $0x5a] sm:$0xff]
      %v2944 = vld [vmem:[#allocation3 + $0x62] sm:$0xff]
      %v2945 = vld [vmem:[#allocation3 + $0x6a] sm:$0xff]
      %v2946 = vld [vmem:[#allocation3 + $0x7a] sm:$0xff]
      %v2947 = vld [vmem:[#allocation3 + $0x82] sm:$0xff]
      %v2948 = vld [vmem:[#allocation3 + $0x8a] sm:$0xff]
      %v2949 = vld [vmem:[#allocation3 + $0x92] sm:$0xff]
      %v2950 = vld [vmem:[#allocation3 + $0xa2] sm:$0xff]
      %v2951 = vld [vmem:[#allocation3 + $0xaa] sm:$0xff]
      %v2952 = vld [vmem:[#allocation3 + $0xb2] sm:$0xff]
      %v2953 = vld [vmem:[#allocation3 + $0xba] sm:$0xff]
      %v2954 = vld [vmem:[#allocation3 + $0xca] sm:$0xff]
      %v2955 = vld [vmem:[#allocation3 + $0xd2] sm:$0xff]
      %v2956 = vld [vmem:[#allocation3 + $0xda] sm:$0xff]
      %v2957 = vld [vmem:[#allocation3 + $0xe2] sm:$0xff]
      %v2958 = vld [vmem:[#allocation3 + $0xf2] sm:$0xff]
      %v2959 = vld [vmem:[#allocation3 + $0xfa] sm:$0xff]
      %v2960 = vld [vmem:[#allocation3 + $0x102] sm:$0xff]
      %v2961 = vld [vmem:[#allocation3 + $0x10a] sm:$0xff]
      %v2962 = vld [vmem:[#allocation3 + $0x11a] sm:$0xff]
      %v2963 = vld [vmem:[#allocation3 + $0x122] sm:$0xff]
      %v2964 = vld [vmem:[#allocation3 + $0x12a] sm:$0xff]
      %v2965 = vld [vmem:[#allocation3 + $0x132] sm:$0xff]
      %v2966 = vld [vmem:[#allocation3 + $0x142] sm:$0xff]
      %v2967 = vld [vmem:[#allocation3 + $0x14a] sm:$0xff]
      %v2968 = vld [vmem:[#allocation3 + $0x152] sm:$0xff]
      %v2969 = vld [vmem:[#allocation3 + $0x15a] sm:$0xff]
      %v2970 = vld [vmem:[#allocation3 + $0x16a] sm:$0xff]
      %v2971 = vld [vmem:[#allocation3 + $0x172] sm:$0xff]
      %v2972 = vld [vmem:[#allocation3 + $0x17a] sm:$0xff]
      %v2973 = vld [vmem:[#allocation3 + $0x182] sm:$0xff]
      %v2974 = vld [vmem:[#allocation3 + $0x192] sm:$0xff]
      %v2975 = vld [vmem:[#allocation3 + $0x19a] sm:$0xff]
      %v2976 = vld [vmem:[#allocation3 + $0x1a2] sm:$0xff]
      %v2977 = vld [vmem:[#allocation3 + $0x1aa] sm:$0xff]
      %v2978 = vld [vmem:[#allocation3 + $0x1ba] sm:$0xff]
      %v2979 = vld [vmem:[#allocation3 + $0x1c2] sm:$0xff]
      %v2980 = vld [vmem:[#allocation3 + $0x1ca] sm:$0xff]
      %v2981 = vld [vmem:[#allocation3 + $0x1d2] sm:$0xff]
      %v2982 = vld [vmem:[#allocation3 + $0x1e2] sm:$0xff]
      %v2983 = vld [vmem:[#allocation3 + $0x1ea] sm:$0xff]
      %v2984 = vld [vmem:[#allocation3 + $0x1f2] sm:$0xff]
      %v2985 = vld [vmem:[#allocation3 + $0x1fa] sm:$0xff]
      %v2986 = vld [vmem:[#allocation3 + $0x20a] sm:$0xff]
      %v2987 = vld [vmem:[#allocation3 + $0x212] sm:$0xff]
      %v2988 = vld [vmem:[#allocation3 + $0x21a] sm:$0xff]
      %v2989 = vld [vmem:[#allocation3 + $0x222] sm:$0xff]
      %v2990 = vld [vmem:[#allocation3 + $0x232] sm:$0xff]
      %v2991 = vld [vmem:[#allocation3 + $0x23a] sm:$0xff]
      %v2992 = vld [vmem:[#allocation3 + $0x242] sm:$0xff]
      %v2993 = vld [vmem:[#allocation3 + $0x24a] sm:$0xff]
      %v2994 = vld [vmem:[#allocation3 + $0x25a] sm:$0xff]
      %v2995 = vld [vmem:[#allocation3 + $0x262] sm:$0xff]
      %v2996 = vld [vmem:[#allocation3 + $0x26a] sm:$0xff]
      %v2997 = vld [vmem:[#allocation3 + $0x272] sm:$0xff]
      %v2998 = vlaneseq
      %v2999 = vshrl.u32 %v2998, 7
      %v3000 = vsub.s32 2, %v2999
      %v3001 = vrot.slane %v1952, %v3000
      %v3002 = vmul.f32 %v2934, %v3001
      %v3003 = vmul.f32 %v2935, %v3001
      %v3004 = vmul.f32 %v2936, %v3001
      %v3005 = vmul.f32 %v2937, %v3001
      %v3006 = vmul.f32 %v2938, %v3001
      %v3007 = vmul.f32 %v2939, %v3001
      %v3008 = vmul.f32 %v2940, %v3001
      %v3009 = vmul.f32 %v2941, %v3001
      %v3010 = vmul.f32 %v2942, %v3001
      %v3011 = vmul.f32 %v2943, %v3001
      %v3012 = vmul.f32 %v2944, %v3001
      %v3013 = vmul.f32 %v2945, %v3001
      %v3014 = vmul.f32 %v2946, %v3001
      %v3015 = vmul.f32 %v2947, %v3001
      %v3016 = vmul.f32 %v2948, %v3001
      %v3017 = vmul.f32 %v2949, %v3001
      %v3018 = vmul.f32 %v2950, %v3001
      %v3019 = vmul.f32 %v2951, %v3001
      %v3020 = vmul.f32 %v2952, %v3001
      %v3021 = vmul.f32 %v2953, %v3001
      %v3022 = vmul.f32 %v2954, %v3001
      %v3023 = vmul.f32 %v2955, %v3001
      %v3024 = vmul.f32 %v2956, %v3001
      %v3025 = vmul.f32 %v2957, %v3001
      %v3026 = vmul.f32 %v2958, %v3001
      %v3027 = vmul.f32 %v2959, %v3001
      %v3028 = vmul.f32 %v2960, %v3001
      %v3029 = vmul.f32 %v2961, %v3001
      %v3030 = vmul.f32 %v2962, %v3001
      %v3031 = vmul.f32 %v2963, %v3001
      %v3032 = vmul.f32 %v2964, %v3001
      %v3033 = vmul.f32 %v2965, %v3001
      %v3034 = vmul.f32 %v2966, %v3001
      %v3035 = vmul.f32 %v2967, %v3001
      %v3036 = vmul.f32 %v2968, %v3001
      %v3037 = vmul.f32 %v2969, %v3001
      %v3038 = vmul.f32 %v2970, %v3001
      %v3039 = vmul.f32 %v2971, %v3001
      %v3040 = vmul.f32 %v2972, %v3001
      %v3041 = vmul.f32 %v2973, %v3001
      %v3042 = vmul.f32 %v2974, %v3001
      %v3043 = vmul.f32 %v2975, %v3001
      %v3044 = vmul.f32 %v2976, %v3001
      %v3045 = vmul.f32 %v2977, %v3001
      %v3046 = vmul.f32 %v2978, %v3001
      %v3047 = vmul.f32 %v2979, %v3001
      %v3048 = vmul.f32 %v2980, %v3001
      %v3049 = vmul.f32 %v2981, %v3001
      %v3050 = vmul.f32 %v2982, %v3001
      %v3051 = vmul.f32 %v2983, %v3001
      %v3052 = vmul.f32 %v2984, %v3001
      %v3053 = vmul.f32 %v2985, %v3001
      %v3054 = vmul.f32 %v2986, %v3001
      %v3055 = vmul.f32 %v2987, %v3001
      %v3056 = vmul.f32 %v2988, %v3001
      %v3057 = vmul.f32 %v2989, %v3001
      %v3058 = vmul.f32 %v2990, %v3001
      %v3059 = vmul.f32 %v2991, %v3001
      %v3060 = vmul.f32 %v2992, %v3001
      %v3061 = vmul.f32 %v2993, %v3001
      %v3062 = vmul.f32 %v2994, %v3001
      %v3063 = vmul.f32 %v2995, %v3001
      %v3064 = vmul.f32 %v2996, %v3001
      %v3065 = vmul.f32 %v2997, %v3001
      %v3066 = vadd.f32 %v2870, %v3002
      %v3067 = vadd.f32 %v2871, %v3003
      %v3068 = vadd.f32 %v2872, %v3004
      %v3069 = vadd.f32 %v2873, %v3005
      %v3070 = vadd.f32 %v2874, %v3006
      %v3071 = vadd.f32 %v2875, %v3007
      %v3072 = vadd.f32 %v2876, %v3008
      %v3073 = vadd.f32 %v2877, %v3009
      %v3074 = vadd.f32 %v2878, %v3010
      %v3075 = vadd.f32 %v2879, %v3011
      %v3076 = vadd.f32 %v2880, %v3012
      %v3077 = vadd.f32 %v2881, %v3013
      %v3078 = vadd.f32 %v2882, %v3014
      %v3079 = vadd.f32 %v2883, %v3015
      %v3080 = vadd.f32 %v2884, %v3016
      %v3081 = vadd.f32 %v2885, %v3017
      %v3082 = vadd.f32 %v2886, %v3018
      %v3083 = vadd.f32 %v2887, %v3019
      %v3084 = vadd.f32 %v2888, %v3020
      %v3085 = vadd.f32 %v2889, %v3021
      %v3086 = vadd.f32 %v2890, %v3022
      %v3087 = vadd.f32 %v2891, %v3023
      %v3088 = vadd.f32 %v2892, %v3024
      %v3089 = vadd.f32 %v2893, %v3025
      %v3090 = vadd.f32 %v2894, %v3026
      %v3091 = vadd.f32 %v2895, %v3027
      %v3092 = vadd.f32 %v2896, %v3028
      %v3093 = vadd.f32 %v2897, %v3029
      %v3094 = vadd.f32 %v2898, %v3030
      %v3095 = vadd.f32 %v2899, %v3031
      %v3096 = vadd.f32 %v2900, %v3032
      %v3097 = vadd.f32 %v2901, %v3033
      %v3098 = vadd.f32 %v2902, %v3034
      %v3099 = vadd.f32 %v2903, %v3035
      %v3100 = vadd.f32 %v2904, %v3036
      %v3101 = vadd.f32 %v2905, %v3037
      %v3102 = vadd.f32 %v2906, %v3038
      %v3103 = vadd.f32 %v2907, %v3039
      %v3104 = vadd.f32 %v2908, %v3040
      %v3105 = vadd.f32 %v2909, %v3041
      %v3106 = vadd.f32 %v2910, %v3042
      %v3107 = vadd.f32 %v2911, %v3043
      %v3108 = vadd.f32 %v2912, %v3044
      %v3109 = vadd.f32 %v2913, %v3045
      %v3110 = vadd.f32 %v2914, %v3046
      %v3111 = vadd.f32 %v2915, %v3047
      %v3112 = vadd.f32 %v2916, %v3048
      %v3113 = vadd.f32 %v2917, %v3049
      %v3114 = vadd.f32 %v2918, %v3050
      %v3115 = vadd.f32 %v2919, %v3051
      %v3116 = vadd.f32 %v2920, %v3052
      %v3117 = vadd.f32 %v2921, %v3053
      %v3118 = vadd.f32 %v2922, %v3054
      %v3119 = vadd.f32 %v2923, %v3055
      %v3120 = vadd.f32 %v2924, %v3056
      %v3121 = vadd.f32 %v2925, %v3057
      %v3122 = vadd.f32 %v2926, %v3058
      %v3123 = vadd.f32 %v2927, %v3059
      %v3124 = vadd.f32 %v2928, %v3060
      %v3125 = vadd.f32 %v2929, %v3061
      %v3126 = vadd.f32 %v2930, %v3062
      %v3127 = vadd.f32 %v2931, %v3063
      %v3128 = vadd.f32 %v2932, %v3064
      %v3129 = vadd.f32 %v2933, %v3065
      %s3130 = scalar_lea.vmem [#allocation2], 40
      %v3131 = vld [vmem:[%s3130] sm:$0xff]
      %v3132 = vld [vmem:[%s3130 + $0x8] sm:$0xff]
      %v3133 = vld [vmem:[%s3130 + $0x10] sm:$0xff]
      %v3134 = vld [vmem:[%s3130 + $0x18] sm:$0xff]
      %v3135 = vld [vmem:[%s3130 + $0x28] sm:$0xff]
      %v3136 = vld [vmem:[%s3130 + $0x30] sm:$0xff]
      %v3137 = vld [vmem:[%s3130 + $0x38] sm:$0xff]
      %v3138 = vld [vmem:[%s3130 + $0x40] sm:$0xff]
      %v3139 = vld [vmem:[%s3130 + $0x50] sm:$0xff]
      %v3140 = vld [vmem:[%s3130 + $0x58] sm:$0xff]
      %v3141 = vld [vmem:[%s3130 + $0x60] sm:$0xff]
      %v3142 = vld [vmem:[%s3130 + $0x68] sm:$0xff]
      %v3143 = vld [vmem:[%s3130 + $0x78] sm:$0xff]
      %v3144 = vld [vmem:[%s3130 + $0x80] sm:$0xff]
      %v3145 = vld [vmem:[%s3130 + $0x88] sm:$0xff]
      %v3146 = vld [vmem:[%s3130 + $0x90] sm:$0xff]
      %v3147 = vld [vmem:[%s3130 + $0xa0] sm:$0xff]
      %v3148 = vld [vmem:[%s3130 + $0xa8] sm:$0xff]
      %v3149 = vld [vmem:[%s3130 + $0xb0] sm:$0xff]
      %v3150 = vld [vmem:[%s3130 + $0xb8] sm:$0xff]
      %v3151 = vld [vmem:[%s3130 + $0xc8] sm:$0xff]
      %v3152 = vld [vmem:[%s3130 + $0xd0] sm:$0xff]
      %v3153 = vld [vmem:[%s3130 + $0xd8] sm:$0xff]
      %v3154 = vld [vmem:[%s3130 + $0xe0] sm:$0xff]
      %v3155 = vld [vmem:[%s3130 + $0xf0] sm:$0xff]
      %v3156 = vld [vmem:[%s3130 + $0xf8] sm:$0xff]
      %v3157 = vld [vmem:[%s3130 + $0x100] sm:$0xff]
      %v3158 = vld [vmem:[%s3130 + $0x108] sm:$0xff]
      %v3159 = vld [vmem:[%s3130 + $0x118] sm:$0xff]
      %v3160 = vld [vmem:[%s3130 + $0x120] sm:$0xff]
      %v3161 = vld [vmem:[%s3130 + $0x128] sm:$0xff]
      %v3162 = vld [vmem:[%s3130 + $0x130] sm:$0xff]
      %v3163 = vld [vmem:[%s3130 + $0x140] sm:$0xff]
      %v3164 = vld [vmem:[%s3130 + $0x148] sm:$0xff]
      %v3165 = vld [vmem:[%s3130 + $0x150] sm:$0xff]
      %v3166 = vld [vmem:[%s3130 + $0x158] sm:$0xff]
      %v3167 = vld [vmem:[%s3130 + $0x168] sm:$0xff]
      %v3168 = vld [vmem:[%s3130 + $0x170] sm:$0xff]
      %v3169 = vld [vmem:[%s3130 + $0x178] sm:$0xff]
      %v3170 = vld [vmem:[%s3130 + $0x180] sm:$0xff]
      %v3171 = vld [vmem:[%s3130 + $0x190] sm:$0xff]
      %v3172 = vld [vmem:[%s3130 + $0x198] sm:$0xff]
      %v3173 = vld [vmem:[%s3130 + $0x1a0] sm:$0xff]
      %v3174 = vld [vmem:[%s3130 + $0x1a8] sm:$0xff]
      %v3175 = vld [vmem:[%s3130 + $0x1b8] sm:$0xff]
      %v3176 = vld [vmem:[%s3130 + $0x1c0] sm:$0xff]
      %v3177 = vld [vmem:[%s3130 + $0x1c8] sm:$0xff]
      %v3178 = vld [vmem:[%s3130 + $0x1d0] sm:$0xff]
      %v3179 = vld [vmem:[%s3130 + $0x1e0] sm:$0xff]
      %v3180 = vld [vmem:[%s3130 + $0x1e8] sm:$0xff]
      %v3181 = vld [vmem:[%s3130 + $0x1f0] sm:$0xff]
      %v3182 = vld [vmem:[%s3130 + $0x1f8] sm:$0xff]
      %v3183 = vld [vmem:[%s3130 + $0x208] sm:$0xff]
      %v3184 = vld [vmem:[%s3130 + $0x210] sm:$0xff]
      %v3185 = vld [vmem:[%s3130 + $0x218] sm:$0xff]
      %v3186 = vld [vmem:[%s3130 + $0x220] sm:$0xff]
      %v3187 = vld [vmem:[%s3130 + $0x230] sm:$0xff]
      %v3188 = vld [vmem:[%s3130 + $0x238] sm:$0xff]
      %v3189 = vld [vmem:[%s3130 + $0x240] sm:$0xff]
      %v3190 = vld [vmem:[%s3130 + $0x248] sm:$0xff]
      %v3191 = vld [vmem:[%s3130 + $0x258] sm:$0xff]
      %v3192 = vld [vmem:[%s3130 + $0x260] sm:$0xff]
      %v3193 = vld [vmem:[%s3130 + $0x268] sm:$0xff]
      %v3194 = vld [vmem:[%s3130 + $0x270] sm:$0xff]
      %v3195 = vlaneseq
      %v3196 = vshrl.u32 %v3195, 7
      %v3197 = vsub.s32 3, %v3196
      %v3198 = vrot.slane %v1949, %v3197
      %v3199 = vmul.f32 %v3131, %v3198
      %v3200 = vmul.f32 %v3132, %v3198
      %v3201 = vmul.f32 %v3133, %v3198
      %v3202 = vmul.f32 %v3134, %v3198
      %v3203 = vmul.f32 %v3135, %v3198
      %v3204 = vmul.f32 %v3136, %v3198
      %v3205 = vmul.f32 %v3137, %v3198
      %v3206 = vmul.f32 %v3138, %v3198
      %v3207 = vmul.f32 %v3139, %v3198
      %v3208 = vmul.f32 %v3140, %v3198
      %v3209 = vmul.f32 %v3141, %v3198
      %v3210 = vmul.f32 %v3142, %v3198
      %v3211 = vmul.f32 %v3143, %v3198
      %v3212 = vmul.f32 %v3144, %v3198
      %v3213 = vmul.f32 %v3145, %v3198
      %v3214 = vmul.f32 %v3146, %v3198
      %v3215 = vmul.f32 %v3147, %v3198
      %v3216 = vmul.f32 %v3148, %v3198
      %v3217 = vmul.f32 %v3149, %v3198
      %v3218 = vmul.f32 %v3150, %v3198
      %v3219 = vmul.f32 %v3151, %v3198
      %v3220 = vmul.f32 %v3152, %v3198
      %v3221 = vmul.f32 %v3153, %v3198
      %v3222 = vmul.f32 %v3154, %v3198
      %v3223 = vmul.f32 %v3155, %v3198
      %v3224 = vmul.f32 %v3156, %v3198
      %v3225 = vmul.f32 %v3157, %v3198
      %v3226 = vmul.f32 %v3158, %v3198
      %v3227 = vmul.f32 %v3159, %v3198
      %v3228 = vmul.f32 %v3160, %v3198
      %v3229 = vmul.f32 %v3161, %v3198
      %v3230 = vmul.f32 %v3162, %v3198
      %v3231 = vmul.f32 %v3163, %v3198
      %v3232 = vmul.f32 %v3164, %v3198
      %v3233 = vmul.f32 %v3165, %v3198
      %v3234 = vmul.f32 %v3166, %v3198
      %v3235 = vmul.f32 %v3167, %v3198
      %v3236 = vmul.f32 %v3168, %v3198
      %v3237 = vmul.f32 %v3169, %v3198
      %v3238 = vmul.f32 %v3170, %v3198
      %v3239 = vmul.f32 %v3171, %v3198
      %v3240 = vmul.f32 %v3172, %v3198
      %v3241 = vmul.f32 %v3173, %v3198
      %v3242 = vmul.f32 %v3174, %v3198
      %v3243 = vmul.f32 %v3175, %v3198
      %v3244 = vmul.f32 %v3176, %v3198
      %v3245 = vmul.f32 %v3177, %v3198
      %v3246 = vmul.f32 %v3178, %v3198
      %v3247 = vmul.f32 %v3179, %v3198
      %v3248 = vmul.f32 %v3180, %v3198
      %v3249 = vmul.f32 %v3181, %v3198
      %v3250 = vmul.f32 %v3182, %v3198
      %v3251 = vmul.f32 %v3183, %v3198
      %v3252 = vmul.f32 %v3184, %v3198
      %v3253 = vmul.f32 %v3185, %v3198
      %v3254 = vmul.f32 %v3186, %v3198
      %v3255 = vmul.f32 %v3187, %v3198
      %v3256 = vmul.f32 %v3188, %v3198
      %v3257 = vmul.f32 %v3189, %v3198
      %v3258 = vmul.f32 %v3190, %v3198
      %v3259 = vmul.f32 %v3191, %v3198
      %v3260 = vmul.f32 %v3192, %v3198
      %v3261 = vmul.f32 %v3193, %v3198
      %v3262 = vmul.f32 %v3194, %v3198
      %v3263 = vadd.f32 %v3066, %v3199
      %v3264 = vadd.f32 %v3067, %v3200
      %v3265 = vadd.f32 %v3068, %v3201
      %v3266 = vadd.f32 %v3069, %v3202
      %v3267 = vadd.f32 %v3070, %v3203
      %v3268 = vadd.f32 %v3071, %v3204
      %v3269 = vadd.f32 %v3072, %v3205
      %v3270 = vadd.f32 %v3073, %v3206
      %v3271 = vadd.f32 %v3074, %v3207
      %v3272 = vadd.f32 %v3075, %v3208
      %v3273 = vadd.f32 %v3076, %v3209
      %v3274 = vadd.f32 %v3077, %v3210
      %v3275 = vadd.f32 %v3078, %v3211
      %v3276 = vadd.f32 %v3079, %v3212
      %v3277 = vadd.f32 %v3080, %v3213
      %v3278 = vadd.f32 %v3081, %v3214
      %v3279 = vadd.f32 %v3082, %v3215
      %v3280 = vadd.f32 %v3083, %v3216
      %v3281 = vadd.f32 %v3084, %v3217
      %v3282 = vadd.f32 %v3085, %v3218
      %v3283 = vadd.f32 %v3086, %v3219
      %v3284 = vadd.f32 %v3087, %v3220
      %v3285 = vadd.f32 %v3088, %v3221
      %v3286 = vadd.f32 %v3089, %v3222
      %v3287 = vadd.f32 %v3090, %v3223
      %v3288 = vadd.f32 %v3091, %v3224
      %v3289 = vadd.f32 %v3092, %v3225
      %v3290 = vadd.f32 %v3093, %v3226
      %v3291 = vadd.f32 %v3094, %v3227
      %v3292 = vadd.f32 %v3095, %v3228
      %v3293 = vadd.f32 %v3096, %v3229
      %v3294 = vadd.f32 %v3097, %v3230
      %v3295 = vadd.f32 %v3098, %v3231
      %v3296 = vadd.f32 %v3099, %v3232
      %v3297 = vadd.f32 %v3100, %v3233
      %v3298 = vadd.f32 %v3101, %v3234
      %v3299 = vadd.f32 %v3102, %v3235
      %v3300 = vadd.f32 %v3103, %v3236
      %v3301 = vadd.f32 %v3104, %v3237
      %v3302 = vadd.f32 %v3105, %v3238
      %v3303 = vadd.f32 %v3106, %v3239
      %v3304 = vadd.f32 %v3107, %v3240
      %v3305 = vadd.f32 %v3108, %v3241
      %v3306 = vadd.f32 %v3109, %v3242
      %v3307 = vadd.f32 %v3110, %v3243
      %v3308 = vadd.f32 %v3111, %v3244
      %v3309 = vadd.f32 %v3112, %v3245
      %v3310 = vadd.f32 %v3113, %v3246
      %v3311 = vadd.f32 %v3114, %v3247
      %v3312 = vadd.f32 %v3115, %v3248
      %v3313 = vadd.f32 %v3116, %v3249
      %v3314 = vadd.f32 %v3117, %v3250
      %v3315 = vadd.f32 %v3118, %v3251
      %v3316 = vadd.f32 %v3119, %v3252
      %v3317 = vadd.f32 %v3120, %v3253
      %v3318 = vadd.f32 %v3121, %v3254
      %v3319 = vadd.f32 %v3122, %v3255
      %v3320 = vadd.f32 %v3123, %v3256
      %v3321 = vadd.f32 %v3124, %v3257
      %v3322 = vadd.f32 %v3125, %v3258
      %v3323 = vadd.f32 %v3126, %v3259
      %v3324 = vadd.f32 %v3127, %v3260
      %v3325 = vadd.f32 %v3128, %v3261
      %v3326 = vadd.f32 %v3129, %v3262
      %s3327 = scalar_lea.vmem [#allocation3], 40
      %v3328 = vld [vmem:[%s3327] sm:$0xff]
      %v3329 = vld [vmem:[%s3327 + $0x8] sm:$0xff]
      %v3330 = vld [vmem:[%s3327 + $0x10] sm:$0xff]
      %v3331 = vld [vmem:[%s3327 + $0x18] sm:$0xff]
      %v3332 = vld [vmem:[%s3327 + $0x28] sm:$0xff]
      %v3333 = vld [vmem:[%s3327 + $0x30] sm:$0xff]
      %v3334 = vld [vmem:[%s3327 + $0x38] sm:$0xff]
      %v3335 = vld [vmem:[%s3327 + $0x40] sm:$0xff]
      %v3336 = vld [vmem:[%s3327 + $0x50] sm:$0xff]
      %v3337 = vld [vmem:[%s3327 + $0x58] sm:$0xff]
      %v3338 = vld [vmem:[%s3327 + $0x60] sm:$0xff]
      %v3339 = vld [vmem:[%s3327 + $0x68] sm:$0xff]
      %v3340 = vld [vmem:[%s3327 + $0x78] sm:$0xff]
      %v3341 = vld [vmem:[%s3327 + $0x80] sm:$0xff]
      %v3342 = vld [vmem:[%s3327 + $0x88] sm:$0xff]
      %v3343 = vld [vmem:[%s3327 + $0x90] sm:$0xff]
      %v3344 = vld [vmem:[%s3327 + $0xa0] sm:$0xff]
      %v3345 = vld [vmem:[%s3327 + $0xa8] sm:$0xff]
      %v3346 = vld [vmem:[%s3327 + $0xb0] sm:$0xff]
      %v3347 = vld [vmem:[%s3327 + $0xb8] sm:$0xff]
      %v3348 = vld [vmem:[%s3327 + $0xc8] sm:$0xff]
      %v3349 = vld [vmem:[%s3327 + $0xd0] sm:$0xff]
      %v3350 = vld [vmem:[%s3327 + $0xd8] sm:$0xff]
      %v3351 = vld [vmem:[%s3327 + $0xe0] sm:$0xff]
      %v3352 = vld [vmem:[%s3327 + $0xf0] sm:$0xff]
      %v3353 = vld [vmem:[%s3327 + $0xf8] sm:$0xff]
      %v3354 = vld [vmem:[%s3327 + $0x100] sm:$0xff]
      %v3355 = vld [vmem:[%s3327 + $0x108] sm:$0xff]
      %v3356 = vld [vmem:[%s3327 + $0x118] sm:$0xff]
      %v3357 = vld [vmem:[%s3327 + $0x120] sm:$0xff]
      %v3358 = vld [vmem:[%s3327 + $0x128] sm:$0xff]
      %v3359 = vld [vmem:[%s3327 + $0x130] sm:$0xff]
      %v3360 = vld [vmem:[%s3327 + $0x140] sm:$0xff]
      %v3361 = vld [vmem:[%s3327 + $0x148] sm:$0xff]
      %v3362 = vld [vmem:[%s3327 + $0x150] sm:$0xff]
      %v3363 = vld [vmem:[%s3327 + $0x158] sm:$0xff]
      %v3364 = vld [vmem:[%s3327 + $0x168] sm:$0xff]
      %v3365 = vld [vmem:[%s3327 + $0x170] sm:$0xff]
      %v3366 = vld [vmem:[%s3327 + $0x178] sm:$0xff]
      %v3367 = vld [vmem:[%s3327 + $0x180] sm:$0xff]
      %v3368 = vld [vmem:[%s3327 + $0x190] sm:$0xff]
      %v3369 = vld [vmem:[%s3327 + $0x198] sm:$0xff]
      %v3370 = vld [vmem:[%s3327 + $0x1a0] sm:$0xff]
      %v3371 = vld [vmem:[%s3327 + $0x1a8] sm:$0xff]
      %v3372 = vld [vmem:[%s3327 + $0x1b8] sm:$0xff]
      %v3373 = vld [vmem:[%s3327 + $0x1c0] sm:$0xff]
      %v3374 = vld [vmem:[%s3327 + $0x1c8] sm:$0xff]
      %v3375 = vld [vmem:[%s3327 + $0x1d0] sm:$0xff]
      %v3376 = vld [vmem:[%s3327 + $0x1e0] sm:$0xff]
      %v3377 = vld [vmem:[%s3327 + $0x1e8] sm:$0xff]
      %v3378 = vld [vmem:[%s3327 + $0x1f0] sm:$0xff]
      %v3379 = vld [vmem:[%s3327 + $0x1f8] sm:$0xff]
      %v3380 = vld [vmem:[%s3327 + $0x208] sm:$0xff]
      %v3381 = vld [vmem:[%s3327 + $0x210] sm:$0xff]
      %v3382 = vld [vmem:[%s3327 + $0x218] sm:$0xff]
      %v3383 = vld [vmem:[%s3327 + $0x220] sm:$0xff]
      %v3384 = vld [vmem:[%s3327 + $0x230] sm:$0xff]
      %v3385 = vld [vmem:[%s3327 + $0x238] sm:$0xff]
      %v3386 = vld [vmem:[%s3327 + $0x240] sm:$0xff]
      %v3387 = vld [vmem:[%s3327 + $0x248] sm:$0xff]
      %v3388 = vld [vmem:[%s3327 + $0x258] sm:$0xff]
      %v3389 = vld [vmem:[%s3327 + $0x260] sm:$0xff]
      %v3390 = vld [vmem:[%s3327 + $0x268] sm:$0xff]
      %v3391 = vld [vmem:[%s3327 + $0x270] sm:$0xff]
      %v3392 = vlaneseq
      %v3393 = vshrl.u32 %v3392, 7
      %v3394 = vsub.s32 3, %v3393
      %v3395 = vrot.slane %v1952, %v3394
      %v3396 = vmul.f32 %v3328, %v3395
      %v3397 = vmul.f32 %v3329, %v3395
      %v3398 = vmul.f32 %v3330, %v3395
      %v3399 = vmul.f32 %v3331, %v3395
      %v3400 = vmul.f32 %v3332, %v3395
      %v3401 = vmul.f32 %v3333, %v3395
      %v3402 = vmul.f32 %v3334, %v3395
      %v3403 = vmul.f32 %v3335, %v3395
      %v3404 = vmul.f32 %v3336, %v3395
      %v3405 = vmul.f32 %v3337, %v3395
      %v3406 = vmul.f32 %v3338, %v3395
      %v3407 = vmul.f32 %v3339, %v3395
      %v3408 = vmul.f32 %v3340, %v3395
      %v3409 = vmul.f32 %v3341, %v3395
      %v3410 = vmul.f32 %v3342, %v3395
      %v3411 = vmul.f32 %v3343, %v3395
      %v3412 = vmul.f32 %v3344, %v3395
      %v3413 = vmul.f32 %v3345, %v3395
      %v3414 = vmul.f32 %v3346, %v3395
      %v3415 = vmul.f32 %v3347, %v3395
      %v3416 = vmul.f32 %v3348, %v3395
      %v3417 = vmul.f32 %v3349, %v3395
      %v3418 = vmul.f32 %v3350, %v3395
      %v3419 = vmul.f32 %v3351, %v3395
      %v3420 = vmul.f32 %v3352, %v3395
      %v3421 = vmul.f32 %v3353, %v3395
      %v3422 = vmul.f32 %v3354, %v3395
      %v3423 = vmul.f32 %v3355, %v3395
      %v3424 = vmul.f32 %v3356, %v3395
      %v3425 = vmul.f32 %v3357, %v3395
      %v3426 = vmul.f32 %v3358, %v3395
      %v3427 = vmul.f32 %v3359, %v3395
      %v3428 = vmul.f32 %v3360, %v3395
      %v3429 = vmul.f32 %v3361, %v3395
      %v3430 = vmul.f32 %v3362, %v3395
      %v3431 = vmul.f32 %v3363, %v3395
      %v3432 = vmul.f32 %v3364, %v3395
      %v3433 = vmul.f32 %v3365, %v3395
      %v3434 = vmul.f32 %v3366, %v3395
      %v3435 = vmul.f32 %v3367, %v3395
      %v3436 = vmul.f32 %v3368, %v3395
      %v3437 = vmul.f32 %v3369, %v3395
      %v3438 = vmul.f32 %v3370, %v3395
      %v3439 = vmul.f32 %v3371, %v3395
      %v3440 = vmul.f32 %v3372, %v3395
      %v3441 = vmul.f32 %v3373, %v3395
      %v3442 = vmul.f32 %v3374, %v3395
      %v3443 = vmul.f32 %v3375, %v3395
      %v3444 = vmul.f32 %v3376, %v3395
      %v3445 = vmul.f32 %v3377, %v3395
      %v3446 = vmul.f32 %v3378, %v3395
      %v3447 = vmul.f32 %v3379, %v3395
      %v3448 = vmul.f32 %v3380, %v3395
      %v3449 = vmul.f32 %v3381, %v3395
      %v3450 = vmul.f32 %v3382, %v3395
      %v3451 = vmul.f32 %v3383, %v3395
      %v3452 = vmul.f32 %v3384, %v3395
      %v3453 = vmul.f32 %v3385, %v3395
      %v3454 = vmul.f32 %v3386, %v3395
      %v3455 = vmul.f32 %v3387, %v3395
      %v3456 = vmul.f32 %v3388, %v3395
      %v3457 = vmul.f32 %v3389, %v3395
      %v3458 = vmul.f32 %v3390, %v3395
      %v3459 = vmul.f32 %v3391, %v3395
      %v3460 = vadd.f32 %v3263, %v3396
      %v3461 = vadd.f32 %v3264, %v3397
      %v3462 = vadd.f32 %v3265, %v3398
      %v3463 = vadd.f32 %v3266, %v3399
      %v3464 = vadd.f32 %v3267, %v3400
      %v3465 = vadd.f32 %v3268, %v3401
      %v3466 = vadd.f32 %v3269, %v3402
      %v3467 = vadd.f32 %v3270, %v3403
      %v3468 = vadd.f32 %v3271, %v3404
      %v3469 = vadd.f32 %v3272, %v3405
      %v3470 = vadd.f32 %v3273, %v3406
      %v3471 = vadd.f32 %v3274, %v3407
      %v3472 = vadd.f32 %v3275, %v3408
      %v3473 = vadd.f32 %v3276, %v3409
      %v3474 = vadd.f32 %v3277, %v3410
      %v3475 = vadd.f32 %v3278, %v3411
      %v3476 = vadd.f32 %v3279, %v3412
      %v3477 = vadd.f32 %v3280, %v3413
      %v3478 = vadd.f32 %v3281, %v3414
      %v3479 = vadd.f32 %v3282, %v3415
      %v3480 = vadd.f32 %v3283, %v3416
      %v3481 = vadd.f32 %v3284, %v3417
      %v3482 = vadd.f32 %v3285, %v3418
      %v3483 = vadd.f32 %v3286, %v3419
      %v3484 = vadd.f32 %v3287, %v3420
      %v3485 = vadd.f32 %v3288, %v3421
      %v3486 = vadd.f32 %v3289, %v3422
      %v3487 = vadd.f32 %v3290, %v3423
      %v3488 = vadd.f32 %v3291, %v3424
      %v3489 = vadd.f32 %v3292, %v3425
      %v3490 = vadd.f32 %v3293, %v3426
      %v3491 = vadd.f32 %v3294, %v3427
      %v3492 = vadd.f32 %v3295, %v3428
      %v3493 = vadd.f32 %v3296, %v3429
      %v3494 = vadd.f32 %v3297, %v3430
      %v3495 = vadd.f32 %v3298, %v3431
      %v3496 = vadd.f32 %v3299, %v3432
      %v3497 = vadd.f32 %v3300, %v3433
      %v3498 = vadd.f32 %v3301, %v3434
      %v3499 = vadd.f32 %v3302, %v3435
      %v3500 = vadd.f32 %v3303, %v3436
      %v3501 = vadd.f32 %v3304, %v3437
      %v3502 = vadd.f32 %v3305, %v3438
      %v3503 = vadd.f32 %v3306, %v3439
      %v3504 = vadd.f32 %v3307, %v3440
      %v3505 = vadd.f32 %v3308, %v3441
      %v3506 = vadd.f32 %v3309, %v3442
      %v3507 = vadd.f32 %v3310, %v3443
      %v3508 = vadd.f32 %v3311, %v3444
      %v3509 = vadd.f32 %v3312, %v3445
      %v3510 = vadd.f32 %v3313, %v3446
      %v3511 = vadd.f32 %v3314, %v3447
      %v3512 = vadd.f32 %v3315, %v3448
      %v3513 = vadd.f32 %v3316, %v3449
      %v3514 = vadd.f32 %v3317, %v3450
      %v3515 = vadd.f32 %v3318, %v3451
      %v3516 = vadd.f32 %v3319, %v3452
      %v3517 = vadd.f32 %v3320, %v3453
      %v3518 = vadd.f32 %v3321, %v3454
      %v3519 = vadd.f32 %v3322, %v3455
      %v3520 = vadd.f32 %v3323, %v3456
      %v3521 = vadd.f32 %v3324, %v3457
      %v3522 = vadd.f32 %v3325, %v3458
      %v3523 = vadd.f32 %v3326, %v3459
      %v3524 = vld [vmem:[%s3130 + $0x1] sm:$0xff]
      %v3525 = vld [vmem:[%s3130 + $0x9] sm:$0xff]
      %v3526 = vld [vmem:[%s3130 + $0x11] sm:$0xff]
      %v3527 = vld [vmem:[%s3130 + $0x19] sm:$0xff]
      %v3528 = vld [vmem:[%s3130 + $0x29] sm:$0xff]
      %v3529 = vld [vmem:[%s3130 + $0x31] sm:$0xff]
      %v3530 = vld [vmem:[%s3130 + $0x39] sm:$0xff]
      %v3531 = vld [vmem:[%s3130 + $0x41] sm:$0xff]
      %v3532 = vld [vmem:[%s3130 + $0x51] sm:$0xff]
      %v3533 = vld [vmem:[%s3130 + $0x59] sm:$0xff]
      %v3534 = vld [vmem:[%s3130 + $0x61] sm:$0xff]
      %v3535 = vld [vmem:[%s3130 + $0x69] sm:$0xff]
      %v3536 = vld [vmem:[%s3130 + $0x79] sm:$0xff]
      %v3537 = vld [vmem:[%s3130 + $0x81] sm:$0xff]
      %v3538 = vld [vmem:[%s3130 + $0x89] sm:$0xff]
      %v3539 = vld [vmem:[%s3130 + $0x91] sm:$0xff]
      %v3540 = vld [vmem:[%s3130 + $0xa1] sm:$0xff]
      %v3541 = vld [vmem:[%s3130 + $0xa9] sm:$0xff]
      %v3542 = vld [vmem:[%s3130 + $0xb1] sm:$0xff]
      %v3543 = vld [vmem:[%s3130 + $0xb9] sm:$0xff]
      %v3544 = vld [vmem:[%s3130 + $0xc9] sm:$0xff]
      %v3545 = vld [vmem:[%s3130 + $0xd1] sm:$0xff]
      %v3546 = vld [vmem:[%s3130 + $0xd9] sm:$0xff]
      %v3547 = vld [vmem:[%s3130 + $0xe1] sm:$0xff]
      %v3548 = vld [vmem:[%s3130 + $0xf1] sm:$0xff]
      %v3549 = vld [vmem:[%s3130 + $0xf9] sm:$0xff]
      %v3550 = vld [vmem:[%s3130 + $0x101] sm:$0xff]
      %v3551 = vld [vmem:[%s3130 + $0x109] sm:$0xff]
      %v3552 = vld [vmem:[%s3130 + $0x119] sm:$0xff]
      %v3553 = vld [vmem:[%s3130 + $0x121] sm:$0xff]
      %v3554 = vld [vmem:[%s3130 + $0x129] sm:$0xff]
      %v3555 = vld [vmem:[%s3130 + $0x131] sm:$0xff]
      %v3556 = vld [vmem:[%s3130 + $0x141] sm:$0xff]
      %v3557 = vld [vmem:[%s3130 + $0x149] sm:$0xff]
      %v3558 = vld [vmem:[%s3130 + $0x151] sm:$0xff]
      %v3559 = vld [vmem:[%s3130 + $0x159] sm:$0xff]
      %v3560 = vld [vmem:[%s3130 + $0x169] sm:$0xff]
      %v3561 = vld [vmem:[%s3130 + $0x171] sm:$0xff]
      %v3562 = vld [vmem:[%s3130 + $0x179] sm:$0xff]
      %v3563 = vld [vmem:[%s3130 + $0x181] sm:$0xff]
      %v3564 = vld [vmem:[%s3130 + $0x191] sm:$0xff]
      %v3565 = vld [vmem:[%s3130 + $0x199] sm:$0xff]
      %v3566 = vld [vmem:[%s3130 + $0x1a1] sm:$0xff]
      %v3567 = vld [vmem:[%s3130 + $0x1a9] sm:$0xff]
      %v3568 = vld [vmem:[%s3130 + $0x1b9] sm:$0xff]
      %v3569 = vld [vmem:[%s3130 + $0x1c1] sm:$0xff]
      %v3570 = vld [vmem:[%s3130 + $0x1c9] sm:$0xff]
      %v3571 = vld [vmem:[%s3130 + $0x1d1] sm:$0xff]
      %v3572 = vld [vmem:[%s3130 + $0x1e1] sm:$0xff]
      %v3573 = vld [vmem:[%s3130 + $0x1e9] sm:$0xff]
      %v3574 = vld [vmem:[%s3130 + $0x1f1] sm:$0xff]
      %v3575 = vld [vmem:[%s3130 + $0x1f9] sm:$0xff]
      %v3576 = vld [vmem:[%s3130 + $0x209] sm:$0xff]
      %v3577 = vld [vmem:[%s3130 + $0x211] sm:$0xff]
      %v3578 = vld [vmem:[%s3130 + $0x219] sm:$0xff]
      %v3579 = vld [vmem:[%s3130 + $0x221] sm:$0xff]
      %v3580 = vld [vmem:[%s3130 + $0x231] sm:$0xff]
      %v3581 = vld [vmem:[%s3130 + $0x239] sm:$0xff]
      %v3582 = vld [vmem:[%s3130 + $0x241] sm:$0xff]
      %v3583 = vld [vmem:[%s3130 + $0x249] sm:$0xff]
      %v3584 = vld [vmem:[%s3130 + $0x259] sm:$0xff]
      %v3585 = vld [vmem:[%s3130 + $0x261] sm:$0xff]
      %v3586 = vld [vmem:[%s3130 + $0x269] sm:$0xff]
      %v3587 = vld [vmem:[%s3130 + $0x271] sm:$0xff]
      %v3588 = vlaneseq
      %v3589 = vshrl.u32 %v3588, 7
      %v3590 = vsub.s32 4, %v3589
      %v3591 = vrot.slane %v1949, %v3590
      %v3592 = vmul.f32 %v3524, %v3591
      %v3593 = vmul.f32 %v3525, %v3591
      %v3594 = vmul.f32 %v3526, %v3591
      %v3595 = vmul.f32 %v3527, %v3591
      %v3596 = vmul.f32 %v3528, %v3591
      %v3597 = vmul.f32 %v3529, %v3591
      %v3598 = vmul.f32 %v3530, %v3591
      %v3599 = vmul.f32 %v3531, %v3591
      %v3600 = vmul.f32 %v3532, %v3591
      %v3601 = vmul.f32 %v3533, %v3591
      %v3602 = vmul.f32 %v3534, %v3591
      %v3603 = vmul.f32 %v3535, %v3591
      %v3604 = vmul.f32 %v3536, %v3591
      %v3605 = vmul.f32 %v3537, %v3591
      %v3606 = vmul.f32 %v3538, %v3591
      %v3607 = vmul.f32 %v3539, %v3591
      %v3608 = vmul.f32 %v3540, %v3591
      %v3609 = vmul.f32 %v3541, %v3591
      %v3610 = vmul.f32 %v3542, %v3591
      %v3611 = vmul.f32 %v3543, %v3591
      %v3612 = vmul.f32 %v3544, %v3591
      %v3613 = vmul.f32 %v3545, %v3591
      %v3614 = vmul.f32 %v3546, %v3591
      %v3615 = vmul.f32 %v3547, %v3591
      %v3616 = vmul.f32 %v3548, %v3591
      %v3617 = vmul.f32 %v3549, %v3591
      %v3618 = vmul.f32 %v3550, %v3591
      %v3619 = vmul.f32 %v3551, %v3591
      %v3620 = vmul.f32 %v3552, %v3591
      %v3621 = vmul.f32 %v3553, %v3591
      %v3622 = vmul.f32 %v3554, %v3591
      %v3623 = vmul.f32 %v3555, %v3591
      %v3624 = vmul.f32 %v3556, %v3591
      %v3625 = vmul.f32 %v3557, %v3591
      %v3626 = vmul.f32 %v3558, %v3591
      %v3627 = vmul.f32 %v3559, %v3591
      %v3628 = vmul.f32 %v3560, %v3591
      %v3629 = vmul.f32 %v3561, %v3591
      %v3630 = vmul.f32 %v3562, %v3591
      %v3631 = vmul.f32 %v3563, %v3591
      %v3632 = vmul.f32 %v3564, %v3591
      %v3633 = vmul.f32 %v3565, %v3591
      %v3634 = vmul.f32 %v3566, %v3591
      %v3635 = vmul.f32 %v3567, %v3591
      %v3636 = vmul.f32 %v3568, %v3591
      %v3637 = vmul.f32 %v3569, %v3591
      %v3638 = vmul.f32 %v3570, %v3591
      %v3639 = vmul.f32 %v3571, %v3591
      %v3640 = vmul.f32 %v3572, %v3591
      %v3641 = vmul.f32 %v3573, %v3591
      %v3642 = vmul.f32 %v3574, %v3591
      %v3643 = vmul.f32 %v3575, %v3591
      %v3644 = vmul.f32 %v3576, %v3591
      %v3645 = vmul.f32 %v3577, %v3591
      %v3646 = vmul.f32 %v3578, %v3591
      %v3647 = vmul.f32 %v3579, %v3591
      %v3648 = vmul.f32 %v3580, %v3591
      %v3649 = vmul.f32 %v3581, %v3591
      %v3650 = vmul.f32 %v3582, %v3591
      %v3651 = vmul.f32 %v3583, %v3591
      %v3652 = vmul.f32 %v3584, %v3591
      %v3653 = vmul.f32 %v3585, %v3591
      %v3654 = vmul.f32 %v3586, %v3591
      %v3655 = vmul.f32 %v3587, %v3591
      %v3656 = vadd.f32 %v3460, %v3592
      %v3657 = vadd.f32 %v3461, %v3593
      %v3658 = vadd.f32 %v3462, %v3594
      %v3659 = vadd.f32 %v3463, %v3595
      %v3660 = vadd.f32 %v3464, %v3596
      %v3661 = vadd.f32 %v3465, %v3597
      %v3662 = vadd.f32 %v3466, %v3598
      %v3663 = vadd.f32 %v3467, %v3599
      %v3664 = vadd.f32 %v3468, %v3600
      %v3665 = vadd.f32 %v3469, %v3601
      %v3666 = vadd.f32 %v3470, %v3602
      %v3667 = vadd.f32 %v3471, %v3603
      %v3668 = vadd.f32 %v3472, %v3604
      %v3669 = vadd.f32 %v3473, %v3605
      %v3670 = vadd.f32 %v3474, %v3606
      %v3671 = vadd.f32 %v3475, %v3607
      %v3672 = vadd.f32 %v3476, %v3608
      %v3673 = vadd.f32 %v3477, %v3609
      %v3674 = vadd.f32 %v3478, %v3610
      %v3675 = vadd.f32 %v3479, %v3611
      %v3676 = vadd.f32 %v3480, %v3612
      %v3677 = vadd.f32 %v3481, %v3613
      %v3678 = vadd.f32 %v3482, %v3614
      %v3679 = vadd.f32 %v3483, %v3615
      %v3680 = vadd.f32 %v3484, %v3616
      %v3681 = vadd.f32 %v3485, %v3617
      %v3682 = vadd.f32 %v3486, %v3618
      %v3683 = vadd.f32 %v3487, %v3619
      %v3684 = vadd.f32 %v3488, %v3620
      %v3685 = vadd.f32 %v3489, %v3621
      %v3686 = vadd.f32 %v3490, %v3622
      %v3687 = vadd.f32 %v3491, %v3623
      %v3688 = vadd.f32 %v3492, %v3624
      %v3689 = vadd.f32 %v3493, %v3625
      %v3690 = vadd.f32 %v3494, %v3626
      %v3691 = vadd.f32 %v3495, %v3627
      %v3692 = vadd.f32 %v3496, %v3628
      %v3693 = vadd.f32 %v3497, %v3629
      %v3694 = vadd.f32 %v3498, %v3630
      %v3695 = vadd.f32 %v3499, %v3631
      %v3696 = vadd.f32 %v3500, %v3632
      %v3697 = vadd.f32 %v3501, %v3633
      %v3698 = vadd.f32 %v3502, %v3634
      %v3699 = vadd.f32 %v3503, %v3635
      %v3700 = vadd.f32 %v3504, %v3636
      %v3701 = vadd.f32 %v3505, %v3637
      %v3702 = vadd.f32 %v3506, %v3638
      %v3703 = vadd.f32 %v3507, %v3639
      %v3704 = vadd.f32 %v3508, %v3640
      %v3705 = vadd.f32 %v3509, %v3641
      %v3706 = vadd.f32 %v3510, %v3642
      %v3707 = vadd.f32 %v3511, %v3643
      %v3708 = vadd.f32 %v3512, %v3644
      %v3709 = vadd.f32 %v3513, %v3645
      %v3710 = vadd.f32 %v3514, %v3646
      %v3711 = vadd.f32 %v3515, %v3647
      %v3712 = vadd.f32 %v3516, %v3648
      %v3713 = vadd.f32 %v3517, %v3649
      %v3714 = vadd.f32 %v3518, %v3650
      %v3715 = vadd.f32 %v3519, %v3651
      %v3716 = vadd.f32 %v3520, %v3652
      %v3717 = vadd.f32 %v3521, %v3653
      %v3718 = vadd.f32 %v3522, %v3654
      %v3719 = vadd.f32 %v3523, %v3655
      %v3720 = vld [vmem:[%s3327 + $0x1] sm:$0xff]
      %v3721 = vld [vmem:[%s3327 + $0x9] sm:$0xff]
      %v3722 = vld [vmem:[%s3327 + $0x11] sm:$0xff]
      %v3723 = vld [vmem:[%s3327 + $0x19] sm:$0xff]
      %v3724 = vld [vmem:[%s3327 + $0x29] sm:$0xff]
      %v3725 = vld [vmem:[%s3327 + $0x31] sm:$0xff]
      %v3726 = vld [vmem:[%s3327 + $0x39] sm:$0xff]
      %v3727 = vld [vmem:[%s3327 + $0x41] sm:$0xff]
      %v3728 = vld [vmem:[%s3327 + $0x51] sm:$0xff]
      %v3729 = vld [vmem:[%s3327 + $0x59] sm:$0xff]
      %v3730 = vld [vmem:[%s3327 + $0x61] sm:$0xff]
      %v3731 = vld [vmem:[%s3327 + $0x69] sm:$0xff]
      %v3732 = vld [vmem:[%s3327 + $0x79] sm:$0xff]
      %v3733 = vld [vmem:[%s3327 + $0x81] sm:$0xff]
      %v3734 = vld [vmem:[%s3327 + $0x89] sm:$0xff]
      %v3735 = vld [vmem:[%s3327 + $0x91] sm:$0xff]
      %v3736 = vld [vmem:[%s3327 + $0xa1] sm:$0xff]
      %v3737 = vld [vmem:[%s3327 + $0xa9] sm:$0xff]
      %v3738 = vld [vmem:[%s3327 + $0xb1] sm:$0xff]
      %v3739 = vld [vmem:[%s3327 + $0xb9] sm:$0xff]
      %v3740 = vld [vmem:[%s3327 + $0xc9] sm:$0xff]
      %v3741 = vld [vmem:[%s3327 + $0xd1] sm:$0xff]
      %v3742 = vld [vmem:[%s3327 + $0xd9] sm:$0xff]
      %v3743 = vld [vmem:[%s3327 + $0xe1] sm:$0xff]
      %v3744 = vld [vmem:[%s3327 + $0xf1] sm:$0xff]
      %v3745 = vld [vmem:[%s3327 + $0xf9] sm:$0xff]
      %v3746 = vld [vmem:[%s3327 + $0x101] sm:$0xff]
      %v3747 = vld [vmem:[%s3327 + $0x109] sm:$0xff]
      %v3748 = vld [vmem:[%s3327 + $0x119] sm:$0xff]
      %v3749 = vld [vmem:[%s3327 + $0x121] sm:$0xff]
      %v3750 = vld [vmem:[%s3327 + $0x129] sm:$0xff]
      %v3751 = vld [vmem:[%s3327 + $0x131] sm:$0xff]
      %v3752 = vld [vmem:[%s3327 + $0x141] sm:$0xff]
      %v3753 = vld [vmem:[%s3327 + $0x149] sm:$0xff]
      %v3754 = vld [vmem:[%s3327 + $0x151] sm:$0xff]
      %v3755 = vld [vmem:[%s3327 + $0x159] sm:$0xff]
      %v3756 = vld [vmem:[%s3327 + $0x169] sm:$0xff]
      %v3757 = vld [vmem:[%s3327 + $0x171] sm:$0xff]
      %v3758 = vld [vmem:[%s3327 + $0x179] sm:$0xff]
      %v3759 = vld [vmem:[%s3327 + $0x181] sm:$0xff]
      %v3760 = vld [vmem:[%s3327 + $0x191] sm:$0xff]
      %v3761 = vld [vmem:[%s3327 + $0x199] sm:$0xff]
      %v3762 = vld [vmem:[%s3327 + $0x1a1] sm:$0xff]
      %v3763 = vld [vmem:[%s3327 + $0x1a9] sm:$0xff]
      %v3764 = vld [vmem:[%s3327 + $0x1b9] sm:$0xff]
      %v3765 = vld [vmem:[%s3327 + $0x1c1] sm:$0xff]
      %v3766 = vld [vmem:[%s3327 + $0x1c9] sm:$0xff]
      %v3767 = vld [vmem:[%s3327 + $0x1d1] sm:$0xff]
      %v3768 = vld [vmem:[%s3327 + $0x1e1] sm:$0xff]
      %v3769 = vld [vmem:[%s3327 + $0x1e9] sm:$0xff]
      %v3770 = vld [vmem:[%s3327 + $0x1f1] sm:$0xff]
      %v3771 = vld [vmem:[%s3327 + $0x1f9] sm:$0xff]
      %v3772 = vld [vmem:[%s3327 + $0x209] sm:$0xff]
      %v3773 = vld [vmem:[%s3327 + $0x211] sm:$0xff]
      %v3774 = vld [vmem:[%s3327 + $0x219] sm:$0xff]
      %v3775 = vld [vmem:[%s3327 + $0x221] sm:$0xff]
      %v3776 = vld [vmem:[%s3327 + $0x231] sm:$0xff]
      %v3777 = vld [vmem:[%s3327 + $0x239] sm:$0xff]
      %v3778 = vld [vmem:[%s3327 + $0x241] sm:$0xff]
      %v3779 = vld [vmem:[%s3327 + $0x249] sm:$0xff]
      %v3780 = vld [vmem:[%s3327 + $0x259] sm:$0xff]
      %v3781 = vld [vmem:[%s3327 + $0x261] sm:$0xff]
      %v3782 = vld [vmem:[%s3327 + $0x269] sm:$0xff]
      %v3783 = vld [vmem:[%s3327 + $0x271] sm:$0xff]
      %v3784 = vlaneseq
      %v3785 = vshrl.u32 %v3784, 7
      %v3786 = vsub.s32 4, %v3785
      %v3787 = vrot.slane %v1952, %v3786
      %v3788 = vmul.f32 %v3720, %v3787
      %v3789 = vmul.f32 %v3721, %v3787
      %v3790 = vmul.f32 %v3722, %v3787
      %v3791 = vmul.f32 %v3723, %v3787
      %v3792 = vmul.f32 %v3724, %v3787
      %v3793 = vmul.f32 %v3725, %v3787
      %v3794 = vmul.f32 %v3726, %v3787
      %v3795 = vmul.f32 %v3727, %v3787
      %v3796 = vmul.f32 %v3728, %v3787
      %v3797 = vmul.f32 %v3729, %v3787
      %v3798 = vmul.f32 %v3730, %v3787
      %v3799 = vmul.f32 %v3731, %v3787
      %v3800 = vmul.f32 %v3732, %v3787
      %v3801 = vmul.f32 %v3733, %v3787
      %v3802 = vmul.f32 %v3734, %v3787
      %v3803 = vmul.f32 %v3735, %v3787
      %v3804 = vmul.f32 %v3736, %v3787
      %v3805 = vmul.f32 %v3737, %v3787
      %v3806 = vmul.f32 %v3738, %v3787
      %v3807 = vmul.f32 %v3739, %v3787
      %v3808 = vmul.f32 %v3740, %v3787
      %v3809 = vmul.f32 %v3741, %v3787
      %v3810 = vmul.f32 %v3742, %v3787
      %v3811 = vmul.f32 %v3743, %v3787
      %v3812 = vmul.f32 %v3744, %v3787
      %v3813 = vmul.f32 %v3745, %v3787
      %v3814 = vmul.f32 %v3746, %v3787
      %v3815 = vmul.f32 %v3747, %v3787
      %v3816 = vmul.f32 %v3748, %v3787
      %v3817 = vmul.f32 %v3749, %v3787
      %v3818 = vmul.f32 %v3750, %v3787
      %v3819 = vmul.f32 %v3751, %v3787
      %v3820 = vmul.f32 %v3752, %v3787
      %v3821 = vmul.f32 %v3753, %v3787
      %v3822 = vmul.f32 %v3754, %v3787
      %v3823 = vmul.f32 %v3755, %v3787
      %v3824 = vmul.f32 %v3756, %v3787
      %v3825 = vmul.f32 %v3757, %v3787
      %v3826 = vmul.f32 %v3758, %v3787
      %v3827 = vmul.f32 %v3759, %v3787
      %v3828 = vmul.f32 %v3760, %v3787
      %v3829 = vmul.f32 %v3761, %v3787
      %v3830 = vmul.f32 %v3762, %v3787
      %v3831 = vmul.f32 %v3763, %v3787
      %v3832 = vmul.f32 %v3764, %v3787
      %v3833 = vmul.f32 %v3765, %v3787
      %v3834 = vmul.f32 %v3766, %v3787
      %v3835 = vmul.f32 %v3767, %v3787
      %v3836 = vmul.f32 %v3768, %v3787
      %v3837 = vmul.f32 %v3769, %v3787
      %v3838 = vmul.f32 %v3770, %v3787
      %v3839 = vmul.f32 %v3771, %v3787
      %v3840 = vmul.f32 %v3772, %v3787
      %v3841 = vmul.f32 %v3773, %v3787
      %v3842 = vmul.f32 %v3774, %v3787
      %v3843 = vmul.f32 %v3775, %v3787
      %v3844 = vmul.f32 %v3776, %v3787
      %v3845 = vmul.f32 %v3777, %v3787
      %v3846 = vmul.f32 %v3778, %v3787
      %v3847 = vmul.f32 %v3779, %v3787
      %v3848 = vmul.f32 %v3780, %v3787
      %v3849 = vmul.f32 %v3781, %v3787
      %v3850 = vmul.f32 %v3782, %v3787
      %v3851 = vmul.f32 %v3783, %v3787
      %v3852 = vadd.f32 %v3656, %v3788
      %v3853 = vadd.f32 %v3657, %v3789
      %v3854 = vadd.f32 %v3658, %v3790
      %v3855 = vadd.f32 %v3659, %v3791
      %v3856 = vadd.f32 %v3660, %v3792
      %v3857 = vadd.f32 %v3661, %v3793
      %v3858 = vadd.f32 %v3662, %v3794
      %v3859 = vadd.f32 %v3663, %v3795
      %v3860 = vadd.f32 %v3664, %v3796
      %v3861 = vadd.f32 %v3665, %v3797
      %v3862 = vadd.f32 %v3666, %v3798
      %v3863 = vadd.f32 %v3667, %v3799
      %v3864 = vadd.f32 %v3668, %v3800
      %v3865 = vadd.f32 %v3669, %v3801
      %v3866 = vadd.f32 %v3670, %v3802
      %v3867 = vadd.f32 %v3671, %v3803
      %v3868 = vadd.f32 %v3672, %v3804
      %v3869 = vadd.f32 %v3673, %v3805
      %v3870 = vadd.f32 %v3674, %v3806
      %v3871 = vadd.f32 %v3675, %v3807
      %v3872 = vadd.f32 %v3676, %v3808
      %v3873 = vadd.f32 %v3677, %v3809
      %v3874 = vadd.f32 %v3678, %v3810
      %v3875 = vadd.f32 %v3679, %v3811
      %v3876 = vadd.f32 %v3680, %v3812
      %v3877 = vadd.f32 %v3681, %v3813
      %v3878 = vadd.f32 %v3682, %v3814
      %v3879 = vadd.f32 %v3683, %v3815
      %v3880 = vadd.f32 %v3684, %v3816
      %v3881 = vadd.f32 %v3685, %v3817
      %v3882 = vadd.f32 %v3686, %v3818
      %v3883 = vadd.f32 %v3687, %v3819
      %v3884 = vadd.f32 %v3688, %v3820
      %v3885 = vadd.f32 %v3689, %v3821
      %v3886 = vadd.f32 %v3690, %v3822
      %v3887 = vadd.f32 %v3691, %v3823
      %v3888 = vadd.f32 %v3692, %v3824
      %v3889 = vadd.f32 %v3693, %v3825
      %v3890 = vadd.f32 %v3694, %v3826
      %v3891 = vadd.f32 %v3695, %v3827
      %v3892 = vadd.f32 %v3696, %v3828
      %v3893 = vadd.f32 %v3697, %v3829
      %v3894 = vadd.f32 %v3698, %v3830
      %v3895 = vadd.f32 %v3699, %v3831
      %v3896 = vadd.f32 %v3700, %v3832
      %v3897 = vadd.f32 %v3701, %v3833
      %v3898 = vadd.f32 %v3702, %v3834
      %v3899 = vadd.f32 %v3703, %v3835
      %v3900 = vadd.f32 %v3704, %v3836
      %v3901 = vadd.f32 %v3705, %v3837
      %v3902 = vadd.f32 %v3706, %v3838
      %v3903 = vadd.f32 %v3707, %v3839
      %v3904 = vadd.f32 %v3708, %v3840
      %v3905 = vadd.f32 %v3709, %v3841
      %v3906 = vadd.f32 %v3710, %v3842
      %v3907 = vadd.f32 %v3711, %v3843
      %v3908 = vadd.f32 %v3712, %v3844
      %v3909 = vadd.f32 %v3713, %v3845
      %v3910 = vadd.f32 %v3714, %v3846
      %v3911 = vadd.f32 %v3715, %v3847
      %v3912 = vadd.f32 %v3716, %v3848
      %v3913 = vadd.f32 %v3717, %v3849
      %v3914 = vadd.f32 %v3718, %v3850
      %v3915 = vadd.f32 %v3719, %v3851
      %v3916 = vld [vmem:[%s3130 + $0x2] sm:$0xff]
      %v3917 = vld [vmem:[%s3130 + $0xa] sm:$0xff]
      %v3918 = vld [vmem:[%s3130 + $0x12] sm:$0xff]
      %v3919 = vld [vmem:[%s3130 + $0x1a] sm:$0xff]
      %v3920 = vld [vmem:[%s3130 + $0x2a] sm:$0xff]
      %v3921 = vld [vmem:[%s3130 + $0x32] sm:$0xff]
      %v3922 = vld [vmem:[%s3130 + $0x3a] sm:$0xff]
      %v3923 = vld [vmem:[%s3130 + $0x42] sm:$0xff]
      %v3924 = vld [vmem:[%s3130 + $0x52] sm:$0xff]
      %v3925 = vld [vmem:[%s3130 + $0x5a] sm:$0xff]
      %v3926 = vld [vmem:[%s3130 + $0x62] sm:$0xff]
      %v3927 = vld [vmem:[%s3130 + $0x6a] sm:$0xff]
      %v3928 = vld [vmem:[%s3130 + $0x7a] sm:$0xff]
      %v3929 = vld [vmem:[%s3130 + $0x82] sm:$0xff]
      %v3930 = vld [vmem:[%s3130 + $0x8a] sm:$0xff]
      %v3931 = vld [vmem:[%s3130 + $0x92] sm:$0xff]
      %v3932 = vld [vmem:[%s3130 + $0xa2] sm:$0xff]
      %v3933 = vld [vmem:[%s3130 + $0xaa] sm:$0xff]
      %v3934 = vld [vmem:[%s3130 + $0xb2] sm:$0xff]
      %v3935 = vld [vmem:[%s3130 + $0xba] sm:$0xff]
      %v3936 = vld [vmem:[%s3130 + $0xca] sm:$0xff]
      %v3937 = vld [vmem:[%s3130 + $0xd2] sm:$0xff]
      %v3938 = vld [vmem:[%s3130 + $0xda] sm:$0xff]
      %v3939 = vld [vmem:[%s3130 + $0xe2] sm:$0xff]
      %v3940 = vld [vmem:[%s3130 + $0xf2] sm:$0xff]
      %v3941 = vld [vmem:[%s3130 + $0xfa] sm:$0xff]
      %v3942 = vld [vmem:[%s3130 + $0x102] sm:$0xff]
      %v3943 = vld [vmem:[%s3130 + $0x10a] sm:$0xff]
      %v3944 = vld [vmem:[%s3130 + $0x11a] sm:$0xff]
      %v3945 = vld [vmem:[%s3130 + $0x122] sm:$0xff]
      %v3946 = vld [vmem:[%s3130 + $0x12a] sm:$0xff]
      %v3947 = vld [vmem:[%s3130 + $0x132] sm:$0xff]
      %v3948 = vld [vmem:[%s3130 + $0x142] sm:$0xff]
      %v3949 = vld [vmem:[%s3130 + $0x14a] sm:$0xff]
      %v3950 = vld [vmem:[%s3130 + $0x152] sm:$0xff]
      %v3951 = vld [vmem:[%s3130 + $0x15a] sm:$0xff]
      %v3952 = vld [vmem:[%s3130 + $0x16a] sm:$0xff]
      %v3953 = vld [vmem:[%s3130 + $0x172] sm:$0xff]
      %v3954 = vld [vmem:[%s3130 + $0x17a] sm:$0xff]
      %v3955 = vld [vmem:[%s3130 + $0x182] sm:$0xff]
      %v3956 = vld [vmem:[%s3130 + $0x192] sm:$0xff]
      %v3957 = vld [vmem:[%s3130 + $0x19a] sm:$0xff]
      %v3958 = vld [vmem:[%s3130 + $0x1a2] sm:$0xff]
      %v3959 = vld [vmem:[%s3130 + $0x1aa] sm:$0xff]
      %v3960 = vld [vmem:[%s3130 + $0x1ba] sm:$0xff]
      %v3961 = vld [vmem:[%s3130 + $0x1c2] sm:$0xff]
      %v3962 = vld [vmem:[%s3130 + $0x1ca] sm:$0xff]
      %v3963 = vld [vmem:[%s3130 + $0x1d2] sm:$0xff]
      %v3964 = vld [vmem:[%s3130 + $0x1e2] sm:$0xff]
      %v3965 = vld [vmem:[%s3130 + $0x1ea] sm:$0xff]
      %v3966 = vld [vmem:[%s3130 + $0x1f2] sm:$0xff]
      %v3967 = vld [vmem:[%s3130 + $0x1fa] sm:$0xff]
      %v3968 = vld [vmem:[%s3130 + $0x20a] sm:$0xff]
      %v3969 = vld [vmem:[%s3130 + $0x212] sm:$0xff]
      %v3970 = vld [vmem:[%s3130 + $0x21a] sm:$0xff]
      %v3971 = vld [vmem:[%s3130 + $0x222] sm:$0xff]
      %v3972 = vld [vmem:[%s3130 + $0x232] sm:$0xff]
      %v3973 = vld [vmem:[%s3130 + $0x23a] sm:$0xff]
      %v3974 = vld [vmem:[%s3130 + $0x242] sm:$0xff]
      %v3975 = vld [vmem:[%s3130 + $0x24a] sm:$0xff]
      %v3976 = vld [vmem:[%s3130 + $0x25a] sm:$0xff]
      %v3977 = vld [vmem:[%s3130 + $0x262] sm:$0xff]
      %v3978 = vld [vmem:[%s3130 + $0x26a] sm:$0xff]
      %v3979 = vld [vmem:[%s3130 + $0x272] sm:$0xff]
      %v3980 = vlaneseq
      %v3981 = vshrl.u32 %v3980, 7
      %v3982 = vsub.s32 5, %v3981
      %v3983 = vrot.slane %v1949, %v3982
      %v3984 = vmul.f32 %v3916, %v3983
      %v3985 = vmul.f32 %v3917, %v3983
      %v3986 = vmul.f32 %v3918, %v3983
      %v3987 = vmul.f32 %v3919, %v3983
      %v3988 = vmul.f32 %v3920, %v3983
      %v3989 = vmul.f32 %v3921, %v3983
      %v3990 = vmul.f32 %v3922, %v3983
      %v3991 = vmul.f32 %v3923, %v3983
      %v3992 = vmul.f32 %v3924, %v3983
      %v3993 = vmul.f32 %v3925, %v3983
      %v3994 = vmul.f32 %v3926, %v3983
      %v3995 = vmul.f32 %v3927, %v3983
      %v3996 = vmul.f32 %v3928, %v3983
      %v3997 = vmul.f32 %v3929, %v3983
      %v3998 = vmul.f32 %v3930, %v3983
      %v3999 = vmul.f32 %v3931, %v3983
      %v4000 = vmul.f32 %v3932, %v3983
      %v4001 = vmul.f32 %v3933, %v3983
      %v4002 = vmul.f32 %v3934, %v3983
      %v4003 = vmul.f32 %v3935, %v3983
      %v4004 = vmul.f32 %v3936, %v3983
      %v4005 = vmul.f32 %v3937, %v3983
      %v4006 = vmul.f32 %v3938, %v3983
      %v4007 = vmul.f32 %v3939, %v3983
      %v4008 = vmul.f32 %v3940, %v3983
      %v4009 = vmul.f32 %v3941, %v3983
      %v4010 = vmul.f32 %v3942, %v3983
      %v4011 = vmul.f32 %v3943, %v3983
      %v4012 = vmul.f32 %v3944, %v3983
      %v4013 = vmul.f32 %v3945, %v3983
      %v4014 = vmul.f32 %v3946, %v3983
      %v4015 = vmul.f32 %v3947, %v3983
      %v4016 = vmul.f32 %v3948, %v3983
      %v4017 = vmul.f32 %v3949, %v3983
      %v4018 = vmul.f32 %v3950, %v3983
      %v4019 = vmul.f32 %v3951, %v3983
      %v4020 = vmul.f32 %v3952, %v3983
      %v4021 = vmul.f32 %v3953, %v3983
      %v4022 = vmul.f32 %v3954, %v3983
      %v4023 = vmul.f32 %v3955, %v3983
      %v4024 = vmul.f32 %v3956, %v3983
      %v4025 = vmul.f32 %v3957, %v3983
      %v4026 = vmul.f32 %v3958, %v3983
      %v4027 = vmul.f32 %v3959, %v3983
      %v4028 = vmul.f32 %v3960, %v3983
      %v4029 = vmul.f32 %v3961, %v3983
      %v4030 = vmul.f32 %v3962, %v3983
      %v4031 = vmul.f32 %v3963, %v3983
      %v4032 = vmul.f32 %v3964, %v3983
      %v4033 = vmul.f32 %v3965, %v3983
      %v4034 = vmul.f32 %v3966, %v3983
      %v4035 = vmul.f32 %v3967, %v3983
      %v4036 = vmul.f32 %v3968, %v3983
      %v4037 = vmul.f32 %v3969, %v3983
      %v4038 = vmul.f32 %v3970, %v3983
      %v4039 = vmul.f32 %v3971, %v3983
      %v4040 = vmul.f32 %v3972, %v3983
      %v4041 = vmul.f32 %v3973, %v3983
      %v4042 = vmul.f32 %v3974, %v3983
      %v4043 = vmul.f32 %v3975, %v3983
      %v4044 = vmul.f32 %v3976, %v3983
      %v4045 = vmul.f32 %v3977, %v3983
      %v4046 = vmul.f32 %v3978, %v3983
      %v4047 = vmul.f32 %v3979, %v3983
      %v4048 = vadd.f32 %v3852, %v3984
      %v4049 = vadd.f32 %v3853, %v3985
      %v4050 = vadd.f32 %v3854, %v3986
      %v4051 = vadd.f32 %v3855, %v3987
      %v4052 = vadd.f32 %v3856, %v3988
      %v4053 = vadd.f32 %v3857, %v3989
      %v4054 = vadd.f32 %v3858, %v3990
      %v4055 = vadd.f32 %v3859, %v3991
      %v4056 = vadd.f32 %v3860, %v3992
      %v4057 = vadd.f32 %v3861, %v3993
      %v4058 = vadd.f32 %v3862, %v3994
      %v4059 = vadd.f32 %v3863, %v3995
      %v4060 = vadd.f32 %v3864, %v3996
      %v4061 = vadd.f32 %v3865, %v3997
      %v4062 = vadd.f32 %v3866, %v3998
      %v4063 = vadd.f32 %v3867, %v3999
      %v4064 = vadd.f32 %v3868, %v4000
      %v4065 = vadd.f32 %v3869, %v4001
      %v4066 = vadd.f32 %v3870, %v4002
      %v4067 = vadd.f32 %v3871, %v4003
      %v4068 = vadd.f32 %v3872, %v4004
      %v4069 = vadd.f32 %v3873, %v4005
      %v4070 = vadd.f32 %v3874, %v4006
      %v4071 = vadd.f32 %v3875, %v4007
      %v4072 = vadd.f32 %v3876, %v4008
      %v4073 = vadd.f32 %v3877, %v4009
      %v4074 = vadd.f32 %v3878, %v4010
      %v4075 = vadd.f32 %v3879, %v4011
      %v4076 = vadd.f32 %v3880, %v4012
      %v4077 = vadd.f32 %v3881, %v4013
      %v4078 = vadd.f32 %v3882, %v4014
      %v4079 = vadd.f32 %v3883, %v4015
      %v4080 = vadd.f32 %v3884, %v4016
      %v4081 = vadd.f32 %v3885, %v4017
      %v4082 = vadd.f32 %v3886, %v4018
      %v4083 = vadd.f32 %v3887, %v4019
      %v4084 = vadd.f32 %v3888, %v4020
      %v4085 = vadd.f32 %v3889, %v4021
      %v4086 = vadd.f32 %v3890, %v4022
      %v4087 = vadd.f32 %v3891, %v4023
      %v4088 = vadd.f32 %v3892, %v4024
      %v4089 = vadd.f32 %v3893, %v4025
      %v4090 = vadd.f32 %v3894, %v4026
      %v4091 = vadd.f32 %v3895, %v4027
      %v4092 = vadd.f32 %v3896, %v4028
      %v4093 = vadd.f32 %v3897, %v4029
      %v4094 = vadd.f32 %v3898, %v4030
      %v4095 = vadd.f32 %v3899, %v4031
      %v4096 = vadd.f32 %v3900, %v4032
      %v4097 = vadd.f32 %v3901, %v4033
      %v4098 = vadd.f32 %v3902, %v4034
      %v4099 = vadd.f32 %v3903, %v4035
      %v4100 = vadd.f32 %v3904, %v4036
      %v4101 = vadd.f32 %v3905, %v4037
      %v4102 = vadd.f32 %v3906, %v4038
      %v4103 = vadd.f32 %v3907, %v4039
      %v4104 = vadd.f32 %v3908, %v4040
      %v4105 = vadd.f32 %v3909, %v4041
      %v4106 = vadd.f32 %v3910, %v4042
      %v4107 = vadd.f32 %v3911, %v4043
      %v4108 = vadd.f32 %v3912, %v4044
      %v4109 = vadd.f32 %v3913, %v4045
      %v4110 = vadd.f32 %v3914, %v4046
      %v4111 = vadd.f32 %v3915, %v4047
      %v4112 = vld [vmem:[%s3327 + $0x2] sm:$0xff]
      %v4113 = vld [vmem:[%s3327 + $0xa] sm:$0xff]
      %v4114 = vld [vmem:[%s3327 + $0x12] sm:$0xff]
      %v4115 = vld [vmem:[%s3327 + $0x1a] sm:$0xff]
      %v4116 = vld [vmem:[%s3327 + $0x2a] sm:$0xff]
      %v4117 = vld [vmem:[%s3327 + $0x32] sm:$0xff]
      %v4118 = vld [vmem:[%s3327 + $0x3a] sm:$0xff]
      %v4119 = vld [vmem:[%s3327 + $0x42] sm:$0xff]
      %v4120 = vld [vmem:[%s3327 + $0x52] sm:$0xff]
      %v4121 = vld [vmem:[%s3327 + $0x5a] sm:$0xff]
      %v4122 = vld [vmem:[%s3327 + $0x62] sm:$0xff]
      %v4123 = vld [vmem:[%s3327 + $0x6a] sm:$0xff]
      %v4124 = vld [vmem:[%s3327 + $0x7a] sm:$0xff]
      %v4125 = vld [vmem:[%s3327 + $0x82] sm:$0xff]
      %v4126 = vld [vmem:[%s3327 + $0x8a] sm:$0xff]
      %v4127 = vld [vmem:[%s3327 + $0x92] sm:$0xff]
      %v4128 = vld [vmem:[%s3327 + $0xa2] sm:$0xff]
      %v4129 = vld [vmem:[%s3327 + $0xaa] sm:$0xff]
      %v4130 = vld [vmem:[%s3327 + $0xb2] sm:$0xff]
      %v4131 = vld [vmem:[%s3327 + $0xba] sm:$0xff]
      %v4132 = vld [vmem:[%s3327 + $0xca] sm:$0xff]
      %v4133 = vld [vmem:[%s3327 + $0xd2] sm:$0xff]
      %v4134 = vld [vmem:[%s3327 + $0xda] sm:$0xff]
      %v4135 = vld [vmem:[%s3327 + $0xe2] sm:$0xff]
      %v4136 = vld [vmem:[%s3327 + $0xf2] sm:$0xff]
      %v4137 = vld [vmem:[%s3327 + $0xfa] sm:$0xff]
      %v4138 = vld [vmem:[%s3327 + $0x102] sm:$0xff]
      %v4139 = vld [vmem:[%s3327 + $0x10a] sm:$0xff]
      %v4140 = vld [vmem:[%s3327 + $0x11a] sm:$0xff]
      %v4141 = vld [vmem:[%s3327 + $0x122] sm:$0xff]
      %v4142 = vld [vmem:[%s3327 + $0x12a] sm:$0xff]
      %v4143 = vld [vmem:[%s3327 + $0x132] sm:$0xff]
      %v4144 = vld [vmem:[%s3327 + $0x142] sm:$0xff]
      %v4145 = vld [vmem:[%s3327 + $0x14a] sm:$0xff]
      %v4146 = vld [vmem:[%s3327 + $0x152] sm:$0xff]
      %v4147 = vld [vmem:[%s3327 + $0x15a] sm:$0xff]
      %v4148 = vld [vmem:[%s3327 + $0x16a] sm:$0xff]
      %v4149 = vld [vmem:[%s3327 + $0x172] sm:$0xff]
      %v4150 = vld [vmem:[%s3327 + $0x17a] sm:$0xff]
      %v4151 = vld [vmem:[%s3327 + $0x182] sm:$0xff]
      %v4152 = vld [vmem:[%s3327 + $0x192] sm:$0xff]
      %v4153 = vld [vmem:[%s3327 + $0x19a] sm:$0xff]
      %v4154 = vld [vmem:[%s3327 + $0x1a2] sm:$0xff]
      %v4155 = vld [vmem:[%s3327 + $0x1aa] sm:$0xff]
      %v4156 = vld [vmem:[%s3327 + $0x1ba] sm:$0xff]
      %v4157 = vld [vmem:[%s3327 + $0x1c2] sm:$0xff]
      %v4158 = vld [vmem:[%s3327 + $0x1ca] sm:$0xff]
      %v4159 = vld [vmem:[%s3327 + $0x1d2] sm:$0xff]
      %v4160 = vld [vmem:[%s3327 + $0x1e2] sm:$0xff]
      %v4161 = vld [vmem:[%s3327 + $0x1ea] sm:$0xff]
      %v4162 = vld [vmem:[%s3327 + $0x1f2] sm:$0xff]
      %v4163 = vld [vmem:[%s3327 + $0x1fa] sm:$0xff]
      %v4164 = vld [vmem:[%s3327 + $0x20a] sm:$0xff]
      %v4165 = vld [vmem:[%s3327 + $0x212] sm:$0xff]
      %v4166 = vld [vmem:[%s3327 + $0x21a] sm:$0xff]
      %v4167 = vld [vmem:[%s3327 + $0x222] sm:$0xff]
      %v4168 = vld [vmem:[%s3327 + $0x232] sm:$0xff]
      %v4169 = vld [vmem:[%s3327 + $0x23a] sm:$0xff]
      %v4170 = vld [vmem:[%s3327 + $0x242] sm:$0xff]
      %v4171 = vld [vmem:[%s3327 + $0x24a] sm:$0xff]
      %v4172 = vld [vmem:[%s3327 + $0x25a] sm:$0xff]
      %v4173 = vld [vmem:[%s3327 + $0x262] sm:$0xff]
      %v4174 = vld [vmem:[%s3327 + $0x26a] sm:$0xff]
      %v4175 = vld [vmem:[%s3327 + $0x272] sm:$0xff]
      %v4176 = vlaneseq
      %v4177 = vshrl.u32 %v4176, 7
      %v4178 = vsub.s32 5, %v4177
      %v4179 = vrot.slane %v1952, %v4178
      %v4180 = vmul.f32 %v4112, %v4179
      %v4181 = vmul.f32 %v4113, %v4179
      %v4182 = vmul.f32 %v4114, %v4179
      %v4183 = vmul.f32 %v4115, %v4179
      %v4184 = vmul.f32 %v4116, %v4179
      %v4185 = vmul.f32 %v4117, %v4179
      %v4186 = vmul.f32 %v4118, %v4179
      %v4187 = vmul.f32 %v4119, %v4179
      %v4188 = vmul.f32 %v4120, %v4179
      %v4189 = vmul.f32 %v4121, %v4179
      %v4190 = vmul.f32 %v4122, %v4179
      %v4191 = vmul.f32 %v4123, %v4179
      %v4192 = vmul.f32 %v4124, %v4179
      %v4193 = vmul.f32 %v4125, %v4179
      %v4194 = vmul.f32 %v4126, %v4179
      %v4195 = vmul.f32 %v4127, %v4179
      %v4196 = vmul.f32 %v4128, %v4179
      %v4197 = vmul.f32 %v4129, %v4179
      %v4198 = vmul.f32 %v4130, %v4179
      %v4199 = vmul.f32 %v4131, %v4179
      %v4200 = vmul.f32 %v4132, %v4179
      %v4201 = vmul.f32 %v4133, %v4179
      %v4202 = vmul.f32 %v4134, %v4179
      %v4203 = vmul.f32 %v4135, %v4179
      %v4204 = vmul.f32 %v4136, %v4179
      %v4205 = vmul.f32 %v4137, %v4179
      %v4206 = vmul.f32 %v4138, %v4179
      %v4207 = vmul.f32 %v4139, %v4179
      %v4208 = vmul.f32 %v4140, %v4179
      %v4209 = vmul.f32 %v4141, %v4179
      %v4210 = vmul.f32 %v4142, %v4179
      %v4211 = vmul.f32 %v4143, %v4179
      %v4212 = vmul.f32 %v4144, %v4179
      %v4213 = vmul.f32 %v4145, %v4179
      %v4214 = vmul.f32 %v4146, %v4179
      %v4215 = vmul.f32 %v4147, %v4179
      %v4216 = vmul.f32 %v4148, %v4179
      %v4217 = vmul.f32 %v4149, %v4179
      %v4218 = vmul.f32 %v4150, %v4179
      %v4219 = vmul.f32 %v4151, %v4179
      %v4220 = vmul.f32 %v4152, %v4179
      %v4221 = vmul.f32 %v4153, %v4179
      %v4222 = vmul.f32 %v4154, %v4179
      %v4223 = vmul.f32 %v4155, %v4179
      %v4224 = vmul.f32 %v4156, %v4179
      %v4225 = vmul.f32 %v4157, %v4179
      %v4226 = vmul.f32 %v4158, %v4179
      %v4227 = vmul.f32 %v4159, %v4179
      %v4228 = vmul.f32 %v4160, %v4179
      %v4229 = vmul.f32 %v4161, %v4179
      %v4230 = vmul.f32 %v4162, %v4179
      %v4231 = vmul.f32 %v4163, %v4179
      %v4232 = vmul.f32 %v4164, %v4179
      %v4233 = vmul.f32 %v4165, %v4179
      %v4234 = vmul.f32 %v4166, %v4179
      %v4235 = vmul.f32 %v4167, %v4179
      %v4236 = vmul.f32 %v4168, %v4179
      %v4237 = vmul.f32 %v4169, %v4179
      %v4238 = vmul.f32 %v4170, %v4179
      %v4239 = vmul.f32 %v4171, %v4179
      %v4240 = vmul.f32 %v4172, %v4179
      %v4241 = vmul.f32 %v4173, %v4179
      %v4242 = vmul.f32 %v4174, %v4179
      %v4243 = vmul.f32 %v4175, %v4179
      %v4244 = vadd.f32 %v4048, %v4180
      %v4245 = vadd.f32 %v4049, %v4181
      %v4246 = vadd.f32 %v4050, %v4182
      %v4247 = vadd.f32 %v4051, %v4183
      %v4248 = vadd.f32 %v4052, %v4184
      %v4249 = vadd.f32 %v4053, %v4185
      %v4250 = vadd.f32 %v4054, %v4186
      %v4251 = vadd.f32 %v4055, %v4187
      %v4252 = vadd.f32 %v4056, %v4188
      %v4253 = vadd.f32 %v4057, %v4189
      %v4254 = vadd.f32 %v4058, %v4190
      %v4255 = vadd.f32 %v4059, %v4191
      %v4256 = vadd.f32 %v4060, %v4192
      %v4257 = vadd.f32 %v4061, %v4193
      %v4258 = vadd.f32 %v4062, %v4194
      %v4259 = vadd.f32 %v4063, %v4195
      %v4260 = vadd.f32 %v4064, %v4196
      %v4261 = vadd.f32 %v4065, %v4197
      %v4262 = vadd.f32 %v4066, %v4198
      %v4263 = vadd.f32 %v4067, %v4199
      %v4264 = vadd.f32 %v4068, %v4200
      %v4265 = vadd.f32 %v4069, %v4201
      %v4266 = vadd.f32 %v4070, %v4202
      %v4267 = vadd.f32 %v4071, %v4203
      %v4268 = vadd.f32 %v4072, %v4204
      %v4269 = vadd.f32 %v4073, %v4205
      %v4270 = vadd.f32 %v4074, %v4206
      %v4271 = vadd.f32 %v4075, %v4207
      %v4272 = vadd.f32 %v4076, %v4208
      %v4273 = vadd.f32 %v4077, %v4209
      %v4274 = vadd.f32 %v4078, %v4210
      %v4275 = vadd.f32 %v4079, %v4211
      %v4276 = vadd.f32 %v4080, %v4212
      %v4277 = vadd.f32 %v4081, %v4213
      %v4278 = vadd.f32 %v4082, %v4214
      %v4279 = vadd.f32 %v4083, %v4215
      %v4280 = vadd.f32 %v4084, %v4216
      %v4281 = vadd.f32 %v4085, %v4217
      %v4282 = vadd.f32 %v4086, %v4218
      %v4283 = vadd.f32 %v4087, %v4219
      %v4284 = vadd.f32 %v4088, %v4220
      %v4285 = vadd.f32 %v4089, %v4221
      %v4286 = vadd.f32 %v4090, %v4222
      %v4287 = vadd.f32 %v4091, %v4223
      %v4288 = vadd.f32 %v4092, %v4224
      %v4289 = vadd.f32 %v4093, %v4225
      %v4290 = vadd.f32 %v4094, %v4226
      %v4291 = vadd.f32 %v4095, %v4227
      %v4292 = vadd.f32 %v4096, %v4228
      %v4293 = vadd.f32 %v4097, %v4229
      %v4294 = vadd.f32 %v4098, %v4230
      %v4295 = vadd.f32 %v4099, %v4231
      %v4296 = vadd.f32 %v4100, %v4232
      %v4297 = vadd.f32 %v4101, %v4233
      %v4298 = vadd.f32 %v4102, %v4234
      %v4299 = vadd.f32 %v4103, %v4235
      %v4300 = vadd.f32 %v4104, %v4236
      %v4301 = vadd.f32 %v4105, %v4237
      %v4302 = vadd.f32 %v4106, %v4238
      %v4303 = vadd.f32 %v4107, %v4239
      %v4304 = vadd.f32 %v4108, %v4240
      %v4305 = vadd.f32 %v4109, %v4241
      %v4306 = vadd.f32 %v4110, %v4242
      %v4307 = vadd.f32 %v4111, %v4243
      %s4308 = scalar_lea.vmem [#allocation2], 80
      %v4309 = vld [vmem:[%s4308] sm:$0xff]
      %v4310 = vld [vmem:[%s4308 + $0x8] sm:$0xff]
      %v4311 = vld [vmem:[%s4308 + $0x10] sm:$0xff]
      %v4312 = vld [vmem:[%s4308 + $0x18] sm:$0xff]
      %v4313 = vld [vmem:[%s4308 + $0x28] sm:$0xff]
      %v4314 = vld [vmem:[%s4308 + $0x30] sm:$0xff]
      %v4315 = vld [vmem:[%s4308 + $0x38] sm:$0xff]
      %v4316 = vld [vmem:[%s4308 + $0x40] sm:$0xff]
      %v4317 = vld [vmem:[%s4308 + $0x50] sm:$0xff]
      %v4318 = vld [vmem:[%s4308 + $0x58] sm:$0xff]
      %v4319 = vld [vmem:[%s4308 + $0x60] sm:$0xff]
      %v4320 = vld [vmem:[%s4308 + $0x68] sm:$0xff]
      %v4321 = vld [vmem:[%s4308 + $0x78] sm:$0xff]
      %v4322 = vld [vmem:[%s4308 + $0x80] sm:$0xff]
      %v4323 = vld [vmem:[%s4308 + $0x88] sm:$0xff]
      %v4324 = vld [vmem:[%s4308 + $0x90] sm:$0xff]
      %v4325 = vld [vmem:[%s4308 + $0xa0] sm:$0xff]
      %v4326 = vld [vmem:[%s4308 + $0xa8] sm:$0xff]
      %v4327 = vld [vmem:[%s4308 + $0xb0] sm:$0xff]
      %v4328 = vld [vmem:[%s4308 + $0xb8] sm:$0xff]
      %v4329 = vld [vmem:[%s4308 + $0xc8] sm:$0xff]
      %v4330 = vld [vmem:[%s4308 + $0xd0] sm:$0xff]
      %v4331 = vld [vmem:[%s4308 + $0xd8] sm:$0xff]
      %v4332 = vld [vmem:[%s4308 + $0xe0] sm:$0xff]
      %v4333 = vld [vmem:[%s4308 + $0xf0] sm:$0xff]
      %v4334 = vld [vmem:[%s4308 + $0xf8] sm:$0xff]
      %v4335 = vld [vmem:[%s4308 + $0x100] sm:$0xff]
      %v4336 = vld [vmem:[%s4308 + $0x108] sm:$0xff]
      %v4337 = vld [vmem:[%s4308 + $0x118] sm:$0xff]
      %v4338 = vld [vmem:[%s4308 + $0x120] sm:$0xff]
      %v4339 = vld [vmem:[%s4308 + $0x128] sm:$0xff]
      %v4340 = vld [vmem:[%s4308 + $0x130] sm:$0xff]
      %v4341 = vld [vmem:[%s4308 + $0x140] sm:$0xff]
      %v4342 = vld [vmem:[%s4308 + $0x148] sm:$0xff]
      %v4343 = vld [vmem:[%s4308 + $0x150] sm:$0xff]
      %v4344 = vld [vmem:[%s4308 + $0x158] sm:$0xff]
      %v4345 = vld [vmem:[%s4308 + $0x168] sm:$0xff]
      %v4346 = vld [vmem:[%s4308 + $0x170] sm:$0xff]
      %v4347 = vld [vmem:[%s4308 + $0x178] sm:$0xff]
      %v4348 = vld [vmem:[%s4308 + $0x180] sm:$0xff]
      %v4349 = vld [vmem:[%s4308 + $0x190] sm:$0xff]
      %v4350 = vld [vmem:[%s4308 + $0x198] sm:$0xff]
      %v4351 = vld [vmem:[%s4308 + $0x1a0] sm:$0xff]
      %v4352 = vld [vmem:[%s4308 + $0x1a8] sm:$0xff]
      %v4353 = vld [vmem:[%s4308 + $0x1b8] sm:$0xff]
      %v4354 = vld [vmem:[%s4308 + $0x1c0] sm:$0xff]
      %v4355 = vld [vmem:[%s4308 + $0x1c8] sm:$0xff]
      %v4356 = vld [vmem:[%s4308 + $0x1d0] sm:$0xff]
      %v4357 = vld [vmem:[%s4308 + $0x1e0] sm:$0xff]
      %v4358 = vld [vmem:[%s4308 + $0x1e8] sm:$0xff]
      %v4359 = vld [vmem:[%s4308 + $0x1f0] sm:$0xff]
      %v4360 = vld [vmem:[%s4308 + $0x1f8] sm:$0xff]
      %v4361 = vld [vmem:[%s4308 + $0x208] sm:$0xff]
      %v4362 = vld [vmem:[%s4308 + $0x210] sm:$0xff]
      %v4363 = vld [vmem:[%s4308 + $0x218] sm:$0xff]
      %v4364 = vld [vmem:[%s4308 + $0x220] sm:$0xff]
      %v4365 = vld [vmem:[%s4308 + $0x230] sm:$0xff]
      %v4366 = vld [vmem:[%s4308 + $0x238] sm:$0xff]
      %v4367 = vld [vmem:[%s4308 + $0x240] sm:$0xff]
      %v4368 = vld [vmem:[%s4308 + $0x248] sm:$0xff]
      %v4369 = vld [vmem:[%s4308 + $0x258] sm:$0xff]
      %v4370 = vld [vmem:[%s4308 + $0x260] sm:$0xff]
      %v4371 = vld [vmem:[%s4308 + $0x268] sm:$0xff]
      %v4372 = vld [vmem:[%s4308 + $0x270] sm:$0xff]
      %v4373 = vlaneseq
      %v4374 = vshrl.u32 %v4373, 7
      %v4375 = vsub.s32 6, %v4374
      %v4376 = vrot.slane %v1949, %v4375
      %v4377 = vmul.f32 %v4309, %v4376
      %v4378 = vmul.f32 %v4310, %v4376
      %v4379 = vmul.f32 %v4311, %v4376
      %v4380 = vmul.f32 %v4312, %v4376
      %v4381 = vmul.f32 %v4313, %v4376
      %v4382 = vmul.f32 %v4314, %v4376
      %v4383 = vmul.f32 %v4315, %v4376
      %v4384 = vmul.f32 %v4316, %v4376
      %v4385 = vmul.f32 %v4317, %v4376
      %v4386 = vmul.f32 %v4318, %v4376
      %v4387 = vmul.f32 %v4319, %v4376
      %v4388 = vmul.f32 %v4320, %v4376
      %v4389 = vmul.f32 %v4321, %v4376
      %v4390 = vmul.f32 %v4322, %v4376
      %v4391 = vmul.f32 %v4323, %v4376
      %v4392 = vmul.f32 %v4324, %v4376
      %v4393 = vmul.f32 %v4325, %v4376
      %v4394 = vmul.f32 %v4326, %v4376
      %v4395 = vmul.f32 %v4327, %v4376
      %v4396 = vmul.f32 %v4328, %v4376
      %v4397 = vmul.f32 %v4329, %v4376
      %v4398 = vmul.f32 %v4330, %v4376
      %v4399 = vmul.f32 %v4331, %v4376
      %v4400 = vmul.f32 %v4332, %v4376
      %v4401 = vmul.f32 %v4333, %v4376
      %v4402 = vmul.f32 %v4334, %v4376
      %v4403 = vmul.f32 %v4335, %v4376
      %v4404 = vmul.f32 %v4336, %v4376
      %v4405 = vmul.f32 %v4337, %v4376
      %v4406 = vmul.f32 %v4338, %v4376
      %v4407 = vmul.f32 %v4339, %v4376
      %v4408 = vmul.f32 %v4340, %v4376
      %v4409 = vmul.f32 %v4341, %v4376
      %v4410 = vmul.f32 %v4342, %v4376
      %v4411 = vmul.f32 %v4343, %v4376
      %v4412 = vmul.f32 %v4344, %v4376
      %v4413 = vmul.f32 %v4345, %v4376
      %v4414 = vmul.f32 %v4346, %v4376
      %v4415 = vmul.f32 %v4347, %v4376
      %v4416 = vmul.f32 %v4348, %v4376
      %v4417 = vmul.f32 %v4349, %v4376
      %v4418 = vmul.f32 %v4350, %v4376
      %v4419 = vmul.f32 %v4351, %v4376
      %v4420 = vmul.f32 %v4352, %v4376
      %v4421 = vmul.f32 %v4353, %v4376
      %v4422 = vmul.f32 %v4354, %v4376
      %v4423 = vmul.f32 %v4355, %v4376
      %v4424 = vmul.f32 %v4356, %v4376
      %v4425 = vmul.f32 %v4357, %v4376
      %v4426 = vmul.f32 %v4358, %v4376
      %v4427 = vmul.f32 %v4359, %v4376
      %v4428 = vmul.f32 %v4360, %v4376
      %v4429 = vmul.f32 %v4361, %v4376
      %v4430 = vmul.f32 %v4362, %v4376
      %v4431 = vmul.f32 %v4363, %v4376
      %v4432 = vmul.f32 %v4364, %v4376
      %v4433 = vmul.f32 %v4365, %v4376
      %v4434 = vmul.f32 %v4366, %v4376
      %v4435 = vmul.f32 %v4367, %v4376
      %v4436 = vmul.f32 %v4368, %v4376
      %v4437 = vmul.f32 %v4369, %v4376
      %v4438 = vmul.f32 %v4370, %v4376
      %v4439 = vmul.f32 %v4371, %v4376
      %v4440 = vmul.f32 %v4372, %v4376
      %v4441 = vadd.f32 %v4244, %v4377
      %v4442 = vadd.f32 %v4245, %v4378
      %v4443 = vadd.f32 %v4246, %v4379
      %v4444 = vadd.f32 %v4247, %v4380
      %v4445 = vadd.f32 %v4248, %v4381
      %v4446 = vadd.f32 %v4249, %v4382
      %v4447 = vadd.f32 %v4250, %v4383
      %v4448 = vadd.f32 %v4251, %v4384
      %v4449 = vadd.f32 %v4252, %v4385
      %v4450 = vadd.f32 %v4253, %v4386
      %v4451 = vadd.f32 %v4254, %v4387
      %v4452 = vadd.f32 %v4255, %v4388
      %v4453 = vadd.f32 %v4256, %v4389
      %v4454 = vadd.f32 %v4257, %v4390
      %v4455 = vadd.f32 %v4258, %v4391
      %v4456 = vadd.f32 %v4259, %v4392
      %v4457 = vadd.f32 %v4260, %v4393
      %v4458 = vadd.f32 %v4261, %v4394
      %v4459 = vadd.f32 %v4262, %v4395
      %v4460 = vadd.f32 %v4263, %v4396
      %v4461 = vadd.f32 %v4264, %v4397
      %v4462 = vadd.f32 %v4265, %v4398
      %v4463 = vadd.f32 %v4266, %v4399
      %v4464 = vadd.f32 %v4267, %v4400
      %v4465 = vadd.f32 %v4268, %v4401
      %v4466 = vadd.f32 %v4269, %v4402
      %v4467 = vadd.f32 %v4270, %v4403
      %v4468 = vadd.f32 %v4271, %v4404
      %v4469 = vadd.f32 %v4272, %v4405
      %v4470 = vadd.f32 %v4273, %v4406
      %v4471 = vadd.f32 %v4274, %v4407
      %v4472 = vadd.f32 %v4275, %v4408
      %v4473 = vadd.f32 %v4276, %v4409
      %v4474 = vadd.f32 %v4277, %v4410
      %v4475 = vadd.f32 %v4278, %v4411
      %v4476 = vadd.f32 %v4279, %v4412
      %v4477 = vadd.f32 %v4280, %v4413
      %v4478 = vadd.f32 %v4281, %v4414
      %v4479 = vadd.f32 %v4282, %v4415
      %v4480 = vadd.f32 %v4283, %v4416
      %v4481 = vadd.f32 %v4284, %v4417
      %v4482 = vadd.f32 %v4285, %v4418
      %v4483 = vadd.f32 %v4286, %v4419
      %v4484 = vadd.f32 %v4287, %v4420
      %v4485 = vadd.f32 %v4288, %v4421
      %v4486 = vadd.f32 %v4289, %v4422
      %v4487 = vadd.f32 %v4290, %v4423
      %v4488 = vadd.f32 %v4291, %v4424
      %v4489 = vadd.f32 %v4292, %v4425
      %v4490 = vadd.f32 %v4293, %v4426
      %v4491 = vadd.f32 %v4294, %v4427
      %v4492 = vadd.f32 %v4295, %v4428
      %v4493 = vadd.f32 %v4296, %v4429
      %v4494 = vadd.f32 %v4297, %v4430
      %v4495 = vadd.f32 %v4298, %v4431
      %v4496 = vadd.f32 %v4299, %v4432
      %v4497 = vadd.f32 %v4300, %v4433
      %v4498 = vadd.f32 %v4301, %v4434
      %v4499 = vadd.f32 %v4302, %v4435
      %v4500 = vadd.f32 %v4303, %v4436
      %v4501 = vadd.f32 %v4304, %v4437
      %v4502 = vadd.f32 %v4305, %v4438
      %v4503 = vadd.f32 %v4306, %v4439
      %v4504 = vadd.f32 %v4307, %v4440
      %s4505 = scalar_lea.vmem [#allocation3], 80
      %v4506 = vld [vmem:[%s4505] sm:$0xff]
      %v4507 = vld [vmem:[%s4505 + $0x8] sm:$0xff]
      %v4508 = vld [vmem:[%s4505 + $0x10] sm:$0xff]
      %v4509 = vld [vmem:[%s4505 + $0x18] sm:$0xff]
      %v4510 = vld [vmem:[%s4505 + $0x28] sm:$0xff]
      %v4511 = vld [vmem:[%s4505 + $0x30] sm:$0xff]
      %v4512 = vld [vmem:[%s4505 + $0x38] sm:$0xff]
      %v4513 = vld [vmem:[%s4505 + $0x40] sm:$0xff]
      %v4514 = vld [vmem:[%s4505 + $0x50] sm:$0xff]
      %v4515 = vld [vmem:[%s4505 + $0x58] sm:$0xff]
      %v4516 = vld [vmem:[%s4505 + $0x60] sm:$0xff]
      %v4517 = vld [vmem:[%s4505 + $0x68] sm:$0xff]
      %v4518 = vld [vmem:[%s4505 + $0x78] sm:$0xff]
      %v4519 = vld [vmem:[%s4505 + $0x80] sm:$0xff]
      %v4520 = vld [vmem:[%s4505 + $0x88] sm:$0xff]
      %v4521 = vld [vmem:[%s4505 + $0x90] sm:$0xff]
      %v4522 = vld [vmem:[%s4505 + $0xa0] sm:$0xff]
      %v4523 = vld [vmem:[%s4505 + $0xa8] sm:$0xff]
      %v4524 = vld [vmem:[%s4505 + $0xb0] sm:$0xff]
      %v4525 = vld [vmem:[%s4505 + $0xb8] sm:$0xff]
      %v4526 = vld [vmem:[%s4505 + $0xc8] sm:$0xff]
      %v4527 = vld [vmem:[%s4505 + $0xd0] sm:$0xff]
      %v4528 = vld [vmem:[%s4505 + $0xd8] sm:$0xff]
      %v4529 = vld [vmem:[%s4505 + $0xe0] sm:$0xff]
      %v4530 = vld [vmem:[%s4505 + $0xf0] sm:$0xff]
      %v4531 = vld [vmem:[%s4505 + $0xf8] sm:$0xff]
      %v4532 = vld [vmem:[%s4505 + $0x100] sm:$0xff]
      %v4533 = vld [vmem:[%s4505 + $0x108] sm:$0xff]
      %v4534 = vld [vmem:[%s4505 + $0x118] sm:$0xff]
      %v4535 = vld [vmem:[%s4505 + $0x120] sm:$0xff]
      %v4536 = vld [vmem:[%s4505 + $0x128] sm:$0xff]
      %v4537 = vld [vmem:[%s4505 + $0x130] sm:$0xff]
      %v4538 = vld [vmem:[%s4505 + $0x140] sm:$0xff]
      %v4539 = vld [vmem:[%s4505 + $0x148] sm:$0xff]
      %v4540 = vld [vmem:[%s4505 + $0x150] sm:$0xff]
      %v4541 = vld [vmem:[%s4505 + $0x158] sm:$0xff]
      %v4542 = vld [vmem:[%s4505 + $0x168] sm:$0xff]
      %v4543 = vld [vmem:[%s4505 + $0x170] sm:$0xff]
      %v4544 = vld [vmem:[%s4505 + $0x178] sm:$0xff]
      %v4545 = vld [vmem:[%s4505 + $0x180] sm:$0xff]
      %v4546 = vld [vmem:[%s4505 + $0x190] sm:$0xff]
      %v4547 = vld [vmem:[%s4505 + $0x198] sm:$0xff]
      %v4548 = vld [vmem:[%s4505 + $0x1a0] sm:$0xff]
      %v4549 = vld [vmem:[%s4505 + $0x1a8] sm:$0xff]
      %v4550 = vld [vmem:[%s4505 + $0x1b8] sm:$0xff]
      %v4551 = vld [vmem:[%s4505 + $0x1c0] sm:$0xff]
      %v4552 = vld [vmem:[%s4505 + $0x1c8] sm:$0xff]
      %v4553 = vld [vmem:[%s4505 + $0x1d0] sm:$0xff]
      %v4554 = vld [vmem:[%s4505 + $0x1e0] sm:$0xff]
      %v4555 = vld [vmem:[%s4505 + $0x1e8] sm:$0xff]
      %v4556 = vld [vmem:[%s4505 + $0x1f0] sm:$0xff]
      %v4557 = vld [vmem:[%s4505 + $0x1f8] sm:$0xff]
      %v4558 = vld [vmem:[%s4505 + $0x208] sm:$0xff]
      %v4559 = vld [vmem:[%s4505 + $0x210] sm:$0xff]
      %v4560 = vld [vmem:[%s4505 + $0x218] sm:$0xff]
      %v4561 = vld [vmem:[%s4505 + $0x220] sm:$0xff]
      %v4562 = vld [vmem:[%s4505 + $0x230] sm:$0xff]
      %v4563 = vld [vmem:[%s4505 + $0x238] sm:$0xff]
      %v4564 = vld [vmem:[%s4505 + $0x240] sm:$0xff]
      %v4565 = vld [vmem:[%s4505 + $0x248] sm:$0xff]
      %v4566 = vld [vmem:[%s4505 + $0x258] sm:$0xff]
      %v4567 = vld [vmem:[%s4505 + $0x260] sm:$0xff]
      %v4568 = vld [vmem:[%s4505 + $0x268] sm:$0xff]
      %v4569 = vld [vmem:[%s4505 + $0x270] sm:$0xff]
      %v4570 = vlaneseq
      %v4571 = vshrl.u32 %v4570, 7
      %v4572 = vsub.s32 6, %v4571
      %v4573 = vrot.slane %v1952, %v4572
      %v4574 = vmul.f32 %v4506, %v4573
      %v4575 = vmul.f32 %v4507, %v4573
      %v4576 = vmul.f32 %v4508, %v4573
      %v4577 = vmul.f32 %v4509, %v4573
      %v4578 = vmul.f32 %v4510, %v4573
      %v4579 = vmul.f32 %v4511, %v4573
      %v4580 = vmul.f32 %v4512, %v4573
      %v4581 = vmul.f32 %v4513, %v4573
      %v4582 = vmul.f32 %v4514, %v4573
      %v4583 = vmul.f32 %v4515, %v4573
      %v4584 = vmul.f32 %v4516, %v4573
      %v4585 = vmul.f32 %v4517, %v4573
      %v4586 = vmul.f32 %v4518, %v4573
      %v4587 = vmul.f32 %v4519, %v4573
      %v4588 = vmul.f32 %v4520, %v4573
      %v4589 = vmul.f32 %v4521, %v4573
      %v4590 = vmul.f32 %v4522, %v4573
      %v4591 = vmul.f32 %v4523, %v4573
      %v4592 = vmul.f32 %v4524, %v4573
      %v4593 = vmul.f32 %v4525, %v4573
      %v4594 = vmul.f32 %v4526, %v4573
      %v4595 = vmul.f32 %v4527, %v4573
      %v4596 = vmul.f32 %v4528, %v4573
      %v4597 = vmul.f32 %v4529, %v4573
      %v4598 = vmul.f32 %v4530, %v4573
      %v4599 = vmul.f32 %v4531, %v4573
      %v4600 = vmul.f32 %v4532, %v4573
      %v4601 = vmul.f32 %v4533, %v4573
      %v4602 = vmul.f32 %v4534, %v4573
      %v4603 = vmul.f32 %v4535, %v4573
      %v4604 = vmul.f32 %v4536, %v4573
      %v4605 = vmul.f32 %v4537, %v4573
      %v4606 = vmul.f32 %v4538, %v4573
      %v4607 = vmul.f32 %v4539, %v4573
      %v4608 = vmul.f32 %v4540, %v4573
      %v4609 = vmul.f32 %v4541, %v4573
      %v4610 = vmul.f32 %v4542, %v4573
      %v4611 = vmul.f32 %v4543, %v4573
      %v4612 = vmul.f32 %v4544, %v4573
      %v4613 = vmul.f32 %v4545, %v4573
      %v4614 = vmul.f32 %v4546, %v4573
      %v4615 = vmul.f32 %v4547, %v4573
      %v4616 = vmul.f32 %v4548, %v4573
      %v4617 = vmul.f32 %v4549, %v4573
      %v4618 = vmul.f32 %v4550, %v4573
      %v4619 = vmul.f32 %v4551, %v4573
      %v4620 = vmul.f32 %v4552, %v4573
      %v4621 = vmul.f32 %v4553, %v4573
      %v4622 = vmul.f32 %v4554, %v4573
      %v4623 = vmul.f32 %v4555, %v4573
      %v4624 = vmul.f32 %v4556, %v4573
      %v4625 = vmul.f32 %v4557, %v4573
      %v4626 = vmul.f32 %v4558, %v4573
      %v4627 = vmul.f32 %v4559, %v4573
      %v4628 = vmul.f32 %v4560, %v4573
      %v4629 = vmul.f32 %v4561, %v4573
      %v4630 = vmul.f32 %v4562, %v4573
      %v4631 = vmul.f32 %v4563, %v4573
      %v4632 = vmul.f32 %v4564, %v4573
      %v4633 = vmul.f32 %v4565, %v4573
      %v4634 = vmul.f32 %v4566, %v4573
      %v4635 = vmul.f32 %v4567, %v4573
      %v4636 = vmul.f32 %v4568, %v4573
      %v4637 = vmul.f32 %v4569, %v4573
      %v4638 = vadd.f32 %v4441, %v4574
      %v4639 = vadd.f32 %v4442, %v4575
      %v4640 = vadd.f32 %v4443, %v4576
      %v4641 = vadd.f32 %v4444, %v4577
      %v4642 = vadd.f32 %v4445, %v4578
      %v4643 = vadd.f32 %v4446, %v4579
      %v4644 = vadd.f32 %v4447, %v4580
      %v4645 = vadd.f32 %v4448, %v4581
      %v4646 = vadd.f32 %v4449, %v4582
      %v4647 = vadd.f32 %v4450, %v4583
      %v4648 = vadd.f32 %v4451, %v4584
      %v4649 = vadd.f32 %v4452, %v4585
      %v4650 = vadd.f32 %v4453, %v4586
      %v4651 = vadd.f32 %v4454, %v4587
      %v4652 = vadd.f32 %v4455, %v4588
      %v4653 = vadd.f32 %v4456, %v4589
      %v4654 = vadd.f32 %v4457, %v4590
      %v4655 = vadd.f32 %v4458, %v4591
      %v4656 = vadd.f32 %v4459, %v4592
      %v4657 = vadd.f32 %v4460, %v4593
      %v4658 = vadd.f32 %v4461, %v4594
      %v4659 = vadd.f32 %v4462, %v4595
      %v4660 = vadd.f32 %v4463, %v4596
      %v4661 = vadd.f32 %v4464, %v4597
      %v4662 = vadd.f32 %v4465, %v4598
      %v4663 = vadd.f32 %v4466, %v4599
      %v4664 = vadd.f32 %v4467, %v4600
      %v4665 = vadd.f32 %v4468, %v4601
      %v4666 = vadd.f32 %v4469, %v4602
      %v4667 = vadd.f32 %v4470, %v4603
      %v4668 = vadd.f32 %v4471, %v4604
      %v4669 = vadd.f32 %v4472, %v4605
      %v4670 = vadd.f32 %v4473, %v4606
      %v4671 = vadd.f32 %v4474, %v4607
      %v4672 = vadd.f32 %v4475, %v4608
      %v4673 = vadd.f32 %v4476, %v4609
      %v4674 = vadd.f32 %v4477, %v4610
      %v4675 = vadd.f32 %v4478, %v4611
      %v4676 = vadd.f32 %v4479, %v4612
      %v4677 = vadd.f32 %v4480, %v4613
      %v4678 = vadd.f32 %v4481, %v4614
      %v4679 = vadd.f32 %v4482, %v4615
      %v4680 = vadd.f32 %v4483, %v4616
      %v4681 = vadd.f32 %v4484, %v4617
      %v4682 = vadd.f32 %v4485, %v4618
      %v4683 = vadd.f32 %v4486, %v4619
      %v4684 = vadd.f32 %v4487, %v4620
      %v4685 = vadd.f32 %v4488, %v4621
      %v4686 = vadd.f32 %v4489, %v4622
      %v4687 = vadd.f32 %v4490, %v4623
      %v4688 = vadd.f32 %v4491, %v4624
      %v4689 = vadd.f32 %v4492, %v4625
      %v4690 = vadd.f32 %v4493, %v4626
      %v4691 = vadd.f32 %v4494, %v4627
      %v4692 = vadd.f32 %v4495, %v4628
      %v4693 = vadd.f32 %v4496, %v4629
      %v4694 = vadd.f32 %v4497, %v4630
      %v4695 = vadd.f32 %v4498, %v4631
      %v4696 = vadd.f32 %v4499, %v4632
      %v4697 = vadd.f32 %v4500, %v4633
      %v4698 = vadd.f32 %v4501, %v4634
      %v4699 = vadd.f32 %v4502, %v4635
      %v4700 = vadd.f32 %v4503, %v4636
      %v4701 = vadd.f32 %v4504, %v4637
      %v4702 = vld [vmem:[%s4308 + $0x1] sm:$0xff]
      %v4703 = vld [vmem:[%s4308 + $0x9] sm:$0xff]
      %v4704 = vld [vmem:[%s4308 + $0x11] sm:$0xff]
      %v4705 = vld [vmem:[%s4308 + $0x19] sm:$0xff]
      %v4706 = vld [vmem:[%s4308 + $0x29] sm:$0xff]
      %v4707 = vld [vmem:[%s4308 + $0x31] sm:$0xff]
      %v4708 = vld [vmem:[%s4308 + $0x39] sm:$0xff]
      %v4709 = vld [vmem:[%s4308 + $0x41] sm:$0xff]
      %v4710 = vld [vmem:[%s4308 + $0x51] sm:$0xff]
      %v4711 = vld [vmem:[%s4308 + $0x59] sm:$0xff]
      %v4712 = vld [vmem:[%s4308 + $0x61] sm:$0xff]
      %v4713 = vld [vmem:[%s4308 + $0x69] sm:$0xff]
      %v4714 = vld [vmem:[%s4308 + $0x79] sm:$0xff]
      %v4715 = vld [vmem:[%s4308 + $0x81] sm:$0xff]
      %v4716 = vld [vmem:[%s4308 + $0x89] sm:$0xff]
      %v4717 = vld [vmem:[%s4308 + $0x91] sm:$0xff]
      %v4718 = vld [vmem:[%s4308 + $0xa1] sm:$0xff]
      %v4719 = vld [vmem:[%s4308 + $0xa9] sm:$0xff]
      %v4720 = vld [vmem:[%s4308 + $0xb1] sm:$0xff]
      %v4721 = vld [vmem:[%s4308 + $0xb9] sm:$0xff]
      %v4722 = vld [vmem:[%s4308 + $0xc9] sm:$0xff]
      %v4723 = vld [vmem:[%s4308 + $0xd1] sm:$0xff]
      %v4724 = vld [vmem:[%s4308 + $0xd9] sm:$0xff]
      %v4725 = vld [vmem:[%s4308 + $0xe1] sm:$0xff]
      %v4726 = vld [vmem:[%s4308 + $0xf1] sm:$0xff]
      %v4727 = vld [vmem:[%s4308 + $0xf9] sm:$0xff]
      %v4728 = vld [vmem:[%s4308 + $0x101] sm:$0xff]
      %v4729 = vld [vmem:[%s4308 + $0x109] sm:$0xff]
      %v4730 = vld [vmem:[%s4308 + $0x119] sm:$0xff]
      %v4731 = vld [vmem:[%s4308 + $0x121] sm:$0xff]
      %v4732 = vld [vmem:[%s4308 + $0x129] sm:$0xff]
      %v4733 = vld [vmem:[%s4308 + $0x131] sm:$0xff]
      %v4734 = vld [vmem:[%s4308 + $0x141] sm:$0xff]
      %v4735 = vld [vmem:[%s4308 + $0x149] sm:$0xff]
      %v4736 = vld [vmem:[%s4308 + $0x151] sm:$0xff]
      %v4737 = vld [vmem:[%s4308 + $0x159] sm:$0xff]
      %v4738 = vld [vmem:[%s4308 + $0x169] sm:$0xff]
      %v4739 = vld [vmem:[%s4308 + $0x171] sm:$0xff]
      %v4740 = vld [vmem:[%s4308 + $0x179] sm:$0xff]
      %v4741 = vld [vmem:[%s4308 + $0x181] sm:$0xff]
      %v4742 = vld [vmem:[%s4308 + $0x191] sm:$0xff]
      %v4743 = vld [vmem:[%s4308 + $0x199] sm:$0xff]
      %v4744 = vld [vmem:[%s4308 + $0x1a1] sm:$0xff]
      %v4745 = vld [vmem:[%s4308 + $0x1a9] sm:$0xff]
      %v4746 = vld [vmem:[%s4308 + $0x1b9] sm:$0xff]
      %v4747 = vld [vmem:[%s4308 + $0x1c1] sm:$0xff]
      %v4748 = vld [vmem:[%s4308 + $0x1c9] sm:$0xff]
      %v4749 = vld [vmem:[%s4308 + $0x1d1] sm:$0xff]
      %v4750 = vld [vmem:[%s4308 + $0x1e1] sm:$0xff]
      %v4751 = vld [vmem:[%s4308 + $0x1e9] sm:$0xff]
      %v4752 = vld [vmem:[%s4308 + $0x1f1] sm:$0xff]
      %v4753 = vld [vmem:[%s4308 + $0x1f9] sm:$0xff]
      %v4754 = vld [vmem:[%s4308 + $0x209] sm:$0xff]
      %v4755 = vld [vmem:[%s4308 + $0x211] sm:$0xff]
      %v4756 = vld [vmem:[%s4308 + $0x219] sm:$0xff]
      %v4757 = vld [vmem:[%s4308 + $0x221] sm:$0xff]
      %v4758 = vld [vmem:[%s4308 + $0x231] sm:$0xff]
      %v4759 = vld [vmem:[%s4308 + $0x239] sm:$0xff]
      %v4760 = vld [vmem:[%s4308 + $0x241] sm:$0xff]
      %v4761 = vld [vmem:[%s4308 + $0x249] sm:$0xff]
      %v4762 = vld [vmem:[%s4308 + $0x259] sm:$0xff]
      %v4763 = vld [vmem:[%s4308 + $0x261] sm:$0xff]
      %v4764 = vld [vmem:[%s4308 + $0x269] sm:$0xff]
      %v4765 = vld [vmem:[%s4308 + $0x271] sm:$0xff]
      %v4766 = vlaneseq
      %v4767 = vshrl.u32 %v4766, 7
      %v4768 = vsub.s32 7, %v4767
      %v4769 = vrot.slane %v1949, %v4768
      %v4770 = vmul.f32 %v4702, %v4769
      %v4771 = vmul.f32 %v4703, %v4769
      %v4772 = vmul.f32 %v4704, %v4769
      %v4773 = vmul.f32 %v4705, %v4769
      %v4774 = vmul.f32 %v4706, %v4769
      %v4775 = vmul.f32 %v4707, %v4769
      %v4776 = vmul.f32 %v4708, %v4769
      %v4777 = vmul.f32 %v4709, %v4769
      %v4778 = vmul.f32 %v4710, %v4769
      %v4779 = vmul.f32 %v4711, %v4769
      %v4780 = vmul.f32 %v4712, %v4769
      %v4781 = vmul.f32 %v4713, %v4769
      %v4782 = vmul.f32 %v4714, %v4769
      %v4783 = vmul.f32 %v4715, %v4769
      %v4784 = vmul.f32 %v4716, %v4769
      %v4785 = vmul.f32 %v4717, %v4769
      %v4786 = vmul.f32 %v4718, %v4769
      %v4787 = vmul.f32 %v4719, %v4769
      %v4788 = vmul.f32 %v4720, %v4769
      %v4789 = vmul.f32 %v4721, %v4769
      %v4790 = vmul.f32 %v4722, %v4769
      %v4791 = vmul.f32 %v4723, %v4769
      %v4792 = vmul.f32 %v4724, %v4769
      %v4793 = vmul.f32 %v4725, %v4769
      %v4794 = vmul.f32 %v4726, %v4769
      %v4795 = vmul.f32 %v4727, %v4769
      %v4796 = vmul.f32 %v4728, %v4769
      %v4797 = vmul.f32 %v4729, %v4769
      %v4798 = vmul.f32 %v4730, %v4769
      %v4799 = vmul.f32 %v4731, %v4769
      %v4800 = vmul.f32 %v4732, %v4769
      %v4801 = vmul.f32 %v4733, %v4769
      %v4802 = vmul.f32 %v4734, %v4769
      %v4803 = vmul.f32 %v4735, %v4769
      %v4804 = vmul.f32 %v4736, %v4769
      %v4805 = vmul.f32 %v4737, %v4769
      %v4806 = vmul.f32 %v4738, %v4769
      %v4807 = vmul.f32 %v4739, %v4769
      %v4808 = vmul.f32 %v4740, %v4769
      %v4809 = vmul.f32 %v4741, %v4769
      %v4810 = vmul.f32 %v4742, %v4769
      %v4811 = vmul.f32 %v4743, %v4769
      %v4812 = vmul.f32 %v4744, %v4769
      %v4813 = vmul.f32 %v4745, %v4769
      %v4814 = vmul.f32 %v4746, %v4769
      %v4815 = vmul.f32 %v4747, %v4769
      %v4816 = vmul.f32 %v4748, %v4769
      %v4817 = vmul.f32 %v4749, %v4769
      %v4818 = vmul.f32 %v4750, %v4769
      %v4819 = vmul.f32 %v4751, %v4769
      %v4820 = vmul.f32 %v4752, %v4769
      %v4821 = vmul.f32 %v4753, %v4769
      %v4822 = vmul.f32 %v4754, %v4769
      %v4823 = vmul.f32 %v4755, %v4769
      %v4824 = vmul.f32 %v4756, %v4769
      %v4825 = vmul.f32 %v4757, %v4769
      %v4826 = vmul.f32 %v4758, %v4769
      %v4827 = vmul.f32 %v4759, %v4769
      %v4828 = vmul.f32 %v4760, %v4769
      %v4829 = vmul.f32 %v4761, %v4769
      %v4830 = vmul.f32 %v4762, %v4769
      %v4831 = vmul.f32 %v4763, %v4769
      %v4832 = vmul.f32 %v4764, %v4769
      %v4833 = vmul.f32 %v4765, %v4769
      %v4834 = vadd.f32 %v4638, %v4770
      %v4835 = vadd.f32 %v4639, %v4771
      %v4836 = vadd.f32 %v4640, %v4772
      %v4837 = vadd.f32 %v4641, %v4773
      %v4838 = vadd.f32 %v4642, %v4774
      %v4839 = vadd.f32 %v4643, %v4775
      %v4840 = vadd.f32 %v4644, %v4776
      %v4841 = vadd.f32 %v4645, %v4777
      %v4842 = vadd.f32 %v4646, %v4778
      %v4843 = vadd.f32 %v4647, %v4779
      %v4844 = vadd.f32 %v4648, %v4780
      %v4845 = vadd.f32 %v4649, %v4781
      %v4846 = vadd.f32 %v4650, %v4782
      %v4847 = vadd.f32 %v4651, %v4783
      %v4848 = vadd.f32 %v4652, %v4784
      %v4849 = vadd.f32 %v4653, %v4785
      %v4850 = vadd.f32 %v4654, %v4786
      %v4851 = vadd.f32 %v4655, %v4787
      %v4852 = vadd.f32 %v4656, %v4788
      %v4853 = vadd.f32 %v4657, %v4789
      %v4854 = vadd.f32 %v4658, %v4790
      %v4855 = vadd.f32 %v4659, %v4791
      %v4856 = vadd.f32 %v4660, %v4792
      %v4857 = vadd.f32 %v4661, %v4793
      %v4858 = vadd.f32 %v4662, %v4794
      %v4859 = vadd.f32 %v4663, %v4795
      %v4860 = vadd.f32 %v4664, %v4796
      %v4861 = vadd.f32 %v4665, %v4797
      %v4862 = vadd.f32 %v4666, %v4798
      %v4863 = vadd.f32 %v4667, %v4799
      %v4864 = vadd.f32 %v4668, %v4800
      %v4865 = vadd.f32 %v4669, %v4801
      %v4866 = vadd.f32 %v4670, %v4802
      %v4867 = vadd.f32 %v4671, %v4803
      %v4868 = vadd.f32 %v4672, %v4804
      %v4869 = vadd.f32 %v4673, %v4805
      %v4870 = vadd.f32 %v4674, %v4806
      %v4871 = vadd.f32 %v4675, %v4807
      %v4872 = vadd.f32 %v4676, %v4808
      %v4873 = vadd.f32 %v4677, %v4809
      %v4874 = vadd.f32 %v4678, %v4810
      %v4875 = vadd.f32 %v4679, %v4811
      %v4876 = vadd.f32 %v4680, %v4812
      %v4877 = vadd.f32 %v4681, %v4813
      %v4878 = vadd.f32 %v4682, %v4814
      %v4879 = vadd.f32 %v4683, %v4815
      %v4880 = vadd.f32 %v4684, %v4816
      %v4881 = vadd.f32 %v4685, %v4817
      %v4882 = vadd.f32 %v4686, %v4818
      %v4883 = vadd.f32 %v4687, %v4819
      %v4884 = vadd.f32 %v4688, %v4820
      %v4885 = vadd.f32 %v4689, %v4821
      %v4886 = vadd.f32 %v4690, %v4822
      %v4887 = vadd.f32 %v4691, %v4823
      %v4888 = vadd.f32 %v4692, %v4824
      %v4889 = vadd.f32 %v4693, %v4825
      %v4890 = vadd.f32 %v4694, %v4826
      %v4891 = vadd.f32 %v4695, %v4827
      %v4892 = vadd.f32 %v4696, %v4828
      %v4893 = vadd.f32 %v4697, %v4829
      %v4894 = vadd.f32 %v4698, %v4830
      %v4895 = vadd.f32 %v4699, %v4831
      %v4896 = vadd.f32 %v4700, %v4832
      %v4897 = vadd.f32 %v4701, %v4833
      %v4898 = vld [vmem:[%s4505 + $0x1] sm:$0xff]
      %v4899 = vld [vmem:[%s4505 + $0x9] sm:$0xff]
      %v4900 = vld [vmem:[%s4505 + $0x11] sm:$0xff]
      %v4901 = vld [vmem:[%s4505 + $0x19] sm:$0xff]
      %v4902 = vld [vmem:[%s4505 + $0x29] sm:$0xff]
      %v4903 = vld [vmem:[%s4505 + $0x31] sm:$0xff]
      %v4904 = vld [vmem:[%s4505 + $0x39] sm:$0xff]
      %v4905 = vld [vmem:[%s4505 + $0x41] sm:$0xff]
      %v4906 = vld [vmem:[%s4505 + $0x51] sm:$0xff]
      %v4907 = vld [vmem:[%s4505 + $0x59] sm:$0xff]
      %v4908 = vld [vmem:[%s4505 + $0x61] sm:$0xff]
      %v4909 = vld [vmem:[%s4505 + $0x69] sm:$0xff]
      %v4910 = vld [vmem:[%s4505 + $0x79] sm:$0xff]
      %v4911 = vld [vmem:[%s4505 + $0x81] sm:$0xff]
      %v4912 = vld [vmem:[%s4505 + $0x89] sm:$0xff]
      %v4913 = vld [vmem:[%s4505 + $0x91] sm:$0xff]
      %v4914 = vld [vmem:[%s4505 + $0xa1] sm:$0xff]
      %v4915 = vld [vmem:[%s4505 + $0xa9] sm:$0xff]
      %v4916 = vld [vmem:[%s4505 + $0xb1] sm:$0xff]
      %v4917 = vld [vmem:[%s4505 + $0xb9] sm:$0xff]
      %v4918 = vld [vmem:[%s4505 + $0xc9] sm:$0xff]
      %v4919 = vld [vmem:[%s4505 + $0xd1] sm:$0xff]
      %v4920 = vld [vmem:[%s4505 + $0xd9] sm:$0xff]
      %v4921 = vld [vmem:[%s4505 + $0xe1] sm:$0xff]
      %v4922 = vld [vmem:[%s4505 + $0xf1] sm:$0xff]
      %v4923 = vld [vmem:[%s4505 + $0xf9] sm:$0xff]
      %v4924 = vld [vmem:[%s4505 + $0x101] sm:$0xff]
      %v4925 = vld [vmem:[%s4505 + $0x109] sm:$0xff]
      %v4926 = vld [vmem:[%s4505 + $0x119] sm:$0xff]
      %v4927 = vld [vmem:[%s4505 + $0x121] sm:$0xff]
      %v4928 = vld [vmem:[%s4505 + $0x129] sm:$0xff]
      %v4929 = vld [vmem:[%s4505 + $0x131] sm:$0xff]
      %v4930 = vld [vmem:[%s4505 + $0x141] sm:$0xff]
      %v4931 = vld [vmem:[%s4505 + $0x149] sm:$0xff]
      %v4932 = vld [vmem:[%s4505 + $0x151] sm:$0xff]
      %v4933 = vld [vmem:[%s4505 + $0x159] sm:$0xff]
      %v4934 = vld [vmem:[%s4505 + $0x169] sm:$0xff]
      %v4935 = vld [vmem:[%s4505 + $0x171] sm:$0xff]
      %v4936 = vld [vmem:[%s4505 + $0x179] sm:$0xff]
      %v4937 = vld [vmem:[%s4505 + $0x181] sm:$0xff]
      %v4938 = vld [vmem:[%s4505 + $0x191] sm:$0xff]
      %v4939 = vld [vmem:[%s4505 + $0x199] sm:$0xff]
      %v4940 = vld [vmem:[%s4505 + $0x1a1] sm:$0xff]
      %v4941 = vld [vmem:[%s4505 + $0x1a9] sm:$0xff]
      %v4942 = vld [vmem:[%s4505 + $0x1b9] sm:$0xff]
      %v4943 = vld [vmem:[%s4505 + $0x1c1] sm:$0xff]
      %v4944 = vld [vmem:[%s4505 + $0x1c9] sm:$0xff]
      %v4945 = vld [vmem:[%s4505 + $0x1d1] sm:$0xff]
      %v4946 = vld [vmem:[%s4505 + $0x1e1] sm:$0xff]
      %v4947 = vld [vmem:[%s4505 + $0x1e9] sm:$0xff]
      %v4948 = vld [vmem:[%s4505 + $0x1f1] sm:$0xff]
      %v4949 = vld [vmem:[%s4505 + $0x1f9] sm:$0xff]
      %v4950 = vld [vmem:[%s4505 + $0x209] sm:$0xff]
      %v4951 = vld [vmem:[%s4505 + $0x211] sm:$0xff]
      %v4952 = vld [vmem:[%s4505 + $0x219] sm:$0xff]
      %v4953 = vld [vmem:[%s4505 + $0x221] sm:$0xff]
      %v4954 = vld [vmem:[%s4505 + $0x231] sm:$0xff]
      %v4955 = vld [vmem:[%s4505 + $0x239] sm:$0xff]
      %v4956 = vld [vmem:[%s4505 + $0x241] sm:$0xff]
      %v4957 = vld [vmem:[%s4505 + $0x249] sm:$0xff]
      %v4958 = vld [vmem:[%s4505 + $0x259] sm:$0xff]
      %v4959 = vld [vmem:[%s4505 + $0x261] sm:$0xff]
      %v4960 = vld [vmem:[%s4505 + $0x269] sm:$0xff]
      %v4961 = vld [vmem:[%s4505 + $0x271] sm:$0xff]
      %v4962 = vlaneseq
      %v4963 = vshrl.u32 %v4962, 7
      %v4964 = vsub.s32 7, %v4963
      %v4965 = vrot.slane %v1952, %v4964
      %v4966 = vmul.f32 %v4898, %v4965
      %v4967 = vmul.f32 %v4899, %v4965
      %v4968 = vmul.f32 %v4900, %v4965
      %v4969 = vmul.f32 %v4901, %v4965
      %v4970 = vmul.f32 %v4902, %v4965
      %v4971 = vmul.f32 %v4903, %v4965
      %v4972 = vmul.f32 %v4904, %v4965
      %v4973 = vmul.f32 %v4905, %v4965
      %v4974 = vmul.f32 %v4906, %v4965
      %v4975 = vmul.f32 %v4907, %v4965
      %v4976 = vmul.f32 %v4908, %v4965
      %v4977 = vmul.f32 %v4909, %v4965
      %v4978 = vmul.f32 %v4910, %v4965
      %v4979 = vmul.f32 %v4911, %v4965
      %v4980 = vmul.f32 %v4912, %v4965
      %v4981 = vmul.f32 %v4913, %v4965
      %v4982 = vmul.f32 %v4914, %v4965
      %v4983 = vmul.f32 %v4915, %v4965
      %v4984 = vmul.f32 %v4916, %v4965
      %v4985 = vmul.f32 %v4917, %v4965
      %v4986 = vmul.f32 %v4918, %v4965
      %v4987 = vmul.f32 %v4919, %v4965
      %v4988 = vmul.f32 %v4920, %v4965
      %v4989 = vmul.f32 %v4921, %v4965
      %v4990 = vmul.f32 %v4922, %v4965
      %v4991 = vmul.f32 %v4923, %v4965
      %v4992 = vmul.f32 %v4924, %v4965
      %v4993 = vmul.f32 %v4925, %v4965
      %v4994 = vmul.f32 %v4926, %v4965
      %v4995 = vmul.f32 %v4927, %v4965
      %v4996 = vmul.f32 %v4928, %v4965
      %v4997 = vmul.f32 %v4929, %v4965
      %v4998 = vmul.f32 %v4930, %v4965
      %v4999 = vmul.f32 %v4931, %v4965
      %v5000 = vmul.f32 %v4932, %v4965
      %v5001 = vmul.f32 %v4933, %v4965
      %v5002 = vmul.f32 %v4934, %v4965
      %v5003 = vmul.f32 %v4935, %v4965
      %v5004 = vmul.f32 %v4936, %v4965
      %v5005 = vmul.f32 %v4937, %v4965
      %v5006 = vmul.f32 %v4938, %v4965
      %v5007 = vmul.f32 %v4939, %v4965
      %v5008 = vmul.f32 %v4940, %v4965
      %v5009 = vmul.f32 %v4941, %v4965
      %v5010 = vmul.f32 %v4942, %v4965
      %v5011 = vmul.f32 %v4943, %v4965
      %v5012 = vmul.f32 %v4944, %v4965
      %v5013 = vmul.f32 %v4945, %v4965
      %v5014 = vmul.f32 %v4946, %v4965
      %v5015 = vmul.f32 %v4947, %v4965
      %v5016 = vmul.f32 %v4948, %v4965
      %v5017 = vmul.f32 %v4949, %v4965
      %v5018 = vmul.f32 %v4950, %v4965
      %v5019 = vmul.f32 %v4951, %v4965
      %v5020 = vmul.f32 %v4952, %v4965
      %v5021 = vmul.f32 %v4953, %v4965
      %v5022 = vmul.f32 %v4954, %v4965
      %v5023 = vmul.f32 %v4955, %v4965
      %v5024 = vmul.f32 %v4956, %v4965
      %v5025 = vmul.f32 %v4957, %v4965
      %v5026 = vmul.f32 %v4958, %v4965
      %v5027 = vmul.f32 %v4959, %v4965
      %v5028 = vmul.f32 %v4960, %v4965
      %v5029 = vmul.f32 %v4961, %v4965
      %v5030 = vadd.f32 %v4834, %v4966
      %v5031 = vadd.f32 %v4835, %v4967
      %v5032 = vadd.f32 %v4836, %v4968
      %v5033 = vadd.f32 %v4837, %v4969
      %v5034 = vadd.f32 %v4838, %v4970
      %v5035 = vadd.f32 %v4839, %v4971
      %v5036 = vadd.f32 %v4840, %v4972
      %v5037 = vadd.f32 %v4841, %v4973
      %v5038 = vadd.f32 %v4842, %v4974
      %v5039 = vadd.f32 %v4843, %v4975
      %v5040 = vadd.f32 %v4844, %v4976
      %v5041 = vadd.f32 %v4845, %v4977
      %v5042 = vadd.f32 %v4846, %v4978
      %v5043 = vadd.f32 %v4847, %v4979
      %v5044 = vadd.f32 %v4848, %v4980
      %v5045 = vadd.f32 %v4849, %v4981
      %v5046 = vadd.f32 %v4850, %v4982
      %v5047 = vadd.f32 %v4851, %v4983
      %v5048 = vadd.f32 %v4852, %v4984
      %v5049 = vadd.f32 %v4853, %v4985
      %v5050 = vadd.f32 %v4854, %v4986
      %v5051 = vadd.f32 %v4855, %v4987
      %v5052 = vadd.f32 %v4856, %v4988
      %v5053 = vadd.f32 %v4857, %v4989
      %v5054 = vadd.f32 %v4858, %v4990
      %v5055 = vadd.f32 %v4859, %v4991
      %v5056 = vadd.f32 %v4860, %v4992
      %v5057 = vadd.f32 %v4861, %v4993
      %v5058 = vadd.f32 %v4862, %v4994
      %v5059 = vadd.f32 %v4863, %v4995
      %v5060 = vadd.f32 %v4864, %v4996
      %v5061 = vadd.f32 %v4865, %v4997
      %v5062 = vadd.f32 %v4866, %v4998
      %v5063 = vadd.f32 %v4867, %v4999
      %v5064 = vadd.f32 %v4868, %v5000
      %v5065 = vadd.f32 %v4869, %v5001
      %v5066 = vadd.f32 %v4870, %v5002
      %v5067 = vadd.f32 %v4871, %v5003
      %v5068 = vadd.f32 %v4872, %v5004
      %v5069 = vadd.f32 %v4873, %v5005
      %v5070 = vadd.f32 %v4874, %v5006
      %v5071 = vadd.f32 %v4875, %v5007
      %v5072 = vadd.f32 %v4876, %v5008
      %v5073 = vadd.f32 %v4877, %v5009
      %v5074 = vadd.f32 %v4878, %v5010
      %v5075 = vadd.f32 %v4879, %v5011
      %v5076 = vadd.f32 %v4880, %v5012
      %v5077 = vadd.f32 %v4881, %v5013
      %v5078 = vadd.f32 %v4882, %v5014
      %v5079 = vadd.f32 %v4883, %v5015
      %v5080 = vadd.f32 %v4884, %v5016
      %v5081 = vadd.f32 %v4885, %v5017
      %v5082 = vadd.f32 %v4886, %v5018
      %v5083 = vadd.f32 %v4887, %v5019
      %v5084 = vadd.f32 %v4888, %v5020
      %v5085 = vadd.f32 %v4889, %v5021
      %v5086 = vadd.f32 %v4890, %v5022
      %v5087 = vadd.f32 %v4891, %v5023
      %v5088 = vadd.f32 %v4892, %v5024
      %v5089 = vadd.f32 %v4893, %v5025
      %v5090 = vadd.f32 %v4894, %v5026
      %v5091 = vadd.f32 %v4895, %v5027
      %v5092 = vadd.f32 %v4896, %v5028
      %v5093 = vadd.f32 %v4897, %v5029
      %v5094 = vld [vmem:[%s4308 + $0x2] sm:$0xff]
      %v5095 = vld [vmem:[%s4308 + $0xa] sm:$0xff]
      %v5096 = vld [vmem:[%s4308 + $0x12] sm:$0xff]
      %v5097 = vld [vmem:[%s4308 + $0x1a] sm:$0xff]
      %v5098 = vld [vmem:[%s4308 + $0x2a] sm:$0xff]
      %v5099 = vld [vmem:[%s4308 + $0x32] sm:$0xff]
      %v5100 = vld [vmem:[%s4308 + $0x3a] sm:$0xff]
      %v5101 = vld [vmem:[%s4308 + $0x42] sm:$0xff]
      %v5102 = vld [vmem:[%s4308 + $0x52] sm:$0xff]
      %v5103 = vld [vmem:[%s4308 + $0x5a] sm:$0xff]
      %v5104 = vld [vmem:[%s4308 + $0x62] sm:$0xff]
      %v5105 = vld [vmem:[%s4308 + $0x6a] sm:$0xff]
      %v5106 = vld [vmem:[%s4308 + $0x7a] sm:$0xff]
      %v5107 = vld [vmem:[%s4308 + $0x82] sm:$0xff]
      %v5108 = vld [vmem:[%s4308 + $0x8a] sm:$0xff]
      %v5109 = vld [vmem:[%s4308 + $0x92] sm:$0xff]
      %v5110 = vld [vmem:[%s4308 + $0xa2] sm:$0xff]
      %v5111 = vld [vmem:[%s4308 + $0xaa] sm:$0xff]
      %v5112 = vld [vmem:[%s4308 + $0xb2] sm:$0xff]
      %v5113 = vld [vmem:[%s4308 + $0xba] sm:$0xff]
      %v5114 = vld [vmem:[%s4308 + $0xca] sm:$0xff]
      %v5115 = vld [vmem:[%s4308 + $0xd2] sm:$0xff]
      %v5116 = vld [vmem:[%s4308 + $0xda] sm:$0xff]
      %v5117 = vld [vmem:[%s4308 + $0xe2] sm:$0xff]
      %v5118 = vld [vmem:[%s4308 + $0xf2] sm:$0xff]
      %v5119 = vld [vmem:[%s4308 + $0xfa] sm:$0xff]
      %v5120 = vld [vmem:[%s4308 + $0x102] sm:$0xff]
      %v5121 = vld [vmem:[%s4308 + $0x10a] sm:$0xff]
      %v5122 = vld [vmem:[%s4308 + $0x11a] sm:$0xff]
      %v5123 = vld [vmem:[%s4308 + $0x122] sm:$0xff]
      %v5124 = vld [vmem:[%s4308 + $0x12a] sm:$0xff]
      %v5125 = vld [vmem:[%s4308 + $0x132] sm:$0xff]
      %v5126 = vld [vmem:[%s4308 + $0x142] sm:$0xff]
      %v5127 = vld [vmem:[%s4308 + $0x14a] sm:$0xff]
      %v5128 = vld [vmem:[%s4308 + $0x152] sm:$0xff]
      %v5129 = vld [vmem:[%s4308 + $0x15a] sm:$0xff]
      %v5130 = vld [vmem:[%s4308 + $0x16a] sm:$0xff]
      %v5131 = vld [vmem:[%s4308 + $0x172] sm:$0xff]
      %v5132 = vld [vmem:[%s4308 + $0x17a] sm:$0xff]
      %v5133 = vld [vmem:[%s4308 + $0x182] sm:$0xff]
      %v5134 = vld [vmem:[%s4308 + $0x192] sm:$0xff]
      %v5135 = vld [vmem:[%s4308 + $0x19a] sm:$0xff]
      %v5136 = vld [vmem:[%s4308 + $0x1a2] sm:$0xff]
      %v5137 = vld [vmem:[%s4308 + $0x1aa] sm:$0xff]
      %v5138 = vld [vmem:[%s4308 + $0x1ba] sm:$0xff]
      %v5139 = vld [vmem:[%s4308 + $0x1c2] sm:$0xff]
      %v5140 = vld [vmem:[%s4308 + $0x1ca] sm:$0xff]
      %v5141 = vld [vmem:[%s4308 + $0x1d2] sm:$0xff]
      %v5142 = vld [vmem:[%s4308 + $0x1e2] sm:$0xff]
      %v5143 = vld [vmem:[%s4308 + $0x1ea] sm:$0xff]
      %v5144 = vld [vmem:[%s4308 + $0x1f2] sm:$0xff]
      %v5145 = vld [vmem:[%s4308 + $0x1fa] sm:$0xff]
      %v5146 = vld [vmem:[%s4308 + $0x20a] sm:$0xff]
      %v5147 = vld [vmem:[%s4308 + $0x212] sm:$0xff]
      %v5148 = vld [vmem:[%s4308 + $0x21a] sm:$0xff]
      %v5149 = vld [vmem:[%s4308 + $0x222] sm:$0xff]
      %v5150 = vld [vmem:[%s4308 + $0x232] sm:$0xff]
      %v5151 = vld [vmem:[%s4308 + $0x23a] sm:$0xff]
      %v5152 = vld [vmem:[%s4308 + $0x242] sm:$0xff]
      %v5153 = vld [vmem:[%s4308 + $0x24a] sm:$0xff]
      %v5154 = vld [vmem:[%s4308 + $0x25a] sm:$0xff]
      %v5155 = vld [vmem:[%s4308 + $0x262] sm:$0xff]
      %v5156 = vld [vmem:[%s4308 + $0x26a] sm:$0xff]
      %v5157 = vld [vmem:[%s4308 + $0x272] sm:$0xff]
      %v5158 = vlaneseq
      %v5159 = vshrl.u32 %v5158, 7
      %v5160 = vsub.s32 0, %v5159
      %v5161 = vrot.slane %v1950, %v5160
      %v5162 = vmul.f32 %v5094, %v5161
      %v5163 = vmul.f32 %v5095, %v5161
      %v5164 = vmul.f32 %v5096, %v5161
      %v5165 = vmul.f32 %v5097, %v5161
      %v5166 = vmul.f32 %v5098, %v5161
      %v5167 = vmul.f32 %v5099, %v5161
      %v5168 = vmul.f32 %v5100, %v5161
      %v5169 = vmul.f32 %v5101, %v5161
      %v5170 = vmul.f32 %v5102, %v5161
      %v5171 = vmul.f32 %v5103, %v5161
      %v5172 = vmul.f32 %v5104, %v5161
      %v5173 = vmul.f32 %v5105, %v5161
      %v5174 = vmul.f32 %v5106, %v5161
      %v5175 = vmul.f32 %v5107, %v5161
      %v5176 = vmul.f32 %v5108, %v5161
      %v5177 = vmul.f32 %v5109, %v5161
      %v5178 = vmul.f32 %v5110, %v5161
      %v5179 = vmul.f32 %v5111, %v5161
      %v5180 = vmul.f32 %v5112, %v5161
      %v5181 = vmul.f32 %v5113, %v5161
      %v5182 = vmul.f32 %v5114, %v5161
      %v5183 = vmul.f32 %v5115, %v5161
      %v5184 = vmul.f32 %v5116, %v5161
      %v5185 = vmul.f32 %v5117, %v5161
      %v5186 = vmul.f32 %v5118, %v5161
      %v5187 = vmul.f32 %v5119, %v5161
      %v5188 = vmul.f32 %v5120, %v5161
      %v5189 = vmul.f32 %v5121, %v5161
      %v5190 = vmul.f32 %v5122, %v5161
      %v5191 = vmul.f32 %v5123, %v5161
      %v5192 = vmul.f32 %v5124, %v5161
      %v5193 = vmul.f32 %v5125, %v5161
      %v5194 = vmul.f32 %v5126, %v5161
      %v5195 = vmul.f32 %v5127, %v5161
      %v5196 = vmul.f32 %v5128, %v5161
      %v5197 = vmul.f32 %v5129, %v5161
      %v5198 = vmul.f32 %v5130, %v5161
      %v5199 = vmul.f32 %v5131, %v5161
      %v5200 = vmul.f32 %v5132, %v5161
      %v5201 = vmul.f32 %v5133, %v5161
      %v5202 = vmul.f32 %v5134, %v5161
      %v5203 = vmul.f32 %v5135, %v5161
      %v5204 = vmul.f32 %v5136, %v5161
      %v5205 = vmul.f32 %v5137, %v5161
      %v5206 = vmul.f32 %v5138, %v5161
      %v5207 = vmul.f32 %v5139, %v5161
      %v5208 = vmul.f32 %v5140, %v5161
      %v5209 = vmul.f32 %v5141, %v5161
      %v5210 = vmul.f32 %v5142, %v5161
      %v5211 = vmul.f32 %v5143, %v5161
      %v5212 = vmul.f32 %v5144, %v5161
      %v5213 = vmul.f32 %v5145, %v5161
      %v5214 = vmul.f32 %v5146, %v5161
      %v5215 = vmul.f32 %v5147, %v5161
      %v5216 = vmul.f32 %v5148, %v5161
      %v5217 = vmul.f32 %v5149, %v5161
      %v5218 = vmul.f32 %v5150, %v5161
      %v5219 = vmul.f32 %v5151, %v5161
      %v5220 = vmul.f32 %v5152, %v5161
      %v5221 = vmul.f32 %v5153, %v5161
      %v5222 = vmul.f32 %v5154, %v5161
      %v5223 = vmul.f32 %v5155, %v5161
      %v5224 = vmul.f32 %v5156, %v5161
      %v5225 = vmul.f32 %v5157, %v5161
      %v5226 = vadd.f32 %v5030, %v5162
      %v5227 = vadd.f32 %v5031, %v5163
      %v5228 = vadd.f32 %v5032, %v5164
      %v5229 = vadd.f32 %v5033, %v5165
      %v5230 = vadd.f32 %v5034, %v5166
      %v5231 = vadd.f32 %v5035, %v5167
      %v5232 = vadd.f32 %v5036, %v5168
      %v5233 = vadd.f32 %v5037, %v5169
      %v5234 = vadd.f32 %v5038, %v5170
      %v5235 = vadd.f32 %v5039, %v5171
      %v5236 = vadd.f32 %v5040, %v5172
      %v5237 = vadd.f32 %v5041, %v5173
      %v5238 = vadd.f32 %v5042, %v5174
      %v5239 = vadd.f32 %v5043, %v5175
      %v5240 = vadd.f32 %v5044, %v5176
      %v5241 = vadd.f32 %v5045, %v5177
      %v5242 = vadd.f32 %v5046, %v5178
      %v5243 = vadd.f32 %v5047, %v5179
      %v5244 = vadd.f32 %v5048, %v5180
      %v5245 = vadd.f32 %v5049, %v5181
      %v5246 = vadd.f32 %v5050, %v5182
      %v5247 = vadd.f32 %v5051, %v5183
      %v5248 = vadd.f32 %v5052, %v5184
      %v5249 = vadd.f32 %v5053, %v5185
      %v5250 = vadd.f32 %v5054, %v5186
      %v5251 = vadd.f32 %v5055, %v5187
      %v5252 = vadd.f32 %v5056, %v5188
      %v5253 = vadd.f32 %v5057, %v5189
      %v5254 = vadd.f32 %v5058, %v5190
      %v5255 = vadd.f32 %v5059, %v5191
      %v5256 = vadd.f32 %v5060, %v5192
      %v5257 = vadd.f32 %v5061, %v5193
      %v5258 = vadd.f32 %v5062, %v5194
      %v5259 = vadd.f32 %v5063, %v5195
      %v5260 = vadd.f32 %v5064, %v5196
      %v5261 = vadd.f32 %v5065, %v5197
      %v5262 = vadd.f32 %v5066, %v5198
      %v5263 = vadd.f32 %v5067, %v5199
      %v5264 = vadd.f32 %v5068, %v5200
      %v5265 = vadd.f32 %v5069, %v5201
      %v5266 = vadd.f32 %v5070, %v5202
      %v5267 = vadd.f32 %v5071, %v5203
      %v5268 = vadd.f32 %v5072, %v5204
      %v5269 = vadd.f32 %v5073, %v5205
      %v5270 = vadd.f32 %v5074, %v5206
      %v5271 = vadd.f32 %v5075, %v5207
      %v5272 = vadd.f32 %v5076, %v5208
      %v5273 = vadd.f32 %v5077, %v5209
      %v5274 = vadd.f32 %v5078, %v5210
      %v5275 = vadd.f32 %v5079, %v5211
      %v5276 = vadd.f32 %v5080, %v5212
      %v5277 = vadd.f32 %v5081, %v5213
      %v5278 = vadd.f32 %v5082, %v5214
      %v5279 = vadd.f32 %v5083, %v5215
      %v5280 = vadd.f32 %v5084, %v5216
      %v5281 = vadd.f32 %v5085, %v5217
      %v5282 = vadd.f32 %v5086, %v5218
      %v5283 = vadd.f32 %v5087, %v5219
      %v5284 = vadd.f32 %v5088, %v5220
      %v5285 = vadd.f32 %v5089, %v5221
      %v5286 = vadd.f32 %v5090, %v5222
      %v5287 = vadd.f32 %v5091, %v5223
      %v5288 = vadd.f32 %v5092, %v5224
      %v5289 = vadd.f32 %v5093, %v5225
      %v5290 = vld [vmem:[%s4505 + $0x2] sm:$0xff]
      %v5291 = vld [vmem:[%s4505 + $0xa] sm:$0xff]
      %v5292 = vld [vmem:[%s4505 + $0x12] sm:$0xff]
      %v5293 = vld [vmem:[%s4505 + $0x1a] sm:$0xff]
      %v5294 = vld [vmem:[%s4505 + $0x2a] sm:$0xff]
      %v5295 = vld [vmem:[%s4505 + $0x32] sm:$0xff]
      %v5296 = vld [vmem:[%s4505 + $0x3a] sm:$0xff]
      %v5297 = vld [vmem:[%s4505 + $0x42] sm:$0xff]
      %v5298 = vld [vmem:[%s4505 + $0x52] sm:$0xff]
      %v5299 = vld [vmem:[%s4505 + $0x5a] sm:$0xff]
      %v5300 = vld [vmem:[%s4505 + $0x62] sm:$0xff]
      %v5301 = vld [vmem:[%s4505 + $0x6a] sm:$0xff]
      %v5302 = vld [vmem:[%s4505 + $0x7a] sm:$0xff]
      %v5303 = vld [vmem:[%s4505 + $0x82] sm:$0xff]
      %v5304 = vld [vmem:[%s4505 + $0x8a] sm:$0xff]
      %v5305 = vld [vmem:[%s4505 + $0x92] sm:$0xff]
      %v5306 = vld [vmem:[%s4505 + $0xa2] sm:$0xff]
      %v5307 = vld [vmem:[%s4505 + $0xaa] sm:$0xff]
      %v5308 = vld [vmem:[%s4505 + $0xb2] sm:$0xff]
      %v5309 = vld [vmem:[%s4505 + $0xba] sm:$0xff]
      %v5310 = vld [vmem:[%s4505 + $0xca] sm:$0xff]
      %v5311 = vld [vmem:[%s4505 + $0xd2] sm:$0xff]
      %v5312 = vld [vmem:[%s4505 + $0xda] sm:$0xff]
      %v5313 = vld [vmem:[%s4505 + $0xe2] sm:$0xff]
      %v5314 = vld [vmem:[%s4505 + $0xf2] sm:$0xff]
      %v5315 = vld [vmem:[%s4505 + $0xfa] sm:$0xff]
      %v5316 = vld [vmem:[%s4505 + $0x102] sm:$0xff]
      %v5317 = vld [vmem:[%s4505 + $0x10a] sm:$0xff]
      %v5318 = vld [vmem:[%s4505 + $0x11a] sm:$0xff]
      %v5319 = vld [vmem:[%s4505 + $0x122] sm:$0xff]
      %v5320 = vld [vmem:[%s4505 + $0x12a] sm:$0xff]
      %v5321 = vld [vmem:[%s4505 + $0x132] sm:$0xff]
      %v5322 = vld [vmem:[%s4505 + $0x142] sm:$0xff]
      %v5323 = vld [vmem:[%s4505 + $0x14a] sm:$0xff]
      %v5324 = vld [vmem:[%s4505 + $0x152] sm:$0xff]
      %v5325 = vld [vmem:[%s4505 + $0x15a] sm:$0xff]
      %v5326 = vld [vmem:[%s4505 + $0x16a] sm:$0xff]
      %v5327 = vld [vmem:[%s4505 + $0x172] sm:$0xff]
      %v5328 = vld [vmem:[%s4505 + $0x17a] sm:$0xff]
      %v5329 = vld [vmem:[%s4505 + $0x182] sm:$0xff]
      %v5330 = vld [vmem:[%s4505 + $0x192] sm:$0xff]
      %v5331 = vld [vmem:[%s4505 + $0x19a] sm:$0xff]
      %v5332 = vld [vmem:[%s4505 + $0x1a2] sm:$0xff]
      %v5333 = vld [vmem:[%s4505 + $0x1aa] sm:$0xff]
      %v5334 = vld [vmem:[%s4505 + $0x1ba] sm:$0xff]
      %v5335 = vld [vmem:[%s4505 + $0x1c2] sm:$0xff]
      %v5336 = vld [vmem:[%s4505 + $0x1ca] sm:$0xff]
      %v5337 = vld [vmem:[%s4505 + $0x1d2] sm:$0xff]
      %v5338 = vld [vmem:[%s4505 + $0x1e2] sm:$0xff]
      %v5339 = vld [vmem:[%s4505 + $0x1ea] sm:$0xff]
      %v5340 = vld [vmem:[%s4505 + $0x1f2] sm:$0xff]
      %v5341 = vld [vmem:[%s4505 + $0x1fa] sm:$0xff]
      %v5342 = vld [vmem:[%s4505 + $0x20a] sm:$0xff]
      %v5343 = vld [vmem:[%s4505 + $0x212] sm:$0xff]
      %v5344 = vld [vmem:[%s4505 + $0x21a] sm:$0xff]
      %v5345 = vld [vmem:[%s4505 + $0x222] sm:$0xff]
      %v5346 = vld [vmem:[%s4505 + $0x232] sm:$0xff]
      %v5347 = vld [vmem:[%s4505 + $0x23a] sm:$0xff]
      %v5348 = vld [vmem:[%s4505 + $0x242] sm:$0xff]
      %v5349 = vld [vmem:[%s4505 + $0x24a] sm:$0xff]
      %v5350 = vld [vmem:[%s4505 + $0x25a] sm:$0xff]
      %v5351 = vld [vmem:[%s4505 + $0x262] sm:$0xff]
      %v5352 = vld [vmem:[%s4505 + $0x26a] sm:$0xff]
      %v5353 = vld [vmem:[%s4505 + $0x272] sm:$0xff]
      %v5354 = vlaneseq
      %v5355 = vshrl.u32 %v5354, 7
      %v5356 = vsub.s32 0, %v5355
      %v5357 = vrot.slane %v1953, %v5356
      %v5358 = vmul.f32 %v5290, %v5357
      %v5359 = vmul.f32 %v5291, %v5357
      %v5360 = vmul.f32 %v5292, %v5357
      %v5361 = vmul.f32 %v5293, %v5357
      %v5362 = vmul.f32 %v5294, %v5357
      %v5363 = vmul.f32 %v5295, %v5357
      %v5364 = vmul.f32 %v5296, %v5357
      %v5365 = vmul.f32 %v5297, %v5357
      %v5366 = vmul.f32 %v5298, %v5357
      %v5367 = vmul.f32 %v5299, %v5357
      %v5368 = vmul.f32 %v5300, %v5357
      %v5369 = vmul.f32 %v5301, %v5357
      %v5370 = vmul.f32 %v5302, %v5357
      %v5371 = vmul.f32 %v5303, %v5357
      %v5372 = vmul.f32 %v5304, %v5357
      %v5373 = vmul.f32 %v5305, %v5357
      %v5374 = vmul.f32 %v5306, %v5357
      %v5375 = vmul.f32 %v5307, %v5357
      %v5376 = vmul.f32 %v5308, %v5357
      %v5377 = vmul.f32 %v5309, %v5357
      %v5378 = vmul.f32 %v5310, %v5357
      %v5379 = vmul.f32 %v5311, %v5357
      %v5380 = vmul.f32 %v5312, %v5357
      %v5381 = vmul.f32 %v5313, %v5357
      %v5382 = vmul.f32 %v5314, %v5357
      %v5383 = vmul.f32 %v5315, %v5357
      %v5384 = vmul.f32 %v5316, %v5357
      %v5385 = vmul.f32 %v5317, %v5357
      %v5386 = vmul.f32 %v5318, %v5357
      %v5387 = vmul.f32 %v5319, %v5357
      %v5388 = vmul.f32 %v5320, %v5357
      %v5389 = vmul.f32 %v5321, %v5357
      %v5390 = vmul.f32 %v5322, %v5357
      %v5391 = vmul.f32 %v5323, %v5357
      %v5392 = vmul.f32 %v5324, %v5357
      %v5393 = vmul.f32 %v5325, %v5357
      %v5394 = vmul.f32 %v5326, %v5357
      %v5395 = vmul.f32 %v5327, %v5357
      %v5396 = vmul.f32 %v5328, %v5357
      %v5397 = vmul.f32 %v5329, %v5357
      %v5398 = vmul.f32 %v5330, %v5357
      %v5399 = vmul.f32 %v5331, %v5357
      %v5400 = vmul.f32 %v5332, %v5357
      %v5401 = vmul.f32 %v5333, %v5357
      %v5402 = vmul.f32 %v5334, %v5357
      %v5403 = vmul.f32 %v5335, %v5357
      %v5404 = vmul.f32 %v5336, %v5357
      %v5405 = vmul.f32 %v5337, %v5357
      %v5406 = vmul.f32 %v5338, %v5357
      %v5407 = vmul.f32 %v5339, %v5357
      %v5408 = vmul.f32 %v5340, %v5357
      %v5409 = vmul.f32 %v5341, %v5357
      %v5410 = vmul.f32 %v5342, %v5357
      %v5411 = vmul.f32 %v5343, %v5357
      %v5412 = vmul.f32 %v5344, %v5357
      %v5413 = vmul.f32 %v5345, %v5357
      %v5414 = vmul.f32 %v5346, %v5357
      %v5415 = vmul.f32 %v5347, %v5357
      %v5416 = vmul.f32 %v5348, %v5357
      %v5417 = vmul.f32 %v5349, %v5357
      %v5418 = vmul.f32 %v5350, %v5357
      %v5419 = vmul.f32 %v5351, %v5357
      %v5420 = vmul.f32 %v5352, %v5357
      %v5421 = vmul.f32 %v5353, %v5357
      %v5422 = vadd.f32 %v5226, %v5358
      %v5423 = vadd.f32 %v5227, %v5359
      %v5424 = vadd.f32 %v5228, %v5360
      %v5425 = vadd.f32 %v5229, %v5361
      %v5426 = vadd.f32 %v5230, %v5362
      %v5427 = vadd.f32 %v5231, %v5363
      %v5428 = vadd.f32 %v5232, %v5364
      %v5429 = vadd.f32 %v5233, %v5365
      %v5430 = vadd.f32 %v5234, %v5366
      %v5431 = vadd.f32 %v5235, %v5367
      %v5432 = vadd.f32 %v5236, %v5368
      %v5433 = vadd.f32 %v5237, %v5369
      %v5434 = vadd.f32 %v5238, %v5370
      %v5435 = vadd.f32 %v5239, %v5371
      %v5436 = vadd.f32 %v5240, %v5372
      %v5437 = vadd.f32 %v5241, %v5373
      %v5438 = vadd.f32 %v5242, %v5374
      %v5439 = vadd.f32 %v5243, %v5375
      %v5440 = vadd.f32 %v5244, %v5376
      %v5441 = vadd.f32 %v5245, %v5377
      %v5442 = vadd.f32 %v5246, %v5378
      %v5443 = vadd.f32 %v5247, %v5379
      %v5444 = vadd.f32 %v5248, %v5380
      %v5445 = vadd.f32 %v5249, %v5381
      %v5446 = vadd.f32 %v5250, %v5382
      %v5447 = vadd.f32 %v5251, %v5383
      %v5448 = vadd.f32 %v5252, %v5384
      %v5449 = vadd.f32 %v5253, %v5385
      %v5450 = vadd.f32 %v5254, %v5386
      %v5451 = vadd.f32 %v5255, %v5387
      %v5452 = vadd.f32 %v5256, %v5388
      %v5453 = vadd.f32 %v5257, %v5389
      %v5454 = vadd.f32 %v5258, %v5390
      %v5455 = vadd.f32 %v5259, %v5391
      %v5456 = vadd.f32 %v5260, %v5392
      %v5457 = vadd.f32 %v5261, %v5393
      %v5458 = vadd.f32 %v5262, %v5394
      %v5459 = vadd.f32 %v5263, %v5395
      %v5460 = vadd.f32 %v5264, %v5396
      %v5461 = vadd.f32 %v5265, %v5397
      %v5462 = vadd.f32 %v5266, %v5398
      %v5463 = vadd.f32 %v5267, %v5399
      %v5464 = vadd.f32 %v5268, %v5400
      %v5465 = vadd.f32 %v5269, %v5401
      %v5466 = vadd.f32 %v5270, %v5402
      %v5467 = vadd.f32 %v5271, %v5403
      %v5468 = vadd.f32 %v5272, %v5404
      %v5469 = vadd.f32 %v5273, %v5405
      %v5470 = vadd.f32 %v5274, %v5406
      %v5471 = vadd.f32 %v5275, %v5407
      %v5472 = vadd.f32 %v5276, %v5408
      %v5473 = vadd.f32 %v5277, %v5409
      %v5474 = vadd.f32 %v5278, %v5410
      %v5475 = vadd.f32 %v5279, %v5411
      %v5476 = vadd.f32 %v5280, %v5412
      %v5477 = vadd.f32 %v5281, %v5413
      %v5478 = vadd.f32 %v5282, %v5414
      %v5479 = vadd.f32 %v5283, %v5415
      %v5480 = vadd.f32 %v5284, %v5416
      %v5481 = vadd.f32 %v5285, %v5417
      %v5482 = vadd.f32 %v5286, %v5418
      %v5483 = vadd.f32 %v5287, %v5419
      %v5484 = vadd.f32 %v5288, %v5420
      %v5485 = vadd.f32 %v5289, %v5421
      %v5486 = vld [vmem:[%s10] sm:$0x1]
      %v5488 = vlaneseq
      %v5489 = vshrl.u32 %v5488, 7
      %v5490 = vsub.s32 0, %v5489
      %v5491 = vrot.slane %v5486, %v5490
      %v5493 = vadd.f32 %v5422, %v5491
      %v5494 = vadd.f32 %v5423, %v5491
      %v5495 = vadd.f32 %v5424, %v5491
      %v5496 = vadd.f32 %v5425, %v5491
      %v5497 = vadd.f32 %v5426, %v5491
      %v5498 = vadd.f32 %v5427, %v5491
      %v5499 = vadd.f32 %v5428, %v5491
      %v5500 = vadd.f32 %v5429, %v5491
      %v5501 = vadd.f32 %v5430, %v5491
      %v5502 = vadd.f32 %v5431, %v5491
      %v5503 = vadd.f32 %v5432, %v5491
      %v5504 = vadd.f32 %v5433, %v5491
      %v5505 = vadd.f32 %v5434, %v5491
      %v5506 = vadd.f32 %v5435, %v5491
      %v5507 = vadd.f32 %v5436, %v5491
      %v5508 = vadd.f32 %v5437, %v5491
      %v5509 = vadd.f32 %v5438, %v5491
      %v5510 = vadd.f32 %v5439, %v5491
      %v5511 = vadd.f32 %v5440, %v5491
      %v5512 = vadd.f32 %v5441, %v5491
      %v5513 = vadd.f32 %v5442, %v5491
      %v5514 = vadd.f32 %v5443, %v5491
      %v5515 = vadd.f32 %v5444, %v5491
      %v5516 = vadd.f32 %v5445, %v5491
      %v5517 = vadd.f32 %v5446, %v5491
      %v5518 = vadd.f32 %v5447, %v5491
      %v5519 = vadd.f32 %v5448, %v5491
      %v5520 = vadd.f32 %v5449, %v5491
      %v5521 = vadd.f32 %v5450, %v5491
      %v5522 = vadd.f32 %v5451, %v5491
      %v5523 = vadd.f32 %v5452, %v5491
      %v5524 = vadd.f32 %v5453, %v5491
      %v5525 = vadd.f32 %v5454, %v5491
      %v5526 = vadd.f32 %v5455, %v5491
      %v5527 = vadd.f32 %v5456, %v5491
      %v5528 = vadd.f32 %v5457, %v5491
      %v5529 = vadd.f32 %v5458, %v5491
      %v5530 = vadd.f32 %v5459, %v5491
      %v5531 = vadd.f32 %v5460, %v5491
      %v5532 = vadd.f32 %v5461, %v5491
      %v5533 = vadd.f32 %v5462, %v5491
      %v5534 = vadd.f32 %v5463, %v5491
      %v5535 = vadd.f32 %v5464, %v5491
      %v5536 = vadd.f32 %v5465, %v5491
      %v5537 = vadd.f32 %v5466, %v5491
      %v5538 = vadd.f32 %v5467, %v5491
      %v5539 = vadd.f32 %v5468, %v5491
      %v5540 = vadd.f32 %v5469, %v5491
      %v5541 = vadd.f32 %v5470, %v5491
      %v5542 = vadd.f32 %v5471, %v5491
      %v5543 = vadd.f32 %v5472, %v5491
      %v5544 = vadd.f32 %v5473, %v5491
      %v5545 = vadd.f32 %v5474, %v5491
      %v5546 = vadd.f32 %v5475, %v5491
      %v5547 = vadd.f32 %v5476, %v5491
      %v5548 = vadd.f32 %v5477, %v5491
      %v5549 = vadd.f32 %v5478, %v5491
      %v5550 = vadd.f32 %v5479, %v5491
      %v5551 = vadd.f32 %v5480, %v5491
      %v5552 = vadd.f32 %v5481, %v5491
      %v5553 = vadd.f32 %v5482, %v5491
      %v5554 = vadd.f32 %v5483, %v5491
      %v5555 = vadd.f32 %v5484, %v5491
      %v5556 = vadd.f32 %v5485, %v5491
      %v5557 = vld [vmem:[%s636] sm:$0xf]
      %v5558 = vld [vmem:[%s636 + $0x4] sm:$0xf]
      %v5559 = vld [vmem:[%s636 + $0x8] sm:$0xf]
      %v5560 = vld [vmem:[%s636 + $0xc] sm:$0xf]
      %v5561 = vld [vmem:[%s636 + $0x10] sm:$0xf]
      %v5562 = vld [vmem:[%s636 + $0x14] sm:$0xf]
      %v5563 = vld [vmem:[%s636 + $0x18] sm:$0xf]
      %v5564 = vld [vmem:[%s636 + $0x1c] sm:$0xf]
      %v5565 = vld [vmem:[%s636 + $0x20] sm:$0xf]
      %v5566 = vld [vmem:[%s636 + $0x24] sm:$0xf]
      %v5567 = vld [vmem:[%s636 + $0x28] sm:$0xf]
      %v5568 = vld [vmem:[%s636 + $0x2c] sm:$0xf]
      %v5569 = vld [vmem:[%s636 + $0x30] sm:$0xf]
      %v5570 = vld [vmem:[%s636 + $0x34] sm:$0xf]
      %v5571 = vld [vmem:[%s636 + $0x38] sm:$0xf]
      %v5572 = vld [vmem:[%s636 + $0x3c] sm:$0xf]
      %v5573 = vld [vmem:[%s636 + $0x40] sm:$0xf]
      %v5574 = vld [vmem:[%s636 + $0x44] sm:$0xf]
      %v5575 = vld [vmem:[%s636 + $0x48] sm:$0xf]
      %v5576 = vld [vmem:[%s636 + $0x4c] sm:$0xf]
      %v5577 = vld [vmem:[%s636 + $0x50] sm:$0xf]
      %v5578 = vld [vmem:[%s636 + $0x54] sm:$0xf]
      %v5579 = vld [vmem:[%s636 + $0x58] sm:$0xf]
      %v5580 = vld [vmem:[%s636 + $0x5c] sm:$0xf]
      %v5581 = vld [vmem:[%s636 + $0x60] sm:$0xf]
      %v5582 = vld [vmem:[%s636 + $0x64] sm:$0xf]
      %v5583 = vld [vmem:[%s636 + $0x68] sm:$0xf]
      %v5584 = vld [vmem:[%s636 + $0x6c] sm:$0xf]
      %v5585 = vld [vmem:[%s636 + $0x70] sm:$0xf]
      %v5586 = vld [vmem:[%s636 + $0x74] sm:$0xf]
      %v5587 = vld [vmem:[%s636 + $0x78] sm:$0xf]
      %v5588 = vld [vmem:[%s636 + $0x7c] sm:$0xf]
      %v5589 = vld [vmem:[%s636 + $0x80] sm:$0xf]
      %v5590 = vld [vmem:[%s636 + $0x84] sm:$0xf]
      %v5591 = vld [vmem:[%s636 + $0x88] sm:$0xf]
      %v5592 = vld [vmem:[%s636 + $0x8c] sm:$0xf]
      %v5593 = vld [vmem:[%s636 + $0x90] sm:$0xf]
      %v5594 = vld [vmem:[%s636 + $0x94] sm:$0xf]
      %v5595 = vld [vmem:[%s636 + $0x98] sm:$0xf]
      %v5596 = vld [vmem:[%s636 + $0x9c] sm:$0xf]
      %v5597 = vld [vmem:[%s636 + $0xa0] sm:$0xf]
      %v5598 = vld [vmem:[%s636 + $0xa4] sm:$0xf]
      %v5599 = vld [vmem:[%s636 + $0xa8] sm:$0xf]
      %v5600 = vld [vmem:[%s636 + $0xac] sm:$0xf]
      %v5601 = vld [vmem:[%s636 + $0xb0] sm:$0xf]
      %v5602 = vld [vmem:[%s636 + $0xb4] sm:$0xf]
      %v5603 = vld [vmem:[%s636 + $0xb8] sm:$0xf]
      %v5604 = vld [vmem:[%s636 + $0xbc] sm:$0xf]
      %v5605 = vld [vmem:[%s636 + $0xc0] sm:$0xf]
      %v5606 = vld [vmem:[%s636 + $0xc4] sm:$0xf]
      %v5607 = vld [vmem:[%s636 + $0xc8] sm:$0xf]
      %v5608 = vld [vmem:[%s636 + $0xcc] sm:$0xf]
      %v5609 = vld [vmem:[%s636 + $0xd0] sm:$0xf]
      %v5610 = vld [vmem:[%s636 + $0xd4] sm:$0xf]
      %v5611 = vld [vmem:[%s636 + $0xd8] sm:$0xf]
      %v5612 = vld [vmem:[%s636 + $0xdc] sm:$0xf]
      %v5613 = vld [vmem:[%s636 + $0xe0] sm:$0xf]
      %v5614 = vld [vmem:[%s636 + $0xe4] sm:$0xf]
      %v5615 = vld [vmem:[%s636 + $0xe8] sm:$0xf]
      %v5616 = vld [vmem:[%s636 + $0xec] sm:$0xf]
      %v5617 = vld [vmem:[%s636 + $0xf0] sm:$0xf]
      %v5618 = vld [vmem:[%s636 + $0xf4] sm:$0xf]
      %v5619 = vld [vmem:[%s636 + $0xf8] sm:$0xf]
      %v5620 = vld [vmem:[%s636 + $0xfc] sm:$0xf]
      %v5621 = vunpack.c.l.bf16 %v5557
      %v5622 = vunpack.c.l.bf16 %v5558
      %v5623 = vunpack.c.l.bf16 %v5559
      %v5624 = vunpack.c.l.bf16 %v5560
      %v5625 = vunpack.c.l.bf16 %v5561
      %v5626 = vunpack.c.l.bf16 %v5562
      %v5627 = vunpack.c.l.bf16 %v5563
      %v5628 = vunpack.c.l.bf16 %v5564
      %v5629 = vunpack.c.l.bf16 %v5565
      %v5630 = vunpack.c.l.bf16 %v5566
      %v5631 = vunpack.c.l.bf16 %v5567
      %v5632 = vunpack.c.l.bf16 %v5568
      %v5633 = vunpack.c.l.bf16 %v5569
      %v5634 = vunpack.c.l.bf16 %v5570
      %v5635 = vunpack.c.l.bf16 %v5571
      %v5636 = vunpack.c.l.bf16 %v5572
      %v5637 = vunpack.c.l.bf16 %v5573
      %v5638 = vunpack.c.l.bf16 %v5574
      %v5639 = vunpack.c.l.bf16 %v5575
      %v5640 = vunpack.c.l.bf16 %v5576
      %v5641 = vunpack.c.l.bf16 %v5577
      %v5642 = vunpack.c.l.bf16 %v5578
      %v5643 = vunpack.c.l.bf16 %v5579
      %v5644 = vunpack.c.l.bf16 %v5580
      %v5645 = vunpack.c.l.bf16 %v5581
      %v5646 = vunpack.c.l.bf16 %v5582
      %v5647 = vunpack.c.l.bf16 %v5583
      %v5648 = vunpack.c.l.bf16 %v5584
      %v5649 = vunpack.c.l.bf16 %v5585
      %v5650 = vunpack.c.l.bf16 %v5586
      %v5651 = vunpack.c.l.bf16 %v5587
      %v5652 = vunpack.c.l.bf16 %v5588
      %v5653 = vunpack.c.l.bf16 %v5589
      %v5654 = vunpack.c.l.bf16 %v5590
      %v5655 = vunpack.c.l.bf16 %v5591
      %v5656 = vunpack.c.l.bf16 %v5592
      %v5657 = vunpack.c.l.bf16 %v5593
      %v5658 = vunpack.c.l.bf16 %v5594
      %v5659 = vunpack.c.l.bf16 %v5595
      %v5660 = vunpack.c.l.bf16 %v5596
      %v5661 = vunpack.c.l.bf16 %v5597
      %v5662 = vunpack.c.l.bf16 %v5598
      %v5663 = vunpack.c.l.bf16 %v5599
      %v5664 = vunpack.c.l.bf16 %v5600
      %v5665 = vunpack.c.l.bf16 %v5601
      %v5666 = vunpack.c.l.bf16 %v5602
      %v5667 = vunpack.c.l.bf16 %v5603
      %v5668 = vunpack.c.l.bf16 %v5604
      %v5669 = vunpack.c.l.bf16 %v5605
      %v5670 = vunpack.c.l.bf16 %v5606
      %v5671 = vunpack.c.l.bf16 %v5607
      %v5672 = vunpack.c.l.bf16 %v5608
      %v5673 = vunpack.c.l.bf16 %v5609
      %v5674 = vunpack.c.l.bf16 %v5610
      %v5675 = vunpack.c.l.bf16 %v5611
      %v5676 = vunpack.c.l.bf16 %v5612
      %v5677 = vunpack.c.l.bf16 %v5613
      %v5678 = vunpack.c.l.bf16 %v5614
      %v5679 = vunpack.c.l.bf16 %v5615
      %v5680 = vunpack.c.l.bf16 %v5616
      %v5681 = vunpack.c.l.bf16 %v5617
      %v5682 = vunpack.c.l.bf16 %v5618
      %v5683 = vunpack.c.l.bf16 %v5619
      %v5684 = vunpack.c.l.bf16 %v5620
      %v5685 = vld [vmem:[%s647] sm:$0xf]
      %v5686 = vld [vmem:[%s647 + $0x4] sm:$0xf]
      %v5687 = vld [vmem:[%s647 + $0x8] sm:$0xf]
      %v5688 = vld [vmem:[%s647 + $0xc] sm:$0xf]
      %v5689 = vld [vmem:[%s647 + $0x10] sm:$0xf]
      %v5690 = vld [vmem:[%s647 + $0x14] sm:$0xf]
      %v5691 = vld [vmem:[%s647 + $0x18] sm:$0xf]
      %v5692 = vld [vmem:[%s647 + $0x1c] sm:$0xf]
      %v5693 = vld [vmem:[%s647 + $0x20] sm:$0xf]
      %v5694 = vld [vmem:[%s647 + $0x24] sm:$0xf]
      %v5695 = vld [vmem:[%s647 + $0x28] sm:$0xf]
      %v5696 = vld [vmem:[%s647 + $0x2c] sm:$0xf]
      %v5697 = vld [vmem:[%s647 + $0x30] sm:$0xf]
      %v5698 = vld [vmem:[%s647 + $0x34] sm:$0xf]
      %v5699 = vld [vmem:[%s647 + $0x38] sm:$0xf]
      %v5700 = vld [vmem:[%s647 + $0x3c] sm:$0xf]
      %v5701 = vld [vmem:[%s647 + $0x40] sm:$0xf]
      %v5702 = vld [vmem:[%s647 + $0x44] sm:$0xf]
      %v5703 = vld [vmem:[%s647 + $0x48] sm:$0xf]
      %v5704 = vld [vmem:[%s647 + $0x4c] sm:$0xf]
      %v5705 = vld [vmem:[%s647 + $0x50] sm:$0xf]
      %v5706 = vld [vmem:[%s647 + $0x54] sm:$0xf]
      %v5707 = vld [vmem:[%s647 + $0x58] sm:$0xf]
      %v5708 = vld [vmem:[%s647 + $0x5c] sm:$0xf]
      %v5709 = vld [vmem:[%s647 + $0x60] sm:$0xf]
      %v5710 = vld [vmem:[%s647 + $0x64] sm:$0xf]
      %v5711 = vld [vmem:[%s647 + $0x68] sm:$0xf]
      %v5712 = vld [vmem:[%s647 + $0x6c] sm:$0xf]
      %v5713 = vld [vmem:[%s647 + $0x70] sm:$0xf]
      %v5714 = vld [vmem:[%s647 + $0x74] sm:$0xf]
      %v5715 = vld [vmem:[%s647 + $0x78] sm:$0xf]
      %v5716 = vld [vmem:[%s647 + $0x7c] sm:$0xf]
      %v5717 = vld [vmem:[%s647 + $0x80] sm:$0xf]
      %v5718 = vld [vmem:[%s647 + $0x84] sm:$0xf]
      %v5719 = vld [vmem:[%s647 + $0x88] sm:$0xf]
      %v5720 = vld [vmem:[%s647 + $0x8c] sm:$0xf]
      %v5721 = vld [vmem:[%s647 + $0x90] sm:$0xf]
      %v5722 = vld [vmem:[%s647 + $0x94] sm:$0xf]
      %v5723 = vld [vmem:[%s647 + $0x98] sm:$0xf]
      %v5724 = vld [vmem:[%s647 + $0x9c] sm:$0xf]
      %v5725 = vld [vmem:[%s647 + $0xa0] sm:$0xf]
      %v5726 = vld [vmem:[%s647 + $0xa4] sm:$0xf]
      %v5727 = vld [vmem:[%s647 + $0xa8] sm:$0xf]
      %v5728 = vld [vmem:[%s647 + $0xac] sm:$0xf]
      %v5729 = vld [vmem:[%s647 + $0xb0] sm:$0xf]
      %v5730 = vld [vmem:[%s647 + $0xb4] sm:$0xf]
      %v5731 = vld [vmem:[%s647 + $0xb8] sm:$0xf]
      %v5732 = vld [vmem:[%s647 + $0xbc] sm:$0xf]
      %v5733 = vld [vmem:[%s647 + $0xc0] sm:$0xf]
      %v5734 = vld [vmem:[%s647 + $0xc4] sm:$0xf]
      %v5735 = vld [vmem:[%s647 + $0xc8] sm:$0xf]
      %v5736 = vld [vmem:[%s647 + $0xcc] sm:$0xf]
      %v5737 = vld [vmem:[%s647 + $0xd0] sm:$0xf]
      %v5738 = vld [vmem:[%s647 + $0xd4] sm:$0xf]
      %v5739 = vld [vmem:[%s647 + $0xd8] sm:$0xf]
      %v5740 = vld [vmem:[%s647 + $0xdc] sm:$0xf]
      %v5741 = vld [vmem:[%s647 + $0xe0] sm:$0xf]
      %v5742 = vld [vmem:[%s647 + $0xe4] sm:$0xf]
      %v5743 = vld [vmem:[%s647 + $0xe8] sm:$0xf]
      %v5744 = vld [vmem:[%s647 + $0xec] sm:$0xf]
      %v5745 = vld [vmem:[%s647 + $0xf0] sm:$0xf]
      %v5746 = vld [vmem:[%s647 + $0xf4] sm:$0xf]
      %v5747 = vld [vmem:[%s647 + $0xf8] sm:$0xf]
      %v5748 = vld [vmem:[%s647 + $0xfc] sm:$0xf]
      %v5749 = vunpack.c.l.bf16 %v5685
      %v5750 = vunpack.c.l.bf16 %v5686
      %v5751 = vunpack.c.l.bf16 %v5687
      %v5752 = vunpack.c.l.bf16 %v5688
      %v5753 = vunpack.c.l.bf16 %v5689
      %v5754 = vunpack.c.l.bf16 %v5690
      %v5755 = vunpack.c.l.bf16 %v5691
      %v5756 = vunpack.c.l.bf16 %v5692
      %v5757 = vunpack.c.l.bf16 %v5693
      %v5758 = vunpack.c.l.bf16 %v5694
      %v5759 = vunpack.c.l.bf16 %v5695
      %v5760 = vunpack.c.l.bf16 %v5696
      %v5761 = vunpack.c.l.bf16 %v5697
      %v5762 = vunpack.c.l.bf16 %v5698
      %v5763 = vunpack.c.l.bf16 %v5699
      %v5764 = vunpack.c.l.bf16 %v5700
      %v5765 = vunpack.c.l.bf16 %v5701
      %v5766 = vunpack.c.l.bf16 %v5702
      %v5767 = vunpack.c.l.bf16 %v5703
      %v5768 = vunpack.c.l.bf16 %v5704
      %v5769 = vunpack.c.l.bf16 %v5705
      %v5770 = vunpack.c.l.bf16 %v5706
      %v5771 = vunpack.c.l.bf16 %v5707
      %v5772 = vunpack.c.l.bf16 %v5708
      %v5773 = vunpack.c.l.bf16 %v5709
      %v5774 = vunpack.c.l.bf16 %v5710
      %v5775 = vunpack.c.l.bf16 %v5711
      %v5776 = vunpack.c.l.bf16 %v5712
      %v5777 = vunpack.c.l.bf16 %v5713
      %v5778 = vunpack.c.l.bf16 %v5714
      %v5779 = vunpack.c.l.bf16 %v5715
      %v5780 = vunpack.c.l.bf16 %v5716
      %v5781 = vunpack.c.l.bf16 %v5717
      %v5782 = vunpack.c.l.bf16 %v5718
      %v5783 = vunpack.c.l.bf16 %v5719
      %v5784 = vunpack.c.l.bf16 %v5720
      %v5785 = vunpack.c.l.bf16 %v5721
      %v5786 = vunpack.c.l.bf16 %v5722
      %v5787 = vunpack.c.l.bf16 %v5723
      %v5788 = vunpack.c.l.bf16 %v5724
      %v5789 = vunpack.c.l.bf16 %v5725
      %v5790 = vunpack.c.l.bf16 %v5726
      %v5791 = vunpack.c.l.bf16 %v5727
      %v5792 = vunpack.c.l.bf16 %v5728
      %v5793 = vunpack.c.l.bf16 %v5729
      %v5794 = vunpack.c.l.bf16 %v5730
      %v5795 = vunpack.c.l.bf16 %v5731
      %v5796 = vunpack.c.l.bf16 %v5732
      %v5797 = vunpack.c.l.bf16 %v5733
      %v5798 = vunpack.c.l.bf16 %v5734
      %v5799 = vunpack.c.l.bf16 %v5735
      %v5800 = vunpack.c.l.bf16 %v5736
      %v5801 = vunpack.c.l.bf16 %v5737
      %v5802 = vunpack.c.l.bf16 %v5738
      %v5803 = vunpack.c.l.bf16 %v5739
      %v5804 = vunpack.c.l.bf16 %v5740
      %v5805 = vunpack.c.l.bf16 %v5741
      %v5806 = vunpack.c.l.bf16 %v5742
      %v5807 = vunpack.c.l.bf16 %v5743
      %v5808 = vunpack.c.l.bf16 %v5744
      %v5809 = vunpack.c.l.bf16 %v5745
      %v5810 = vunpack.c.l.bf16 %v5746
      %v5811 = vunpack.c.l.bf16 %v5747
      %v5812 = vunpack.c.l.bf16 %v5748
      %5877 = vrot.lane.b32.xlu0 %v5749, 4
      %v5878 = vpop.permute.xlu0 %5877
      %5879 = vrot.lane.b32.xlu0 %v5750, 4
      %v5880 = vpop.permute.xlu0 %5879
      %5881 = vrot.lane.b32.xlu0 %v5751, 4
      %v5882 = vpop.permute.xlu0 %5881
      %5883 = vrot.lane.b32.xlu0 %v5752, 4
      %v5884 = vpop.permute.xlu0 %5883
      %5885 = vrot.lane.b32.xlu0 %v5753, 4
      %v5886 = vpop.permute.xlu0 %5885
      %5887 = vrot.lane.b32.xlu0 %v5754, 4
      %v5888 = vpop.permute.xlu0 %5887
      %5889 = vrot.lane.b32.xlu0 %v5755, 4
      %v5890 = vpop.permute.xlu0 %5889
      %5891 = vrot.lane.b32.xlu0 %v5756, 4
      %v5892 = vpop.permute.xlu0 %5891
      %5893 = vrot.lane.b32.xlu0 %v5757, 4
      %v5894 = vpop.permute.xlu0 %5893
      %5895 = vrot.lane.b32.xlu0 %v5758, 4
      %v5896 = vpop.permute.xlu0 %5895
      %5897 = vrot.lane.b32.xlu0 %v5759, 4
      %v5898 = vpop.permute.xlu0 %5897
      %5899 = vrot.lane.b32.xlu0 %v5760, 4
      %v5900 = vpop.permute.xlu0 %5899
      %5901 = vrot.lane.b32.xlu0 %v5761, 4
      %v5902 = vpop.permute.xlu0 %5901
      %5903 = vrot.lane.b32.xlu0 %v5762, 4
      %v5904 = vpop.permute.xlu0 %5903
      %5905 = vrot.lane.b32.xlu0 %v5763, 4
      %v5906 = vpop.permute.xlu0 %5905
      %5907 = vrot.lane.b32.xlu0 %v5764, 4
      %v5908 = vpop.permute.xlu0 %5907
      %5909 = vrot.lane.b32.xlu0 %v5765, 4
      %v5910 = vpop.permute.xlu0 %5909
      %5911 = vrot.lane.b32.xlu0 %v5766, 4
      %v5912 = vpop.permute.xlu0 %5911
      %5913 = vrot.lane.b32.xlu0 %v5767, 4
      %v5914 = vpop.permute.xlu0 %5913
      %5915 = vrot.lane.b32.xlu0 %v5768, 4
      %v5916 = vpop.permute.xlu0 %5915
      %5917 = vrot.lane.b32.xlu0 %v5769, 4
      %v5918 = vpop.permute.xlu0 %5917
      %5919 = vrot.lane.b32.xlu0 %v5770, 4
      %v5920 = vpop.permute.xlu0 %5919
      %5921 = vrot.lane.b32.xlu0 %v5771, 4
      %v5922 = vpop.permute.xlu0 %5921
      %5923 = vrot.lane.b32.xlu0 %v5772, 4
      %v5924 = vpop.permute.xlu0 %5923
      %5925 = vrot.lane.b32.xlu0 %v5773, 4
      %v5926 = vpop.permute.xlu0 %5925
      %5927 = vrot.lane.b32.xlu0 %v5774, 4
      %v5928 = vpop.permute.xlu0 %5927
      %5929 = vrot.lane.b32.xlu0 %v5775, 4
      %v5930 = vpop.permute.xlu0 %5929
      %5931 = vrot.lane.b32.xlu0 %v5776, 4
      %v5932 = vpop.permute.xlu0 %5931
      %5933 = vrot.lane.b32.xlu0 %v5777, 4
      %v5934 = vpop.permute.xlu0 %5933
      %5935 = vrot.lane.b32.xlu0 %v5778, 4
      %v5936 = vpop.permute.xlu0 %5935
      %5937 = vrot.lane.b32.xlu0 %v5779, 4
      %v5938 = vpop.permute.xlu0 %5937
      %5939 = vrot.lane.b32.xlu0 %v5780, 4
      %v5940 = vpop.permute.xlu0 %5939
      %5941 = vrot.lane.b32.xlu0 %v5781, 4
      %v5942 = vpop.permute.xlu0 %5941
      %5943 = vrot.lane.b32.xlu0 %v5782, 4
      %v5944 = vpop.permute.xlu0 %5943
      %5945 = vrot.lane.b32.xlu0 %v5783, 4
      %v5946 = vpop.permute.xlu0 %5945
      %5947 = vrot.lane.b32.xlu0 %v5784, 4
      %v5948 = vpop.permute.xlu0 %5947
      %5949 = vrot.lane.b32.xlu0 %v5785, 4
      %v5950 = vpop.permute.xlu0 %5949
      %5951 = vrot.lane.b32.xlu0 %v5786, 4
      %v5952 = vpop.permute.xlu0 %5951
      %5953 = vrot.lane.b32.xlu0 %v5787, 4
      %v5954 = vpop.permute.xlu0 %5953
      %5955 = vrot.lane.b32.xlu0 %v5788, 4
      %v5956 = vpop.permute.xlu0 %5955
      %5957 = vrot.lane.b32.xlu0 %v5789, 4
      %v5958 = vpop.permute.xlu0 %5957
      %5959 = vrot.lane.b32.xlu0 %v5790, 4
      %v5960 = vpop.permute.xlu0 %5959
      %5961 = vrot.lane.b32.xlu0 %v5791, 4
      %v5962 = vpop.permute.xlu0 %5961
      %5963 = vrot.lane.b32.xlu0 %v5792, 4
      %v5964 = vpop.permute.xlu0 %5963
      %5965 = vrot.lane.b32.xlu0 %v5793, 4
      %v5966 = vpop.permute.xlu0 %5965
      %5967 = vrot.lane.b32.xlu0 %v5794, 4
      %v5968 = vpop.permute.xlu0 %5967
      %5969 = vrot.lane.b32.xlu0 %v5795, 4
      %v5970 = vpop.permute.xlu0 %5969
      %5971 = vrot.lane.b32.xlu0 %v5796, 4
      %v5972 = vpop.permute.xlu0 %5971
      %5973 = vrot.lane.b32.xlu0 %v5797, 4
      %v5974 = vpop.permute.xlu0 %5973
      %5975 = vrot.lane.b32.xlu0 %v5798, 4
      %v5976 = vpop.permute.xlu0 %5975
      %5977 = vrot.lane.b32.xlu0 %v5799, 4
      %v5978 = vpop.permute.xlu0 %5977
      %5979 = vrot.lane.b32.xlu0 %v5800, 4
      %v5980 = vpop.permute.xlu0 %5979
      %5981 = vrot.lane.b32.xlu0 %v5801, 4
      %v5982 = vpop.permute.xlu0 %5981
      %5983 = vrot.lane.b32.xlu0 %v5802, 4
      %v5984 = vpop.permute.xlu0 %5983
      %5985 = vrot.lane.b32.xlu0 %v5803, 4
      %v5986 = vpop.permute.xlu0 %5985
      %5987 = vrot.lane.b32.xlu0 %v5804, 4
      %v5988 = vpop.permute.xlu0 %5987
      %5989 = vrot.lane.b32.xlu0 %v5805, 4
      %v5990 = vpop.permute.xlu0 %5989
      %5991 = vrot.lane.b32.xlu0 %v5806, 4
      %v5992 = vpop.permute.xlu0 %5991
      %5993 = vrot.lane.b32.xlu0 %v5807, 4
      %v5994 = vpop.permute.xlu0 %5993
      %5995 = vrot.lane.b32.xlu0 %v5808, 4
      %v5996 = vpop.permute.xlu0 %5995
      %5997 = vrot.lane.b32.xlu0 %v5809, 4
      %v5998 = vpop.permute.xlu0 %5997
      %5999 = vrot.lane.b32.xlu0 %v5810, 4
      %v6000 = vpop.permute.xlu0 %5999
      %6001 = vrot.lane.b32.xlu0 %v5811, 4
      %v6002 = vpop.permute.xlu0 %6001
      %6003 = vrot.lane.b32.xlu0 %v5812, 4
      %v6004 = vpop.permute.xlu0 %6003
      %vm6069 = vcmask 31744
      %v6070 = vsel %vm6069, %v5621, %v5878
      %v6071 = vsel %vm6069, %v5622, %v5880
      %v6072 = vsel %vm6069, %v5623, %v5882
      %v6073 = vsel %vm6069, %v5624, %v5884
      %v6074 = vsel %vm6069, %v5625, %v5886
      %v6075 = vsel %vm6069, %v5626, %v5888
      %v6076 = vsel %vm6069, %v5627, %v5890
      %v6077 = vsel %vm6069, %v5628, %v5892
      %v6078 = vsel %vm6069, %v5629, %v5894
      %v6079 = vsel %vm6069, %v5630, %v5896
      %v6080 = vsel %vm6069, %v5631, %v5898
      %v6081 = vsel %vm6069, %v5632, %v5900
      %v6082 = vsel %vm6069, %v5633, %v5902
      %v6083 = vsel %vm6069, %v5634, %v5904
      %v6084 = vsel %vm6069, %v5635, %v5906
      %v6085 = vsel %vm6069, %v5636, %v5908
      %v6086 = vsel %vm6069, %v5637, %v5910
      %v6087 = vsel %vm6069, %v5638, %v5912
      %v6088 = vsel %vm6069, %v5639, %v5914
      %v6089 = vsel %vm6069, %v5640, %v5916
      %v6090 = vsel %vm6069, %v5641, %v5918
      %v6091 = vsel %vm6069, %v5642, %v5920
      %v6092 = vsel %vm6069, %v5643, %v5922
      %v6093 = vsel %vm6069, %v5644, %v5924
      %v6094 = vsel %vm6069, %v5645, %v5926
      %v6095 = vsel %vm6069, %v5646, %v5928
      %v6096 = vsel %vm6069, %v5647, %v5930
      %v6097 = vsel %vm6069, %v5648, %v5932
      %v6098 = vsel %vm6069, %v5649, %v5934
      %v6099 = vsel %vm6069, %v5650, %v5936
      %v6100 = vsel %vm6069, %v5651, %v5938
      %v6101 = vsel %vm6069, %v5652, %v5940
      %v6102 = vsel %vm6069, %v5653, %v5942
      %v6103 = vsel %vm6069, %v5654, %v5944
      %v6104 = vsel %vm6069, %v5655, %v5946
      %v6105 = vsel %vm6069, %v5656, %v5948
      %v6106 = vsel %vm6069, %v5657, %v5950
      %v6107 = vsel %vm6069, %v5658, %v5952
      %v6108 = vsel %vm6069, %v5659, %v5954
      %v6109 = vsel %vm6069, %v5660, %v5956
      %v6110 = vsel %vm6069, %v5661, %v5958
      %v6111 = vsel %vm6069, %v5662, %v5960
      %v6112 = vsel %vm6069, %v5663, %v5962
      %v6113 = vsel %vm6069, %v5664, %v5964
      %v6114 = vsel %vm6069, %v5665, %v5966
      %v6115 = vsel %vm6069, %v5666, %v5968
      %v6116 = vsel %vm6069, %v5667, %v5970
      %v6117 = vsel %vm6069, %v5668, %v5972
      %v6118 = vsel %vm6069, %v5669, %v5974
      %v6119 = vsel %vm6069, %v5670, %v5976
      %v6120 = vsel %vm6069, %v5671, %v5978
      %v6121 = vsel %vm6069, %v5672, %v5980
      %v6122 = vsel %vm6069, %v5673, %v5982
      %v6123 = vsel %vm6069, %v5674, %v5984
      %v6124 = vsel %vm6069, %v5675, %v5986
      %v6125 = vsel %vm6069, %v5676, %v5988
      %v6126 = vsel %vm6069, %v5677, %v5990
      %v6127 = vsel %vm6069, %v5678, %v5992
      %v6128 = vsel %vm6069, %v5679, %v5994
      %v6129 = vsel %vm6069, %v5680, %v5996
      %v6130 = vsel %vm6069, %v5681, %v5998
      %v6131 = vsel %vm6069, %v5682, %v6000
      %v6132 = vsel %vm6069, %v5683, %v6002
      %v6133 = vsel %vm6069, %v5684, %v6004
      %v6134 = vld [vmem:[%s11] sm:$0x1]
      %v6135 = vlaneseq
      %v6136 = vshrl.u32 %v6135, 7
      %v6137 = vsub.s32 0, %v6136
      %v6138 = vrot.slane %v6134, %v6137
      %v6139 = vmul.f32 %v6070, %v6138
      %v6140 = vmul.f32 %v6071, %v6138
      %v6141 = vmul.f32 %v6072, %v6138
      %v6142 = vmul.f32 %v6073, %v6138
      %v6143 = vmul.f32 %v6074, %v6138
      %v6144 = vmul.f32 %v6075, %v6138
      %v6145 = vmul.f32 %v6076, %v6138
      %v6146 = vmul.f32 %v6077, %v6138
      %v6147 = vmul.f32 %v6078, %v6138
      %v6148 = vmul.f32 %v6079, %v6138
      %v6149 = vmul.f32 %v6080, %v6138
      %v6150 = vmul.f32 %v6081, %v6138
      %v6151 = vmul.f32 %v6082, %v6138
      %v6152 = vmul.f32 %v6083, %v6138
      %v6153 = vmul.f32 %v6084, %v6138
      %v6154 = vmul.f32 %v6085, %v6138
      %v6155 = vmul.f32 %v6086, %v6138
      %v6156 = vmul.f32 %v6087, %v6138
      %v6157 = vmul.f32 %v6088, %v6138
      %v6158 = vmul.f32 %v6089, %v6138
      %v6159 = vmul.f32 %v6090, %v6138
      %v6160 = vmul.f32 %v6091, %v6138
      %v6161 = vmul.f32 %v6092, %v6138
      %v6162 = vmul.f32 %v6093, %v6138
      %v6163 = vmul.f32 %v6094, %v6138
      %v6164 = vmul.f32 %v6095, %v6138
      %v6165 = vmul.f32 %v6096, %v6138
      %v6166 = vmul.f32 %v6097, %v6138
      %v6167 = vmul.f32 %v6098, %v6138
      %v6168 = vmul.f32 %v6099, %v6138
      %v6169 = vmul.f32 %v6100, %v6138
      %v6170 = vmul.f32 %v6101, %v6138
      %v6171 = vmul.f32 %v6102, %v6138
      %v6172 = vmul.f32 %v6103, %v6138
      %v6173 = vmul.f32 %v6104, %v6138
      %v6174 = vmul.f32 %v6105, %v6138
      %v6175 = vmul.f32 %v6106, %v6138
      %v6176 = vmul.f32 %v6107, %v6138
      %v6177 = vmul.f32 %v6108, %v6138
      %v6178 = vmul.f32 %v6109, %v6138
      %v6179 = vmul.f32 %v6110, %v6138
      %v6180 = vmul.f32 %v6111, %v6138
      %v6181 = vmul.f32 %v6112, %v6138
      %v6182 = vmul.f32 %v6113, %v6138
      %v6183 = vmul.f32 %v6114, %v6138
      %v6184 = vmul.f32 %v6115, %v6138
      %v6185 = vmul.f32 %v6116, %v6138
      %v6186 = vmul.f32 %v6117, %v6138
      %v6187 = vmul.f32 %v6118, %v6138
      %v6188 = vmul.f32 %v6119, %v6138
      %v6189 = vmul.f32 %v6120, %v6138
      %v6190 = vmul.f32 %v6121, %v6138
      %v6191 = vmul.f32 %v6122, %v6138
      %v6192 = vmul.f32 %v6123, %v6138
      %v6193 = vmul.f32 %v6124, %v6138
      %v6194 = vmul.f32 %v6125, %v6138
      %v6195 = vmul.f32 %v6126, %v6138
      %v6196 = vmul.f32 %v6127, %v6138
      %v6197 = vmul.f32 %v6128, %v6138
      %v6198 = vmul.f32 %v6129, %v6138
      %v6199 = vmul.f32 %v6130, %v6138
      %v6200 = vmul.f32 %v6131, %v6138
      %v6201 = vmul.f32 %v6132, %v6138
      %v6202 = vmul.f32 %v6133, %v6138
      %v6203 = vld [vmem:[%s11 + $0x1] sm:$0x1]
      %v6204 = vlaneseq
      %v6205 = vshrl.u32 %v6204, 7
      %v6206 = vsub.s32 0, %v6205
      %v6207 = vrot.slane %v6203, %v6206
      %v6208 = vadd.f32 %v6139, %v6207
      %v6209 = vadd.f32 %v6140, %v6207
      %v6210 = vadd.f32 %v6141, %v6207
      %v6211 = vadd.f32 %v6142, %v6207
      %v6212 = vadd.f32 %v6143, %v6207
      %v6213 = vadd.f32 %v6144, %v6207
      %v6214 = vadd.f32 %v6145, %v6207
      %v6215 = vadd.f32 %v6146, %v6207
      %v6216 = vadd.f32 %v6147, %v6207
      %v6217 = vadd.f32 %v6148, %v6207
      %v6218 = vadd.f32 %v6149, %v6207
      %v6219 = vadd.f32 %v6150, %v6207
      %v6220 = vadd.f32 %v6151, %v6207
      %v6221 = vadd.f32 %v6152, %v6207
      %v6222 = vadd.f32 %v6153, %v6207
      %v6223 = vadd.f32 %v6154, %v6207
      %v6224 = vadd.f32 %v6155, %v6207
      %v6225 = vadd.f32 %v6156, %v6207
      %v6226 = vadd.f32 %v6157, %v6207
      %v6227 = vadd.f32 %v6158, %v6207
      %v6228 = vadd.f32 %v6159, %v6207
      %v6229 = vadd.f32 %v6160, %v6207
      %v6230 = vadd.f32 %v6161, %v6207
      %v6231 = vadd.f32 %v6162, %v6207
      %v6232 = vadd.f32 %v6163, %v6207
      %v6233 = vadd.f32 %v6164, %v6207
      %v6234 = vadd.f32 %v6165, %v6207
      %v6235 = vadd.f32 %v6166, %v6207
      %v6236 = vadd.f32 %v6167, %v6207
      %v6237 = vadd.f32 %v6168, %v6207
      %v6238 = vadd.f32 %v6169, %v6207
      %v6239 = vadd.f32 %v6170, %v6207
      %v6240 = vadd.f32 %v6171, %v6207
      %v6241 = vadd.f32 %v6172, %v6207
      %v6242 = vadd.f32 %v6173, %v6207
      %v6243 = vadd.f32 %v6174, %v6207
      %v6244 = vadd.f32 %v6175, %v6207
      %v6245 = vadd.f32 %v6176, %v6207
      %v6246 = vadd.f32 %v6177, %v6207
      %v6247 = vadd.f32 %v6178, %v6207
      %v6248 = vadd.f32 %v6179, %v6207
      %v6249 = vadd.f32 %v6180, %v6207
      %v6250 = vadd.f32 %v6181, %v6207
      %v6251 = vadd.f32 %v6182, %v6207
      %v6252 = vadd.f32 %v6183, %v6207
      %v6253 = vadd.f32 %v6184, %v6207
      %v6254 = vadd.f32 %v6185, %v6207
      %v6255 = vadd.f32 %v6186, %v6207
      %v6256 = vadd.f32 %v6187, %v6207
      %v6257 = vadd.f32 %v6188, %v6207
      %v6258 = vadd.f32 %v6189, %v6207
      %v6259 = vadd.f32 %v6190, %v6207
      %v6260 = vadd.f32 %v6191, %v6207
      %v6261 = vadd.f32 %v6192, %v6207
      %v6262 = vadd.f32 %v6193, %v6207
      %v6263 = vadd.f32 %v6194, %v6207
      %v6264 = vadd.f32 %v6195, %v6207
      %v6265 = vadd.f32 %v6196, %v6207
      %v6266 = vadd.f32 %v6197, %v6207
      %v6267 = vadd.f32 %v6198, %v6207
      %v6268 = vadd.f32 %v6199, %v6207
      %v6269 = vadd.f32 %v6200, %v6207
      %v6270 = vadd.f32 %v6201, %v6207
      %v6271 = vadd.f32 %v6202, %v6207
      %v6272 = vadd.f32 %v5493, %v6208
      %v6273 = vadd.f32 %v5494, %v6209
      %v6274 = vadd.f32 %v5495, %v6210
      %v6275 = vadd.f32 %v5496, %v6211
      %v6276 = vadd.f32 %v5497, %v6212
      %v6277 = vadd.f32 %v5498, %v6213
      %v6278 = vadd.f32 %v5499, %v6214
      %v6279 = vadd.f32 %v5500, %v6215
      %v6280 = vadd.f32 %v5501, %v6216
      %v6281 = vadd.f32 %v5502, %v6217
      %v6282 = vadd.f32 %v5503, %v6218
      %v6283 = vadd.f32 %v5504, %v6219
      %v6284 = vadd.f32 %v5505, %v6220
      %v6285 = vadd.f32 %v5506, %v6221
      %v6286 = vadd.f32 %v5507, %v6222
      %v6287 = vadd.f32 %v5508, %v6223
      %v6288 = vadd.f32 %v5509, %v6224
      %v6289 = vadd.f32 %v5510, %v6225
      %v6290 = vadd.f32 %v5511, %v6226
      %v6291 = vadd.f32 %v5512, %v6227
      %v6292 = vadd.f32 %v5513, %v6228
      %v6293 = vadd.f32 %v5514, %v6229
      %v6294 = vadd.f32 %v5515, %v6230
      %v6295 = vadd.f32 %v5516, %v6231
      %v6296 = vadd.f32 %v5517, %v6232
      %v6297 = vadd.f32 %v5518, %v6233
      %v6298 = vadd.f32 %v5519, %v6234
      %v6299 = vadd.f32 %v5520, %v6235
      %v6300 = vadd.f32 %v5521, %v6236
      %v6301 = vadd.f32 %v5522, %v6237
      %v6302 = vadd.f32 %v5523, %v6238
      %v6303 = vadd.f32 %v5524, %v6239
      %v6304 = vadd.f32 %v5525, %v6240
      %v6305 = vadd.f32 %v5526, %v6241
      %v6306 = vadd.f32 %v5527, %v6242
      %v6307 = vadd.f32 %v5528, %v6243
      %v6308 = vadd.f32 %v5529, %v6244
      %v6309 = vadd.f32 %v5530, %v6245
      %v6310 = vadd.f32 %v5531, %v6246
      %v6311 = vadd.f32 %v5532, %v6247
      %v6312 = vadd.f32 %v5533, %v6248
      %v6313 = vadd.f32 %v5534, %v6249
      %v6314 = vadd.f32 %v5535, %v6250
      %v6315 = vadd.f32 %v5536, %v6251
      %v6316 = vadd.f32 %v5537, %v6252
      %v6317 = vadd.f32 %v5538, %v6253
      %v6318 = vadd.f32 %v5539, %v6254
      %v6319 = vadd.f32 %v5540, %v6255
      %v6320 = vadd.f32 %v5541, %v6256
      %v6321 = vadd.f32 %v5542, %v6257
      %v6322 = vadd.f32 %v5543, %v6258
      %v6323 = vadd.f32 %v5544, %v6259
      %v6324 = vadd.f32 %v5545, %v6260
      %v6325 = vadd.f32 %v5546, %v6261
      %v6326 = vadd.f32 %v5547, %v6262
      %v6327 = vadd.f32 %v5548, %v6263
      %v6328 = vadd.f32 %v5549, %v6264
      %v6329 = vadd.f32 %v5550, %v6265
      %v6330 = vadd.f32 %v5551, %v6266
      %v6331 = vadd.f32 %v5552, %v6267
      %v6332 = vadd.f32 %v5553, %v6268
      %v6333 = vadd.f32 %v5554, %v6269
      %v6334 = vadd.f32 %v5555, %v6270
      %v6335 = vadd.f32 %v5556, %v6271
      %6336 = vst.msk [vmem:[%s658] sm:$0xff] %vm1772, %v6272
      %6337 = vst.msk [vmem:[%s658 + $0x8] sm:$0xff] %vm1772, %v6273
      %6338 = vst.msk [vmem:[%s658 + $0x10] sm:$0xff] %vm1772, %v6274
      %6339 = vst.msk [vmem:[%s658 + $0x18] sm:$0xff] %vm1772, %v6275
      %6340 = vst.msk [vmem:[%s658 + $0x20] sm:$0xff] %vm1772, %v6276
      %6341 = vst.msk [vmem:[%s658 + $0x28] sm:$0xff] %vm1772, %v6277
      %6342 = vst.msk [vmem:[%s658 + $0x30] sm:$0xff] %vm1772, %v6278
      %6343 = vst.msk [vmem:[%s658 + $0x38] sm:$0xff] %vm1772, %v6279
      %6344 = vst.msk [vmem:[%s658 + $0x40] sm:$0xff] %vm1772, %v6280
      %6345 = vst.msk [vmem:[%s658 + $0x48] sm:$0xff] %vm1772, %v6281
      %6346 = vst.msk [vmem:[%s658 + $0x50] sm:$0xff] %vm1772, %v6282
      %6347 = vst.msk [vmem:[%s658 + $0x58] sm:$0xff] %vm1772, %v6283
      %6348 = vst.msk [vmem:[%s658 + $0x60] sm:$0xff] %vm1772, %v6284
      %6349 = vst.msk [vmem:[%s658 + $0x68] sm:$0xff] %vm1772, %v6285
      %6350 = vst.msk [vmem:[%s658 + $0x70] sm:$0xff] %vm1772, %v6286
      %6351 = vst.msk [vmem:[%s658 + $0x78] sm:$0xff] %vm1772, %v6287
      %6352 = vst.msk [vmem:[%s658 + $0x80] sm:$0xff] %vm1772, %v6288
      %6353 = vst.msk [vmem:[%s658 + $0x88] sm:$0xff] %vm1772, %v6289
      %6354 = vst.msk [vmem:[%s658 + $0x90] sm:$0xff] %vm1772, %v6290
      %6355 = vst.msk [vmem:[%s658 + $0x98] sm:$0xff] %vm1772, %v6291
      %6356 = vst.msk [vmem:[%s658 + $0xa0] sm:$0xff] %vm1772, %v6292
      %6357 = vst.msk [vmem:[%s658 + $0xa8] sm:$0xff] %vm1772, %v6293
      %6358 = vst.msk [vmem:[%s658 + $0xb0] sm:$0xff] %vm1772, %v6294
      %6359 = vst.msk [vmem:[%s658 + $0xb8] sm:$0xff] %vm1772, %v6295
      %6360 = vst.msk [vmem:[%s658 + $0xc0] sm:$0xff] %vm1772, %v6296
      %6361 = vst.msk [vmem:[%s658 + $0xc8] sm:$0xff] %vm1772, %v6297
      %6362 = vst.msk [vmem:[%s658 + $0xd0] sm:$0xff] %vm1772, %v6298
      %6363 = vst.msk [vmem:[%s658 + $0xd8] sm:$0xff] %vm1772, %v6299
      %6364 = vst.msk [vmem:[%s658 + $0xe0] sm:$0xff] %vm1772, %v6300
      %6365 = vst.msk [vmem:[%s658 + $0xe8] sm:$0xff] %vm1772, %v6301
      %6366 = vst.msk [vmem:[%s658 + $0xf0] sm:$0xff] %vm1772, %v6302
      %6367 = vst.msk [vmem:[%s658 + $0xf8] sm:$0xff] %vm1772, %v6303
      %6368 = vst.msk [vmem:[%s658 + $0x100] sm:$0xff] %vm1772, %v6304
      %6369 = vst.msk [vmem:[%s658 + $0x108] sm:$0xff] %vm1772, %v6305
      %6370 = vst.msk [vmem:[%s658 + $0x110] sm:$0xff] %vm1772, %v6306
      %6371 = vst.msk [vmem:[%s658 + $0x118] sm:$0xff] %vm1772, %v6307
      %6372 = vst.msk [vmem:[%s658 + $0x120] sm:$0xff] %vm1772, %v6308
      %6373 = vst.msk [vmem:[%s658 + $0x128] sm:$0xff] %vm1772, %v6309
      %6374 = vst.msk [vmem:[%s658 + $0x130] sm:$0xff] %vm1772, %v6310
      %6375 = vst.msk [vmem:[%s658 + $0x138] sm:$0xff] %vm1772, %v6311
      %6376 = vst.msk [vmem:[%s658 + $0x140] sm:$0xff] %vm1772, %v6312
      %6377 = vst.msk [vmem:[%s658 + $0x148] sm:$0xff] %vm1772, %v6313
      %6378 = vst.msk [vmem:[%s658 + $0x150] sm:$0xff] %vm1772, %v6314
      %6379 = vst.msk [vmem:[%s658 + $0x158] sm:$0xff] %vm1772, %v6315
      %6380 = vst.msk [vmem:[%s658 + $0x160] sm:$0xff] %vm1772, %v6316
      %6381 = vst.msk [vmem:[%s658 + $0x168] sm:$0xff] %vm1772, %v6317
      %6382 = vst.msk [vmem:[%s658 + $0x170] sm:$0xff] %vm1772, %v6318
      %6383 = vst.msk [vmem:[%s658 + $0x178] sm:$0xff] %vm1772, %v6319
      %6384 = vst.msk [vmem:[%s658 + $0x180] sm:$0xff] %vm1772, %v6320
      %6385 = vst.msk [vmem:[%s658 + $0x188] sm:$0xff] %vm1772, %v6321
      %6386 = vst.msk [vmem:[%s658 + $0x190] sm:$0xff] %vm1772, %v6322
      %6387 = vst.msk [vmem:[%s658 + $0x198] sm:$0xff] %vm1772, %v6323
      %6388 = vst.msk [vmem:[%s658 + $0x1a0] sm:$0xff] %vm1772, %v6324
      %6389 = vst.msk [vmem:[%s658 + $0x1a8] sm:$0xff] %vm1772, %v6325
      %6390 = vst.msk [vmem:[%s658 + $0x1b0] sm:$0xff] %vm1772, %v6326
      %6391 = vst.msk [vmem:[%s658 + $0x1b8] sm:$0xff] %vm1772, %v6327
      %6392 = vst.msk [vmem:[%s658 + $0x1c0] sm:$0xff] %vm1772, %v6328
      %6393 = vst.msk [vmem:[%s658 + $0x1c8] sm:$0xff] %vm1772, %v6329
      %6394 = vst.msk [vmem:[%s658 + $0x1d0] sm:$0xff] %vm1772, %v6330
      %6395 = vst.msk [vmem:[%s658 + $0x1d8] sm:$0xff] %vm1772, %v6331
      %6396 = vst.msk [vmem:[%s658 + $0x1e0] sm:$0xff] %vm1772, %v6332
      %6397 = vst.msk [vmem:[%s658 + $0x1e8] sm:$0xff] %vm1772, %v6333
      %6398 = vst.msk [vmem:[%s658 + $0x1f0] sm:$0xff] %vm1772, %v6334
      %6399 = vst.msk [vmem:[%s658 + $0x1f8] sm:$0xff] %vm1772, %v6335
      %s6400 = smul.u32 16, %s28
      %p6401 = scmp.lt.s32.totalorder %s27, 1
      %s6402 = scalar_select %p6401, %s27, 1
      %p6403 = scmp.lt.s32.totalorder %s6400, 31
      %s6404 = scalar_select %p6403, %s6400, 31
      %s6405 = smul.addr %s6404, 4
      %s6406 = smul.addr %s6402, 128
      %s6407 = sadd.s32 %s6405, %s6406
      %s6408 = smul.addr %s6407, 8
      %s6409 = scalar_lea.vmem %s12, %s6408
      // Predicated region
      $region77: #{unet_stage_block.5} parent=67 // pred_check
        %p6410 = pneg %p358
      $region78: #{unet_stage_block.5} parent=67 // pred_check_branch
        %6412 = sbr.rel (%p6410) target = $region80
      $region79: #{unet_stage_block.5} parent=67 // pred_region
        %s6413 = smul.u32 16, %s28
      $region80: #{unet_stage_block.5} parent=67 // pred_fallthru
        _
    $region68: #{unet_stage_block.5} parent=5 // pred_fallthru
      _
    %p6414 = scmp.le.s32.totalorder 2, %s18
    // Predicated region
    $region81: #{unet_stage_block.5} parent=5 // pred_check
      %p6415 = pneg %p6414
    $region82: #{unet_stage_block.5} parent=5 // pred_check_branch
      %6417 = sbr.rel (%p6415) target = $region84
    $region83: #{unet_stage_block.5} parent=5 // pred_region
      %s6418 = ssub.s32 %s18, 2
      // Predicated region
      $region85: #{unet_stage_block.5} parent=83 // pred_check
        %p6419 = pneg %p364
      $region86: #{unet_stage_block.5} parent=83 // pred_check_branch
        %6421 = sbr.rel (%p6419) target = $region88
      $region87: #{unet_stage_block.5} parent=83 // pred_region
        %s6422 = smul.u32 16, %s30
        %p6423 = scmp.lt.s32.totalorder %s29, 1
        %s6424 = scalar_select %p6423, %s29, 1
        %p6425 = scmp.lt.s32.totalorder %s6422, 31
        %s6426 = scalar_select %p6425, %s6422, 31
        %s6427 = smul.addr %s6426, 4
        %s6428 = smul.addr %s6424, 128
        %s6429 = sadd.s32 %s6427, %s6428
        %s6430 = smul.addr %s6429, 8
        %s6431 = scalar_lea.vmem %s12, %s6430
      $region88: #{unet_stage_block.5} parent=83 // pred_fallthru
        _
    $region84: #{unet_stage_block.5} parent=5 // pred_fallthru
      _
  $region6: #{unet_stage_block.5} parent=0 // loop_footer
    %s22 = sadd.s32 1, %s18
  $region7: #{unet_stage_block.5} parent=0 // loop_footer_branch
    %17 = sbr.rel target = $region3
  $region8: #{unet_stage_block.5} parent=0 // loop_exit
    _

</llo_original>
